<compile_context>
chip_gen: v6e
topology: v6e:2x2x1
jax: 0.10.0
libtpu: 0.0.40
codegen_flags: <defaults>
</compile_context>

<pallas_src>
import functools
import numpy as np
import jax
import jax.numpy as jnp
from jax import lax
from jax.experimental import pallas as pl
from jax.experimental.pallas import tpu as pltpu

# Matmul operand dtype for the conv layers (perf review: bf16 halves weight/
# activation DMA and doubles MXU throughput on v5e/v6e/v7x; accumulation is
# f32).  Set to jnp.float32 for bit-exact f32 math.
MXU_DTYPE = jnp.bfloat16

_VMEM = pl.BlockSpec(memory_space=pltpu.MemorySpace.VMEM)


# --------------------------- fused layer kernel -----------------------------
# y = BatchNorm( ReLU( x @ w + b ) )  with training-mode batch statistics.
# x:(M,K) w:(K,N) b/gamma/beta:(1,N).  Whole layer in a single VMEM block.

def _conv_bias_relu_bn_kernel(x_ref, w_ref, b_ref, g_ref, bt_ref, o_ref,
                              *, inv_m, eps):
    acc = jnp.dot(x_ref[...], w_ref[...], preferred_element_type=jnp.float32)
    acc = acc + b_ref[...]
    acc = jnp.maximum(acc, 0.0)                                   # ReLU
    mean = jnp.sum(acc, axis=0, keepdims=True) * inv_m            # batch stats
    var = jnp.sum(acc * acc, axis=0, keepdims=True) * inv_m - mean * mean
    scale = g_ref[...] * lax.rsqrt(var + eps)                     # biased var
    shift = bt_ref[...] - mean * scale
    o_ref[...] = acc * scale + shift


def conv_bias_relu_bn(patches, wmat, b, gamma, beta, eps=1e-5):
    M, K = patches.shape
    N = wmat.shape[1]
    kern = functools.partial(_conv_bias_relu_bn_kernel, inv_m=1.0 / M, eps=eps)
    return pl.pallas_call(
        kern,
        out_shape=jax.ShapeDtypeStruct((M, N), jnp.float32),
        in_specs=[_VMEM] * 5,
        out_specs=_VMEM,
    )(patches.astype(MXU_DTYPE),
      wmat.astype(MXU_DTYPE),
      b.reshape(1, N).astype(jnp.float32),
      gamma.reshape(1, N).astype(jnp.float32),
      beta.reshape(1, N).astype(jnp.float32))


# ---------------- fused 1x1-conv + bilinear-upsample head kernel -------------
# x:(N*Cin, H*W)  w2:(N*Cout, N*Cin) block-diag kron(I_N, W1)  b2:(N*Cout, 1)
# at:(H*W, Ho*Wo) = A.T with A = kron(Ah, Aw)  ->  o:(N*Cout, Ho*Wo)

def _head_kernel(x_ref, w_ref, b_ref, a_ref, o_ref):
    z = jnp.dot(w_ref[...], x_ref[...], preferred_element_type=jnp.float32)
    z = z + b_ref[...]                                            # 1x1 conv bias
    o_ref[...] = jnp.dot(z, a_ref[...], preferred_element_type=jnp.float32)


def _bilinear_matrix(n_in, n_out):
    """Interpolation matrix (n_out, n_in), bilinear, align_corners=True."""
    if n_in == 1:
        return np.ones((n_out, 1), np.float32)
    coords = np.arange(n_out, dtype=np.float64) * (n_in - 1) / (n_out - 1)
    i0 = np.clip(np.floor(coords).astype(np.int64), 0, n_in - 2)
    frac = (coords - i0).astype(np.float32)
    A = np.zeros((n_out, n_in), np.float32)
    A[np.arange(n_out), i0] += 1.0 - frac
    A[np.arange(n_out), i0 + 1] += frac
    return A


def head_1x1_conv_upsample(x_nhwc, w1, b1, scale):
    """Fused Conv2d(k=1) + Upsample(scale, bilinear, align_corners=True).

    x_nhwc:(N,H,W,Cin), w1:(Cout,Cin,1,1) torch layout, b1:(Cout,)
    Returns NCHW (N, Cout, H*scale, W*scale)."""
    N, H, W, Cin = x_nhwc.shape
    Cout = w1.shape[0]
    Ho, Wo = H * scale, W * scale

    # Trace-time constant interpolation matrix (Ho*Wo, H*W) -> pass transposed.
    A = np.kron(_bilinear_matrix(H, Ho), _bilinear_matrix(W, Wo))
    At = jnp.asarray(A.T)                                         # (H*W, Ho*Wo)

    # rows = (n, cin), cols = h*W + w   (tiny 16 KiB layout-glue transpose)
    xt = x_nhwc.reshape(N, H * W, Cin).transpose(0, 2, 1).reshape(N * Cin, H * W)

    w1m = w1.reshape(Cout, Cin).astype(jnp.float32)               # (Cout, Cin)
    w2 = jnp.kron(jnp.eye(N, dtype=jnp.float32), w1m)             # (N*Cout, N*Cin)
    b2 = jnp.tile(b1.reshape(Cout, 1).astype(jnp.float32), (N, 1))  # (N*Cout, 1)

    y = pl.pallas_call(
        _head_kernel,
        out_shape=jax.ShapeDtypeStruct((N * Cout, Ho * Wo), jnp.float32),
        in_specs=[_VMEM] * 4,
        out_specs=_VMEM,
    )(xt.astype(jnp.float32), w2, b2, At)
    return y.reshape(N, Cout, Ho, Wo)                             # NCHW


# ------------------------------ conv glue -----------------------------------

def im2col(x, k, stride, padding, dilation):
    """x:(N,H,W,C) -> patches:(N*Ho*Wo, k*k*C) in (kh, kw, cin) column order."""
    N, H, W, C = x.shape
    if padding:
        x = jnp.pad(x, ((0, 0), (padding, padding), (padding, padding), (0, 0)))
    Ho = (H + 2 * padding - dilation * (k - 1) - 1) // stride + 1
    Wo = (W + 2 * padding - dilation * (k - 1) - 1) // stride + 1
    cols = []
    for ki in range(k):
        for kj in range(k):
            cols.append(x[:, ki * dilation: ki * dilation + stride * Ho: stride,
                             kj * dilation: kj * dilation + stride * Wo: stride, :])
    patches = jnp.concatenate(cols, axis=-1)          # (N, Ho, Wo, k*k*C)
    return patches.reshape(N * Ho * Wo, k * k * C), (N, Ho, Wo)


def _conv_weight_matrix(w):
    """torch (Cout, Cin, kh, kw) -> (kh*kw*Cin, Cout), matching im2col order."""
    Cout, Cin, kh, kw = w.shape
    return jnp.transpose(w, (2, 3, 1, 0)).reshape(kh * kw * Cin, Cout)


def conv_bn_layer(x, p, *, stride, padding, dilation=1):
    """Conv2d -> ReLU -> BatchNorm2d (training stats), NHWC in / NHWC out."""
    Cout, Cin, kh, kw = p["w"].shape
    patches, (N, Ho, Wo) = im2col(x, kh, stride, padding, dilation)
    y = conv_bias_relu_bn(patches, _conv_weight_matrix(p["w"]),
                          p["b"], p["gamma"], p["beta"])
    return y.reshape(N, Ho, Wo, Cout)


def convT_bn_layer(x, p, *, stride, padding):
    """ConvTranspose2d -> ReLU -> BatchNorm2d, via zero-dilated equivalent conv."""
    N, H, W, Cin = x.shape
    _, Cout, kh, kw = p["w"].shape
    Hd, Wd = (H - 1) * stride + 1, (W - 1) * stride + 1
    xd = jnp.zeros((N, Hd, Wd, Cin), x.dtype).at[:, ::stride, ::stride, :].set(x)
    # torch ConvTranspose2d weight (Cin,Cout,kh,kw) -> flipped conv weight.
    w_conv = jnp.transpose(p["w"], (1, 0, 2, 3))[:, :, ::-1, ::-1]
    patches, (N2, Ho, Wo) = im2col(xd, kh, 1, kh - 1 - padding, 1)
    y = conv_bias_relu_bn(patches, _conv_weight_matrix(w_conv),
                          p["b"], p["gamma"], p["beta"])
    return y.reshape(N2, Ho, Wo, Cout)


# ------------------------------ full model ----------------------------------

def baseline_forward(x_nchw, params):
    x = jnp.transpose(x_nchw, (0, 2, 3, 1)).astype(jnp.float32)   # -> NHWC
    # encoder
    x = conv_bn_layer(x, params["l1"], stride=2, padding=1)
    x = conv_bn_layer(x, params["l2"], stride=2, padding=1)
    x = conv_bn_layer(x, params["l3"], stride=2, padding=1)
    x = conv_bn_layer(x, params["l4"], stride=2, padding=3, dilation=2)
    # decoder
    x = convT_bn_layer(x, params["l5a"], stride=2, padding=1)
    x = convT_bn_layer(x, params["l5b"], stride=2, padding=1)
    # fused 1x1 conv + bilinear x4 upsample -> NCHW
    return head_1x1_conv_upsample(x, params["l6"]["w"], params["l6"]["b"], scale=4)


def init_params(key):
    ks = jax.random.split(key, 32)
    it = iter(range(32))

    def nrm(shape, s=0.1):
        return s * jax.random.normal(ks[next(it)], shape, jnp.float32)

    def conv_block(cout, cin, k):
        return dict(w=nrm((cout, cin, k, k)), b=nrm((cout,)),
                    gamma=1.0 + nrm((cout,)), beta=nrm((cout,)))

    def convT_block(cin, cout, k):
        return dict(w=nrm((cin, cout, k, k)), b=nrm((cout,)),
                    gamma=1.0 + nrm((cout,)), beta=nrm((cout,)))

    return {
        "l1": conv_block(32, 1, 4),
        "l2": conv_block(64, 32, 4),
        "l3": conv_block(128, 64, 4),
        "l4": conv_block(128, 128, 4),
        "l5a": convT_block(128, 64, 4),
        "l5b": convT_block(64, 32, 4),
        "l6": dict(w=nrm((2, 32, 1, 1)), b=nrm((2,))),
    }


if __name__ == "__main__":
    key = jax.random.PRNGKey(0)
    k_x, k_p = jax.random.split(key)
    x = jax.random.normal(k_x, (2, 1, 32, 32), jnp.float32)   # NCHW like PyTorch
    params = init_params(k_p)

    y = jax.jit(baseline_forward)(x, params)
    y = jax.block_until_ready(y)
    assert y.shape == (2, 2, 32, 32), y.shape
    assert bool(jnp.all(jnp.isfinite(y)))
    print("KERNEL_OK")
</pallas_src>

<mosaic_0001>
module attributes {stable_mosaic.version = 11 : i64} {
  func.func @_conv_bias_relu_bn_kernel(%arg0: memref<512x16xbf16, #tpu.memory_space<vmem>>, %arg1: memref<16x32xbf16, #tpu.memory_space<vmem>>, %arg2: memref<1x32xf32, #tpu.memory_space<vmem>>, %arg3: memref<1x32xf32, #tpu.memory_space<vmem>>, %arg4: memref<1x32xf32, #tpu.memory_space<vmem>>, %arg5: memref<512x32xf32, #tpu.memory_space<vmem>>) attributes {dimension_semantics = [], scalar_prefetch = 0 : i64, scratch_operands = 0 : i64, tpu.core_type = #tpu.core_type<tc>} {
    %c0 = arith.constant 0 : index
    %c0_0 = arith.constant 0 : index
    %0 = vector.load %arg0[%c0, %c0_0] : memref<512x16xbf16, #tpu.memory_space<vmem>>, vector<512x16xbf16>
    %c0_1 = arith.constant 0 : index
    %c0_2 = arith.constant 0 : index
    %1 = vector.load %arg1[%c0_1, %c0_2] : memref<16x32xbf16, #tpu.memory_space<vmem>>, vector<16x32xbf16>
    %cst = arith.constant dense<0.000000e+00> : vector<512x32xf32>
    %2 = tpu.matmul %0, %1, %cst {dimension_numbers = #tpu.dot_dimension_numbers<[1], [0], [0], [1], [0, 0, 1, 1], [], []>} : vector<512x16xbf16>, vector<16x32xbf16>, vector<512x32xf32> -> vector<512x32xf32>
    %c0_3 = arith.constant 0 : index
    %c0_4 = arith.constant 0 : index
    %3 = vector.load %arg2[%c0_3, %c0_4] : memref<1x32xf32, #tpu.memory_space<vmem>>, vector<1x32xf32>
    %4 = vector.broadcast %3 : vector<1x32xf32> to vector<512x32xf32>
    %5 = arith.addf %2, %4 : vector<512x32xf32>
    %cst_5 = arith.constant 0.000000e+00 : f32
    %6 = vector.broadcast %cst_5 : f32 to vector<512x32xf32>
    %7 = arith.maximumf %5, %6 : vector<512x32xf32>
    %cst_6 = arith.constant dense<0.000000e+00> : vector<32xf32>
    %8 = vector.multi_reduction <add>, %7, %cst_6 [0] : vector<512x32xf32> to vector<32xf32>
    %9 = vector.shape_cast %8 : vector<32xf32> to vector<1x32xf32>
    %cst_7 = arith.constant 0.001953125 : f32
    %10 = vector.broadcast %cst_7 : f32 to vector<1x32xf32>
    %11 = arith.mulf %9, %10 : vector<1x32xf32>
    %12 = arith.mulf %7, %7 : vector<512x32xf32>
    %cst_8 = arith.constant dense<0.000000e+00> : vector<32xf32>
    %13 = vector.multi_reduction <add>, %12, %cst_8 [0] : vector<512x32xf32> to vector<32xf32>
    %14 = vector.shape_cast %13 : vector<32xf32> to vector<1x32xf32>
    %cst_9 = arith.constant 0.001953125 : f32
    %15 = vector.broadcast %cst_9 : f32 to vector<1x32xf32>
    %16 = arith.mulf %14, %15 : vector<1x32xf32>
    %17 = arith.mulf %11, %11 : vector<1x32xf32>
    %18 = arith.subf %16, %17 : vector<1x32xf32>
    %c0_10 = arith.constant 0 : index
    %c0_11 = arith.constant 0 : index
    %19 = vector.load %arg3[%c0_10, %c0_11] : memref<1x32xf32, #tpu.memory_space<vmem>>, vector<1x32xf32>
    %cst_12 = arith.constant 9.99999974E-6 : f32
    %20 = vector.broadcast %cst_12 : f32 to vector<1x32xf32>
    %21 = arith.addf %18, %20 : vector<1x32xf32>
    %22 = math.rsqrt %21 : vector<1x32xf32>
    %23 = arith.mulf %19, %22 : vector<1x32xf32>
    %c0_13 = arith.constant 0 : index
    %c0_14 = arith.constant 0 : index
    %24 = vector.load %arg4[%c0_13, %c0_14] : memref<1x32xf32, #tpu.memory_space<vmem>>, vector<1x32xf32>
    %25 = arith.mulf %11, %23 : vector<1x32xf32>
    %26 = arith.subf %24, %25 : vector<1x32xf32>
    %27 = vector.broadcast %23 : vector<1x32xf32> to vector<512x32xf32>
    %28 = arith.mulf %7, %27 : vector<512x32xf32>
    %29 = vector.broadcast %26 : vector<1x32xf32> to vector<512x32xf32>
    %30 = arith.addf %28, %29 : vector<512x32xf32>
    %c0_15 = arith.constant 0 : index
    %c0_16 = arith.constant 0 : index
    %31 = vector.load %arg5[%c0_15, %c0_16] : memref<512x32xf32, #tpu.memory_space<vmem>>, vector<512x32xf32>
    tpu.vector_store %arg5[%c0_15, %c0_16], %30 {strides = array<i32>} : memref<512x32xf32, #tpu.memory_space<vmem>>, vector<512x32xf32>,
    return
  }
}

module attributes {stable_mosaic.version = 11 : i64} {
  func.func @_conv_bias_relu_bn_kernel(%arg0: memref<128x512xbf16, #tpu.memory_space<vmem>>, %arg1: memref<512x64xbf16, #tpu.memory_space<vmem>>, %arg2: memref<1x64xf32, #tpu.memory_space<vmem>>, %arg3: memref<1x64xf32, #tpu.memory_space<vmem>>, %arg4: memref<1x64xf32, #tpu.memory_space<vmem>>, %arg5: memref<128x64xf32, #tpu.memory_space<vmem>>) attributes {dimension_semantics = [], scalar_prefetch = 0 : i64, scratch_operands = 0 : i64, tpu.core_type = #tpu.core_type<tc>} {
    %c0 = arith.constant 0 : index
    %c0_0 = arith.constant 0 : index
    %0 = vector.load %arg0[%c0, %c0_0] : memref<128x512xbf16, #tpu.memory_space<vmem>>, vector<128x512xbf16>
    %c0_1 = arith.constant 0 : index
    %c0_2 = arith.constant 0 : index
    %1 = vector.load %arg1[%c0_1, %c0_2] : memref<512x64xbf16, #tpu.memory_space<vmem>>, vector<512x64xbf16>
    %cst = arith.constant dense<0.000000e+00> : vector<128x64xf32>
    %2 = tpu.matmul %0, %1, %cst {dimension_numbers = #tpu.dot_dimension_numbers<[1], [0], [0], [1], [0, 0, 1, 1], [], []>} : vector<128x512xbf16>, vector<512x64xbf16>, vector<128x64xf32> -> vector<128x64xf32>
    %c0_3 = arith.constant 0 : index
    %c0_4 = arith.constant 0 : index
    %3 = vector.load %arg2[%c0_3, %c0_4] : memref<1x64xf32, #tpu.memory_space<vmem>>, vector<1x64xf32>
    %4 = vector.broadcast %3 : vector<1x64xf32> to vector<128x64xf32>
    %5 = arith.addf %2, %4 : vector<128x64xf32>
    %cst_5 = arith.constant 0.000000e+00 : f32
    %6 = vector.broadcast %cst_5 : f32 to vector<128x64xf32>
    %7 = arith.maximumf %5, %6 : vector<128x64xf32>
    %cst_6 = arith.constant dense<0.000000e+00> : vector<64xf32>
    %8 = vector.multi_reduction <add>, %7, %cst_6 [0] : vector<128x64xf32> to vector<64xf32>
    %9 = vector.shape_cast %8 : vector<64xf32> to vector<1x64xf32>
    %cst_7 = arith.constant 7.812500e-03 : f32
    %10 = vector.broadcast %cst_7 : f32 to vector<1x64xf32>
    %11 = arith.mulf %9, %10 : vector<1x64xf32>
    %12 = arith.mulf %7, %7 : vector<128x64xf32>
    %cst_8 = arith.constant dense<0.000000e+00> : vector<64xf32>
    %13 = vector.multi_reduction <add>, %12, %cst_8 [0] : vector<128x64xf32> to vector<64xf32>
    %14 = vector.shape_cast %13 : vector<64xf32> to vector<1x64xf32>
    %cst_9 = arith.constant 7.812500e-03 : f32
    %15 = vector.broadcast %cst_9 : f32 to vector<1x64xf32>
    %16 = arith.mulf %14, %15 : vector<1x64xf32>
    %17 = arith.mulf %11, %11 : vector<1x64xf32>
    %18 = arith.subf %16, %17 : vector<1x64xf32>
    %c0_10 = arith.constant 0 : index
    %c0_11 = arith.constant 0 : index
    %19 = vector.load %arg3[%c0_10, %c0_11] : memref<1x64xf32, #tpu.memory_space<vmem>>, vector<1x64xf32>
    %cst_12 = arith.constant 9.99999974E-6 : f32
    %20 = vector.broadcast %cst_12 : f32 to vector<1x64xf32>
    %21 = arith.addf %18, %20 : vector<1x64xf32>
    %22 = math.rsqrt %21 : vector<1x64xf32>
    %23 = arith.mulf %19, %22 : vector<1x64xf32>
    %c0_13 = arith.constant 0 : index
    %c0_14 = arith.constant 0 : index
    %24 = vector.load %arg4[%c0_13, %c0_14] : memref<1x64xf32, #tpu.memory_space<vmem>>, vector<1x64xf32>
    %25 = arith.mulf %11, %23 : vector<1x64xf32>
    %26 = arith.subf %24, %25 : vector<1x64xf32>
    %27 = vector.broadcast %23 : vector<1x64xf32> to vector<128x64xf32>
    %28 = arith.mulf %7, %27 : vector<128x64xf32>
    %29 = vector.broadcast %26 : vector<1x64xf32> to vector<128x64xf32>
    %30 = arith.addf %28, %29 : vector<128x64xf32>
    %c0_15 = arith.constant 0 : index
    %c0_16 = arith.constant 0 : index
    %31 = vector.load %arg5[%c0_15, %c0_16] : memref<128x64xf32, #tpu.memory_space<vmem>>, vector<128x64xf32>
    tpu.vector_store %arg5[%c0_15, %c0_16], %30 {strides = array<i32>} : memref<128x64xf32, #tpu.memory_space<vmem>>, vector<128x64xf32>,
    return
  }
}

module attributes {stable_mosaic.version = 11 : i64} {
  func.func @_conv_bias_relu_bn_kernel(%arg0: memref<32x1024xbf16, #tpu.memory_space<vmem>>, %arg1: memref<1024x128xbf16, #tpu.memory_space<vmem>>, %arg2: memref<1x128xf32, #tpu.memory_space<vmem>>, %arg3: memref<1x128xf32, #tpu.memory_space<vmem>>, %arg4: memref<1x128xf32, #tpu.memory_space<vmem>>, %arg5: memref<32x128xf32, #tpu.memory_space<vmem>>) attributes {dimension_semantics = [], scalar_prefetch = 0 : i64, scratch_operands = 0 : i64, tpu.core_type = #tpu.core_type<tc>} {
    %c0 = arith.constant 0 : index
    %c0_0 = arith.constant 0 : index
    %0 = vector.load %arg0[%c0, %c0_0] : memref<32x1024xbf16, #tpu.memory_space<vmem>>, vector<32x1024xbf16>
    %c0_1 = arith.constant 0 : index
    %c0_2 = arith.constant 0 : index
    %1 = vector.load %arg1[%c0_1, %c0_2] : memref<1024x128xbf16, #tpu.memory_space<vmem>>, vector<1024x128xbf16>
    %cst = arith.constant dense<0.000000e+00> : vector<32x128xf32>
    %2 = tpu.matmul %0, %1, %cst {dimension_numbers = #tpu.dot_dimension_numbers<[1], [0], [0], [1], [0, 0, 1, 1], [], []>} : vector<32x1024xbf16>, vector<1024x128xbf16>, vector<32x128xf32> -> vector<32x128xf32>
    %c0_3 = arith.constant 0 : index
    %c0_4 = arith.constant 0 : index
    %3 = vector.load %arg2[%c0_3, %c0_4] : memref<1x128xf32, #tpu.memory_space<vmem>>, vector<1x128xf32>
    %4 = vector.broadcast %3 : vector<1x128xf32> to vector<32x128xf32>
    %5 = arith.addf %2, %4 : vector<32x128xf32>
    %cst_5 = arith.constant 0.000000e+00 : f32
    %6 = vector.broadcast %cst_5 : f32 to vector<32x128xf32>
    %7 = arith.maximumf %5, %6 : vector<32x128xf32>
    %cst_6 = arith.constant dense<0.000000e+00> : vector<128xf32>
    %8 = vector.multi_reduction <add>, %7, %cst_6 [0] : vector<32x128xf32> to vector<128xf32>
    %9 = vector.shape_cast %8 : vector<128xf32> to vector<1x128xf32>
    %cst_7 = arith.constant 3.125000e-02 : f32
    %10 = vector.broadcast %cst_7 : f32 to vector<1x128xf32>
    %11 = arith.mulf %9, %10 : vector<1x128xf32>
    %12 = arith.mulf %7, %7 : vector<32x128xf32>
    %cst_8 = arith.constant dense<0.000000e+00> : vector<128xf32>
    %13 = vector.multi_reduction <add>, %12, %cst_8 [0] : vector<32x128xf32> to vector<128xf32>
    %14 = vector.shape_cast %13 : vector<128xf32> to vector<1x128xf32>
    %cst_9 = arith.constant 3.125000e-02 : f32
    %15 = vector.broadcast %cst_9 : f32 to vector<1x128xf32>
    %16 = arith.mulf %14, %15 : vector<1x128xf32>
    %17 = arith.mulf %11, %11 : vector<1x128xf32>
    %18 = arith.subf %16, %17 : vector<1x128xf32>
    %c0_10 = arith.constant 0 : index
    %c0_11 = arith.constant 0 : index
    %19 = vector.load %arg3[%c0_10, %c0_11] : memref<1x128xf32, #tpu.memory_space<vmem>>, vector<1x128xf32>
    %cst_12 = arith.constant 9.99999974E-6 : f32
    %20 = vector.broadcast %cst_12 : f32 to vector<1x128xf32>
    %21 = arith.addf %18, %20 : vector<1x128xf32>
    %22 = math.rsqrt %21 : vector<1x128xf32>
    %23 = arith.mulf %19, %22 : vector<1x128xf32>
    %c0_13 = arith.constant 0 : index
    %c0_14 = arith.constant 0 : index
    %24 = vector.load %arg4[%c0_13, %c0_14] : memref<1x128xf32, #tpu.memory_space<vmem>>, vector<1x128xf32>
    %25 = arith.mulf %11, %23 : vector<1x128xf32>
    %26 = arith.subf %24, %25 : vector<1x128xf32>
    %27 = vector.broadcast %23 : vector<1x128xf32> to vector<32x128xf32>
    %28 = arith.mulf %7, %27 : vector<32x128xf32>
    %29 = vector.broadcast %26 : vector<1x128xf32> to vector<32x128xf32>
    %30 = arith.addf %28, %29 : vector<32x128xf32>
    %c0_15 = arith.constant 0 : index
    %c0_16 = arith.constant 0 : index
    %31 = vector.load %arg5[%c0_15, %c0_16] : memref<32x128xf32, #tpu.memory_space<vmem>>, vector<32x128xf32>
    tpu.vector_store %arg5[%c0_15, %c0_16], %30 {strides = array<i32>} : memref<32x128xf32, #tpu.memory_space<vmem>>, vector<32x128xf32>,
    return
  }
}

module attributes {stable_mosaic.version = 11 : i64} {
  func.func @_conv_bias_relu_bn_kernel(%arg0: memref<8x2048xbf16, #tpu.memory_space<vmem>>, %arg1: memref<2048x128xbf16, #tpu.memory_space<vmem>>, %arg2: memref<1x128xf32, #tpu.memory_space<vmem>>, %arg3: memref<1x128xf32, #tpu.memory_space<vmem>>, %arg4: memref<1x128xf32, #tpu.memory_space<vmem>>, %arg5: memref<8x128xf32, #tpu.memory_space<vmem>>) attributes {dimension_semantics = [], scalar_prefetch = 0 : i64, scratch_operands = 0 : i64, tpu.core_type = #tpu.core_type<tc>} {
    %c0 = arith.constant 0 : index
    %c0_0 = arith.constant 0 : index
    %0 = vector.load %arg0[%c0, %c0_0] : memref<8x2048xbf16, #tpu.memory_space<vmem>>, vector<8x2048xbf16>
    %c0_1 = arith.constant 0 : index
    %c0_2 = arith.constant 0 : index
    %1 = vector.load %arg1[%c0_1, %c0_2] : memref<2048x128xbf16, #tpu.memory_space<vmem>>, vector<2048x128xbf16>
    %cst = arith.constant dense<0.000000e+00> : vector<8x128xf32>
    %2 = tpu.matmul %0, %1, %cst {dimension_numbers = #tpu.dot_dimension_numbers<[1], [0], [0], [1], [0, 0, 1, 1], [], []>} : vector<8x2048xbf16>, vector<2048x128xbf16>, vector<8x128xf32> -> vector<8x128xf32>
    %c0_3 = arith.constant 0 : index
    %c0_4 = arith.constant 0 : index
    %3 = vector.load %arg2[%c0_3, %c0_4] : memref<1x128xf32, #tpu.memory_space<vmem>>, vector<1x128xf32>
    %4 = vector.broadcast %3 : vector<1x128xf32> to vector<8x128xf32>
    %5 = arith.addf %2, %4 : vector<8x128xf32>
    %cst_5 = arith.constant 0.000000e+00 : f32
    %6 = vector.broadcast %cst_5 : f32 to vector<8x128xf32>
    %7 = arith.maximumf %5, %6 : vector<8x128xf32>
    %cst_6 = arith.constant dense<0.000000e+00> : vector<128xf32>
    %8 = vector.multi_reduction <add>, %7, %cst_6 [0] : vector<8x128xf32> to vector<128xf32>
    %9 = vector.shape_cast %8 : vector<128xf32> to vector<1x128xf32>
    %cst_7 = arith.constant 1.250000e-01 : f32
    %10 = vector.broadcast %cst_7 : f32 to vector<1x128xf32>
    %11 = arith.mulf %9, %10 : vector<1x128xf32>
    %12 = arith.mulf %7, %7 : vector<8x128xf32>
    %cst_8 = arith.constant dense<0.000000e+00> : vector<128xf32>
    %13 = vector.multi_reduction <add>, %12, %cst_8 [0] : vector<8x128xf32> to vector<128xf32>
    %14 = vector.shape_cast %13 : vector<128xf32> to vector<1x128xf32>
    %cst_9 = arith.constant 1.250000e-01 : f32
    %15 = vector.broadcast %cst_9 : f32 to vector<1x128xf32>
    %16 = arith.mulf %14, %15 : vector<1x128xf32>
    %17 = arith.mulf %11, %11 : vector<1x128xf32>
    %18 = arith.subf %16, %17 : vector<1x128xf32>
    %c0_10 = arith.constant 0 : index
    %c0_11 = arith.constant 0 : index
    %19 = vector.load %arg3[%c0_10, %c0_11] : memref<1x128xf32, #tpu.memory_space<vmem>>, vector<1x128xf32>
    %cst_12 = arith.constant 9.99999974E-6 : f32
    %20 = vector.broadcast %cst_12 : f32 to vector<1x128xf32>
    %21 = arith.addf %18, %20 : vector<1x128xf32>
    %22 = math.rsqrt %21 : vector<1x128xf32>
    %23 = arith.mulf %19, %22 : vector<1x128xf32>
    %c0_13 = arith.constant 0 : index
    %c0_14 = arith.constant 0 : index
    %24 = vector.load %arg4[%c0_13, %c0_14] : memref<1x128xf32, #tpu.memory_space<vmem>>, vector<1x128xf32>
    %25 = arith.mulf %11, %23 : vector<1x128xf32>
    %26 = arith.subf %24, %25 : vector<1x128xf32>
    %27 = vector.broadcast %23 : vector<1x128xf32> to vector<8x128xf32>
    %28 = arith.mulf %7, %27 : vector<8x128xf32>
    %29 = vector.broadcast %26 : vector<1x128xf32> to vector<8x128xf32>
    %30 = arith.addf %28, %29 : vector<8x128xf32>
    %c0_15 = arith.constant 0 : index
    %c0_16 = arith.constant 0 : index
    %31 = vector.load %arg5[%c0_15, %c0_16] : memref<8x128xf32, #tpu.memory_space<vmem>>, vector<8x128xf32>
    tpu.vector_store %arg5[%c0_15, %c0_16], %30 {strides = array<i32>} : memref<8x128xf32, #tpu.memory_space<vmem>>, vector<8x128xf32>,
    return
  }
}

module attributes {stable_mosaic.version = 11 : i64} {
  func.func @_conv_bias_relu_bn_kernel(%arg0: memref<32x2048xbf16, #tpu.memory_space<vmem>>, %arg1: memref<2048x64xbf16, #tpu.memory_space<vmem>>, %arg2: memref<1x64xf32, #tpu.memory_space<vmem>>, %arg3: memref<1x64xf32, #tpu.memory_space<vmem>>, %arg4: memref<1x64xf32, #tpu.memory_space<vmem>>, %arg5: memref<32x64xf32, #tpu.memory_space<vmem>>) attributes {dimension_semantics = [], scalar_prefetch = 0 : i64, scratch_operands = 0 : i64, tpu.core_type = #tpu.core_type<tc>} {
    %c0 = arith.constant 0 : index
    %c0_0 = arith.constant 0 : index
    %0 = vector.load %arg0[%c0, %c0_0] : memref<32x2048xbf16, #tpu.memory_space<vmem>>, vector<32x2048xbf16>
    %c0_1 = arith.constant 0 : index
    %c0_2 = arith.constant 0 : index
    %1 = vector.load %arg1[%c0_1, %c0_2] : memref<2048x64xbf16, #tpu.memory_space<vmem>>, vector<2048x64xbf16>
    %cst = arith.constant dense<0.000000e+00> : vector<32x64xf32>
    %2 = tpu.matmul %0, %1, %cst {dimension_numbers = #tpu.dot_dimension_numbers<[1], [0], [0], [1], [0, 0, 1, 1], [], []>} : vector<32x2048xbf16>, vector<2048x64xbf16>, vector<32x64xf32> -> vector<32x64xf32>
    %c0_3 = arith.constant 0 : index
    %c0_4 = arith.constant 0 : index
    %3 = vector.load %arg2[%c0_3, %c0_4] : memref<1x64xf32, #tpu.memory_space<vmem>>, vector<1x64xf32>
    %4 = vector.broadcast %3 : vector<1x64xf32> to vector<32x64xf32>
    %5 = arith.addf %2, %4 : vector<32x64xf32>
    %cst_5 = arith.constant 0.000000e+00 : f32
    %6 = vector.broadcast %cst_5 : f32 to vector<32x64xf32>
    %7 = arith.maximumf %5, %6 : vector<32x64xf32>
    %cst_6 = arith.constant dense<0.000000e+00> : vector<64xf32>
    %8 = vector.multi_reduction <add>, %7, %cst_6 [0] : vector<32x64xf32> to vector<64xf32>
    %9 = vector.shape_cast %8 : vector<64xf32> to vector<1x64xf32>
    %cst_7 = arith.constant 3.125000e-02 : f32
    %10 = vector.broadcast %cst_7 : f32 to vector<1x64xf32>
    %11 = arith.mulf %9, %10 : vector<1x64xf32>
    %12 = arith.mulf %7, %7 : vector<32x64xf32>
    %cst_8 = arith.constant dense<0.000000e+00> : vector<64xf32>
    %13 = vector.multi_reduction <add>, %12, %cst_8 [0] : vector<32x64xf32> to vector<64xf32>
    %14 = vector.shape_cast %13 : vector<64xf32> to vector<1x64xf32>
    %cst_9 = arith.constant 3.125000e-02 : f32
    %15 = vector.broadcast %cst_9 : f32 to vector<1x64xf32>
    %16 = arith.mulf %14, %15 : vector<1x64xf32>
    %17 = arith.mulf %11, %11 : vector<1x64xf32>
    %18 = arith.subf %16, %17 : vector<1x64xf32>
    %c0_10 = arith.constant 0 : index
    %c0_11 = arith.constant 0 : index
    %19 = vector.load %arg3[%c0_10, %c0_11] : memref<1x64xf32, #tpu.memory_space<vmem>>, vector<1x64xf32>
    %cst_12 = arith.constant 9.99999974E-6 : f32
    %20 = vector.broadcast %cst_12 : f32 to vector<1x64xf32>
    %21 = arith.addf %18, %20 : vector<1x64xf32>
    %22 = math.rsqrt %21 : vector<1x64xf32>
    %23 = arith.mulf %19, %22 : vector<1x64xf32>
    %c0_13 = arith.constant 0 : index
    %c0_14 = arith.constant 0 : index
    %24 = vector.load %arg4[%c0_13, %c0_14] : memref<1x64xf32, #tpu.memory_space<vmem>>, vector<1x64xf32>
    %25 = arith.mulf %11, %23 : vector<1x64xf32>
    %26 = arith.subf %24, %25 : vector<1x64xf32>
    %27 = vector.broadcast %23 : vector<1x64xf32> to vector<32x64xf32>
    %28 = arith.mulf %7, %27 : vector<32x64xf32>
    %29 = vector.broadcast %26 : vector<1x64xf32> to vector<32x64xf32>
    %30 = arith.addf %28, %29 : vector<32x64xf32>
    %c0_15 = arith.constant 0 : index
    %c0_16 = arith.constant 0 : index
    %31 = vector.load %arg5[%c0_15, %c0_16] : memref<32x64xf32, #tpu.memory_space<vmem>>, vector<32x64xf32>
    tpu.vector_store %arg5[%c0_15, %c0_16], %30 {strides = array<i32>} : memref<32x64xf32, #tpu.memory_space<vmem>>, vector<32x64xf32>,
    return
  }
}

module attributes {stable_mosaic.version = 11 : i64} {
  func.func @_conv_bias_relu_bn_kernel(%arg0: memref<128x1024xbf16, #tpu.memory_space<vmem>>, %arg1: memref<1024x32xbf16, #tpu.memory_space<vmem>>, %arg2: memref<1x32xf32, #tpu.memory_space<vmem>>, %arg3: memref<1x32xf32, #tpu.memory_space<vmem>>, %arg4: memref<1x32xf32, #tpu.memory_space<vmem>>, %arg5: memref<128x32xf32, #tpu.memory_space<vmem>>) attributes {dimension_semantics = [], scalar_prefetch = 0 : i64, scratch_operands = 0 : i64, tpu.core_type = #tpu.core_type<tc>} {
    %c0 = arith.constant 0 : index
    %c0_0 = arith.constant 0 : index
    %0 = vector.load %arg0[%c0, %c0_0] : memref<128x1024xbf16, #tpu.memory_space<vmem>>, vector<128x1024xbf16>
    %c0_1 = arith.constant 0 : index
    %c0_2 = arith.constant 0 : index
    %1 = vector.load %arg1[%c0_1, %c0_2] : memref<1024x32xbf16, #tpu.memory_space<vmem>>, vector<1024x32xbf16>
    %cst = arith.constant dense<0.000000e+00> : vector<128x32xf32>
    %2 = tpu.matmul %0, %1, %cst {dimension_numbers = #tpu.dot_dimension_numbers<[1], [0], [0], [1], [0, 0, 1, 1], [], []>} : vector<128x1024xbf16>, vector<1024x32xbf16>, vector<128x32xf32> -> vector<128x32xf32>
    %c0_3 = arith.constant 0 : index
    %c0_4 = arith.constant 0 : index
    %3 = vector.load %arg2[%c0_3, %c0_4] : memref<1x32xf32, #tpu.memory_space<vmem>>, vector<1x32xf32>
    %4 = vector.broadcast %3 : vector<1x32xf32> to vector<128x32xf32>
    %5 = arith.addf %2, %4 : vector<128x32xf32>
    %cst_5 = arith.constant 0.000000e+00 : f32
    %6 = vector.broadcast %cst_5 : f32 to vector<128x32xf32>
    %7 = arith.maximumf %5, %6 : vector<128x32xf32>
    %cst_6 = arith.constant dense<0.000000e+00> : vector<32xf32>
    %8 = vector.multi_reduction <add>, %7, %cst_6 [0] : vector<128x32xf32> to vector<32xf32>
    %9 = vector.shape_cast %8 : vector<32xf32> to vector<1x32xf32>
    %cst_7 = arith.constant 7.812500e-03 : f32
    %10 = vector.broadcast %cst_7 : f32 to vector<1x32xf32>
    %11 = arith.mulf %9, %10 : vector<1x32xf32>
    %12 = arith.mulf %7, %7 : vector<128x32xf32>
    %cst_8 = arith.constant dense<0.000000e+00> : vector<32xf32>
    %13 = vector.multi_reduction <add>, %12, %cst_8 [0] : vector<128x32xf32> to vector<32xf32>
    %14 = vector.shape_cast %13 : vector<32xf32> to vector<1x32xf32>
    %cst_9 = arith.constant 7.812500e-03 : f32
    %15 = vector.broadcast %cst_9 : f32 to vector<1x32xf32>
    %16 = arith.mulf %14, %15 : vector<1x32xf32>
    %17 = arith.mulf %11, %11 : vector<1x32xf32>
    %18 = arith.subf %16, %17 : vector<1x32xf32>
    %c0_10 = arith.constant 0 : index
    %c0_11 = arith.constant 0 : index
    %19 = vector.load %arg3[%c0_10, %c0_11] : memref<1x32xf32, #tpu.memory_space<vmem>>, vector<1x32xf32>
    %cst_12 = arith.constant 9.99999974E-6 : f32
    %20 = vector.broadcast %cst_12 : f32 to vector<1x32xf32>
    %21 = arith.addf %18, %20 : vector<1x32xf32>
    %22 = math.rsqrt %21 : vector<1x32xf32>
    %23 = arith.mulf %19, %22 : vector<1x32xf32>
    %c0_13 = arith.constant 0 : index
    %c0_14 = arith.constant 0 : index
    %24 = vector.load %arg4[%c0_13, %c0_14] : memref<1x32xf32, #tpu.memory_space<vmem>>, vector<1x32xf32>
    %25 = arith.mulf %11, %23 : vector<1x32xf32>
    %26 = arith.subf %24, %25 : vector<1x32xf32>
    %27 = vector.broadcast %23 : vector<1x32xf32> to vector<128x32xf32>
    %28 = arith.mulf %7, %27 : vector<128x32xf32>
    %29 = vector.broadcast %26 : vector<1x32xf32> to vector<128x32xf32>
    %30 = arith.addf %28, %29 : vector<128x32xf32>
    %c0_15 = arith.constant 0 : index
    %c0_16 = arith.constant 0 : index
    %31 = vector.load %arg5[%c0_15, %c0_16] : memref<128x32xf32, #tpu.memory_space<vmem>>, vector<128x32xf32>
    tpu.vector_store %arg5[%c0_15, %c0_16], %30 {strides = array<i32>} : memref<128x32xf32, #tpu.memory_space<vmem>>, vector<128x32xf32>,
    return
  }
}

module attributes {stable_mosaic.version = 11 : i64} {
  func.func @_head_kernel(%arg0: memref<64x64xf32, #tpu.memory_space<vmem>>, %arg1: memref<4x64xf32, #tpu.memory_space<vmem>>, %arg2: memref<4x1xf32, #tpu.memory_space<vmem>>, %arg3: memref<64x1024xf32, #tpu.memory_space<vmem>>, %arg4: memref<4x1024xf32, #tpu.memory_space<vmem>>) attributes {dimension_semantics = [], scalar_prefetch = 0 : i64, scratch_operands = 0 : i64, tpu.core_type = #tpu.core_type<tc>} {
    %c0 = arith.constant 0 : index
    %c0_0 = arith.constant 0 : index
    %0 = vector.load %arg1[%c0, %c0_0] : memref<4x64xf32, #tpu.memory_space<vmem>>, vector<4x64xf32>
    %c0_1 = arith.constant 0 : index
    %c0_2 = arith.constant 0 : index
    %1 = vector.load %arg0[%c0_1, %c0_2] : memref<64x64xf32, #tpu.memory_space<vmem>>, vector<64x64xf32>
    %cst = arith.constant dense<0.000000e+00> : vector<4x64xf32>
    %2 = tpu.matmul %0, %1, %cst {dimension_numbers = #tpu.dot_dimension_numbers<[1], [0], [0], [1], [0, 0, 1, 1], [], []>} : vector<4x64xf32>, vector<64x64xf32>, vector<4x64xf32> -> vector<4x64xf32>
    %c0_3 = arith.constant 0 : index
    %c0_4 = arith.constant 0 : index
    %3 = vector.load %arg2[%c0_3, %c0_4] : memref<4x1xf32, #tpu.memory_space<vmem>>, vector<4x1xf32>
    %4 = vector.broadcast %3 : vector<4x1xf32> to vector<4x64xf32>
    %5 = arith.addf %2, %4 : vector<4x64xf32>
    %c0_5 = arith.constant 0 : index
    %c0_6 = arith.constant 0 : index
    %6 = vector.load %arg3[%c0_5, %c0_6] : memref<64x1024xf32, #tpu.memory_space<vmem>>, vector<64x1024xf32>
    %cst_7 = arith.constant dense<0.000000e+00> : vector<4x1024xf32>
    %7 = tpu.matmul %5, %6, %cst_7 {dimension_numbers = #tpu.dot_dimension_numbers<[1], [0], [0], [1], [0, 0, 1, 1], [], []>} : vector<4x64xf32>, vector<64x1024xf32>, vector<4x1024xf32> -> vector<4x1024xf32>
    %c0_8 = arith.constant 0 : index
    %c0_9 = arith.constant 0 : index
    %8 = vector.load %arg4[%c0_8, %c0_9] : memref<4x1024xf32, #tpu.memory_space<vmem>>, vector<4x1024xf32>
    tpu.vector_store %arg4[%c0_8, %c0_9], %7 {strides = array<i32>} : memref<4x1024xf32, #tpu.memory_space<vmem>>, vector<4x1024xf32>,
    return
  }
}

</mosaic_0001>

<llo_original>
// kernel: baseline_forward.7
$region0: #{baseline_forward.7}
  #allocation0 [shape = 'u32[]', space=smem, size = 0x4, offset = 0x4, fixed_abs, tag = 'smem constant byte address 0x4 - core index']
  #allocation1 [shape = 'u32[144,128]{1,0:T(1,128)}', space=vmem, size = 0x12000, scoped, tag = 'internal scratch']
  %s0 = inlined_call_operand.vmem [shape: bf16[512,16], index: 0, kind: input, shape index: {}]
  %s1 = inlined_call_operand.vmem [shape: bf16[16,32], index: 1, kind: input, shape index: {}]
  %s2 = inlined_call_operand.vmem [shape: f32[1,32], index: 2, kind: input, shape index: {}]
  %s3 = inlined_call_operand.vmem [shape: f32[1,32], index: 3, kind: input, shape index: {}]
  %s4 = inlined_call_operand.vmem [shape: f32[1,32], index: 4, kind: input, shape index: {}]
  %s5 = inlined_call_operand.vmem [shape: f32[512,32], index: 5, kind: output, shape index: {}]
  %s6 = sld [smem:[#allocation0]]
  $region30: #{baseline_forward.7} parent=0
    _
  %s8 = ssub.s32 1, %s6
  %s9 = scalar_select 0, %s8, %s6
  // Predicated region
  $region2: #{baseline_forward.7} parent=0 // pred_check
    _
  $region3: #{baseline_forward.7} parent=0 // pred_check_branch
    %11 = sbr.rel (0) target = $region5
  $region4: #{baseline_forward.7} parent=0 // pred_region
    _
  $region5: #{baseline_forward.7} parent=0 // pred_fallthru
    _
  // Predicated region
  $region6: #{baseline_forward.7} parent=0 // pred_check
    _
  $region7: #{baseline_forward.7} parent=0 // pred_check_branch
    %13 = sbr.rel (0) target = $region9
  $region8: #{baseline_forward.7} parent=0 // pred_region
    _
  $region9: #{baseline_forward.7} parent=0 // pred_fallthru
    _
  // Predicated region
  $region10: #{baseline_forward.7} parent=0 // pred_check
    _
  $region11: #{baseline_forward.7} parent=0 // pred_check_branch
    %15 = sbr.rel (0) target = $region13
  $region12: #{baseline_forward.7} parent=0 // pred_region
    _
  $region13: #{baseline_forward.7} parent=0 // pred_fallthru
    _
  // Predicated region
  $region14: #{baseline_forward.7} parent=0 // pred_check
    _
  $region15: #{baseline_forward.7} parent=0 // pred_check_branch
    %17 = sbr.rel (0) target = $region17
  $region16: #{baseline_forward.7} parent=0 // pred_region
    _
  $region17: #{baseline_forward.7} parent=0 // pred_fallthru
    _
  // Predicated region
  $region18: #{baseline_forward.7} parent=0 // pred_check
    _
  $region19: #{baseline_forward.7} parent=0 // pred_check_branch
    %19 = sbr.rel (0) target = $region21
  $region20: #{baseline_forward.7} parent=0 // pred_region
    _
  $region21: #{baseline_forward.7} parent=0 // pred_fallthru
    _
  %v21 = vld [vmem:[%s0] sm:$0xf]
  %v22 = vld [vmem:[%s0 + $0x4] sm:$0xf]
  %v23 = vld [vmem:[%s0 + $0x8] sm:$0xf]
  %v24 = vld [vmem:[%s0 + $0xc] sm:$0xf]
  %v25 = vld [vmem:[%s0 + $0x10] sm:$0xf]
  %v26 = vld [vmem:[%s0 + $0x14] sm:$0xf]
  %v27 = vld [vmem:[%s0 + $0x18] sm:$0xf]
  %v28 = vld [vmem:[%s0 + $0x1c] sm:$0xf]
  %v29 = vld [vmem:[%s0 + $0x20] sm:$0xf]
  %v30 = vld [vmem:[%s0 + $0x24] sm:$0xf]
  %v31 = vld [vmem:[%s0 + $0x28] sm:$0xf]
  %v32 = vld [vmem:[%s0 + $0x2c] sm:$0xf]
  %v33 = vld [vmem:[%s0 + $0x30] sm:$0xf]
  %v34 = vld [vmem:[%s0 + $0x34] sm:$0xf]
  %v35 = vld [vmem:[%s0 + $0x38] sm:$0xf]
  %v36 = vld [vmem:[%s0 + $0x3c] sm:$0xf]
  %v37 = vld [vmem:[%s0 + $0x40] sm:$0xf]
  %v38 = vld [vmem:[%s0 + $0x44] sm:$0xf]
  %v39 = vld [vmem:[%s0 + $0x48] sm:$0xf]
  %v40 = vld [vmem:[%s0 + $0x4c] sm:$0xf]
  %v41 = vld [vmem:[%s0 + $0x50] sm:$0xf]
  %v42 = vld [vmem:[%s0 + $0x54] sm:$0xf]
  %v43 = vld [vmem:[%s0 + $0x58] sm:$0xf]
  %v44 = vld [vmem:[%s0 + $0x5c] sm:$0xf]
  %v45 = vld [vmem:[%s0 + $0x60] sm:$0xf]
  %v46 = vld [vmem:[%s0 + $0x64] sm:$0xf]
  %v47 = vld [vmem:[%s0 + $0x68] sm:$0xf]
  %v48 = vld [vmem:[%s0 + $0x6c] sm:$0xf]
  %v49 = vld [vmem:[%s0 + $0x70] sm:$0xf]
  %v50 = vld [vmem:[%s0 + $0x74] sm:$0xf]
  %v51 = vld [vmem:[%s0 + $0x78] sm:$0xf]
  %v52 = vld [vmem:[%s0 + $0x7c] sm:$0xf]
  %v53 = vld [vmem:[%s0 + $0x80] sm:$0xf]
  %v54 = vld [vmem:[%s0 + $0x84] sm:$0xf]
  %v55 = vld [vmem:[%s0 + $0x88] sm:$0xf]
  %v56 = vld [vmem:[%s0 + $0x8c] sm:$0xf]
  %v57 = vld [vmem:[%s0 + $0x90] sm:$0xf]
  %v58 = vld [vmem:[%s0 + $0x94] sm:$0xf]
  %v59 = vld [vmem:[%s0 + $0x98] sm:$0xf]
  %v60 = vld [vmem:[%s0 + $0x9c] sm:$0xf]
  %v61 = vld [vmem:[%s0 + $0xa0] sm:$0xf]
  %v62 = vld [vmem:[%s0 + $0xa4] sm:$0xf]
  %v63 = vld [vmem:[%s0 + $0xa8] sm:$0xf]
  %v64 = vld [vmem:[%s0 + $0xac] sm:$0xf]
  %v65 = vld [vmem:[%s0 + $0xb0] sm:$0xf]
  %v66 = vld [vmem:[%s0 + $0xb4] sm:$0xf]
  %v67 = vld [vmem:[%s0 + $0xb8] sm:$0xf]
  %v68 = vld [vmem:[%s0 + $0xbc] sm:$0xf]
  %v69 = vld [vmem:[%s0 + $0xc0] sm:$0xf]
  %v70 = vld [vmem:[%s0 + $0xc4] sm:$0xf]
  %v71 = vld [vmem:[%s0 + $0xc8] sm:$0xf]
  %v72 = vld [vmem:[%s0 + $0xcc] sm:$0xf]
  %v73 = vld [vmem:[%s0 + $0xd0] sm:$0xf]
  %v74 = vld [vmem:[%s0 + $0xd4] sm:$0xf]
  %v75 = vld [vmem:[%s0 + $0xd8] sm:$0xf]
  %v76 = vld [vmem:[%s0 + $0xdc] sm:$0xf]
  %v77 = vld [vmem:[%s0 + $0xe0] sm:$0xf]
  %v78 = vld [vmem:[%s0 + $0xe4] sm:$0xf]
  %v79 = vld [vmem:[%s0 + $0xe8] sm:$0xf]
  %v80 = vld [vmem:[%s0 + $0xec] sm:$0xf]
  %v81 = vld [vmem:[%s0 + $0xf0] sm:$0xf]
  %v82 = vld [vmem:[%s0 + $0xf4] sm:$0xf]
  %v83 = vld [vmem:[%s0 + $0xf8] sm:$0xf]
  %v84 = vld [vmem:[%s0 + $0xfc] sm:$0xf]
  %v85 = vld [vmem:[%s1] sm:$0xf]
  %v86 = vld [vmem:[%s1 + $0x4] sm:$0xf]
  %v87 = vld [vmem:[%s2] sm:$0x1]
  %v89 = vlaneseq
  %v90 = vshrl.u32 %v89, 7
  %v91 = vsub.s32 0, %v90
  %v92 = vrot.slane %v87, %v91
  %v158 = vunpack.c.l.b16 %v21
  %v159 = vunpack.c.l.b16 %v22
  %v160 = vunpack.c.l.b16 %v23
  %v161 = vunpack.c.l.b16 %v24
  %v162 = vunpack.c.l.b16 %v25
  %v163 = vunpack.c.l.b16 %v26
  %v164 = vunpack.c.l.b16 %v27
  %v165 = vunpack.c.l.b16 %v28
  %v166 = vunpack.c.l.b16 %v29
  %v167 = vunpack.c.l.b16 %v30
  %v168 = vunpack.c.l.b16 %v31
  %v169 = vunpack.c.l.b16 %v32
  %v170 = vunpack.c.l.b16 %v33
  %v171 = vunpack.c.l.b16 %v34
  %v172 = vunpack.c.l.b16 %v35
  %v173 = vunpack.c.l.b16 %v36
  %v174 = vunpack.c.l.b16 %v37
  %v175 = vunpack.c.l.b16 %v38
  %v176 = vunpack.c.l.b16 %v39
  %v177 = vunpack.c.l.b16 %v40
  %v178 = vunpack.c.l.b16 %v41
  %v179 = vunpack.c.l.b16 %v42
  %v180 = vunpack.c.l.b16 %v43
  %v181 = vunpack.c.l.b16 %v44
  %v182 = vunpack.c.l.b16 %v45
  %v183 = vunpack.c.l.b16 %v46
  %v184 = vunpack.c.l.b16 %v47
  %v185 = vunpack.c.l.b16 %v48
  %v186 = vunpack.c.l.b16 %v49
  %v187 = vunpack.c.l.b16 %v50
  %v188 = vunpack.c.l.b16 %v51
  %v189 = vunpack.c.l.b16 %v52
  %v190 = vunpack.c.l.b16 %v53
  %v191 = vunpack.c.l.b16 %v54
  %v192 = vunpack.c.l.b16 %v55
  %v193 = vunpack.c.l.b16 %v56
  %v194 = vunpack.c.l.b16 %v57
  %v195 = vunpack.c.l.b16 %v58
  %v196 = vunpack.c.l.b16 %v59
  %v197 = vunpack.c.l.b16 %v60
  %v198 = vunpack.c.l.b16 %v61
  %v199 = vunpack.c.l.b16 %v62
  %v200 = vunpack.c.l.b16 %v63
  %v201 = vunpack.c.l.b16 %v64
  %v202 = vunpack.c.l.b16 %v65
  %v203 = vunpack.c.l.b16 %v66
  %v204 = vunpack.c.l.b16 %v67
  %v205 = vunpack.c.l.b16 %v68
  %v206 = vunpack.c.l.b16 %v69
  %v207 = vunpack.c.l.b16 %v70
  %v208 = vunpack.c.l.b16 %v71
  %v209 = vunpack.c.l.b16 %v72
  %v210 = vunpack.c.l.b16 %v73
  %v211 = vunpack.c.l.b16 %v74
  %v212 = vunpack.c.l.b16 %v75
  %v213 = vunpack.c.l.b16 %v76
  %v214 = vunpack.c.l.b16 %v77
  %v215 = vunpack.c.l.b16 %v78
  %v216 = vunpack.c.l.b16 %v79
  %v217 = vunpack.c.l.b16 %v80
  %v218 = vunpack.c.l.b16 %v81
  %v219 = vunpack.c.l.b16 %v82
  %v220 = vunpack.c.l.b16 %v83
  %v221 = vunpack.c.l.b16 %v84
  %v222 = vpack.c.b16 %v159, %v158
  %v223 = vpack.c.b16 %v161, %v160
  %v224 = vpack.c.b16 %v163, %v162
  %v225 = vpack.c.b16 %v165, %v164
  %v226 = vpack.c.b16 %v167, %v166
  %v227 = vpack.c.b16 %v169, %v168
  %v228 = vpack.c.b16 %v171, %v170
  %v229 = vpack.c.b16 %v173, %v172
  %v230 = vpack.c.b16 %v175, %v174
  %v231 = vpack.c.b16 %v177, %v176
  %v232 = vpack.c.b16 %v179, %v178
  %v233 = vpack.c.b16 %v181, %v180
  %v234 = vpack.c.b16 %v183, %v182
  %v235 = vpack.c.b16 %v185, %v184
  %v236 = vpack.c.b16 %v187, %v186
  %v237 = vpack.c.b16 %v189, %v188
  %v238 = vpack.c.b16 %v191, %v190
  %v239 = vpack.c.b16 %v193, %v192
  %v240 = vpack.c.b16 %v195, %v194
  %v241 = vpack.c.b16 %v197, %v196
  %v242 = vpack.c.b16 %v199, %v198
  %v243 = vpack.c.b16 %v201, %v200
  %v244 = vpack.c.b16 %v203, %v202
  %v245 = vpack.c.b16 %v205, %v204
  %v246 = vpack.c.b16 %v207, %v206
  %v247 = vpack.c.b16 %v209, %v208
  %v248 = vpack.c.b16 %v211, %v210
  %v249 = vpack.c.b16 %v213, %v212
  %v250 = vpack.c.b16 %v215, %v214
  %v251 = vpack.c.b16 %v217, %v216
  %v252 = vpack.c.b16 %v219, %v218
  %v253 = vpack.c.b16 %v221, %v220
  %v256 = vunpack.c.l.b16 %v85
  %v257 = vunpack.c.l.b16 %v86
  %v258 = vpack.c.b16 %v257, %v256
  %vm260 = vcmask 130048
  %v262 = vsel %vm260, %v222, 0
  %v265 = vsel %vm260, %v223, 0
  %v268 = vsel %vm260, %v224, 0
  %v271 = vsel %vm260, %v225, 0
  %v274 = vsel %vm260, %v226, 0
  %v277 = vsel %vm260, %v227, 0
  %v280 = vsel %vm260, %v228, 0
  %v283 = vsel %vm260, %v229, 0
  %v286 = vsel %vm260, %v230, 0
  %v289 = vsel %vm260, %v231, 0
  %v292 = vsel %vm260, %v232, 0
  %v295 = vsel %vm260, %v233, 0
  %v298 = vsel %vm260, %v234, 0
  %v301 = vsel %vm260, %v235, 0
  %v304 = vsel %vm260, %v236, 0
  %v307 = vsel %vm260, %v237, 0
  %v310 = vsel %vm260, %v238, 0
  %v313 = vsel %vm260, %v239, 0
  %v316 = vsel %vm260, %v240, 0
  %v319 = vsel %vm260, %v241, 0
  %v322 = vsel %vm260, %v242, 0
  %v325 = vsel %vm260, %v243, 0
  %v328 = vsel %vm260, %v244, 0
  %v331 = vsel %vm260, %v245, 0
  %v334 = vsel %vm260, %v246, 0
  %v337 = vsel %vm260, %v247, 0
  %v340 = vsel %vm260, %v248, 0
  %v343 = vsel %vm260, %v249, 0
  %v346 = vsel %vm260, %v250, 0
  %v349 = vsel %vm260, %v251, 0
  %v352 = vsel %vm260, %v252, 0
  %v355 = vsel %vm260, %v253, 0
  %357 = vmatprep.subr.bf16.mxu0 0
  %358 = vmatpush1.bf16.msra.mxu0 0
  %359 = vmatprep.subr.bf16.mxu0 0
  %360 = vmatpush1.bf16.msra.mxu0 0
  %361 = vmatprep.subr.bf16.mxu0 0
  %362 = vmatpush1.bf16.msra.mxu0 0
  %363 = vmatprep.subr.bf16.mxu0 0
  %364 = vmatpush1.bf16.msra.mxu0 0
  %365 = vmatprep.subr.bf16.mxu0 0
  %366 = vmatpush1.bf16.msra.mxu0 0
  %367 = vmatprep.subr.bf16.mxu0 0
  %368 = vmatpush1.bf16.msra.mxu0 0
  %369 = vmatprep.subr.bf16.mxu0 0
  %370 = vmatpush1.bf16.msra.mxu0 0
  %371 = vmatprep.subr.bf16.mxu0 0
  %372 = vmatpush1.bf16.msra.mxu0 %v258
  %373 = vmatprep.subr.bf16.mxu0 0
  %374 = vmatpush2.bf16.msra.mxu0 0
  %375 = vmatprep.subr.bf16.mxu0 0
  %376 = vmatpush2.bf16.msra.mxu0 0
  %377 = vmatprep.subr.bf16.mxu0 0
  %378 = vmatpush2.bf16.msra.mxu0 0
  %379 = vmatprep.subr.bf16.mxu0 0
  %380 = vmatpush2.bf16.msra.mxu0 0
  %381 = vmatprep.subr.bf16.mxu0 0
  %382 = vmatpush2.bf16.msra.mxu0 0
  %383 = vmatprep.subr.bf16.mxu0 0
  %384 = vmatpush2.bf16.msra.mxu0 0
  %385 = vmatprep.subr.bf16.mxu0 0
  %386 = vmatpush2.bf16.msra.mxu0 0
  %387 = vmatprep.subr.bf16.mxu0 0
  %388 = vmatpush2.bf16.msra.mxu0 0
  %389 = vmatprep.mubr.bf16.mxu0 0
  %390 = vmatmul.mubr.bf16.gmra.mxu0 %v262
  %v391 = vpop.f32.mrf.mxu0
  %v392 = vadd.f32 %v92, %v391
  %v393 = vpop.f32.mrf.mxu0
  %v394 = vpop.f32.mrf.mxu0
  %v395 = vadd.f32 %v92, %v394
  %v396 = vpop.f32.mrf.mxu0
  %397 = vmatprep.mubr.bf16.mxu0 0
  %398 = vmatmul.mubr.bf16.gmra.mxu0 %v265
  %v399 = vpop.f32.mrf.mxu0
  %v400 = vadd.f32 %v92, %v399
  %v401 = vpop.f32.mrf.mxu0
  %v402 = vpop.f32.mrf.mxu0
  %v403 = vadd.f32 %v92, %v402
  %v404 = vpop.f32.mrf.mxu0
  %405 = vmatprep.mubr.bf16.mxu0 0
  %406 = vmatmul.mubr.bf16.gmra.mxu0 %v268
  %v407 = vpop.f32.mrf.mxu0
  %v408 = vadd.f32 %v92, %v407
  %v409 = vpop.f32.mrf.mxu0
  %v410 = vpop.f32.mrf.mxu0
  %v411 = vadd.f32 %v92, %v410
  %v412 = vpop.f32.mrf.mxu0
  %413 = vmatprep.mubr.bf16.mxu0 0
  %414 = vmatmul.mubr.bf16.gmra.mxu0 %v271
  %v415 = vpop.f32.mrf.mxu0
  %v416 = vadd.f32 %v92, %v415
  %v417 = vpop.f32.mrf.mxu0
  %v418 = vpop.f32.mrf.mxu0
  %v419 = vadd.f32 %v92, %v418
  %v420 = vpop.f32.mrf.mxu0
  %421 = vmatprep.mubr.bf16.mxu0 0
  %422 = vmatmul.mubr.bf16.gmra.mxu0 %v274
  %v423 = vpop.f32.mrf.mxu0
  %v424 = vadd.f32 %v92, %v423
  %v425 = vpop.f32.mrf.mxu0
  %v426 = vpop.f32.mrf.mxu0
  %v427 = vadd.f32 %v92, %v426
  %v428 = vpop.f32.mrf.mxu0
  %429 = vmatprep.mubr.bf16.mxu0 0
  %430 = vmatmul.mubr.bf16.gmra.mxu0 %v277
  %v431 = vpop.f32.mrf.mxu0
  %v432 = vadd.f32 %v92, %v431
  %v433 = vpop.f32.mrf.mxu0
  %v434 = vpop.f32.mrf.mxu0
  %v435 = vadd.f32 %v92, %v434
  %v436 = vpop.f32.mrf.mxu0
  %437 = vmatprep.mubr.bf16.mxu0 0
  %438 = vmatmul.mubr.bf16.gmra.mxu0 %v280
  %v439 = vpop.f32.mrf.mxu0
  %v440 = vadd.f32 %v92, %v439
  %v441 = vpop.f32.mrf.mxu0
  %v442 = vpop.f32.mrf.mxu0
  %v443 = vadd.f32 %v92, %v442
  %v444 = vpop.f32.mrf.mxu0
  %445 = vmatprep.mubr.bf16.mxu0 0
  %446 = vmatmul.mubr.bf16.gmra.mxu0 %v283
  %v447 = vpop.f32.mrf.mxu0
  %v448 = vadd.f32 %v92, %v447
  %v449 = vpop.f32.mrf.mxu0
  %v450 = vpop.f32.mrf.mxu0
  %v451 = vadd.f32 %v92, %v450
  %v452 = vpop.f32.mrf.mxu0
  %453 = vmatprep.mubr.bf16.mxu0 0
  %454 = vmatmul.mubr.bf16.gmra.mxu0 %v286
  %v455 = vpop.f32.mrf.mxu0
  %v456 = vadd.f32 %v92, %v455
  %v457 = vpop.f32.mrf.mxu0
  %v458 = vpop.f32.mrf.mxu0
  %v459 = vadd.f32 %v92, %v458
  %v460 = vpop.f32.mrf.mxu0
  %461 = vmatprep.mubr.bf16.mxu0 0
  %462 = vmatmul.mubr.bf16.gmra.mxu0 %v289
  %v463 = vpop.f32.mrf.mxu0
  %v464 = vadd.f32 %v92, %v463
  %v465 = vpop.f32.mrf.mxu0
  %v466 = vpop.f32.mrf.mxu0
  %v467 = vadd.f32 %v92, %v466
  %v468 = vpop.f32.mrf.mxu0
  %469 = vmatprep.mubr.bf16.mxu0 0
  %470 = vmatmul.mubr.bf16.gmra.mxu0 %v292
  %v471 = vpop.f32.mrf.mxu0
  %v472 = vadd.f32 %v92, %v471
  %v473 = vpop.f32.mrf.mxu0
  %v474 = vpop.f32.mrf.mxu0
  %v475 = vadd.f32 %v92, %v474
  %v476 = vpop.f32.mrf.mxu0
  %477 = vmatprep.mubr.bf16.mxu0 0
  %478 = vmatmul.mubr.bf16.gmra.mxu0 %v295
  %v479 = vpop.f32.mrf.mxu0
  %v480 = vadd.f32 %v92, %v479
  %v481 = vpop.f32.mrf.mxu0
  %v482 = vpop.f32.mrf.mxu0
  %v483 = vadd.f32 %v92, %v482
  %v484 = vpop.f32.mrf.mxu0
  %485 = vmatprep.mubr.bf16.mxu0 0
  %486 = vmatmul.mubr.bf16.gmra.mxu0 %v298
  %v487 = vpop.f32.mrf.mxu0
  %v488 = vadd.f32 %v92, %v487
  %v489 = vpop.f32.mrf.mxu0
  %v490 = vpop.f32.mrf.mxu0
  %v491 = vadd.f32 %v92, %v490
  %v492 = vpop.f32.mrf.mxu0
  %493 = vmatprep.mubr.bf16.mxu0 0
  %494 = vmatmul.mubr.bf16.gmra.mxu0 %v301
  %v495 = vpop.f32.mrf.mxu0
  %v496 = vadd.f32 %v92, %v495
  %v497 = vpop.f32.mrf.mxu0
  %v498 = vpop.f32.mrf.mxu0
  %v499 = vadd.f32 %v92, %v498
  %v500 = vpop.f32.mrf.mxu0
  %501 = vmatprep.mubr.bf16.mxu0 0
  %502 = vmatmul.mubr.bf16.gmra.mxu0 %v304
  %v503 = vpop.f32.mrf.mxu0
  %v504 = vadd.f32 %v92, %v503
  %v505 = vpop.f32.mrf.mxu0
  %v506 = vpop.f32.mrf.mxu0
  %v507 = vadd.f32 %v92, %v506
  %v508 = vpop.f32.mrf.mxu0
  %509 = vmatprep.mubr.bf16.mxu0 0
  %510 = vmatmul.mubr.bf16.gmra.mxu0 %v307
  %v511 = vpop.f32.mrf.mxu0
  %v512 = vadd.f32 %v92, %v511
  %v513 = vpop.f32.mrf.mxu0
  %v514 = vpop.f32.mrf.mxu0
  %v515 = vadd.f32 %v92, %v514
  %v516 = vpop.f32.mrf.mxu0
  %517 = vmatprep.mubr.bf16.mxu0 0
  %518 = vmatmul.mubr.bf16.gmra.mxu0 %v310
  %v519 = vpop.f32.mrf.mxu0
  %v520 = vadd.f32 %v92, %v519
  %v521 = vpop.f32.mrf.mxu0
  %v522 = vpop.f32.mrf.mxu0
  %v523 = vadd.f32 %v92, %v522
  %v524 = vpop.f32.mrf.mxu0
  %525 = vmatprep.mubr.bf16.mxu0 0
  %526 = vmatmul.mubr.bf16.gmra.mxu0 %v313
  %v527 = vpop.f32.mrf.mxu0
  %v528 = vadd.f32 %v92, %v527
  %v529 = vpop.f32.mrf.mxu0
  %v530 = vpop.f32.mrf.mxu0
  %v531 = vadd.f32 %v92, %v530
  %v532 = vpop.f32.mrf.mxu0
  %533 = vmatprep.mubr.bf16.mxu0 0
  %534 = vmatmul.mubr.bf16.gmra.mxu0 %v316
  %v535 = vpop.f32.mrf.mxu0
  %v536 = vadd.f32 %v92, %v535
  %v537 = vpop.f32.mrf.mxu0
  %v538 = vpop.f32.mrf.mxu0
  %v539 = vadd.f32 %v92, %v538
  %v540 = vpop.f32.mrf.mxu0
  %541 = vmatprep.mubr.bf16.mxu0 0
  %542 = vmatmul.mubr.bf16.gmra.mxu0 %v319
  %v543 = vpop.f32.mrf.mxu0
  %v544 = vadd.f32 %v92, %v543
  %v545 = vpop.f32.mrf.mxu0
  %v546 = vpop.f32.mrf.mxu0
  %v547 = vadd.f32 %v92, %v546
  %v548 = vpop.f32.mrf.mxu0
  %549 = vmatprep.mubr.bf16.mxu0 0
  %550 = vmatmul.mubr.bf16.gmra.mxu0 %v322
  %v551 = vpop.f32.mrf.mxu0
  %v552 = vadd.f32 %v92, %v551
  %v553 = vpop.f32.mrf.mxu0
  %v554 = vpop.f32.mrf.mxu0
  %v555 = vadd.f32 %v92, %v554
  %v556 = vpop.f32.mrf.mxu0
  %557 = vmatprep.mubr.bf16.mxu0 0
  %558 = vmatmul.mubr.bf16.gmra.mxu0 %v325
  %v559 = vpop.f32.mrf.mxu0
  %v560 = vadd.f32 %v92, %v559
  %v561 = vpop.f32.mrf.mxu0
  %v562 = vpop.f32.mrf.mxu0
  %v563 = vadd.f32 %v92, %v562
  %v564 = vpop.f32.mrf.mxu0
  %565 = vmatprep.mubr.bf16.mxu0 0
  %566 = vmatmul.mubr.bf16.gmra.mxu0 %v328
  %v567 = vpop.f32.mrf.mxu0
  %v568 = vadd.f32 %v92, %v567
  %v569 = vpop.f32.mrf.mxu0
  %v570 = vpop.f32.mrf.mxu0
  %v571 = vadd.f32 %v92, %v570
  %v572 = vpop.f32.mrf.mxu0
  %573 = vmatprep.mubr.bf16.mxu0 0
  %574 = vmatmul.mubr.bf16.gmra.mxu0 %v331
  %v575 = vpop.f32.mrf.mxu0
  %v576 = vadd.f32 %v92, %v575
  %v577 = vpop.f32.mrf.mxu0
  %v578 = vpop.f32.mrf.mxu0
  %v579 = vadd.f32 %v92, %v578
  %v580 = vpop.f32.mrf.mxu0
  %581 = vmatprep.mubr.bf16.mxu0 0
  %582 = vmatmul.mubr.bf16.gmra.mxu0 %v334
  %v583 = vpop.f32.mrf.mxu0
  %v584 = vadd.f32 %v92, %v583
  %v585 = vpop.f32.mrf.mxu0
  %v586 = vpop.f32.mrf.mxu0
  %v587 = vadd.f32 %v92, %v586
  %v588 = vpop.f32.mrf.mxu0
  %589 = vmatprep.mubr.bf16.mxu0 0
  %590 = vmatmul.mubr.bf16.gmra.mxu0 %v337
  %v591 = vpop.f32.mrf.mxu0
  %v592 = vadd.f32 %v92, %v591
  %v593 = vpop.f32.mrf.mxu0
  %v594 = vpop.f32.mrf.mxu0
  %v595 = vadd.f32 %v92, %v594
  %v596 = vpop.f32.mrf.mxu0
  %597 = vmatprep.mubr.bf16.mxu0 0
  %598 = vmatmul.mubr.bf16.gmra.mxu0 %v340
  %v599 = vpop.f32.mrf.mxu0
  %v600 = vadd.f32 %v92, %v599
  %v601 = vpop.f32.mrf.mxu0
  %v602 = vpop.f32.mrf.mxu0
  %v603 = vadd.f32 %v92, %v602
  %v604 = vpop.f32.mrf.mxu0
  %605 = vmatprep.mubr.bf16.mxu0 0
  %606 = vmatmul.mubr.bf16.gmra.mxu0 %v343
  %v607 = vpop.f32.mrf.mxu0
  %v608 = vadd.f32 %v92, %v607
  %v609 = vpop.f32.mrf.mxu0
  %v610 = vpop.f32.mrf.mxu0
  %v611 = vadd.f32 %v92, %v610
  %v612 = vpop.f32.mrf.mxu0
  %613 = vmatprep.mubr.bf16.mxu0 0
  %614 = vmatmul.mubr.bf16.gmra.mxu0 %v346
  %v615 = vpop.f32.mrf.mxu0
  %v616 = vadd.f32 %v92, %v615
  %v617 = vpop.f32.mrf.mxu0
  %v618 = vpop.f32.mrf.mxu0
  %v619 = vadd.f32 %v92, %v618
  %v620 = vpop.f32.mrf.mxu0
  %621 = vmatprep.mubr.bf16.mxu0 0
  %622 = vmatmul.mubr.bf16.gmra.mxu0 %v349
  %v623 = vpop.f32.mrf.mxu0
  %v624 = vadd.f32 %v92, %v623
  %v625 = vpop.f32.mrf.mxu0
  %v626 = vpop.f32.mrf.mxu0
  %v627 = vadd.f32 %v92, %v626
  %v628 = vpop.f32.mrf.mxu0
  %629 = vmatprep.mubr.bf16.mxu0 0
  %630 = vmatmul.mubr.bf16.gmra.mxu0 %v352
  %v631 = vpop.f32.mrf.mxu0
  %v632 = vadd.f32 %v92, %v631
  %v633 = vpop.f32.mrf.mxu0
  %v634 = vpop.f32.mrf.mxu0
  %v635 = vadd.f32 %v92, %v634
  %v636 = vpop.f32.mrf.mxu0
  %637 = vmatprep.mubr.bf16.mxu0 0
  %638 = vmatmul.mubr.bf16.gmra.mxu0 %v355
  %v639 = vpop.f32.mrf.mxu0
  %v640 = vadd.f32 %v92, %v639
  %v641 = vpop.f32.mrf.mxu0
  %v642 = vpop.f32.mrf.mxu0
  %v643 = vadd.f32 %v92, %v642
  %v644 = vpop.f32.mrf.mxu0
  %645 = vdwg.mxu0
  %v646 = vmax.f32 %v392, 0.0
  %v647 = vmax.f32 %v395, 0.0
  %v648 = vmax.f32 %v400, 0.0
  %v649 = vmax.f32 %v403, 0.0
  %v650 = vmax.f32 %v408, 0.0
  %v651 = vmax.f32 %v411, 0.0
  %v652 = vmax.f32 %v416, 0.0
  %v653 = vmax.f32 %v419, 0.0
  %v654 = vmax.f32 %v424, 0.0
  %v655 = vmax.f32 %v427, 0.0
  %v656 = vmax.f32 %v432, 0.0
  %v657 = vmax.f32 %v435, 0.0
  %v658 = vmax.f32 %v440, 0.0
  %v659 = vmax.f32 %v443, 0.0
  %v660 = vmax.f32 %v448, 0.0
  %v661 = vmax.f32 %v451, 0.0
  %v662 = vmax.f32 %v456, 0.0
  %v663 = vmax.f32 %v459, 0.0
  %v664 = vmax.f32 %v464, 0.0
  %v665 = vmax.f32 %v467, 0.0
  %v666 = vmax.f32 %v472, 0.0
  %v667 = vmax.f32 %v475, 0.0
  %v668 = vmax.f32 %v480, 0.0
  %v669 = vmax.f32 %v483, 0.0
  %v670 = vmax.f32 %v488, 0.0
  %v671 = vmax.f32 %v491, 0.0
  %v672 = vmax.f32 %v496, 0.0
  %v673 = vmax.f32 %v499, 0.0
  %v674 = vmax.f32 %v504, 0.0
  %v675 = vmax.f32 %v507, 0.0
  %v676 = vmax.f32 %v512, 0.0
  %v677 = vmax.f32 %v515, 0.0
  %v678 = vmax.f32 %v520, 0.0
  %v679 = vmax.f32 %v523, 0.0
  %v680 = vmax.f32 %v528, 0.0
  %v681 = vmax.f32 %v531, 0.0
  %v682 = vmax.f32 %v536, 0.0
  %v683 = vmax.f32 %v539, 0.0
  %v684 = vmax.f32 %v544, 0.0
  %v685 = vmax.f32 %v547, 0.0
  %v686 = vmax.f32 %v552, 0.0
  %v687 = vmax.f32 %v555, 0.0
  %v688 = vmax.f32 %v560, 0.0
  %v689 = vmax.f32 %v563, 0.0
  %v690 = vmax.f32 %v568, 0.0
  %v691 = vmax.f32 %v571, 0.0
  %v692 = vmax.f32 %v576, 0.0
  %v693 = vmax.f32 %v579, 0.0
  %v694 = vmax.f32 %v584, 0.0
  %v695 = vmax.f32 %v587, 0.0
  %v696 = vmax.f32 %v592, 0.0
  %v697 = vmax.f32 %v595, 0.0
  %v698 = vmax.f32 %v600, 0.0
  %v699 = vmax.f32 %v603, 0.0
  %v700 = vmax.f32 %v608, 0.0
  %v701 = vmax.f32 %v611, 0.0
  %v702 = vmax.f32 %v616, 0.0
  %v703 = vmax.f32 %v619, 0.0
  %v704 = vmax.f32 %v624, 0.0
  %v705 = vmax.f32 %v627, 0.0
  %v706 = vmax.f32 %v632, 0.0
  %v707 = vmax.f32 %v635, 0.0
  %v708 = vmax.f32 %v640, 0.0
  %v709 = vmax.f32 %v643, 0.0
  %vm710 = vcmask 261120
  %v711 = vsel %vm710, %v646, 0.0
  %v712 = vsel %vm710, %v647, 0.0
  %v713 = vadd.f32 %v711, %v712
  %v714 = vsel %vm710, %v648, 0.0
  %v715 = vadd.f32 %v713, %v714
  %v716 = vsel %vm710, %v649, 0.0
  %v717 = vadd.f32 %v715, %v716
  %v718 = vsel %vm710, %v650, 0.0
  %v719 = vadd.f32 %v717, %v718
  %v720 = vsel %vm710, %v651, 0.0
  %v721 = vadd.f32 %v719, %v720
  %v722 = vsel %vm710, %v652, 0.0
  %v723 = vadd.f32 %v721, %v722
  %v724 = vsel %vm710, %v653, 0.0
  %v725 = vadd.f32 %v723, %v724
  %v726 = vsel %vm710, %v654, 0.0
  %v727 = vadd.f32 %v725, %v726
  %v728 = vsel %vm710, %v655, 0.0
  %v729 = vadd.f32 %v727, %v728
  %v730 = vsel %vm710, %v656, 0.0
  %v731 = vadd.f32 %v729, %v730
  %v732 = vsel %vm710, %v657, 0.0
  %v733 = vadd.f32 %v731, %v732
  %v734 = vsel %vm710, %v658, 0.0
  %v735 = vadd.f32 %v733, %v734
  %v736 = vsel %vm710, %v659, 0.0
  %v737 = vadd.f32 %v735, %v736
  %v738 = vsel %vm710, %v660, 0.0
  %v739 = vadd.f32 %v737, %v738
  %v740 = vsel %vm710, %v661, 0.0
  %v741 = vadd.f32 %v739, %v740
  %v742 = vsel %vm710, %v662, 0.0
  %v743 = vadd.f32 %v741, %v742
  %v744 = vsel %vm710, %v663, 0.0
  %v745 = vadd.f32 %v743, %v744
  %v746 = vsel %vm710, %v664, 0.0
  %v747 = vadd.f32 %v745, %v746
  %v748 = vsel %vm710, %v665, 0.0
  %v749 = vadd.f32 %v747, %v748
  %v750 = vsel %vm710, %v666, 0.0
  %v751 = vadd.f32 %v749, %v750
  %v752 = vsel %vm710, %v667, 0.0
  %v753 = vadd.f32 %v751, %v752
  %v754 = vsel %vm710, %v668, 0.0
  %v755 = vadd.f32 %v753, %v754
  %v756 = vsel %vm710, %v669, 0.0
  %v757 = vadd.f32 %v755, %v756
  %v758 = vsel %vm710, %v670, 0.0
  %v759 = vadd.f32 %v757, %v758
  %v760 = vsel %vm710, %v671, 0.0
  %v761 = vadd.f32 %v759, %v760
  %v762 = vsel %vm710, %v672, 0.0
  %v763 = vadd.f32 %v761, %v762
  %v764 = vsel %vm710, %v673, 0.0
  %v765 = vadd.f32 %v763, %v764
  %v766 = vsel %vm710, %v674, 0.0
  %v767 = vadd.f32 %v765, %v766
  %v768 = vsel %vm710, %v675, 0.0
  %v769 = vadd.f32 %v767, %v768
  %v770 = vsel %vm710, %v676, 0.0
  %v771 = vadd.f32 %v769, %v770
  %v772 = vsel %vm710, %v677, 0.0
  %v773 = vadd.f32 %v771, %v772
  %v774 = vsel %vm710, %v678, 0.0
  %v775 = vadd.f32 %v773, %v774
  %v776 = vsel %vm710, %v679, 0.0
  %v777 = vadd.f32 %v775, %v776
  %v778 = vsel %vm710, %v680, 0.0
  %v779 = vadd.f32 %v777, %v778
  %v780 = vsel %vm710, %v681, 0.0
  %v781 = vadd.f32 %v779, %v780
  %v782 = vsel %vm710, %v682, 0.0
  %v783 = vadd.f32 %v781, %v782
  %v784 = vsel %vm710, %v683, 0.0
  %v785 = vadd.f32 %v783, %v784
  %v786 = vsel %vm710, %v684, 0.0
  %v787 = vadd.f32 %v785, %v786
  %v788 = vsel %vm710, %v685, 0.0
  %v789 = vadd.f32 %v787, %v788
  %v790 = vsel %vm710, %v686, 0.0
  %v791 = vadd.f32 %v789, %v790
  %v792 = vsel %vm710, %v687, 0.0
  %v793 = vadd.f32 %v791, %v792
  %v794 = vsel %vm710, %v688, 0.0
  %v795 = vadd.f32 %v793, %v794
  %v796 = vsel %vm710, %v689, 0.0
  %v797 = vadd.f32 %v795, %v796
  %v798 = vsel %vm710, %v690, 0.0
  %v799 = vadd.f32 %v797, %v798
  %v800 = vsel %vm710, %v691, 0.0
  %v801 = vadd.f32 %v799, %v800
  %v802 = vsel %vm710, %v692, 0.0
  %v803 = vadd.f32 %v801, %v802
  %v804 = vsel %vm710, %v693, 0.0
  %v805 = vadd.f32 %v803, %v804
  %v806 = vsel %vm710, %v694, 0.0
  %v807 = vadd.f32 %v805, %v806
  %v808 = vsel %vm710, %v695, 0.0
  %v809 = vadd.f32 %v807, %v808
  %v810 = vsel %vm710, %v696, 0.0
  %v811 = vadd.f32 %v809, %v810
  %v812 = vsel %vm710, %v697, 0.0
  %v813 = vadd.f32 %v811, %v812
  %v814 = vsel %vm710, %v698, 0.0
  %v815 = vadd.f32 %v813, %v814
  %v816 = vsel %vm710, %v699, 0.0
  %v817 = vadd.f32 %v815, %v816
  %v818 = vsel %vm710, %v700, 0.0
  %v819 = vadd.f32 %v817, %v818
  %v820 = vsel %vm710, %v701, 0.0
  %v821 = vadd.f32 %v819, %v820
  %v822 = vsel %vm710, %v702, 0.0
  %v823 = vadd.f32 %v821, %v822
  %v824 = vsel %vm710, %v703, 0.0
  %v825 = vadd.f32 %v823, %v824
  %v826 = vsel %vm710, %v704, 0.0
  %v827 = vadd.f32 %v825, %v826
  %v828 = vsel %vm710, %v705, 0.0
  %v829 = vadd.f32 %v827, %v828
  %v830 = vsel %vm710, %v706, 0.0
  %v831 = vadd.f32 %v829, %v830
  %v832 = vsel %vm710, %v707, 0.0
  %v833 = vadd.f32 %v831, %v832
  %v834 = vsel %vm710, %v708, 0.0
  %v835 = vadd.f32 %v833, %v834
  %v836 = vsel %vm710, %v709, 0.0
  %v837 = vadd.f32 %v835, %v836
  %v838 = vrot.slane %v837, 4
  %v839 = vadd.f32 %v837, %v838
  %v840 = vrot.slane %v839, 2
  %v841 = vadd.f32 %v839, %v840
  %v842 = vrot.slane %v841, 1
  %v843 = vadd.f32 %v841, %v842
  %v844 = vmul.f32 %v843, 0.001953125
  %v845 = vmul.f32 %v646, %v646
  %v846 = vmul.f32 %v647, %v647
  %v847 = vmul.f32 %v648, %v648
  %v848 = vmul.f32 %v649, %v649
  %v849 = vmul.f32 %v650, %v650
  %v850 = vmul.f32 %v651, %v651
  %v851 = vmul.f32 %v652, %v652
  %v852 = vmul.f32 %v653, %v653
  %v853 = vmul.f32 %v654, %v654
  %v854 = vmul.f32 %v655, %v655
  %v855 = vmul.f32 %v656, %v656
  %v856 = vmul.f32 %v657, %v657
  %v857 = vmul.f32 %v658, %v658
  %v858 = vmul.f32 %v659, %v659
  %v859 = vmul.f32 %v660, %v660
  %v860 = vmul.f32 %v661, %v661
  %v861 = vmul.f32 %v662, %v662
  %v862 = vmul.f32 %v663, %v663
  %v863 = vmul.f32 %v664, %v664
  %v864 = vmul.f32 %v665, %v665
  %v865 = vmul.f32 %v666, %v666
  %v866 = vmul.f32 %v667, %v667
  %v867 = vmul.f32 %v668, %v668
  %v868 = vmul.f32 %v669, %v669
  %v869 = vmul.f32 %v670, %v670
  %v870 = vmul.f32 %v671, %v671
  %v871 = vmul.f32 %v672, %v672
  %v872 = vmul.f32 %v673, %v673
  %v873 = vmul.f32 %v674, %v674
  %v874 = vmul.f32 %v675, %v675
  %v875 = vmul.f32 %v676, %v676
  %v876 = vmul.f32 %v677, %v677
  %v877 = vmul.f32 %v678, %v678
  %v878 = vmul.f32 %v679, %v679
  %v879 = vmul.f32 %v680, %v680
  %v880 = vmul.f32 %v681, %v681
  %v881 = vmul.f32 %v682, %v682
  %v882 = vmul.f32 %v683, %v683
  %v883 = vmul.f32 %v684, %v684
  %v884 = vmul.f32 %v685, %v685
  %v885 = vmul.f32 %v686, %v686
  %v886 = vmul.f32 %v687, %v687
  %v887 = vmul.f32 %v688, %v688
  %v888 = vmul.f32 %v689, %v689
  %v889 = vmul.f32 %v690, %v690
  %v890 = vmul.f32 %v691, %v691
  %v891 = vmul.f32 %v692, %v692
  %v892 = vmul.f32 %v693, %v693
  %v893 = vmul.f32 %v694, %v694
  %v894 = vmul.f32 %v695, %v695
  %v895 = vmul.f32 %v696, %v696
  %v896 = vmul.f32 %v697, %v697
  %v897 = vmul.f32 %v698, %v698
  %v898 = vmul.f32 %v699, %v699
  %v899 = vmul.f32 %v700, %v700
  %v900 = vmul.f32 %v701, %v701
  %v901 = vmul.f32 %v702, %v702
  %v902 = vmul.f32 %v703, %v703
  %v903 = vmul.f32 %v704, %v704
  %v904 = vmul.f32 %v705, %v705
  %v905 = vmul.f32 %v706, %v706
  %v906 = vmul.f32 %v707, %v707
  %v907 = vmul.f32 %v708, %v708
  %v908 = vmul.f32 %v709, %v709
  %v909 = vsel %vm710, %v845, 0.0
  %v910 = vsel %vm710, %v846, 0.0
  %v911 = vadd.f32 %v909, %v910
  %v912 = vsel %vm710, %v847, 0.0
  %v913 = vadd.f32 %v911, %v912
  %v914 = vsel %vm710, %v848, 0.0
  %v915 = vadd.f32 %v913, %v914
  %v916 = vsel %vm710, %v849, 0.0
  %v917 = vadd.f32 %v915, %v916
  %v918 = vsel %vm710, %v850, 0.0
  %v919 = vadd.f32 %v917, %v918
  %v920 = vsel %vm710, %v851, 0.0
  %v921 = vadd.f32 %v919, %v920
  %v922 = vsel %vm710, %v852, 0.0
  %v923 = vadd.f32 %v921, %v922
  %v924 = vsel %vm710, %v853, 0.0
  %v925 = vadd.f32 %v923, %v924
  %v926 = vsel %vm710, %v854, 0.0
  %v927 = vadd.f32 %v925, %v926
  %v928 = vsel %vm710, %v855, 0.0
  %v929 = vadd.f32 %v927, %v928
  %v930 = vsel %vm710, %v856, 0.0
  %v931 = vadd.f32 %v929, %v930
  %v932 = vsel %vm710, %v857, 0.0
  %v933 = vadd.f32 %v931, %v932
  %v934 = vsel %vm710, %v858, 0.0
  %v935 = vadd.f32 %v933, %v934
  %v936 = vsel %vm710, %v859, 0.0
  %v937 = vadd.f32 %v935, %v936
  %v938 = vsel %vm710, %v860, 0.0
  %v939 = vadd.f32 %v937, %v938
  %v940 = vsel %vm710, %v861, 0.0
  %v941 = vadd.f32 %v939, %v940
  %v942 = vsel %vm710, %v862, 0.0
  %v943 = vadd.f32 %v941, %v942
  %v944 = vsel %vm710, %v863, 0.0
  %v945 = vadd.f32 %v943, %v944
  %v946 = vsel %vm710, %v864, 0.0
  %v947 = vadd.f32 %v945, %v946
  %v948 = vsel %vm710, %v865, 0.0
  %v949 = vadd.f32 %v947, %v948
  %v950 = vsel %vm710, %v866, 0.0
  %v951 = vadd.f32 %v949, %v950
  %v952 = vsel %vm710, %v867, 0.0
  %v953 = vadd.f32 %v951, %v952
  %v954 = vsel %vm710, %v868, 0.0
  %v955 = vadd.f32 %v953, %v954
  %v956 = vsel %vm710, %v869, 0.0
  %v957 = vadd.f32 %v955, %v956
  %v958 = vsel %vm710, %v870, 0.0
  %v959 = vadd.f32 %v957, %v958
  %v960 = vsel %vm710, %v871, 0.0
  %v961 = vadd.f32 %v959, %v960
  %v962 = vsel %vm710, %v872, 0.0
  %v963 = vadd.f32 %v961, %v962
  %v964 = vsel %vm710, %v873, 0.0
  %v965 = vadd.f32 %v963, %v964
  %v966 = vsel %vm710, %v874, 0.0
  %v967 = vadd.f32 %v965, %v966
  %v968 = vsel %vm710, %v875, 0.0
  %v969 = vadd.f32 %v967, %v968
  %v970 = vsel %vm710, %v876, 0.0
  %v971 = vadd.f32 %v969, %v970
  %v972 = vsel %vm710, %v877, 0.0
  %v973 = vadd.f32 %v971, %v972
  %v974 = vsel %vm710, %v878, 0.0
  %v975 = vadd.f32 %v973, %v974
  %v976 = vsel %vm710, %v879, 0.0
  %v977 = vadd.f32 %v975, %v976
  %v978 = vsel %vm710, %v880, 0.0
  %v979 = vadd.f32 %v977, %v978
  %v980 = vsel %vm710, %v881, 0.0
  %v981 = vadd.f32 %v979, %v980
  %v982 = vsel %vm710, %v882, 0.0
  %v983 = vadd.f32 %v981, %v982
  %v984 = vsel %vm710, %v883, 0.0
  %v985 = vadd.f32 %v983, %v984
  %v986 = vsel %vm710, %v884, 0.0
  %v987 = vadd.f32 %v985, %v986
  %v988 = vsel %vm710, %v885, 0.0
  %v989 = vadd.f32 %v987, %v988
  %v990 = vsel %vm710, %v886, 0.0
  %v991 = vadd.f32 %v989, %v990
  %v992 = vsel %vm710, %v887, 0.0
  %v993 = vadd.f32 %v991, %v992
  %v994 = vsel %vm710, %v888, 0.0
  %v995 = vadd.f32 %v993, %v994
  %v996 = vsel %vm710, %v889, 0.0
  %v997 = vadd.f32 %v995, %v996
  %v998 = vsel %vm710, %v890, 0.0
  %v999 = vadd.f32 %v997, %v998
  %v1000 = vsel %vm710, %v891, 0.0
  %v1001 = vadd.f32 %v999, %v1000
  %v1002 = vsel %vm710, %v892, 0.0
  %v1003 = vadd.f32 %v1001, %v1002
  %v1004 = vsel %vm710, %v893, 0.0
  %v1005 = vadd.f32 %v1003, %v1004
  %v1006 = vsel %vm710, %v894, 0.0
  %v1007 = vadd.f32 %v1005, %v1006
  %v1008 = vsel %vm710, %v895, 0.0
  %v1009 = vadd.f32 %v1007, %v1008
  %v1010 = vsel %vm710, %v896, 0.0
  %v1011 = vadd.f32 %v1009, %v1010
  %v1012 = vsel %vm710, %v897, 0.0
  %v1013 = vadd.f32 %v1011, %v1012
  %v1014 = vsel %vm710, %v898, 0.0
  %v1015 = vadd.f32 %v1013, %v1014
  %v1016 = vsel %vm710, %v899, 0.0
  %v1017 = vadd.f32 %v1015, %v1016
  %v1018 = vsel %vm710, %v900, 0.0
  %v1019 = vadd.f32 %v1017, %v1018
  %v1020 = vsel %vm710, %v901, 0.0
  %v1021 = vadd.f32 %v1019, %v1020
  %v1022 = vsel %vm710, %v902, 0.0
  %v1023 = vadd.f32 %v1021, %v1022
  %v1024 = vsel %vm710, %v903, 0.0
  %v1025 = vadd.f32 %v1023, %v1024
  %v1026 = vsel %vm710, %v904, 0.0
  %v1027 = vadd.f32 %v1025, %v1026
  %v1028 = vsel %vm710, %v905, 0.0
  %v1029 = vadd.f32 %v1027, %v1028
  %v1030 = vsel %vm710, %v906, 0.0
  %v1031 = vadd.f32 %v1029, %v1030
  %v1032 = vsel %vm710, %v907, 0.0
  %v1033 = vadd.f32 %v1031, %v1032
  %v1034 = vsel %vm710, %v908, 0.0
  %v1035 = vadd.f32 %v1033, %v1034
  %v1036 = vrot.slane %v1035, 4
  %v1037 = vadd.f32 %v1035, %v1036
  %v1038 = vrot.slane %v1037, 2
  %v1039 = vadd.f32 %v1037, %v1038
  %v1040 = vrot.slane %v1039, 1
  %v1041 = vadd.f32 %v1039, %v1040
  %v1042 = vmul.f32 %v1041, 0.001953125
  %v1043 = vmul.f32 %v844, %v844
  %v1044 = vsub.f32 %v1042, %v1043
  %v1045 = vld [vmem:[%s3] sm:$0x1]
  %v1046 = vadd.f32 %v1044, 1e-05
  %v1047 = vrsqrt.pop %v1046
  %v1048 = vmul.f32 %v1045, %v1047
  %v1049 = vld [vmem:[%s4] sm:$0x1]
  %v1050 = vmul.f32 %v844, %v1048
  %v1051 = vsub.f32 %v1049, %v1050
  %v1053 = vlaneseq
  %v1054 = vshrl.u32 %v1053, 7
  %v1055 = vsub.s32 0, %v1054
  %v1056 = vrot.slane %v1048, %v1055
  %v1058 = vmul.f32 %v646, %v1056
  %v1059 = vmul.f32 %v647, %v1056
  %v1060 = vmul.f32 %v648, %v1056
  %v1061 = vmul.f32 %v649, %v1056
  %v1062 = vmul.f32 %v650, %v1056
  %v1063 = vmul.f32 %v651, %v1056
  %v1064 = vmul.f32 %v652, %v1056
  %v1065 = vmul.f32 %v653, %v1056
  %v1066 = vmul.f32 %v654, %v1056
  %v1067 = vmul.f32 %v655, %v1056
  %v1068 = vmul.f32 %v656, %v1056
  %v1069 = vmul.f32 %v657, %v1056
  %v1070 = vmul.f32 %v658, %v1056
  %v1071 = vmul.f32 %v659, %v1056
  %v1072 = vmul.f32 %v660, %v1056
  %v1073 = vmul.f32 %v661, %v1056
  %v1074 = vmul.f32 %v662, %v1056
  %v1075 = vmul.f32 %v663, %v1056
  %v1076 = vmul.f32 %v664, %v1056
  %v1077 = vmul.f32 %v665, %v1056
  %v1078 = vmul.f32 %v666, %v1056
  %v1079 = vmul.f32 %v667, %v1056
  %v1080 = vmul.f32 %v668, %v1056
  %v1081 = vmul.f32 %v669, %v1056
  %v1082 = vmul.f32 %v670, %v1056
  %v1083 = vmul.f32 %v671, %v1056
  %v1084 = vmul.f32 %v672, %v1056
  %v1085 = vmul.f32 %v673, %v1056
  %v1086 = vmul.f32 %v674, %v1056
  %v1087 = vmul.f32 %v675, %v1056
  %v1088 = vmul.f32 %v676, %v1056
  %v1089 = vmul.f32 %v677, %v1056
  %v1090 = vmul.f32 %v678, %v1056
  %v1091 = vmul.f32 %v679, %v1056
  %v1092 = vmul.f32 %v680, %v1056
  %v1093 = vmul.f32 %v681, %v1056
  %v1094 = vmul.f32 %v682, %v1056
  %v1095 = vmul.f32 %v683, %v1056
  %v1096 = vmul.f32 %v684, %v1056
  %v1097 = vmul.f32 %v685, %v1056
  %v1098 = vmul.f32 %v686, %v1056
  %v1099 = vmul.f32 %v687, %v1056
  %v1100 = vmul.f32 %v688, %v1056
  %v1101 = vmul.f32 %v689, %v1056
  %v1102 = vmul.f32 %v690, %v1056
  %v1103 = vmul.f32 %v691, %v1056
  %v1104 = vmul.f32 %v692, %v1056
  %v1105 = vmul.f32 %v693, %v1056
  %v1106 = vmul.f32 %v694, %v1056
  %v1107 = vmul.f32 %v695, %v1056
  %v1108 = vmul.f32 %v696, %v1056
  %v1109 = vmul.f32 %v697, %v1056
  %v1110 = vmul.f32 %v698, %v1056
  %v1111 = vmul.f32 %v699, %v1056
  %v1112 = vmul.f32 %v700, %v1056
  %v1113 = vmul.f32 %v701, %v1056
  %v1114 = vmul.f32 %v702, %v1056
  %v1115 = vmul.f32 %v703, %v1056
  %v1116 = vmul.f32 %v704, %v1056
  %v1117 = vmul.f32 %v705, %v1056
  %v1118 = vmul.f32 %v706, %v1056
  %v1119 = vmul.f32 %v707, %v1056
  %v1120 = vmul.f32 %v708, %v1056
  %v1121 = vmul.f32 %v709, %v1056
  %v1123 = vlaneseq
  %v1124 = vshrl.u32 %v1123, 7
  %v1125 = vsub.s32 0, %v1124
  %v1126 = vrot.slane %v1051, %v1125
  %v1128 = vadd.f32 %v1058, %v1126
  %v1129 = vadd.f32 %v1059, %v1126
  %v1130 = vadd.f32 %v1060, %v1126
  %v1131 = vadd.f32 %v1061, %v1126
  %v1132 = vadd.f32 %v1062, %v1126
  %v1133 = vadd.f32 %v1063, %v1126
  %v1134 = vadd.f32 %v1064, %v1126
  %v1135 = vadd.f32 %v1065, %v1126
  %v1136 = vadd.f32 %v1066, %v1126
  %v1137 = vadd.f32 %v1067, %v1126
  %v1138 = vadd.f32 %v1068, %v1126
  %v1139 = vadd.f32 %v1069, %v1126
  %v1140 = vadd.f32 %v1070, %v1126
  %v1141 = vadd.f32 %v1071, %v1126
  %v1142 = vadd.f32 %v1072, %v1126
  %v1143 = vadd.f32 %v1073, %v1126
  %v1144 = vadd.f32 %v1074, %v1126
  %v1145 = vadd.f32 %v1075, %v1126
  %v1146 = vadd.f32 %v1076, %v1126
  %v1147 = vadd.f32 %v1077, %v1126
  %v1148 = vadd.f32 %v1078, %v1126
  %v1149 = vadd.f32 %v1079, %v1126
  %v1150 = vadd.f32 %v1080, %v1126
  %v1151 = vadd.f32 %v1081, %v1126
  %v1152 = vadd.f32 %v1082, %v1126
  %v1153 = vadd.f32 %v1083, %v1126
  %v1154 = vadd.f32 %v1084, %v1126
  %v1155 = vadd.f32 %v1085, %v1126
  %v1156 = vadd.f32 %v1086, %v1126
  %v1157 = vadd.f32 %v1087, %v1126
  %v1158 = vadd.f32 %v1088, %v1126
  %v1159 = vadd.f32 %v1089, %v1126
  %v1160 = vadd.f32 %v1090, %v1126
  %v1161 = vadd.f32 %v1091, %v1126
  %v1162 = vadd.f32 %v1092, %v1126
  %v1163 = vadd.f32 %v1093, %v1126
  %v1164 = vadd.f32 %v1094, %v1126
  %v1165 = vadd.f32 %v1095, %v1126
  %v1166 = vadd.f32 %v1096, %v1126
  %v1167 = vadd.f32 %v1097, %v1126
  %v1168 = vadd.f32 %v1098, %v1126
  %v1169 = vadd.f32 %v1099, %v1126
  %v1170 = vadd.f32 %v1100, %v1126
  %v1171 = vadd.f32 %v1101, %v1126
  %v1172 = vadd.f32 %v1102, %v1126
  %v1173 = vadd.f32 %v1103, %v1126
  %v1174 = vadd.f32 %v1104, %v1126
  %v1175 = vadd.f32 %v1105, %v1126
  %v1176 = vadd.f32 %v1106, %v1126
  %v1177 = vadd.f32 %v1107, %v1126
  %v1178 = vadd.f32 %v1108, %v1126
  %v1179 = vadd.f32 %v1109, %v1126
  %v1180 = vadd.f32 %v1110, %v1126
  %v1181 = vadd.f32 %v1111, %v1126
  %v1182 = vadd.f32 %v1112, %v1126
  %v1183 = vadd.f32 %v1113, %v1126
  %v1184 = vadd.f32 %v1114, %v1126
  %v1185 = vadd.f32 %v1115, %v1126
  %v1186 = vadd.f32 %v1116, %v1126
  %v1187 = vadd.f32 %v1117, %v1126
  %v1188 = vadd.f32 %v1118, %v1126
  %v1189 = vadd.f32 %v1119, %v1126
  %v1190 = vadd.f32 %v1120, %v1126
  %v1191 = vadd.f32 %v1121, %v1126
  %1192 = vst.msk [vmem:[%s5] sm:$0xff] %vm710, %v1128
  %1193 = vst.msk [vmem:[%s5 + $0x8] sm:$0xff] %vm710, %v1129
  %1194 = vst.msk [vmem:[%s5 + $0x10] sm:$0xff] %vm710, %v1130
  %1195 = vst.msk [vmem:[%s5 + $0x18] sm:$0xff] %vm710, %v1131
  %1196 = vst.msk [vmem:[%s5 + $0x20] sm:$0xff] %vm710, %v1132
  %1197 = vst.msk [vmem:[%s5 + $0x28] sm:$0xff] %vm710, %v1133
  %1198 = vst.msk [vmem:[%s5 + $0x30] sm:$0xff] %vm710, %v1134
  %1199 = vst.msk [vmem:[%s5 + $0x38] sm:$0xff] %vm710, %v1135
  %1200 = vst.msk [vmem:[%s5 + $0x40] sm:$0xff] %vm710, %v1136
  %1201 = vst.msk [vmem:[%s5 + $0x48] sm:$0xff] %vm710, %v1137
  %1202 = vst.msk [vmem:[%s5 + $0x50] sm:$0xff] %vm710, %v1138
  %1203 = vst.msk [vmem:[%s5 + $0x58] sm:$0xff] %vm710, %v1139
  %1204 = vst.msk [vmem:[%s5 + $0x60] sm:$0xff] %vm710, %v1140
  %1205 = vst.msk [vmem:[%s5 + $0x68] sm:$0xff] %vm710, %v1141
  %1206 = vst.msk [vmem:[%s5 + $0x70] sm:$0xff] %vm710, %v1142
  %1207 = vst.msk [vmem:[%s5 + $0x78] sm:$0xff] %vm710, %v1143
  %1208 = vst.msk [vmem:[%s5 + $0x80] sm:$0xff] %vm710, %v1144
  %1209 = vst.msk [vmem:[%s5 + $0x88] sm:$0xff] %vm710, %v1145
  %1210 = vst.msk [vmem:[%s5 + $0x90] sm:$0xff] %vm710, %v1146
  %1211 = vst.msk [vmem:[%s5 + $0x98] sm:$0xff] %vm710, %v1147
  %1212 = vst.msk [vmem:[%s5 + $0xa0] sm:$0xff] %vm710, %v1148
  %1213 = vst.msk [vmem:[%s5 + $0xa8] sm:$0xff] %vm710, %v1149
  %1214 = vst.msk [vmem:[%s5 + $0xb0] sm:$0xff] %vm710, %v1150
  %1215 = vst.msk [vmem:[%s5 + $0xb8] sm:$0xff] %vm710, %v1151
  %1216 = vst.msk [vmem:[%s5 + $0xc0] sm:$0xff] %vm710, %v1152
  %1217 = vst.msk [vmem:[%s5 + $0xc8] sm:$0xff] %vm710, %v1153
  %1218 = vst.msk [vmem:[%s5 + $0xd0] sm:$0xff] %vm710, %v1154
  %1219 = vst.msk [vmem:[%s5 + $0xd8] sm:$0xff] %vm710, %v1155
  %1220 = vst.msk [vmem:[%s5 + $0xe0] sm:$0xff] %vm710, %v1156
  %1221 = vst.msk [vmem:[%s5 + $0xe8] sm:$0xff] %vm710, %v1157
  %1222 = vst.msk [vmem:[%s5 + $0xf0] sm:$0xff] %vm710, %v1158
  %1223 = vst.msk [vmem:[%s5 + $0xf8] sm:$0xff] %vm710, %v1159
  %1224 = vst.msk [vmem:[%s5 + $0x100] sm:$0xff] %vm710, %v1160
  %1225 = vst.msk [vmem:[%s5 + $0x108] sm:$0xff] %vm710, %v1161
  %1226 = vst.msk [vmem:[%s5 + $0x110] sm:$0xff] %vm710, %v1162
  %1227 = vst.msk [vmem:[%s5 + $0x118] sm:$0xff] %vm710, %v1163
  %1228 = vst.msk [vmem:[%s5 + $0x120] sm:$0xff] %vm710, %v1164
  %1229 = vst.msk [vmem:[%s5 + $0x128] sm:$0xff] %vm710, %v1165
  %1230 = vst.msk [vmem:[%s5 + $0x130] sm:$0xff] %vm710, %v1166
  %1231 = vst.msk [vmem:[%s5 + $0x138] sm:$0xff] %vm710, %v1167
  %1232 = vst.msk [vmem:[%s5 + $0x140] sm:$0xff] %vm710, %v1168
  %1233 = vst.msk [vmem:[%s5 + $0x148] sm:$0xff] %vm710, %v1169
  %1234 = vst.msk [vmem:[%s5 + $0x150] sm:$0xff] %vm710, %v1170
  %1235 = vst.msk [vmem:[%s5 + $0x158] sm:$0xff] %vm710, %v1171
  %1236 = vst.msk [vmem:[%s5 + $0x160] sm:$0xff] %vm710, %v1172
  %1237 = vst.msk [vmem:[%s5 + $0x168] sm:$0xff] %vm710, %v1173
  %1238 = vst.msk [vmem:[%s5 + $0x170] sm:$0xff] %vm710, %v1174
  %1239 = vst.msk [vmem:[%s5 + $0x178] sm:$0xff] %vm710, %v1175
  %1240 = vst.msk [vmem:[%s5 + $0x180] sm:$0xff] %vm710, %v1176
  %1241 = vst.msk [vmem:[%s5 + $0x188] sm:$0xff] %vm710, %v1177
  %1242 = vst.msk [vmem:[%s5 + $0x190] sm:$0xff] %vm710, %v1178
  %1243 = vst.msk [vmem:[%s5 + $0x198] sm:$0xff] %vm710, %v1179
  %1244 = vst.msk [vmem:[%s5 + $0x1a0] sm:$0xff] %vm710, %v1180
  %1245 = vst.msk [vmem:[%s5 + $0x1a8] sm:$0xff] %vm710, %v1181
  %1246 = vst.msk [vmem:[%s5 + $0x1b0] sm:$0xff] %vm710, %v1182
  %1247 = vst.msk [vmem:[%s5 + $0x1b8] sm:$0xff] %vm710, %v1183
  %1248 = vst.msk [vmem:[%s5 + $0x1c0] sm:$0xff] %vm710, %v1184
  %1249 = vst.msk [vmem:[%s5 + $0x1c8] sm:$0xff] %vm710, %v1185
  %1250 = vst.msk [vmem:[%s5 + $0x1d0] sm:$0xff] %vm710, %v1186
  %1251 = vst.msk [vmem:[%s5 + $0x1d8] sm:$0xff] %vm710, %v1187
  %1252 = vst.msk [vmem:[%s5 + $0x1e0] sm:$0xff] %vm710, %v1188
  %1253 = vst.msk [vmem:[%s5 + $0x1e8] sm:$0xff] %vm710, %v1189
  %1254 = vst.msk [vmem:[%s5 + $0x1f0] sm:$0xff] %vm710, %v1190
  %1255 = vst.msk [vmem:[%s5 + $0x1f8] sm:$0xff] %vm710, %v1191
  // Predicated region
  $region22: #{baseline_forward.7} parent=0 // pred_check
    _
  $region23: #{baseline_forward.7} parent=0 // pred_check_branch
    %1257 = sbr.rel (0) target = $region25
  $region24: #{baseline_forward.7} parent=0 // pred_region
    _
  $region25: #{baseline_forward.7} parent=0 // pred_fallthru
    _
  // Predicated region
  $region26: #{baseline_forward.7} parent=0 // pred_check
    _
  $region27: #{baseline_forward.7} parent=0 // pred_check_branch
    %1259 = sbr.rel (0) target = $region29
  $region28: #{baseline_forward.7} parent=0 // pred_region
    _
  $region29: #{baseline_forward.7} parent=0 // pred_fallthru
    _

// kernel: baseline_forward.8
$region0: #{baseline_forward.8}
  #allocation0 [shape = 'u32[]', space=smem, size = 0x4, offset = 0x4, fixed_abs, tag = 'smem constant byte address 0x4 - core index']
  #allocation1 [shape = 'u32[144,128]{1,0:T(1,128)}', space=vmem, size = 0x12000, scoped, tag = 'internal scratch']
  %s0 = inlined_call_operand.vmem [shape: bf16[128,512], index: 0, kind: input, shape index: {}]
  %s1 = inlined_call_operand.vmem [shape: bf16[512,64], index: 1, kind: input, shape index: {}]
  %s2 = inlined_call_operand.vmem [shape: f32[1,64], index: 2, kind: input, shape index: {}]
  %s3 = inlined_call_operand.vmem [shape: f32[1,64], index: 3, kind: input, shape index: {}]
  %s4 = inlined_call_operand.vmem [shape: f32[1,64], index: 4, kind: input, shape index: {}]
  %s5 = inlined_call_operand.vmem [shape: f32[128,64], index: 5, kind: output, shape index: {}]
  %s6 = sld [smem:[#allocation0]]
  $region30: #{baseline_forward.8} parent=0
    _
  %s8 = ssub.s32 1, %s6
  %s9 = scalar_select 0, %s8, %s6
  // Predicated region
  $region2: #{baseline_forward.8} parent=0 // pred_check
    _
  $region3: #{baseline_forward.8} parent=0 // pred_check_branch
    %11 = sbr.rel (0) target = $region5
  $region4: #{baseline_forward.8} parent=0 // pred_region
    _
  $region5: #{baseline_forward.8} parent=0 // pred_fallthru
    _
  // Predicated region
  $region6: #{baseline_forward.8} parent=0 // pred_check
    _
  $region7: #{baseline_forward.8} parent=0 // pred_check_branch
    %13 = sbr.rel (0) target = $region9
  $region8: #{baseline_forward.8} parent=0 // pred_region
    _
  $region9: #{baseline_forward.8} parent=0 // pred_fallthru
    _
  // Predicated region
  $region10: #{baseline_forward.8} parent=0 // pred_check
    _
  $region11: #{baseline_forward.8} parent=0 // pred_check_branch
    %15 = sbr.rel (0) target = $region13
  $region12: #{baseline_forward.8} parent=0 // pred_region
    _
  $region13: #{baseline_forward.8} parent=0 // pred_fallthru
    _
  // Predicated region
  $region14: #{baseline_forward.8} parent=0 // pred_check
    _
  $region15: #{baseline_forward.8} parent=0 // pred_check_branch
    %17 = sbr.rel (0) target = $region17
  $region16: #{baseline_forward.8} parent=0 // pred_region
    _
  $region17: #{baseline_forward.8} parent=0 // pred_fallthru
    _
  // Predicated region
  $region18: #{baseline_forward.8} parent=0 // pred_check
    _
  $region19: #{baseline_forward.8} parent=0 // pred_check_branch
    %19 = sbr.rel (0) target = $region21
  $region20: #{baseline_forward.8} parent=0 // pred_region
    _
  $region21: #{baseline_forward.8} parent=0 // pred_fallthru
    _
  %v21 = vld [vmem:[%s0] sm:$0xff]
  %v22 = vld [vmem:[%s0 + $0x8] sm:$0xff]
  %v23 = vld [vmem:[%s0 + $0x10] sm:$0xff]
  %v24 = vld [vmem:[%s0 + $0x18] sm:$0xff]
  %v25 = vld [vmem:[%s0 + $0x20] sm:$0xff]
  %v26 = vld [vmem:[%s0 + $0x28] sm:$0xff]
  %v27 = vld [vmem:[%s0 + $0x30] sm:$0xff]
  %v28 = vld [vmem:[%s0 + $0x38] sm:$0xff]
  %v29 = vld [vmem:[%s0 + $0x40] sm:$0xff]
  %v30 = vld [vmem:[%s0 + $0x48] sm:$0xff]
  %v31 = vld [vmem:[%s0 + $0x50] sm:$0xff]
  %v32 = vld [vmem:[%s0 + $0x58] sm:$0xff]
  %v33 = vld [vmem:[%s0 + $0x60] sm:$0xff]
  %v34 = vld [vmem:[%s0 + $0x68] sm:$0xff]
  %v35 = vld [vmem:[%s0 + $0x70] sm:$0xff]
  %v36 = vld [vmem:[%s0 + $0x78] sm:$0xff]
  %v37 = vld [vmem:[%s0 + $0x80] sm:$0xff]
  %v38 = vld [vmem:[%s0 + $0x88] sm:$0xff]
  %v39 = vld [vmem:[%s0 + $0x90] sm:$0xff]
  %v40 = vld [vmem:[%s0 + $0x98] sm:$0xff]
  %v41 = vld [vmem:[%s0 + $0xa0] sm:$0xff]
  %v42 = vld [vmem:[%s0 + $0xa8] sm:$0xff]
  %v43 = vld [vmem:[%s0 + $0xb0] sm:$0xff]
  %v44 = vld [vmem:[%s0 + $0xb8] sm:$0xff]
  %v45 = vld [vmem:[%s0 + $0xc0] sm:$0xff]
  %v46 = vld [vmem:[%s0 + $0xc8] sm:$0xff]
  %v47 = vld [vmem:[%s0 + $0xd0] sm:$0xff]
  %v48 = vld [vmem:[%s0 + $0xd8] sm:$0xff]
  %v49 = vld [vmem:[%s0 + $0xe0] sm:$0xff]
  %v50 = vld [vmem:[%s0 + $0xe8] sm:$0xff]
  %v51 = vld [vmem:[%s0 + $0xf0] sm:$0xff]
  %v52 = vld [vmem:[%s0 + $0xf8] sm:$0xff]
  %v53 = vld [vmem:[%s1] sm:$0xf]
  %v54 = vld [vmem:[%s1 + $0x4] sm:$0xf]
  %v55 = vld [vmem:[%s1 + $0x8] sm:$0xf]
  %v56 = vld [vmem:[%s1 + $0xc] sm:$0xf]
  %v57 = vld [vmem:[%s1 + $0x10] sm:$0xf]
  %v58 = vld [vmem:[%s1 + $0x14] sm:$0xf]
  %v59 = vld [vmem:[%s1 + $0x18] sm:$0xf]
  %v60 = vld [vmem:[%s1 + $0x1c] sm:$0xf]
  %v61 = vld [vmem:[%s1 + $0x20] sm:$0xf]
  %v62 = vld [vmem:[%s1 + $0x24] sm:$0xf]
  %v63 = vld [vmem:[%s1 + $0x28] sm:$0xf]
  %v64 = vld [vmem:[%s1 + $0x2c] sm:$0xf]
  %v65 = vld [vmem:[%s1 + $0x30] sm:$0xf]
  %v66 = vld [vmem:[%s1 + $0x34] sm:$0xf]
  %v67 = vld [vmem:[%s1 + $0x38] sm:$0xf]
  %v68 = vld [vmem:[%s1 + $0x3c] sm:$0xf]
  %v69 = vld [vmem:[%s1 + $0x40] sm:$0xf]
  %v70 = vld [vmem:[%s1 + $0x44] sm:$0xf]
  %v71 = vld [vmem:[%s1 + $0x48] sm:$0xf]
  %v72 = vld [vmem:[%s1 + $0x4c] sm:$0xf]
  %v73 = vld [vmem:[%s1 + $0x50] sm:$0xf]
  %v74 = vld [vmem:[%s1 + $0x54] sm:$0xf]
  %v75 = vld [vmem:[%s1 + $0x58] sm:$0xf]
  %v76 = vld [vmem:[%s1 + $0x5c] sm:$0xf]
  %v77 = vld [vmem:[%s1 + $0x60] sm:$0xf]
  %v78 = vld [vmem:[%s1 + $0x64] sm:$0xf]
  %v79 = vld [vmem:[%s1 + $0x68] sm:$0xf]
  %v80 = vld [vmem:[%s1 + $0x6c] sm:$0xf]
  %v81 = vld [vmem:[%s1 + $0x70] sm:$0xf]
  %v82 = vld [vmem:[%s1 + $0x74] sm:$0xf]
  %v83 = vld [vmem:[%s1 + $0x78] sm:$0xf]
  %v84 = vld [vmem:[%s1 + $0x7c] sm:$0xf]
  %v85 = vld [vmem:[%s1 + $0x80] sm:$0xf]
  %v86 = vld [vmem:[%s1 + $0x84] sm:$0xf]
  %v87 = vld [vmem:[%s1 + $0x88] sm:$0xf]
  %v88 = vld [vmem:[%s1 + $0x8c] sm:$0xf]
  %v89 = vld [vmem:[%s1 + $0x90] sm:$0xf]
  %v90 = vld [vmem:[%s1 + $0x94] sm:$0xf]
  %v91 = vld [vmem:[%s1 + $0x98] sm:$0xf]
  %v92 = vld [vmem:[%s1 + $0x9c] sm:$0xf]
  %v93 = vld [vmem:[%s1 + $0xa0] sm:$0xf]
  %v94 = vld [vmem:[%s1 + $0xa4] sm:$0xf]
  %v95 = vld [vmem:[%s1 + $0xa8] sm:$0xf]
  %v96 = vld [vmem:[%s1 + $0xac] sm:$0xf]
  %v97 = vld [vmem:[%s1 + $0xb0] sm:$0xf]
  %v98 = vld [vmem:[%s1 + $0xb4] sm:$0xf]
  %v99 = vld [vmem:[%s1 + $0xb8] sm:$0xf]
  %v100 = vld [vmem:[%s1 + $0xbc] sm:$0xf]
  %v101 = vld [vmem:[%s1 + $0xc0] sm:$0xf]
  %v102 = vld [vmem:[%s1 + $0xc4] sm:$0xf]
  %v103 = vld [vmem:[%s1 + $0xc8] sm:$0xf]
  %v104 = vld [vmem:[%s1 + $0xcc] sm:$0xf]
  %v105 = vld [vmem:[%s1 + $0xd0] sm:$0xf]
  %v106 = vld [vmem:[%s1 + $0xd4] sm:$0xf]
  %v107 = vld [vmem:[%s1 + $0xd8] sm:$0xf]
  %v108 = vld [vmem:[%s1 + $0xdc] sm:$0xf]
  %v109 = vld [vmem:[%s1 + $0xe0] sm:$0xf]
  %v110 = vld [vmem:[%s1 + $0xe4] sm:$0xf]
  %v111 = vld [vmem:[%s1 + $0xe8] sm:$0xf]
  %v112 = vld [vmem:[%s1 + $0xec] sm:$0xf]
  %v113 = vld [vmem:[%s1 + $0xf0] sm:$0xf]
  %v114 = vld [vmem:[%s1 + $0xf4] sm:$0xf]
  %v115 = vld [vmem:[%s1 + $0xf8] sm:$0xf]
  %v116 = vld [vmem:[%s1 + $0xfc] sm:$0xf]
  %v117 = vld [vmem:[%s2] sm:$0x1]
  %v119 = vlaneseq
  %v120 = vshrl.u32 %v119, 7
  %v121 = vsub.s32 0, %v120
  %v122 = vrot.slane %v117, %v121
  %v156 = vunpack.c.l.b16 %v21
  %v157 = vunpack.c.h.b16 %v21
  %v158 = vunpack.c.l.b16 %v22
  %v159 = vunpack.c.h.b16 %v22
  %v160 = vunpack.c.l.b16 %v23
  %v161 = vunpack.c.h.b16 %v23
  %v162 = vunpack.c.l.b16 %v24
  %v163 = vunpack.c.h.b16 %v24
  %v164 = vunpack.c.l.b16 %v25
  %v165 = vunpack.c.h.b16 %v25
  %v166 = vunpack.c.l.b16 %v26
  %v167 = vunpack.c.h.b16 %v26
  %v168 = vunpack.c.l.b16 %v27
  %v169 = vunpack.c.h.b16 %v27
  %v170 = vunpack.c.l.b16 %v28
  %v171 = vunpack.c.h.b16 %v28
  %v172 = vunpack.c.l.b16 %v29
  %v173 = vunpack.c.h.b16 %v29
  %v174 = vunpack.c.l.b16 %v30
  %v175 = vunpack.c.h.b16 %v30
  %v176 = vunpack.c.l.b16 %v31
  %v177 = vunpack.c.h.b16 %v31
  %v178 = vunpack.c.l.b16 %v32
  %v179 = vunpack.c.h.b16 %v32
  %v180 = vunpack.c.l.b16 %v33
  %v181 = vunpack.c.h.b16 %v33
  %v182 = vunpack.c.l.b16 %v34
  %v183 = vunpack.c.h.b16 %v34
  %v184 = vunpack.c.l.b16 %v35
  %v185 = vunpack.c.h.b16 %v35
  %v186 = vunpack.c.l.b16 %v36
  %v187 = vunpack.c.h.b16 %v36
  %v188 = vunpack.c.l.b16 %v37
  %v189 = vunpack.c.h.b16 %v37
  %v190 = vunpack.c.l.b16 %v38
  %v191 = vunpack.c.h.b16 %v38
  %v192 = vunpack.c.l.b16 %v39
  %v193 = vunpack.c.h.b16 %v39
  %v194 = vunpack.c.l.b16 %v40
  %v195 = vunpack.c.h.b16 %v40
  %v196 = vunpack.c.l.b16 %v41
  %v197 = vunpack.c.h.b16 %v41
  %v198 = vunpack.c.l.b16 %v42
  %v199 = vunpack.c.h.b16 %v42
  %v200 = vunpack.c.l.b16 %v43
  %v201 = vunpack.c.h.b16 %v43
  %v202 = vunpack.c.l.b16 %v44
  %v203 = vunpack.c.h.b16 %v44
  %v204 = vunpack.c.l.b16 %v45
  %v205 = vunpack.c.h.b16 %v45
  %v206 = vunpack.c.l.b16 %v46
  %v207 = vunpack.c.h.b16 %v46
  %v208 = vunpack.c.l.b16 %v47
  %v209 = vunpack.c.h.b16 %v47
  %v210 = vunpack.c.l.b16 %v48
  %v211 = vunpack.c.h.b16 %v48
  %v212 = vunpack.c.l.b16 %v49
  %v213 = vunpack.c.h.b16 %v49
  %v214 = vunpack.c.l.b16 %v50
  %v215 = vunpack.c.h.b16 %v50
  %v216 = vunpack.c.l.b16 %v51
  %v217 = vunpack.c.h.b16 %v51
  %v218 = vunpack.c.l.b16 %v52
  %v219 = vunpack.c.h.b16 %v52
  %v220 = vpack.c.b16 %v160, %v156
  %v221 = vpack.c.b16 %v161, %v157
  %v222 = vpack.c.b16 %v162, %v158
  %v223 = vpack.c.b16 %v163, %v159
  %v224 = vpack.c.b16 %v168, %v164
  %v225 = vpack.c.b16 %v169, %v165
  %v226 = vpack.c.b16 %v170, %v166
  %v227 = vpack.c.b16 %v171, %v167
  %v228 = vpack.c.b16 %v176, %v172
  %v229 = vpack.c.b16 %v177, %v173
  %v230 = vpack.c.b16 %v178, %v174
  %v231 = vpack.c.b16 %v179, %v175
  %v232 = vpack.c.b16 %v184, %v180
  %v233 = vpack.c.b16 %v185, %v181
  %v234 = vpack.c.b16 %v186, %v182
  %v235 = vpack.c.b16 %v187, %v183
  %v236 = vpack.c.b16 %v192, %v188
  %v237 = vpack.c.b16 %v193, %v189
  %v238 = vpack.c.b16 %v194, %v190
  %v239 = vpack.c.b16 %v195, %v191
  %v240 = vpack.c.b16 %v200, %v196
  %v241 = vpack.c.b16 %v201, %v197
  %v242 = vpack.c.b16 %v202, %v198
  %v243 = vpack.c.b16 %v203, %v199
  %v244 = vpack.c.b16 %v208, %v204
  %v245 = vpack.c.b16 %v209, %v205
  %v246 = vpack.c.b16 %v210, %v206
  %v247 = vpack.c.b16 %v211, %v207
  %v248 = vpack.c.b16 %v216, %v212
  %v249 = vpack.c.b16 %v217, %v213
  %v250 = vpack.c.b16 %v218, %v214
  %v251 = vpack.c.b16 %v219, %v215
  %v348 = vunpack.c.l.b16 %v53
  %v349 = vunpack.c.l.b16 %v54
  %v350 = vunpack.c.l.b16 %v55
  %v351 = vunpack.c.l.b16 %v56
  %v352 = vunpack.c.l.b16 %v57
  %v353 = vunpack.c.l.b16 %v58
  %v354 = vunpack.c.l.b16 %v59
  %v355 = vunpack.c.l.b16 %v60
  %v356 = vunpack.c.l.b16 %v61
  %v357 = vunpack.c.l.b16 %v62
  %v358 = vunpack.c.l.b16 %v63
  %v359 = vunpack.c.l.b16 %v64
  %v360 = vunpack.c.l.b16 %v65
  %v361 = vunpack.c.l.b16 %v66
  %v362 = vunpack.c.l.b16 %v67
  %v363 = vunpack.c.l.b16 %v68
  %v364 = vunpack.c.l.b16 %v69
  %v365 = vunpack.c.l.b16 %v70
  %v366 = vunpack.c.l.b16 %v71
  %v367 = vunpack.c.l.b16 %v72
  %v368 = vunpack.c.l.b16 %v73
  %v369 = vunpack.c.l.b16 %v74
  %v370 = vunpack.c.l.b16 %v75
  %v371 = vunpack.c.l.b16 %v76
  %v372 = vunpack.c.l.b16 %v77
  %v373 = vunpack.c.l.b16 %v78
  %v374 = vunpack.c.l.b16 %v79
  %v375 = vunpack.c.l.b16 %v80
  %v376 = vunpack.c.l.b16 %v81
  %v377 = vunpack.c.l.b16 %v82
  %v378 = vunpack.c.l.b16 %v83
  %v379 = vunpack.c.l.b16 %v84
  %v380 = vunpack.c.l.b16 %v85
  %v381 = vunpack.c.l.b16 %v86
  %v382 = vunpack.c.l.b16 %v87
  %v383 = vunpack.c.l.b16 %v88
  %v384 = vunpack.c.l.b16 %v89
  %v385 = vunpack.c.l.b16 %v90
  %v386 = vunpack.c.l.b16 %v91
  %v387 = vunpack.c.l.b16 %v92
  %v388 = vunpack.c.l.b16 %v93
  %v389 = vunpack.c.l.b16 %v94
  %v390 = vunpack.c.l.b16 %v95
  %v391 = vunpack.c.l.b16 %v96
  %v392 = vunpack.c.l.b16 %v97
  %v393 = vunpack.c.l.b16 %v98
  %v394 = vunpack.c.l.b16 %v99
  %v395 = vunpack.c.l.b16 %v100
  %v396 = vunpack.c.l.b16 %v101
  %v397 = vunpack.c.l.b16 %v102
  %v398 = vunpack.c.l.b16 %v103
  %v399 = vunpack.c.l.b16 %v104
  %v400 = vunpack.c.l.b16 %v105
  %v401 = vunpack.c.l.b16 %v106
  %v402 = vunpack.c.l.b16 %v107
  %v403 = vunpack.c.l.b16 %v108
  %v404 = vunpack.c.l.b16 %v109
  %v405 = vunpack.c.l.b16 %v110
  %v406 = vunpack.c.l.b16 %v111
  %v407 = vunpack.c.l.b16 %v112
  %v408 = vunpack.c.l.b16 %v113
  %v409 = vunpack.c.l.b16 %v114
  %v410 = vunpack.c.l.b16 %v115
  %v411 = vunpack.c.l.b16 %v116
  %v412 = vpack.c.b16 %v349, %v348
  %v413 = vpack.c.b16 %v351, %v350
  %v414 = vpack.c.b16 %v353, %v352
  %v415 = vpack.c.b16 %v355, %v354
  %v416 = vpack.c.b16 %v357, %v356
  %v417 = vpack.c.b16 %v359, %v358
  %v418 = vpack.c.b16 %v361, %v360
  %v419 = vpack.c.b16 %v363, %v362
  %v420 = vpack.c.b16 %v365, %v364
  %v421 = vpack.c.b16 %v367, %v366
  %v422 = vpack.c.b16 %v369, %v368
  %v423 = vpack.c.b16 %v371, %v370
  %v424 = vpack.c.b16 %v373, %v372
  %v425 = vpack.c.b16 %v375, %v374
  %v426 = vpack.c.b16 %v377, %v376
  %v427 = vpack.c.b16 %v379, %v378
  %v428 = vpack.c.b16 %v381, %v380
  %v429 = vpack.c.b16 %v383, %v382
  %v430 = vpack.c.b16 %v385, %v384
  %v431 = vpack.c.b16 %v387, %v386
  %v432 = vpack.c.b16 %v389, %v388
  %v433 = vpack.c.b16 %v391, %v390
  %v434 = vpack.c.b16 %v393, %v392
  %v435 = vpack.c.b16 %v395, %v394
  %v436 = vpack.c.b16 %v397, %v396
  %v437 = vpack.c.b16 %v399, %v398
  %v438 = vpack.c.b16 %v401, %v400
  %v439 = vpack.c.b16 %v403, %v402
  %v440 = vpack.c.b16 %v405, %v404
  %v441 = vpack.c.b16 %v407, %v406
  %v442 = vpack.c.b16 %v409, %v408
  %v443 = vpack.c.b16 %v411, %v410
  %476 = vmatprep.subr.bf16.mxu0 0
  %477 = vmatpush1.bf16.msra.mxu0 %v419
  %478 = vmatprep.subr.bf16.mxu0 0
  %479 = vmatpush1.bf16.msra.mxu0 %v418
  %480 = vmatprep.subr.bf16.mxu0 0
  %481 = vmatpush1.bf16.msra.mxu0 %v417
  %482 = vmatprep.subr.bf16.mxu0 0
  %483 = vmatpush1.bf16.msra.mxu0 %v416
  %484 = vmatprep.subr.bf16.mxu0 0
  %485 = vmatpush1.bf16.msra.mxu0 %v415
  %486 = vmatprep.subr.bf16.mxu0 0
  %487 = vmatpush1.bf16.msra.mxu0 %v414
  %488 = vmatprep.subr.bf16.mxu0 0
  %489 = vmatpush1.bf16.msra.mxu0 %v413
  %490 = vmatprep.subr.bf16.mxu0 0
  %491 = vmatpush1.bf16.msra.mxu0 %v412
  %492 = vmatprep.subr.bf16.mxu0 0
  %493 = vmatpush2.bf16.msra.mxu0 %v427
  %494 = vmatprep.subr.bf16.mxu0 0
  %495 = vmatpush2.bf16.msra.mxu0 %v426
  %496 = vmatprep.subr.bf16.mxu0 0
  %497 = vmatpush2.bf16.msra.mxu0 %v425
  %498 = vmatprep.subr.bf16.mxu0 0
  %499 = vmatpush2.bf16.msra.mxu0 %v424
  %500 = vmatprep.subr.bf16.mxu0 0
  %501 = vmatpush2.bf16.msra.mxu0 %v423
  %502 = vmatprep.subr.bf16.mxu0 0
  %503 = vmatpush2.bf16.msra.mxu0 %v422
  %504 = vmatprep.subr.bf16.mxu0 0
  %505 = vmatpush2.bf16.msra.mxu0 %v421
  %506 = vmatprep.subr.bf16.mxu0 0
  %507 = vmatpush2.bf16.msra.mxu0 %v420
  %508 = vmatprep.mubr.bf16.mxu0 %v221
  %509 = vmatmul.mubr.bf16.gmra.mxu0 %v220
  %v510 = vpop.f32.mrf.mxu0
  %v511 = vadd.f32 %v122, %v510
  %v512 = vpop.f32.mrf.mxu0
  %v513 = vpop.f32.mrf.mxu0
  %v514 = vadd.f32 %v122, %v513
  %v515 = vpop.f32.mrf.mxu0
  %516 = vmatprep.mubr.bf16.mxu0 %v225
  %517 = vmatmul.mubr.bf16.gmra.mxu0 %v224
  %v518 = vpop.f32.mrf.mxu0
  %v519 = vadd.f32 %v122, %v518
  %v520 = vpop.f32.mrf.mxu0
  %v521 = vpop.f32.mrf.mxu0
  %v522 = vadd.f32 %v122, %v521
  %v523 = vpop.f32.mrf.mxu0
  %524 = vmatprep.mubr.bf16.mxu0 %v229
  %525 = vmatmul.mubr.bf16.gmra.mxu0 %v228
  %v526 = vpop.f32.mrf.mxu0
  %v527 = vadd.f32 %v122, %v526
  %v528 = vpop.f32.mrf.mxu0
  %v529 = vpop.f32.mrf.mxu0
  %v530 = vadd.f32 %v122, %v529
  %v531 = vpop.f32.mrf.mxu0
  %532 = vmatprep.mubr.bf16.mxu0 %v233
  %533 = vmatmul.mubr.bf16.gmra.mxu0 %v232
  %v534 = vpop.f32.mrf.mxu0
  %v535 = vadd.f32 %v122, %v534
  %v536 = vpop.f32.mrf.mxu0
  %v537 = vpop.f32.mrf.mxu0
  %v538 = vadd.f32 %v122, %v537
  %v539 = vpop.f32.mrf.mxu0
  %540 = vmatprep.mubr.bf16.mxu0 %v237
  %541 = vmatmul.mubr.bf16.gmra.mxu0 %v236
  %v542 = vpop.f32.mrf.mxu0
  %v543 = vadd.f32 %v122, %v542
  %v544 = vpop.f32.mrf.mxu0
  %v545 = vpop.f32.mrf.mxu0
  %v546 = vadd.f32 %v122, %v545
  %v547 = vpop.f32.mrf.mxu0
  %548 = vmatprep.mubr.bf16.mxu0 %v241
  %549 = vmatmul.mubr.bf16.gmra.mxu0 %v240
  %v550 = vpop.f32.mrf.mxu0
  %v551 = vadd.f32 %v122, %v550
  %v552 = vpop.f32.mrf.mxu0
  %v553 = vpop.f32.mrf.mxu0
  %v554 = vadd.f32 %v122, %v553
  %v555 = vpop.f32.mrf.mxu0
  %556 = vmatprep.mubr.bf16.mxu0 %v245
  %557 = vmatmul.mubr.bf16.gmra.mxu0 %v244
  %v558 = vpop.f32.mrf.mxu0
  %v559 = vadd.f32 %v122, %v558
  %v560 = vpop.f32.mrf.mxu0
  %v561 = vpop.f32.mrf.mxu0
  %v562 = vadd.f32 %v122, %v561
  %v563 = vpop.f32.mrf.mxu0
  %564 = vmatprep.mubr.bf16.mxu0 %v249
  %565 = vmatmul.mubr.bf16.gmra.mxu0 %v248
  %v566 = vpop.f32.mrf.mxu0
  %v567 = vadd.f32 %v122, %v566
  %v568 = vpop.f32.mrf.mxu0
  %v569 = vpop.f32.mrf.mxu0
  %v570 = vadd.f32 %v122, %v569
  %v571 = vpop.f32.mrf.mxu0
  %572 = vdwg.mxu0
  %573 = vmatprep.subr.bf16.mxu0 0
  %574 = vmatpush1.bf16.msra.mxu0 %v435
  %575 = vmatprep.subr.bf16.mxu0 0
  %576 = vmatpush1.bf16.msra.mxu0 %v434
  %577 = vmatprep.subr.bf16.mxu0 0
  %578 = vmatpush1.bf16.msra.mxu0 %v433
  %579 = vmatprep.subr.bf16.mxu0 0
  %580 = vmatpush1.bf16.msra.mxu0 %v432
  %581 = vmatprep.subr.bf16.mxu0 0
  %582 = vmatpush1.bf16.msra.mxu0 %v431
  %583 = vmatprep.subr.bf16.mxu0 0
  %584 = vmatpush1.bf16.msra.mxu0 %v430
  %585 = vmatprep.subr.bf16.mxu0 0
  %586 = vmatpush1.bf16.msra.mxu0 %v429
  %587 = vmatprep.subr.bf16.mxu0 0
  %588 = vmatpush1.bf16.msra.mxu0 %v428
  %589 = vmatprep.subr.bf16.mxu0 0
  %590 = vmatpush2.bf16.msra.mxu0 %v443
  %591 = vmatprep.subr.bf16.mxu0 0
  %592 = vmatpush2.bf16.msra.mxu0 %v442
  %593 = vmatprep.subr.bf16.mxu0 0
  %594 = vmatpush2.bf16.msra.mxu0 %v441
  %595 = vmatprep.subr.bf16.mxu0 0
  %596 = vmatpush2.bf16.msra.mxu0 %v440
  %597 = vmatprep.subr.bf16.mxu0 0
  %598 = vmatpush2.bf16.msra.mxu0 %v439
  %599 = vmatprep.subr.bf16.mxu0 0
  %600 = vmatpush2.bf16.msra.mxu0 %v438
  %601 = vmatprep.subr.bf16.mxu0 0
  %602 = vmatpush2.bf16.msra.mxu0 %v437
  %603 = vmatprep.subr.bf16.mxu0 0
  %604 = vmatpush2.bf16.msra.mxu0 %v436
  %605 = vmatprep.mubr.bf16.mxu0 %v223
  %606 = vmatmul.mubr.bf16.gmra.mxu0 %v222
  %v607 = vpop.f32.mrf.mxu0
  %v608 = vadd.f32 %v511, %v607
  %v609 = vpop.f32.mrf.mxu0
  %v610 = vpop.f32.mrf.mxu0
  %v611 = vadd.f32 %v514, %v610
  %v612 = vpop.f32.mrf.mxu0
  %613 = vmatprep.mubr.bf16.mxu0 %v227
  %614 = vmatmul.mubr.bf16.gmra.mxu0 %v226
  %v615 = vpop.f32.mrf.mxu0
  %v616 = vadd.f32 %v519, %v615
  %v617 = vpop.f32.mrf.mxu0
  %v618 = vpop.f32.mrf.mxu0
  %v619 = vadd.f32 %v522, %v618
  %v620 = vpop.f32.mrf.mxu0
  %621 = vmatprep.mubr.bf16.mxu0 %v231
  %622 = vmatmul.mubr.bf16.gmra.mxu0 %v230
  %v623 = vpop.f32.mrf.mxu0
  %v624 = vadd.f32 %v527, %v623
  %v625 = vpop.f32.mrf.mxu0
  %v626 = vpop.f32.mrf.mxu0
  %v627 = vadd.f32 %v530, %v626
  %v628 = vpop.f32.mrf.mxu0
  %629 = vmatprep.mubr.bf16.mxu0 %v235
  %630 = vmatmul.mubr.bf16.gmra.mxu0 %v234
  %v631 = vpop.f32.mrf.mxu0
  %v632 = vadd.f32 %v535, %v631
  %v633 = vpop.f32.mrf.mxu0
  %v634 = vpop.f32.mrf.mxu0
  %v635 = vadd.f32 %v538, %v634
  %v636 = vpop.f32.mrf.mxu0
  %637 = vmatprep.mubr.bf16.mxu0 %v239
  %638 = vmatmul.mubr.bf16.gmra.mxu0 %v238
  %v639 = vpop.f32.mrf.mxu0
  %v640 = vadd.f32 %v543, %v639
  %v641 = vpop.f32.mrf.mxu0
  %v642 = vpop.f32.mrf.mxu0
  %v643 = vadd.f32 %v546, %v642
  %v644 = vpop.f32.mrf.mxu0
  %645 = vmatprep.mubr.bf16.mxu0 %v243
  %646 = vmatmul.mubr.bf16.gmra.mxu0 %v242
  %v647 = vpop.f32.mrf.mxu0
  %v648 = vadd.f32 %v551, %v647
  %v649 = vpop.f32.mrf.mxu0
  %v650 = vpop.f32.mrf.mxu0
  %v651 = vadd.f32 %v554, %v650
  %v652 = vpop.f32.mrf.mxu0
  %653 = vmatprep.mubr.bf16.mxu0 %v247
  %654 = vmatmul.mubr.bf16.gmra.mxu0 %v246
  %v655 = vpop.f32.mrf.mxu0
  %v656 = vadd.f32 %v559, %v655
  %v657 = vpop.f32.mrf.mxu0
  %v658 = vpop.f32.mrf.mxu0
  %v659 = vadd.f32 %v562, %v658
  %v660 = vpop.f32.mrf.mxu0
  %661 = vmatprep.mubr.bf16.mxu0 %v251
  %662 = vmatmul.mubr.bf16.gmra.mxu0 %v250
  %v663 = vpop.f32.mrf.mxu0
  %v664 = vadd.f32 %v567, %v663
  %v665 = vpop.f32.mrf.mxu0
  %v666 = vpop.f32.mrf.mxu0
  %v667 = vadd.f32 %v570, %v666
  %v668 = vpop.f32.mrf.mxu0
  %669 = vdwg.mxu0
  %v670 = vmax.f32 %v608, 0.0
  %v671 = vmax.f32 %v611, 0.0
  %v672 = vmax.f32 %v616, 0.0
  %v673 = vmax.f32 %v619, 0.0
  %v674 = vmax.f32 %v624, 0.0
  %v675 = vmax.f32 %v627, 0.0
  %v676 = vmax.f32 %v632, 0.0
  %v677 = vmax.f32 %v635, 0.0
  %v678 = vmax.f32 %v640, 0.0
  %v679 = vmax.f32 %v643, 0.0
  %v680 = vmax.f32 %v648, 0.0
  %v681 = vmax.f32 %v651, 0.0
  %v682 = vmax.f32 %v656, 0.0
  %v683 = vmax.f32 %v659, 0.0
  %v684 = vmax.f32 %v664, 0.0
  %v685 = vmax.f32 %v667, 0.0
  %vm686 = vcmask 523264
  %v687 = vsel %vm686, %v670, 0.0
  %v688 = vsel %vm686, %v671, 0.0
  %v689 = vadd.f32 %v687, %v688
  %v690 = vsel %vm686, %v672, 0.0
  %v691 = vadd.f32 %v689, %v690
  %v692 = vsel %vm686, %v673, 0.0
  %v693 = vadd.f32 %v691, %v692
  %v694 = vsel %vm686, %v674, 0.0
  %v695 = vadd.f32 %v693, %v694
  %v696 = vsel %vm686, %v675, 0.0
  %v697 = vadd.f32 %v695, %v696
  %v698 = vsel %vm686, %v676, 0.0
  %v699 = vadd.f32 %v697, %v698
  %v700 = vsel %vm686, %v677, 0.0
  %v701 = vadd.f32 %v699, %v700
  %v702 = vsel %vm686, %v678, 0.0
  %v703 = vadd.f32 %v701, %v702
  %v704 = vsel %vm686, %v679, 0.0
  %v705 = vadd.f32 %v703, %v704
  %v706 = vsel %vm686, %v680, 0.0
  %v707 = vadd.f32 %v705, %v706
  %v708 = vsel %vm686, %v681, 0.0
  %v709 = vadd.f32 %v707, %v708
  %v710 = vsel %vm686, %v682, 0.0
  %v711 = vadd.f32 %v709, %v710
  %v712 = vsel %vm686, %v683, 0.0
  %v713 = vadd.f32 %v711, %v712
  %v714 = vsel %vm686, %v684, 0.0
  %v715 = vadd.f32 %v713, %v714
  %v716 = vsel %vm686, %v685, 0.0
  %v717 = vadd.f32 %v715, %v716
  %v718 = vrot.slane %v717, 4
  %v719 = vadd.f32 %v717, %v718
  %v720 = vrot.slane %v719, 2
  %v721 = vadd.f32 %v719, %v720
  %v722 = vrot.slane %v721, 1
  %v723 = vadd.f32 %v721, %v722
  %v724 = vmul.f32 %v723, 0.0078125
  %v725 = vmul.f32 %v670, %v670
  %v726 = vmul.f32 %v671, %v671
  %v727 = vmul.f32 %v672, %v672
  %v728 = vmul.f32 %v673, %v673
  %v729 = vmul.f32 %v674, %v674
  %v730 = vmul.f32 %v675, %v675
  %v731 = vmul.f32 %v676, %v676
  %v732 = vmul.f32 %v677, %v677
  %v733 = vmul.f32 %v678, %v678
  %v734 = vmul.f32 %v679, %v679
  %v735 = vmul.f32 %v680, %v680
  %v736 = vmul.f32 %v681, %v681
  %v737 = vmul.f32 %v682, %v682
  %v738 = vmul.f32 %v683, %v683
  %v739 = vmul.f32 %v684, %v684
  %v740 = vmul.f32 %v685, %v685
  %v741 = vsel %vm686, %v725, 0.0
  %v742 = vsel %vm686, %v726, 0.0
  %v743 = vadd.f32 %v741, %v742
  %v744 = vsel %vm686, %v727, 0.0
  %v745 = vadd.f32 %v743, %v744
  %v746 = vsel %vm686, %v728, 0.0
  %v747 = vadd.f32 %v745, %v746
  %v748 = vsel %vm686, %v729, 0.0
  %v749 = vadd.f32 %v747, %v748
  %v750 = vsel %vm686, %v730, 0.0
  %v751 = vadd.f32 %v749, %v750
  %v752 = vsel %vm686, %v731, 0.0
  %v753 = vadd.f32 %v751, %v752
  %v754 = vsel %vm686, %v732, 0.0
  %v755 = vadd.f32 %v753, %v754
  %v756 = vsel %vm686, %v733, 0.0
  %v757 = vadd.f32 %v755, %v756
  %v758 = vsel %vm686, %v734, 0.0
  %v759 = vadd.f32 %v757, %v758
  %v760 = vsel %vm686, %v735, 0.0
  %v761 = vadd.f32 %v759, %v760
  %v762 = vsel %vm686, %v736, 0.0
  %v763 = vadd.f32 %v761, %v762
  %v764 = vsel %vm686, %v737, 0.0
  %v765 = vadd.f32 %v763, %v764
  %v766 = vsel %vm686, %v738, 0.0
  %v767 = vadd.f32 %v765, %v766
  %v768 = vsel %vm686, %v739, 0.0
  %v769 = vadd.f32 %v767, %v768
  %v770 = vsel %vm686, %v740, 0.0
  %v771 = vadd.f32 %v769, %v770
  %v772 = vrot.slane %v771, 4
  %v773 = vadd.f32 %v771, %v772
  %v774 = vrot.slane %v773, 2
  %v775 = vadd.f32 %v773, %v774
  %v776 = vrot.slane %v775, 1
  %v777 = vadd.f32 %v775, %v776
  %v778 = vmul.f32 %v777, 0.0078125
  %v779 = vmul.f32 %v724, %v724
  %v780 = vsub.f32 %v778, %v779
  %v781 = vld [vmem:[%s3] sm:$0x1]
  %v782 = vadd.f32 %v780, 1e-05
  %v783 = vrsqrt.pop %v782
  %v784 = vmul.f32 %v781, %v783
  %v785 = vld [vmem:[%s4] sm:$0x1]
  %v786 = vmul.f32 %v724, %v784
  %v787 = vsub.f32 %v785, %v786
  %v789 = vlaneseq
  %v790 = vshrl.u32 %v789, 7
  %v791 = vsub.s32 0, %v790
  %v792 = vrot.slane %v784, %v791
  %v794 = vmul.f32 %v670, %v792
  %v795 = vmul.f32 %v671, %v792
  %v796 = vmul.f32 %v672, %v792
  %v797 = vmul.f32 %v673, %v792
  %v798 = vmul.f32 %v674, %v792
  %v799 = vmul.f32 %v675, %v792
  %v800 = vmul.f32 %v676, %v792
  %v801 = vmul.f32 %v677, %v792
  %v802 = vmul.f32 %v678, %v792
  %v803 = vmul.f32 %v679, %v792
  %v804 = vmul.f32 %v680, %v792
  %v805 = vmul.f32 %v681, %v792
  %v806 = vmul.f32 %v682, %v792
  %v807 = vmul.f32 %v683, %v792
  %v808 = vmul.f32 %v684, %v792
  %v809 = vmul.f32 %v685, %v792
  %v811 = vlaneseq
  %v812 = vshrl.u32 %v811, 7
  %v813 = vsub.s32 0, %v812
  %v814 = vrot.slane %v787, %v813
  %v816 = vadd.f32 %v794, %v814
  %v817 = vadd.f32 %v795, %v814
  %v818 = vadd.f32 %v796, %v814
  %v819 = vadd.f32 %v797, %v814
  %v820 = vadd.f32 %v798, %v814
  %v821 = vadd.f32 %v799, %v814
  %v822 = vadd.f32 %v800, %v814
  %v823 = vadd.f32 %v801, %v814
  %v824 = vadd.f32 %v802, %v814
  %v825 = vadd.f32 %v803, %v814
  %v826 = vadd.f32 %v804, %v814
  %v827 = vadd.f32 %v805, %v814
  %v828 = vadd.f32 %v806, %v814
  %v829 = vadd.f32 %v807, %v814
  %v830 = vadd.f32 %v808, %v814
  %v831 = vadd.f32 %v809, %v814
  %832 = vst.msk [vmem:[%s5] sm:$0xff] %vm686, %v816
  %833 = vst.msk [vmem:[%s5 + $0x8] sm:$0xff] %vm686, %v817
  %834 = vst.msk [vmem:[%s5 + $0x10] sm:$0xff] %vm686, %v818
  %835 = vst.msk [vmem:[%s5 + $0x18] sm:$0xff] %vm686, %v819
  %836 = vst.msk [vmem:[%s5 + $0x20] sm:$0xff] %vm686, %v820
  %837 = vst.msk [vmem:[%s5 + $0x28] sm:$0xff] %vm686, %v821
  %838 = vst.msk [vmem:[%s5 + $0x30] sm:$0xff] %vm686, %v822
  %839 = vst.msk [vmem:[%s5 + $0x38] sm:$0xff] %vm686, %v823
  %840 = vst.msk [vmem:[%s5 + $0x40] sm:$0xff] %vm686, %v824
  %841 = vst.msk [vmem:[%s5 + $0x48] sm:$0xff] %vm686, %v825
  %842 = vst.msk [vmem:[%s5 + $0x50] sm:$0xff] %vm686, %v826
  %843 = vst.msk [vmem:[%s5 + $0x58] sm:$0xff] %vm686, %v827
  %844 = vst.msk [vmem:[%s5 + $0x60] sm:$0xff] %vm686, %v828
  %845 = vst.msk [vmem:[%s5 + $0x68] sm:$0xff] %vm686, %v829
  %846 = vst.msk [vmem:[%s5 + $0x70] sm:$0xff] %vm686, %v830
  %847 = vst.msk [vmem:[%s5 + $0x78] sm:$0xff] %vm686, %v831
  // Predicated region
  $region22: #{baseline_forward.8} parent=0 // pred_check
    _
  $region23: #{baseline_forward.8} parent=0 // pred_check_branch
    %849 = sbr.rel (0) target = $region25
  $region24: #{baseline_forward.8} parent=0 // pred_region
    _
  $region25: #{baseline_forward.8} parent=0 // pred_fallthru
    _
  // Predicated region
  $region26: #{baseline_forward.8} parent=0 // pred_check
    _
  $region27: #{baseline_forward.8} parent=0 // pred_check_branch
    %851 = sbr.rel (0) target = $region29
  $region28: #{baseline_forward.8} parent=0 // pred_region
    _
  $region29: #{baseline_forward.8} parent=0 // pred_fallthru
    _

// kernel: baseline_forward.9
$region0: #{baseline_forward.9}
  #allocation0 [shape = 'u32[]', space=smem, size = 0x4, offset = 0x4, fixed_abs, tag = 'smem constant byte address 0x4 - core index']
  #allocation1 [shape = 'u32[144,128]{1,0:T(1,128)}', space=vmem, size = 0x12000, scoped, tag = 'internal scratch']
  %s0 = inlined_call_operand.vmem [shape: bf16[32,1024], index: 0, kind: input, shape index: {}]
  %s1 = inlined_call_operand.vmem [shape: bf16[1024,128], index: 1, kind: input, shape index: {}]
  %s2 = inlined_call_operand.vmem [shape: f32[1,128], index: 2, kind: input, shape index: {}]
  %s3 = inlined_call_operand.vmem [shape: f32[1,128], index: 3, kind: input, shape index: {}]
  %s4 = inlined_call_operand.vmem [shape: f32[1,128], index: 4, kind: input, shape index: {}]
  %s5 = inlined_call_operand.vmem [shape: f32[32,128], index: 5, kind: output, shape index: {}]
  %s6 = sld [smem:[#allocation0]]
  $region30: #{baseline_forward.9} parent=0
    _
  %s8 = ssub.s32 1, %s6
  %s9 = scalar_select 0, %s8, %s6
  // Predicated region
  $region2: #{baseline_forward.9} parent=0 // pred_check
    _
  $region3: #{baseline_forward.9} parent=0 // pred_check_branch
    %11 = sbr.rel (0) target = $region5
  $region4: #{baseline_forward.9} parent=0 // pred_region
    _
  $region5: #{baseline_forward.9} parent=0 // pred_fallthru
    _
  // Predicated region
  $region6: #{baseline_forward.9} parent=0 // pred_check
    _
  $region7: #{baseline_forward.9} parent=0 // pred_check_branch
    %13 = sbr.rel (0) target = $region9
  $region8: #{baseline_forward.9} parent=0 // pred_region
    _
  $region9: #{baseline_forward.9} parent=0 // pred_fallthru
    _
  // Predicated region
  $region10: #{baseline_forward.9} parent=0 // pred_check
    _
  $region11: #{baseline_forward.9} parent=0 // pred_check_branch
    %15 = sbr.rel (0) target = $region13
  $region12: #{baseline_forward.9} parent=0 // pred_region
    _
  $region13: #{baseline_forward.9} parent=0 // pred_fallthru
    _
  // Predicated region
  $region14: #{baseline_forward.9} parent=0 // pred_check
    _
  $region15: #{baseline_forward.9} parent=0 // pred_check_branch
    %17 = sbr.rel (0) target = $region17
  $region16: #{baseline_forward.9} parent=0 // pred_region
    _
  $region17: #{baseline_forward.9} parent=0 // pred_fallthru
    _
  // Predicated region
  $region18: #{baseline_forward.9} parent=0 // pred_check
    _
  $region19: #{baseline_forward.9} parent=0 // pred_check_branch
    %19 = sbr.rel (0) target = $region21
  $region20: #{baseline_forward.9} parent=0 // pred_region
    _
  $region21: #{baseline_forward.9} parent=0 // pred_fallthru
    _
  %v21 = vld [vmem:[%s0] sm:$0xff]
  %v22 = vld [vmem:[%s0 + $0x8] sm:$0xff]
  %v23 = vld [vmem:[%s0 + $0x10] sm:$0xff]
  %v24 = vld [vmem:[%s0 + $0x18] sm:$0xff]
  %v25 = vld [vmem:[%s0 + $0x20] sm:$0xff]
  %v26 = vld [vmem:[%s0 + $0x28] sm:$0xff]
  %v27 = vld [vmem:[%s0 + $0x30] sm:$0xff]
  %v28 = vld [vmem:[%s0 + $0x38] sm:$0xff]
  %v29 = vld [vmem:[%s0 + $0x40] sm:$0xff]
  %v30 = vld [vmem:[%s0 + $0x48] sm:$0xff]
  %v31 = vld [vmem:[%s0 + $0x50] sm:$0xff]
  %v32 = vld [vmem:[%s0 + $0x58] sm:$0xff]
  %v33 = vld [vmem:[%s0 + $0x60] sm:$0xff]
  %v34 = vld [vmem:[%s0 + $0x68] sm:$0xff]
  %v35 = vld [vmem:[%s0 + $0x70] sm:$0xff]
  %v36 = vld [vmem:[%s0 + $0x78] sm:$0xff]
  %v37 = vld [vmem:[%s1] sm:$0xf]
  %v38 = vld [vmem:[%s1 + $0x4] sm:$0xf]
  %v39 = vld [vmem:[%s1 + $0x8] sm:$0xf]
  %v40 = vld [vmem:[%s1 + $0xc] sm:$0xf]
  %v41 = vld [vmem:[%s1 + $0x10] sm:$0xf]
  %v42 = vld [vmem:[%s1 + $0x14] sm:$0xf]
  %v43 = vld [vmem:[%s1 + $0x18] sm:$0xf]
  %v44 = vld [vmem:[%s1 + $0x1c] sm:$0xf]
  %v45 = vld [vmem:[%s1 + $0x20] sm:$0xf]
  %v46 = vld [vmem:[%s1 + $0x24] sm:$0xf]
  %v47 = vld [vmem:[%s1 + $0x28] sm:$0xf]
  %v48 = vld [vmem:[%s1 + $0x2c] sm:$0xf]
  %v49 = vld [vmem:[%s1 + $0x30] sm:$0xf]
  %v50 = vld [vmem:[%s1 + $0x34] sm:$0xf]
  %v51 = vld [vmem:[%s1 + $0x38] sm:$0xf]
  %v52 = vld [vmem:[%s1 + $0x3c] sm:$0xf]
  %v53 = vld [vmem:[%s1 + $0x40] sm:$0xf]
  %v54 = vld [vmem:[%s1 + $0x44] sm:$0xf]
  %v55 = vld [vmem:[%s1 + $0x48] sm:$0xf]
  %v56 = vld [vmem:[%s1 + $0x4c] sm:$0xf]
  %v57 = vld [vmem:[%s1 + $0x50] sm:$0xf]
  %v58 = vld [vmem:[%s1 + $0x54] sm:$0xf]
  %v59 = vld [vmem:[%s1 + $0x58] sm:$0xf]
  %v60 = vld [vmem:[%s1 + $0x5c] sm:$0xf]
  %v61 = vld [vmem:[%s1 + $0x60] sm:$0xf]
  %v62 = vld [vmem:[%s1 + $0x64] sm:$0xf]
  %v63 = vld [vmem:[%s1 + $0x68] sm:$0xf]
  %v64 = vld [vmem:[%s1 + $0x6c] sm:$0xf]
  %v65 = vld [vmem:[%s1 + $0x70] sm:$0xf]
  %v66 = vld [vmem:[%s1 + $0x74] sm:$0xf]
  %v67 = vld [vmem:[%s1 + $0x78] sm:$0xf]
  %v68 = vld [vmem:[%s1 + $0x7c] sm:$0xf]
  %v69 = vld [vmem:[%s1 + $0x80] sm:$0xf]
  %v70 = vld [vmem:[%s1 + $0x84] sm:$0xf]
  %v71 = vld [vmem:[%s1 + $0x88] sm:$0xf]
  %v72 = vld [vmem:[%s1 + $0x8c] sm:$0xf]
  %v73 = vld [vmem:[%s1 + $0x90] sm:$0xf]
  %v74 = vld [vmem:[%s1 + $0x94] sm:$0xf]
  %v75 = vld [vmem:[%s1 + $0x98] sm:$0xf]
  %v76 = vld [vmem:[%s1 + $0x9c] sm:$0xf]
  %v77 = vld [vmem:[%s1 + $0xa0] sm:$0xf]
  %v78 = vld [vmem:[%s1 + $0xa4] sm:$0xf]
  %v79 = vld [vmem:[%s1 + $0xa8] sm:$0xf]
  %v80 = vld [vmem:[%s1 + $0xac] sm:$0xf]
  %v81 = vld [vmem:[%s1 + $0xb0] sm:$0xf]
  %v82 = vld [vmem:[%s1 + $0xb4] sm:$0xf]
  %v83 = vld [vmem:[%s1 + $0xb8] sm:$0xf]
  %v84 = vld [vmem:[%s1 + $0xbc] sm:$0xf]
  %v85 = vld [vmem:[%s1 + $0xc0] sm:$0xf]
  %v86 = vld [vmem:[%s1 + $0xc4] sm:$0xf]
  %v87 = vld [vmem:[%s1 + $0xc8] sm:$0xf]
  %v88 = vld [vmem:[%s1 + $0xcc] sm:$0xf]
  %v89 = vld [vmem:[%s1 + $0xd0] sm:$0xf]
  %v90 = vld [vmem:[%s1 + $0xd4] sm:$0xf]
  %v91 = vld [vmem:[%s1 + $0xd8] sm:$0xf]
  %v92 = vld [vmem:[%s1 + $0xdc] sm:$0xf]
  %v93 = vld [vmem:[%s1 + $0xe0] sm:$0xf]
  %v94 = vld [vmem:[%s1 + $0xe4] sm:$0xf]
  %v95 = vld [vmem:[%s1 + $0xe8] sm:$0xf]
  %v96 = vld [vmem:[%s1 + $0xec] sm:$0xf]
  %v97 = vld [vmem:[%s1 + $0xf0] sm:$0xf]
  %v98 = vld [vmem:[%s1 + $0xf4] sm:$0xf]
  %v99 = vld [vmem:[%s1 + $0xf8] sm:$0xf]
  %v100 = vld [vmem:[%s1 + $0xfc] sm:$0xf]
  %v101 = vld [vmem:[%s1 + $0x100] sm:$0xf]
  %v102 = vld [vmem:[%s1 + $0x104] sm:$0xf]
  %v103 = vld [vmem:[%s1 + $0x108] sm:$0xf]
  %v104 = vld [vmem:[%s1 + $0x10c] sm:$0xf]
  %v105 = vld [vmem:[%s1 + $0x110] sm:$0xf]
  %v106 = vld [vmem:[%s1 + $0x114] sm:$0xf]
  %v107 = vld [vmem:[%s1 + $0x118] sm:$0xf]
  %v108 = vld [vmem:[%s1 + $0x11c] sm:$0xf]
  %v109 = vld [vmem:[%s1 + $0x120] sm:$0xf]
  %v110 = vld [vmem:[%s1 + $0x124] sm:$0xf]
  %v111 = vld [vmem:[%s1 + $0x128] sm:$0xf]
  %v112 = vld [vmem:[%s1 + $0x12c] sm:$0xf]
  %v113 = vld [vmem:[%s1 + $0x130] sm:$0xf]
  %v114 = vld [vmem:[%s1 + $0x134] sm:$0xf]
  %v115 = vld [vmem:[%s1 + $0x138] sm:$0xf]
  %v116 = vld [vmem:[%s1 + $0x13c] sm:$0xf]
  %v117 = vld [vmem:[%s1 + $0x140] sm:$0xf]
  %v118 = vld [vmem:[%s1 + $0x144] sm:$0xf]
  %v119 = vld [vmem:[%s1 + $0x148] sm:$0xf]
  %v120 = vld [vmem:[%s1 + $0x14c] sm:$0xf]
  %v121 = vld [vmem:[%s1 + $0x150] sm:$0xf]
  %v122 = vld [vmem:[%s1 + $0x154] sm:$0xf]
  %v123 = vld [vmem:[%s1 + $0x158] sm:$0xf]
  %v124 = vld [vmem:[%s1 + $0x15c] sm:$0xf]
  %v125 = vld [vmem:[%s1 + $0x160] sm:$0xf]
  %v126 = vld [vmem:[%s1 + $0x164] sm:$0xf]
  %v127 = vld [vmem:[%s1 + $0x168] sm:$0xf]
  %v128 = vld [vmem:[%s1 + $0x16c] sm:$0xf]
  %v129 = vld [vmem:[%s1 + $0x170] sm:$0xf]
  %v130 = vld [vmem:[%s1 + $0x174] sm:$0xf]
  %v131 = vld [vmem:[%s1 + $0x178] sm:$0xf]
  %v132 = vld [vmem:[%s1 + $0x17c] sm:$0xf]
  %v133 = vld [vmem:[%s1 + $0x180] sm:$0xf]
  %v134 = vld [vmem:[%s1 + $0x184] sm:$0xf]
  %v135 = vld [vmem:[%s1 + $0x188] sm:$0xf]
  %v136 = vld [vmem:[%s1 + $0x18c] sm:$0xf]
  %v137 = vld [vmem:[%s1 + $0x190] sm:$0xf]
  %v138 = vld [vmem:[%s1 + $0x194] sm:$0xf]
  %v139 = vld [vmem:[%s1 + $0x198] sm:$0xf]
  %v140 = vld [vmem:[%s1 + $0x19c] sm:$0xf]
  %v141 = vld [vmem:[%s1 + $0x1a0] sm:$0xf]
  %v142 = vld [vmem:[%s1 + $0x1a4] sm:$0xf]
  %v143 = vld [vmem:[%s1 + $0x1a8] sm:$0xf]
  %v144 = vld [vmem:[%s1 + $0x1ac] sm:$0xf]
  %v145 = vld [vmem:[%s1 + $0x1b0] sm:$0xf]
  %v146 = vld [vmem:[%s1 + $0x1b4] sm:$0xf]
  %v147 = vld [vmem:[%s1 + $0x1b8] sm:$0xf]
  %v148 = vld [vmem:[%s1 + $0x1bc] sm:$0xf]
  %v149 = vld [vmem:[%s1 + $0x1c0] sm:$0xf]
  %v150 = vld [vmem:[%s1 + $0x1c4] sm:$0xf]
  %v151 = vld [vmem:[%s1 + $0x1c8] sm:$0xf]
  %v152 = vld [vmem:[%s1 + $0x1cc] sm:$0xf]
  %v153 = vld [vmem:[%s1 + $0x1d0] sm:$0xf]
  %v154 = vld [vmem:[%s1 + $0x1d4] sm:$0xf]
  %v155 = vld [vmem:[%s1 + $0x1d8] sm:$0xf]
  %v156 = vld [vmem:[%s1 + $0x1dc] sm:$0xf]
  %v157 = vld [vmem:[%s1 + $0x1e0] sm:$0xf]
  %v158 = vld [vmem:[%s1 + $0x1e4] sm:$0xf]
  %v159 = vld [vmem:[%s1 + $0x1e8] sm:$0xf]
  %v160 = vld [vmem:[%s1 + $0x1ec] sm:$0xf]
  %v161 = vld [vmem:[%s1 + $0x1f0] sm:$0xf]
  %v162 = vld [vmem:[%s1 + $0x1f4] sm:$0xf]
  %v163 = vld [vmem:[%s1 + $0x1f8] sm:$0xf]
  %v164 = vld [vmem:[%s1 + $0x1fc] sm:$0xf]
  %v165 = vld [vmem:[%s2] sm:$0x1]
  %v167 = vlaneseq
  %v168 = vshrl.u32 %v167, 7
  %v169 = vsub.s32 0, %v168
  %v170 = vrot.slane %v165, %v169
  %v188 = vunpack.c.l.b16 %v21
  %v189 = vunpack.c.h.b16 %v21
  %v190 = vunpack.c.l.b16 %v22
  %v191 = vunpack.c.h.b16 %v22
  %v192 = vunpack.c.l.b16 %v23
  %v193 = vunpack.c.h.b16 %v23
  %v194 = vunpack.c.l.b16 %v24
  %v195 = vunpack.c.h.b16 %v24
  %v196 = vunpack.c.l.b16 %v25
  %v197 = vunpack.c.h.b16 %v25
  %v198 = vunpack.c.l.b16 %v26
  %v199 = vunpack.c.h.b16 %v26
  %v200 = vunpack.c.l.b16 %v27
  %v201 = vunpack.c.h.b16 %v27
  %v202 = vunpack.c.l.b16 %v28
  %v203 = vunpack.c.h.b16 %v28
  %v204 = vunpack.c.l.b16 %v29
  %v205 = vunpack.c.h.b16 %v29
  %v206 = vunpack.c.l.b16 %v30
  %v207 = vunpack.c.h.b16 %v30
  %v208 = vunpack.c.l.b16 %v31
  %v209 = vunpack.c.h.b16 %v31
  %v210 = vunpack.c.l.b16 %v32
  %v211 = vunpack.c.h.b16 %v32
  %v212 = vunpack.c.l.b16 %v33
  %v213 = vunpack.c.h.b16 %v33
  %v214 = vunpack.c.l.b16 %v34
  %v215 = vunpack.c.h.b16 %v34
  %v216 = vunpack.c.l.b16 %v35
  %v217 = vunpack.c.h.b16 %v35
  %v218 = vunpack.c.l.b16 %v36
  %v219 = vunpack.c.h.b16 %v36
  %v220 = vpack.c.b16 %v196, %v188
  %v221 = vpack.c.b16 %v197, %v189
  %v222 = vpack.c.b16 %v198, %v190
  %v223 = vpack.c.b16 %v199, %v191
  %v224 = vpack.c.b16 %v200, %v192
  %v225 = vpack.c.b16 %v201, %v193
  %v226 = vpack.c.b16 %v202, %v194
  %v227 = vpack.c.b16 %v203, %v195
  %v228 = vpack.c.b16 %v212, %v204
  %v229 = vpack.c.b16 %v213, %v205
  %v230 = vpack.c.b16 %v214, %v206
  %v231 = vpack.c.b16 %v215, %v207
  %v232 = vpack.c.b16 %v216, %v208
  %v233 = vpack.c.b16 %v217, %v209
  %v234 = vpack.c.b16 %v218, %v210
  %v235 = vpack.c.b16 %v219, %v211
  %v380 = vunpack.c.l.b16 %v37
  %v381 = vunpack.c.l.b16 %v38
  %v382 = vunpack.c.l.b16 %v39
  %v383 = vunpack.c.l.b16 %v40
  %v384 = vunpack.c.l.b16 %v41
  %v385 = vunpack.c.l.b16 %v42
  %v386 = vunpack.c.l.b16 %v43
  %v387 = vunpack.c.l.b16 %v44
  %v388 = vunpack.c.l.b16 %v45
  %v389 = vunpack.c.l.b16 %v46
  %v390 = vunpack.c.l.b16 %v47
  %v391 = vunpack.c.l.b16 %v48
  %v392 = vunpack.c.l.b16 %v49
  %v393 = vunpack.c.l.b16 %v50
  %v394 = vunpack.c.l.b16 %v51
  %v395 = vunpack.c.l.b16 %v52
  %v396 = vunpack.c.l.b16 %v53
  %v397 = vunpack.c.l.b16 %v54
  %v398 = vunpack.c.l.b16 %v55
  %v399 = vunpack.c.l.b16 %v56
  %v400 = vunpack.c.l.b16 %v57
  %v401 = vunpack.c.l.b16 %v58
  %v402 = vunpack.c.l.b16 %v59
  %v403 = vunpack.c.l.b16 %v60
  %v404 = vunpack.c.l.b16 %v61
  %v405 = vunpack.c.l.b16 %v62
  %v406 = vunpack.c.l.b16 %v63
  %v407 = vunpack.c.l.b16 %v64
  %v408 = vunpack.c.l.b16 %v65
  %v409 = vunpack.c.l.b16 %v66
  %v410 = vunpack.c.l.b16 %v67
  %v411 = vunpack.c.l.b16 %v68
  %v412 = vunpack.c.l.b16 %v69
  %v413 = vunpack.c.l.b16 %v70
  %v414 = vunpack.c.l.b16 %v71
  %v415 = vunpack.c.l.b16 %v72
  %v416 = vunpack.c.l.b16 %v73
  %v417 = vunpack.c.l.b16 %v74
  %v418 = vunpack.c.l.b16 %v75
  %v419 = vunpack.c.l.b16 %v76
  %v420 = vunpack.c.l.b16 %v77
  %v421 = vunpack.c.l.b16 %v78
  %v422 = vunpack.c.l.b16 %v79
  %v423 = vunpack.c.l.b16 %v80
  %v424 = vunpack.c.l.b16 %v81
  %v425 = vunpack.c.l.b16 %v82
  %v426 = vunpack.c.l.b16 %v83
  %v427 = vunpack.c.l.b16 %v84
  %v428 = vunpack.c.l.b16 %v85
  %v429 = vunpack.c.l.b16 %v86
  %v430 = vunpack.c.l.b16 %v87
  %v431 = vunpack.c.l.b16 %v88
  %v432 = vunpack.c.l.b16 %v89
  %v433 = vunpack.c.l.b16 %v90
  %v434 = vunpack.c.l.b16 %v91
  %v435 = vunpack.c.l.b16 %v92
  %v436 = vunpack.c.l.b16 %v93
  %v437 = vunpack.c.l.b16 %v94
  %v438 = vunpack.c.l.b16 %v95
  %v439 = vunpack.c.l.b16 %v96
  %v440 = vunpack.c.l.b16 %v97
  %v441 = vunpack.c.l.b16 %v98
  %v442 = vunpack.c.l.b16 %v99
  %v443 = vunpack.c.l.b16 %v100
  %v444 = vunpack.c.l.b16 %v101
  %v445 = vunpack.c.l.b16 %v102
  %v446 = vunpack.c.l.b16 %v103
  %v447 = vunpack.c.l.b16 %v104
  %v448 = vunpack.c.l.b16 %v105
  %v449 = vunpack.c.l.b16 %v106
  %v450 = vunpack.c.l.b16 %v107
  %v451 = vunpack.c.l.b16 %v108
  %v452 = vunpack.c.l.b16 %v109
  %v453 = vunpack.c.l.b16 %v110
  %v454 = vunpack.c.l.b16 %v111
  %v455 = vunpack.c.l.b16 %v112
  %v456 = vunpack.c.l.b16 %v113
  %v457 = vunpack.c.l.b16 %v114
  %v458 = vunpack.c.l.b16 %v115
  %v459 = vunpack.c.l.b16 %v116
  %v460 = vunpack.c.l.b16 %v117
  %v461 = vunpack.c.l.b16 %v118
  %v462 = vunpack.c.l.b16 %v119
  %v463 = vunpack.c.l.b16 %v120
  %v464 = vunpack.c.l.b16 %v121
  %v465 = vunpack.c.l.b16 %v122
  %v466 = vunpack.c.l.b16 %v123
  %v467 = vunpack.c.l.b16 %v124
  %v468 = vunpack.c.l.b16 %v125
  %v469 = vunpack.c.l.b16 %v126
  %v470 = vunpack.c.l.b16 %v127
  %v471 = vunpack.c.l.b16 %v128
  %v472 = vunpack.c.l.b16 %v129
  %v473 = vunpack.c.l.b16 %v130
  %v474 = vunpack.c.l.b16 %v131
  %v475 = vunpack.c.l.b16 %v132
  %v476 = vunpack.c.l.b16 %v133
  %v477 = vunpack.c.l.b16 %v134
  %v478 = vunpack.c.l.b16 %v135
  %v479 = vunpack.c.l.b16 %v136
  %v480 = vunpack.c.l.b16 %v137
  %v481 = vunpack.c.l.b16 %v138
  %v482 = vunpack.c.l.b16 %v139
  %v483 = vunpack.c.l.b16 %v140
  %v484 = vunpack.c.l.b16 %v141
  %v485 = vunpack.c.l.b16 %v142
  %v486 = vunpack.c.l.b16 %v143
  %v487 = vunpack.c.l.b16 %v144
  %v488 = vunpack.c.l.b16 %v145
  %v489 = vunpack.c.l.b16 %v146
  %v490 = vunpack.c.l.b16 %v147
  %v491 = vunpack.c.l.b16 %v148
  %v492 = vunpack.c.l.b16 %v149
  %v493 = vunpack.c.l.b16 %v150
  %v494 = vunpack.c.l.b16 %v151
  %v495 = vunpack.c.l.b16 %v152
  %v496 = vunpack.c.l.b16 %v153
  %v497 = vunpack.c.l.b16 %v154
  %v498 = vunpack.c.l.b16 %v155
  %v499 = vunpack.c.l.b16 %v156
  %v500 = vunpack.c.l.b16 %v157
  %v501 = vunpack.c.l.b16 %v158
  %v502 = vunpack.c.l.b16 %v159
  %v503 = vunpack.c.l.b16 %v160
  %v504 = vunpack.c.l.b16 %v161
  %v505 = vunpack.c.l.b16 %v162
  %v506 = vunpack.c.l.b16 %v163
  %v507 = vunpack.c.l.b16 %v164
  %v508 = vpack.c.b16 %v381, %v380
  %v509 = vpack.c.b16 %v383, %v382
  %v510 = vpack.c.b16 %v385, %v384
  %v511 = vpack.c.b16 %v387, %v386
  %v512 = vpack.c.b16 %v389, %v388
  %v513 = vpack.c.b16 %v391, %v390
  %v514 = vpack.c.b16 %v393, %v392
  %v515 = vpack.c.b16 %v395, %v394
  %v516 = vpack.c.b16 %v397, %v396
  %v517 = vpack.c.b16 %v399, %v398
  %v518 = vpack.c.b16 %v401, %v400
  %v519 = vpack.c.b16 %v403, %v402
  %v520 = vpack.c.b16 %v405, %v404
  %v521 = vpack.c.b16 %v407, %v406
  %v522 = vpack.c.b16 %v409, %v408
  %v523 = vpack.c.b16 %v411, %v410
  %v524 = vpack.c.b16 %v413, %v412
  %v525 = vpack.c.b16 %v415, %v414
  %v526 = vpack.c.b16 %v417, %v416
  %v527 = vpack.c.b16 %v419, %v418
  %v528 = vpack.c.b16 %v421, %v420
  %v529 = vpack.c.b16 %v423, %v422
  %v530 = vpack.c.b16 %v425, %v424
  %v531 = vpack.c.b16 %v427, %v426
  %v532 = vpack.c.b16 %v429, %v428
  %v533 = vpack.c.b16 %v431, %v430
  %v534 = vpack.c.b16 %v433, %v432
  %v535 = vpack.c.b16 %v435, %v434
  %v536 = vpack.c.b16 %v437, %v436
  %v537 = vpack.c.b16 %v439, %v438
  %v538 = vpack.c.b16 %v441, %v440
  %v539 = vpack.c.b16 %v443, %v442
  %v540 = vpack.c.b16 %v445, %v444
  %v541 = vpack.c.b16 %v447, %v446
  %v542 = vpack.c.b16 %v449, %v448
  %v543 = vpack.c.b16 %v451, %v450
  %v544 = vpack.c.b16 %v453, %v452
  %v545 = vpack.c.b16 %v455, %v454
  %v546 = vpack.c.b16 %v457, %v456
  %v547 = vpack.c.b16 %v459, %v458
  %v548 = vpack.c.b16 %v461, %v460
  %v549 = vpack.c.b16 %v463, %v462
  %v550 = vpack.c.b16 %v465, %v464
  %v551 = vpack.c.b16 %v467, %v466
  %v552 = vpack.c.b16 %v469, %v468
  %v553 = vpack.c.b16 %v471, %v470
  %v554 = vpack.c.b16 %v473, %v472
  %v555 = vpack.c.b16 %v475, %v474
  %v556 = vpack.c.b16 %v477, %v476
  %v557 = vpack.c.b16 %v479, %v478
  %v558 = vpack.c.b16 %v481, %v480
  %v559 = vpack.c.b16 %v483, %v482
  %v560 = vpack.c.b16 %v485, %v484
  %v561 = vpack.c.b16 %v487, %v486
  %v562 = vpack.c.b16 %v489, %v488
  %v563 = vpack.c.b16 %v491, %v490
  %v564 = vpack.c.b16 %v493, %v492
  %v565 = vpack.c.b16 %v495, %v494
  %v566 = vpack.c.b16 %v497, %v496
  %v567 = vpack.c.b16 %v499, %v498
  %v568 = vpack.c.b16 %v501, %v500
  %v569 = vpack.c.b16 %v503, %v502
  %v570 = vpack.c.b16 %v505, %v504
  %v571 = vpack.c.b16 %v507, %v506
  %636 = vmatprep.subr.bf16.mxu0 0
  %637 = vmatpush1.bf16.msra.mxu0 %v515
  %638 = vmatprep.subr.bf16.mxu0 0
  %639 = vmatpush1.bf16.msra.mxu0 %v514
  %640 = vmatprep.subr.bf16.mxu0 0
  %641 = vmatpush1.bf16.msra.mxu0 %v513
  %642 = vmatprep.subr.bf16.mxu0 0
  %643 = vmatpush1.bf16.msra.mxu0 %v512
  %644 = vmatprep.subr.bf16.mxu0 0
  %645 = vmatpush1.bf16.msra.mxu0 %v511
  %646 = vmatprep.subr.bf16.mxu0 0
  %647 = vmatpush1.bf16.msra.mxu0 %v510
  %648 = vmatprep.subr.bf16.mxu0 0
  %649 = vmatpush1.bf16.msra.mxu0 %v509
  %650 = vmatprep.subr.bf16.mxu0 0
  %651 = vmatpush1.bf16.msra.mxu0 %v508
  %652 = vmatprep.subr.bf16.mxu0 0
  %653 = vmatpush2.bf16.msra.mxu0 %v523
  %654 = vmatprep.subr.bf16.mxu0 0
  %655 = vmatpush2.bf16.msra.mxu0 %v522
  %656 = vmatprep.subr.bf16.mxu0 0
  %657 = vmatpush2.bf16.msra.mxu0 %v521
  %658 = vmatprep.subr.bf16.mxu0 0
  %659 = vmatpush2.bf16.msra.mxu0 %v520
  %660 = vmatprep.subr.bf16.mxu0 0
  %661 = vmatpush2.bf16.msra.mxu0 %v519
  %662 = vmatprep.subr.bf16.mxu0 0
  %663 = vmatpush2.bf16.msra.mxu0 %v518
  %664 = vmatprep.subr.bf16.mxu0 0
  %665 = vmatpush2.bf16.msra.mxu0 %v517
  %666 = vmatprep.subr.bf16.mxu0 0
  %667 = vmatpush2.bf16.msra.mxu0 %v516
  %668 = vmatprep.mubr.bf16.mxu0 %v221
  %669 = vmatmul.mubr.bf16.gmra.mxu0 %v220
  %v670 = vpop.f32.mrf.mxu0
  %v671 = vadd.f32 %v170, %v670
  %v672 = vpop.f32.mrf.mxu0
  %v673 = vpop.f32.mrf.mxu0
  %v674 = vadd.f32 %v170, %v673
  %v675 = vpop.f32.mrf.mxu0
  %676 = vmatprep.mubr.bf16.mxu0 %v229
  %677 = vmatmul.mubr.bf16.gmra.mxu0 %v228
  %v678 = vpop.f32.mrf.mxu0
  %v679 = vadd.f32 %v170, %v678
  %v680 = vpop.f32.mrf.mxu0
  %v681 = vpop.f32.mrf.mxu0
  %v682 = vadd.f32 %v170, %v681
  %v683 = vpop.f32.mrf.mxu0
  %684 = vdwg.mxu0
  %685 = vmatprep.subr.bf16.mxu0 0
  %686 = vmatpush1.bf16.msra.mxu0 %v531
  %687 = vmatprep.subr.bf16.mxu0 0
  %688 = vmatpush1.bf16.msra.mxu0 %v530
  %689 = vmatprep.subr.bf16.mxu0 0
  %690 = vmatpush1.bf16.msra.mxu0 %v529
  %691 = vmatprep.subr.bf16.mxu0 0
  %692 = vmatpush1.bf16.msra.mxu0 %v528
  %693 = vmatprep.subr.bf16.mxu0 0
  %694 = vmatpush1.bf16.msra.mxu0 %v527
  %695 = vmatprep.subr.bf16.mxu0 0
  %696 = vmatpush1.bf16.msra.mxu0 %v526
  %697 = vmatprep.subr.bf16.mxu0 0
  %698 = vmatpush1.bf16.msra.mxu0 %v525
  %699 = vmatprep.subr.bf16.mxu0 0
  %700 = vmatpush1.bf16.msra.mxu0 %v524
  %701 = vmatprep.subr.bf16.mxu0 0
  %702 = vmatpush2.bf16.msra.mxu0 %v539
  %703 = vmatprep.subr.bf16.mxu0 0
  %704 = vmatpush2.bf16.msra.mxu0 %v538
  %705 = vmatprep.subr.bf16.mxu0 0
  %706 = vmatpush2.bf16.msra.mxu0 %v537
  %707 = vmatprep.subr.bf16.mxu0 0
  %708 = vmatpush2.bf16.msra.mxu0 %v536
  %709 = vmatprep.subr.bf16.mxu0 0
  %710 = vmatpush2.bf16.msra.mxu0 %v535
  %711 = vmatprep.subr.bf16.mxu0 0
  %712 = vmatpush2.bf16.msra.mxu0 %v534
  %713 = vmatprep.subr.bf16.mxu0 0
  %714 = vmatpush2.bf16.msra.mxu0 %v533
  %715 = vmatprep.subr.bf16.mxu0 0
  %716 = vmatpush2.bf16.msra.mxu0 %v532
  %717 = vmatprep.mubr.bf16.mxu0 %v223
  %718 = vmatmul.mubr.bf16.gmra.mxu0 %v222
  %v719 = vpop.f32.mrf.mxu0
  %v720 = vadd.f32 %v671, %v719
  %v721 = vpop.f32.mrf.mxu0
  %v722 = vpop.f32.mrf.mxu0
  %v723 = vadd.f32 %v674, %v722
  %v724 = vpop.f32.mrf.mxu0
  %725 = vmatprep.mubr.bf16.mxu0 %v231
  %726 = vmatmul.mubr.bf16.gmra.mxu0 %v230
  %v727 = vpop.f32.mrf.mxu0
  %v728 = vadd.f32 %v679, %v727
  %v729 = vpop.f32.mrf.mxu0
  %v730 = vpop.f32.mrf.mxu0
  %v731 = vadd.f32 %v682, %v730
  %v732 = vpop.f32.mrf.mxu0
  %733 = vdwg.mxu0
  %734 = vmatprep.subr.bf16.mxu0 0
  %735 = vmatpush1.bf16.msra.mxu0 %v547
  %736 = vmatprep.subr.bf16.mxu0 0
  %737 = vmatpush1.bf16.msra.mxu0 %v546
  %738 = vmatprep.subr.bf16.mxu0 0
  %739 = vmatpush1.bf16.msra.mxu0 %v545
  %740 = vmatprep.subr.bf16.mxu0 0
  %741 = vmatpush1.bf16.msra.mxu0 %v544
  %742 = vmatprep.subr.bf16.mxu0 0
  %743 = vmatpush1.bf16.msra.mxu0 %v543
  %744 = vmatprep.subr.bf16.mxu0 0
  %745 = vmatpush1.bf16.msra.mxu0 %v542
  %746 = vmatprep.subr.bf16.mxu0 0
  %747 = vmatpush1.bf16.msra.mxu0 %v541
  %748 = vmatprep.subr.bf16.mxu0 0
  %749 = vmatpush1.bf16.msra.mxu0 %v540
  %750 = vmatprep.subr.bf16.mxu0 0
  %751 = vmatpush2.bf16.msra.mxu0 %v555
  %752 = vmatprep.subr.bf16.mxu0 0
  %753 = vmatpush2.bf16.msra.mxu0 %v554
  %754 = vmatprep.subr.bf16.mxu0 0
  %755 = vmatpush2.bf16.msra.mxu0 %v553
  %756 = vmatprep.subr.bf16.mxu0 0
  %757 = vmatpush2.bf16.msra.mxu0 %v552
  %758 = vmatprep.subr.bf16.mxu0 0
  %759 = vmatpush2.bf16.msra.mxu0 %v551
  %760 = vmatprep.subr.bf16.mxu0 0
  %761 = vmatpush2.bf16.msra.mxu0 %v550
  %762 = vmatprep.subr.bf16.mxu0 0
  %763 = vmatpush2.bf16.msra.mxu0 %v549
  %764 = vmatprep.subr.bf16.mxu0 0
  %765 = vmatpush2.bf16.msra.mxu0 %v548
  %766 = vmatprep.mubr.bf16.mxu0 %v225
  %767 = vmatmul.mubr.bf16.gmra.mxu0 %v224
  %v768 = vpop.f32.mrf.mxu0
  %v769 = vadd.f32 %v720, %v768
  %v770 = vpop.f32.mrf.mxu0
  %v771 = vpop.f32.mrf.mxu0
  %v772 = vadd.f32 %v723, %v771
  %v773 = vpop.f32.mrf.mxu0
  %774 = vmatprep.mubr.bf16.mxu0 %v233
  %775 = vmatmul.mubr.bf16.gmra.mxu0 %v232
  %v776 = vpop.f32.mrf.mxu0
  %v777 = vadd.f32 %v728, %v776
  %v778 = vpop.f32.mrf.mxu0
  %v779 = vpop.f32.mrf.mxu0
  %v780 = vadd.f32 %v731, %v779
  %v781 = vpop.f32.mrf.mxu0
  %782 = vdwg.mxu0
  %783 = vmatprep.subr.bf16.mxu0 0
  %784 = vmatpush1.bf16.msra.mxu0 %v563
  %785 = vmatprep.subr.bf16.mxu0 0
  %786 = vmatpush1.bf16.msra.mxu0 %v562
  %787 = vmatprep.subr.bf16.mxu0 0
  %788 = vmatpush1.bf16.msra.mxu0 %v561
  %789 = vmatprep.subr.bf16.mxu0 0
  %790 = vmatpush1.bf16.msra.mxu0 %v560
  %791 = vmatprep.subr.bf16.mxu0 0
  %792 = vmatpush1.bf16.msra.mxu0 %v559
  %793 = vmatprep.subr.bf16.mxu0 0
  %794 = vmatpush1.bf16.msra.mxu0 %v558
  %795 = vmatprep.subr.bf16.mxu0 0
  %796 = vmatpush1.bf16.msra.mxu0 %v557
  %797 = vmatprep.subr.bf16.mxu0 0
  %798 = vmatpush1.bf16.msra.mxu0 %v556
  %799 = vmatprep.subr.bf16.mxu0 0
  %800 = vmatpush2.bf16.msra.mxu0 %v571
  %801 = vmatprep.subr.bf16.mxu0 0
  %802 = vmatpush2.bf16.msra.mxu0 %v570
  %803 = vmatprep.subr.bf16.mxu0 0
  %804 = vmatpush2.bf16.msra.mxu0 %v569
  %805 = vmatprep.subr.bf16.mxu0 0
  %806 = vmatpush2.bf16.msra.mxu0 %v568
  %807 = vmatprep.subr.bf16.mxu0 0
  %808 = vmatpush2.bf16.msra.mxu0 %v567
  %809 = vmatprep.subr.bf16.mxu0 0
  %810 = vmatpush2.bf16.msra.mxu0 %v566
  %811 = vmatprep.subr.bf16.mxu0 0
  %812 = vmatpush2.bf16.msra.mxu0 %v565
  %813 = vmatprep.subr.bf16.mxu0 0
  %814 = vmatpush2.bf16.msra.mxu0 %v564
  %815 = vmatprep.mubr.bf16.mxu0 %v227
  %816 = vmatmul.mubr.bf16.gmra.mxu0 %v226
  %v817 = vpop.f32.mrf.mxu0
  %v818 = vadd.f32 %v769, %v817
  %v819 = vpop.f32.mrf.mxu0
  %v820 = vpop.f32.mrf.mxu0
  %v821 = vadd.f32 %v772, %v820
  %v822 = vpop.f32.mrf.mxu0
  %823 = vmatprep.mubr.bf16.mxu0 %v235
  %824 = vmatmul.mubr.bf16.gmra.mxu0 %v234
  %v825 = vpop.f32.mrf.mxu0
  %v826 = vadd.f32 %v777, %v825
  %v827 = vpop.f32.mrf.mxu0
  %v828 = vpop.f32.mrf.mxu0
  %v829 = vadd.f32 %v780, %v828
  %v830 = vpop.f32.mrf.mxu0
  %831 = vdwg.mxu0
  %v832 = vmax.f32 %v818, 0.0
  %v833 = vmax.f32 %v821, 0.0
  %v834 = vmax.f32 %v826, 0.0
  %v835 = vmax.f32 %v829, 0.0
  %v836 = vadd.f32 %v832, %v833
  %v837 = vadd.f32 %v836, %v834
  %v838 = vadd.f32 %v837, %v835
  %v839 = vrot.slane %v838, 4
  %v840 = vadd.f32 %v838, %v839
  %v841 = vrot.slane %v840, 2
  %v842 = vadd.f32 %v840, %v841
  %v843 = vrot.slane %v842, 1
  %v844 = vadd.f32 %v842, %v843
  %v845 = vmul.f32 %v844, 0.03125
  %v846 = vmul.f32 %v832, %v832
  %v847 = vmul.f32 %v833, %v833
  %v848 = vmul.f32 %v834, %v834
  %v849 = vmul.f32 %v835, %v835
  %v850 = vadd.f32 %v846, %v847
  %v851 = vadd.f32 %v850, %v848
  %v852 = vadd.f32 %v851, %v849
  %v853 = vrot.slane %v852, 4
  %v854 = vadd.f32 %v852, %v853
  %v855 = vrot.slane %v854, 2
  %v856 = vadd.f32 %v854, %v855
  %v857 = vrot.slane %v856, 1
  %v858 = vadd.f32 %v856, %v857
  %v859 = vmul.f32 %v858, 0.03125
  %v860 = vmul.f32 %v845, %v845
  %v861 = vsub.f32 %v859, %v860
  %v862 = vld [vmem:[%s3] sm:$0x1]
  %v863 = vadd.f32 %v861, 1e-05
  %v864 = vrsqrt.pop %v863
  %v865 = vmul.f32 %v862, %v864
  %v866 = vld [vmem:[%s4] sm:$0x1]
  %v867 = vmul.f32 %v845, %v865
  %v868 = vsub.f32 %v866, %v867
  %v870 = vlaneseq
  %v871 = vshrl.u32 %v870, 7
  %v872 = vsub.s32 0, %v871
  %v873 = vrot.slane %v865, %v872
  %v875 = vmul.f32 %v832, %v873
  %v876 = vmul.f32 %v833, %v873
  %v877 = vmul.f32 %v834, %v873
  %v878 = vmul.f32 %v835, %v873
  %v880 = vlaneseq
  %v881 = vshrl.u32 %v880, 7
  %v882 = vsub.s32 0, %v881
  %v883 = vrot.slane %v868, %v882
  %v885 = vadd.f32 %v875, %v883
  %v886 = vadd.f32 %v876, %v883
  %v887 = vadd.f32 %v877, %v883
  %v888 = vadd.f32 %v878, %v883
  %889 = vst [vmem:[%s5] sm:$0xff] %v885
  %890 = vst [vmem:[%s5 + $0x8] sm:$0xff] %v886
  %891 = vst [vmem:[%s5 + $0x10] sm:$0xff] %v887
  %892 = vst [vmem:[%s5 + $0x18] sm:$0xff] %v888
  // Predicated region
  $region22: #{baseline_forward.9} parent=0 // pred_check
    _
  $region23: #{baseline_forward.9} parent=0 // pred_check_branch
    %894 = sbr.rel (0) target = $region25
  $region24: #{baseline_forward.9} parent=0 // pred_region
    _
  $region25: #{baseline_forward.9} parent=0 // pred_fallthru
    _
  // Predicated region
  $region26: #{baseline_forward.9} parent=0 // pred_check
    _
  $region27: #{baseline_forward.9} parent=0 // pred_check_branch
    %896 = sbr.rel (0) target = $region29
  $region28: #{baseline_forward.9} parent=0 // pred_region
    _
  $region29: #{baseline_forward.9} parent=0 // pred_fallthru
    _

// kernel: baseline_forward.10
$region0: #{baseline_forward.10}
  #allocation0 [shape = 'u32[]', space=smem, size = 0x4, offset = 0x4, fixed_abs, tag = 'smem constant byte address 0x4 - core index']
  #allocation1 [shape = 'u32[144,128]{1,0:T(1,128)}', space=vmem, size = 0x12000, scoped, tag = 'internal scratch']
  %s0 = inlined_call_operand.vmem [shape: bf16[8,2048], index: 0, kind: input, shape index: {}]
  %s1 = inlined_call_operand.vmem [shape: bf16[2048,128], index: 1, kind: input, shape index: {}]
  %s2 = inlined_call_operand.vmem [shape: f32[1,128], index: 2, kind: input, shape index: {}]
  %s3 = inlined_call_operand.vmem [shape: f32[1,128], index: 3, kind: input, shape index: {}]
  %s4 = inlined_call_operand.vmem [shape: f32[1,128], index: 4, kind: input, shape index: {}]
  %s5 = inlined_call_operand.vmem [shape: f32[8,128], index: 5, kind: output, shape index: {}]
  %s6 = sld [smem:[#allocation0]]
  $region30: #{baseline_forward.10} parent=0
    _
  %s8 = ssub.s32 1, %s6
  %s9 = scalar_select 0, %s8, %s6
  // Predicated region
  $region2: #{baseline_forward.10} parent=0 // pred_check
    _
  $region3: #{baseline_forward.10} parent=0 // pred_check_branch
    %11 = sbr.rel (0) target = $region5
  $region4: #{baseline_forward.10} parent=0 // pred_region
    _
  $region5: #{baseline_forward.10} parent=0 // pred_fallthru
    _
  // Predicated region
  $region6: #{baseline_forward.10} parent=0 // pred_check
    _
  $region7: #{baseline_forward.10} parent=0 // pred_check_branch
    %13 = sbr.rel (0) target = $region9
  $region8: #{baseline_forward.10} parent=0 // pred_region
    _
  $region9: #{baseline_forward.10} parent=0 // pred_fallthru
    _
  // Predicated region
  $region10: #{baseline_forward.10} parent=0 // pred_check
    _
  $region11: #{baseline_forward.10} parent=0 // pred_check_branch
    %15 = sbr.rel (0) target = $region13
  $region12: #{baseline_forward.10} parent=0 // pred_region
    _
  $region13: #{baseline_forward.10} parent=0 // pred_fallthru
    _
  // Predicated region
  $region14: #{baseline_forward.10} parent=0 // pred_check
    _
  $region15: #{baseline_forward.10} parent=0 // pred_check_branch
    %17 = sbr.rel (0) target = $region17
  $region16: #{baseline_forward.10} parent=0 // pred_region
    _
  $region17: #{baseline_forward.10} parent=0 // pred_fallthru
    _
  // Predicated region
  $region18: #{baseline_forward.10} parent=0 // pred_check
    _
  $region19: #{baseline_forward.10} parent=0 // pred_check_branch
    %19 = sbr.rel (0) target = $region21
  $region20: #{baseline_forward.10} parent=0 // pred_region
    _
  $region21: #{baseline_forward.10} parent=0 // pred_fallthru
    _
  %v21 = vld [vmem:[%s0] sm:$0xff]
  %v22 = vld [vmem:[%s0 + $0x8] sm:$0xff]
  %v23 = vld [vmem:[%s0 + $0x10] sm:$0xff]
  %v24 = vld [vmem:[%s0 + $0x18] sm:$0xff]
  %v25 = vld [vmem:[%s0 + $0x20] sm:$0xff]
  %v26 = vld [vmem:[%s0 + $0x28] sm:$0xff]
  %v27 = vld [vmem:[%s0 + $0x30] sm:$0xff]
  %v28 = vld [vmem:[%s0 + $0x38] sm:$0xff]
  %v29 = vld [vmem:[%s1] sm:$0xf]
  %v30 = vld [vmem:[%s1 + $0x4] sm:$0xf]
  %v31 = vld [vmem:[%s1 + $0x8] sm:$0xf]
  %v32 = vld [vmem:[%s1 + $0xc] sm:$0xf]
  %v33 = vld [vmem:[%s1 + $0x10] sm:$0xf]
  %v34 = vld [vmem:[%s1 + $0x14] sm:$0xf]
  %v35 = vld [vmem:[%s1 + $0x18] sm:$0xf]
  %v36 = vld [vmem:[%s1 + $0x1c] sm:$0xf]
  %v37 = vld [vmem:[%s1 + $0x20] sm:$0xf]
  %v38 = vld [vmem:[%s1 + $0x24] sm:$0xf]
  %v39 = vld [vmem:[%s1 + $0x28] sm:$0xf]
  %v40 = vld [vmem:[%s1 + $0x2c] sm:$0xf]
  %v41 = vld [vmem:[%s1 + $0x30] sm:$0xf]
  %v42 = vld [vmem:[%s1 + $0x34] sm:$0xf]
  %v43 = vld [vmem:[%s1 + $0x38] sm:$0xf]
  %v44 = vld [vmem:[%s1 + $0x3c] sm:$0xf]
  %v45 = vld [vmem:[%s1 + $0x40] sm:$0xf]
  %v46 = vld [vmem:[%s1 + $0x44] sm:$0xf]
  %v47 = vld [vmem:[%s1 + $0x48] sm:$0xf]
  %v48 = vld [vmem:[%s1 + $0x4c] sm:$0xf]
  %v49 = vld [vmem:[%s1 + $0x50] sm:$0xf]
  %v50 = vld [vmem:[%s1 + $0x54] sm:$0xf]
  %v51 = vld [vmem:[%s1 + $0x58] sm:$0xf]
  %v52 = vld [vmem:[%s1 + $0x5c] sm:$0xf]
  %v53 = vld [vmem:[%s1 + $0x60] sm:$0xf]
  %v54 = vld [vmem:[%s1 + $0x64] sm:$0xf]
  %v55 = vld [vmem:[%s1 + $0x68] sm:$0xf]
  %v56 = vld [vmem:[%s1 + $0x6c] sm:$0xf]
  %v57 = vld [vmem:[%s1 + $0x70] sm:$0xf]
  %v58 = vld [vmem:[%s1 + $0x74] sm:$0xf]
  %v59 = vld [vmem:[%s1 + $0x78] sm:$0xf]
  %v60 = vld [vmem:[%s1 + $0x7c] sm:$0xf]
  %v61 = vld [vmem:[%s1 + $0x80] sm:$0xf]
  %v62 = vld [vmem:[%s1 + $0x84] sm:$0xf]
  %v63 = vld [vmem:[%s1 + $0x88] sm:$0xf]
  %v64 = vld [vmem:[%s1 + $0x8c] sm:$0xf]
  %v65 = vld [vmem:[%s1 + $0x90] sm:$0xf]
  %v66 = vld [vmem:[%s1 + $0x94] sm:$0xf]
  %v67 = vld [vmem:[%s1 + $0x98] sm:$0xf]
  %v68 = vld [vmem:[%s1 + $0x9c] sm:$0xf]
  %v69 = vld [vmem:[%s1 + $0xa0] sm:$0xf]
  %v70 = vld [vmem:[%s1 + $0xa4] sm:$0xf]
  %v71 = vld [vmem:[%s1 + $0xa8] sm:$0xf]
  %v72 = vld [vmem:[%s1 + $0xac] sm:$0xf]
  %v73 = vld [vmem:[%s1 + $0xb0] sm:$0xf]
  %v74 = vld [vmem:[%s1 + $0xb4] sm:$0xf]
  %v75 = vld [vmem:[%s1 + $0xb8] sm:$0xf]
  %v76 = vld [vmem:[%s1 + $0xbc] sm:$0xf]
  %v77 = vld [vmem:[%s1 + $0xc0] sm:$0xf]
  %v78 = vld [vmem:[%s1 + $0xc4] sm:$0xf]
  %v79 = vld [vmem:[%s1 + $0xc8] sm:$0xf]
  %v80 = vld [vmem:[%s1 + $0xcc] sm:$0xf]
  %v81 = vld [vmem:[%s1 + $0xd0] sm:$0xf]
  %v82 = vld [vmem:[%s1 + $0xd4] sm:$0xf]
  %v83 = vld [vmem:[%s1 + $0xd8] sm:$0xf]
  %v84 = vld [vmem:[%s1 + $0xdc] sm:$0xf]
  %v85 = vld [vmem:[%s1 + $0xe0] sm:$0xf]
  %v86 = vld [vmem:[%s1 + $0xe4] sm:$0xf]
  %v87 = vld [vmem:[%s1 + $0xe8] sm:$0xf]
  %v88 = vld [vmem:[%s1 + $0xec] sm:$0xf]
  %v89 = vld [vmem:[%s1 + $0xf0] sm:$0xf]
  %v90 = vld [vmem:[%s1 + $0xf4] sm:$0xf]
  %v91 = vld [vmem:[%s1 + $0xf8] sm:$0xf]
  %v92 = vld [vmem:[%s1 + $0xfc] sm:$0xf]
  %v93 = vld [vmem:[%s1 + $0x100] sm:$0xf]
  %v94 = vld [vmem:[%s1 + $0x104] sm:$0xf]
  %v95 = vld [vmem:[%s1 + $0x108] sm:$0xf]
  %v96 = vld [vmem:[%s1 + $0x10c] sm:$0xf]
  %v97 = vld [vmem:[%s1 + $0x110] sm:$0xf]
  %v98 = vld [vmem:[%s1 + $0x114] sm:$0xf]
  %v99 = vld [vmem:[%s1 + $0x118] sm:$0xf]
  %v100 = vld [vmem:[%s1 + $0x11c] sm:$0xf]
  %v101 = vld [vmem:[%s1 + $0x120] sm:$0xf]
  %v102 = vld [vmem:[%s1 + $0x124] sm:$0xf]
  %v103 = vld [vmem:[%s1 + $0x128] sm:$0xf]
  %v104 = vld [vmem:[%s1 + $0x12c] sm:$0xf]
  %v105 = vld [vmem:[%s1 + $0x130] sm:$0xf]
  %v106 = vld [vmem:[%s1 + $0x134] sm:$0xf]
  %v107 = vld [vmem:[%s1 + $0x138] sm:$0xf]
  %v108 = vld [vmem:[%s1 + $0x13c] sm:$0xf]
  %v109 = vld [vmem:[%s1 + $0x140] sm:$0xf]
  %v110 = vld [vmem:[%s1 + $0x144] sm:$0xf]
  %v111 = vld [vmem:[%s1 + $0x148] sm:$0xf]
  %v112 = vld [vmem:[%s1 + $0x14c] sm:$0xf]
  %v113 = vld [vmem:[%s1 + $0x150] sm:$0xf]
  %v114 = vld [vmem:[%s1 + $0x154] sm:$0xf]
  %v115 = vld [vmem:[%s1 + $0x158] sm:$0xf]
  %v116 = vld [vmem:[%s1 + $0x15c] sm:$0xf]
  %v117 = vld [vmem:[%s1 + $0x160] sm:$0xf]
  %v118 = vld [vmem:[%s1 + $0x164] sm:$0xf]
  %v119 = vld [vmem:[%s1 + $0x168] sm:$0xf]
  %v120 = vld [vmem:[%s1 + $0x16c] sm:$0xf]
  %v121 = vld [vmem:[%s1 + $0x170] sm:$0xf]
  %v122 = vld [vmem:[%s1 + $0x174] sm:$0xf]
  %v123 = vld [vmem:[%s1 + $0x178] sm:$0xf]
  %v124 = vld [vmem:[%s1 + $0x17c] sm:$0xf]
  %v125 = vld [vmem:[%s1 + $0x180] sm:$0xf]
  %v126 = vld [vmem:[%s1 + $0x184] sm:$0xf]
  %v127 = vld [vmem:[%s1 + $0x188] sm:$0xf]
  %v128 = vld [vmem:[%s1 + $0x18c] sm:$0xf]
  %v129 = vld [vmem:[%s1 + $0x190] sm:$0xf]
  %v130 = vld [vmem:[%s1 + $0x194] sm:$0xf]
  %v131 = vld [vmem:[%s1 + $0x198] sm:$0xf]
  %v132 = vld [vmem:[%s1 + $0x19c] sm:$0xf]
  %v133 = vld [vmem:[%s1 + $0x1a0] sm:$0xf]
  %v134 = vld [vmem:[%s1 + $0x1a4] sm:$0xf]
  %v135 = vld [vmem:[%s1 + $0x1a8] sm:$0xf]
  %v136 = vld [vmem:[%s1 + $0x1ac] sm:$0xf]
  %v137 = vld [vmem:[%s1 + $0x1b0] sm:$0xf]
  %v138 = vld [vmem:[%s1 + $0x1b4] sm:$0xf]
  %v139 = vld [vmem:[%s1 + $0x1b8] sm:$0xf]
  %v140 = vld [vmem:[%s1 + $0x1bc] sm:$0xf]
  %v141 = vld [vmem:[%s1 + $0x1c0] sm:$0xf]
  %v142 = vld [vmem:[%s1 + $0x1c4] sm:$0xf]
  %v143 = vld [vmem:[%s1 + $0x1c8] sm:$0xf]
  %v144 = vld [vmem:[%s1 + $0x1cc] sm:$0xf]
  %v145 = vld [vmem:[%s1 + $0x1d0] sm:$0xf]
  %v146 = vld [vmem:[%s1 + $0x1d4] sm:$0xf]
  %v147 = vld [vmem:[%s1 + $0x1d8] sm:$0xf]
  %v148 = vld [vmem:[%s1 + $0x1dc] sm:$0xf]
  %v149 = vld [vmem:[%s1 + $0x1e0] sm:$0xf]
  %v150 = vld [vmem:[%s1 + $0x1e4] sm:$0xf]
  %v151 = vld [vmem:[%s1 + $0x1e8] sm:$0xf]
  %v152 = vld [vmem:[%s1 + $0x1ec] sm:$0xf]
  %v153 = vld [vmem:[%s1 + $0x1f0] sm:$0xf]
  %v154 = vld [vmem:[%s1 + $0x1f4] sm:$0xf]
  %v155 = vld [vmem:[%s1 + $0x1f8] sm:$0xf]
  %v156 = vld [vmem:[%s1 + $0x1fc] sm:$0xf]
  %v157 = vld [vmem:[%s1 + $0x200] sm:$0xf]
  %v158 = vld [vmem:[%s1 + $0x204] sm:$0xf]
  %v159 = vld [vmem:[%s1 + $0x208] sm:$0xf]
  %v160 = vld [vmem:[%s1 + $0x20c] sm:$0xf]
  %v161 = vld [vmem:[%s1 + $0x210] sm:$0xf]
  %v162 = vld [vmem:[%s1 + $0x214] sm:$0xf]
  %v163 = vld [vmem:[%s1 + $0x218] sm:$0xf]
  %v164 = vld [vmem:[%s1 + $0x21c] sm:$0xf]
  %v165 = vld [vmem:[%s1 + $0x220] sm:$0xf]
  %v166 = vld [vmem:[%s1 + $0x224] sm:$0xf]
  %v167 = vld [vmem:[%s1 + $0x228] sm:$0xf]
  %v168 = vld [vmem:[%s1 + $0x22c] sm:$0xf]
  %v169 = vld [vmem:[%s1 + $0x230] sm:$0xf]
  %v170 = vld [vmem:[%s1 + $0x234] sm:$0xf]
  %v171 = vld [vmem:[%s1 + $0x238] sm:$0xf]
  %v172 = vld [vmem:[%s1 + $0x23c] sm:$0xf]
  %v173 = vld [vmem:[%s1 + $0x240] sm:$0xf]
  %v174 = vld [vmem:[%s1 + $0x244] sm:$0xf]
  %v175 = vld [vmem:[%s1 + $0x248] sm:$0xf]
  %v176 = vld [vmem:[%s1 + $0x24c] sm:$0xf]
  %v177 = vld [vmem:[%s1 + $0x250] sm:$0xf]
  %v178 = vld [vmem:[%s1 + $0x254] sm:$0xf]
  %v179 = vld [vmem:[%s1 + $0x258] sm:$0xf]
  %v180 = vld [vmem:[%s1 + $0x25c] sm:$0xf]
  %v181 = vld [vmem:[%s1 + $0x260] sm:$0xf]
  %v182 = vld [vmem:[%s1 + $0x264] sm:$0xf]
  %v183 = vld [vmem:[%s1 + $0x268] sm:$0xf]
  %v184 = vld [vmem:[%s1 + $0x26c] sm:$0xf]
  %v185 = vld [vmem:[%s1 + $0x270] sm:$0xf]
  %v186 = vld [vmem:[%s1 + $0x274] sm:$0xf]
  %v187 = vld [vmem:[%s1 + $0x278] sm:$0xf]
  %v188 = vld [vmem:[%s1 + $0x27c] sm:$0xf]
  %v189 = vld [vmem:[%s1 + $0x280] sm:$0xf]
  %v190 = vld [vmem:[%s1 + $0x284] sm:$0xf]
  %v191 = vld [vmem:[%s1 + $0x288] sm:$0xf]
  %v192 = vld [vmem:[%s1 + $0x28c] sm:$0xf]
  %v193 = vld [vmem:[%s1 + $0x290] sm:$0xf]
  %v194 = vld [vmem:[%s1 + $0x294] sm:$0xf]
  %v195 = vld [vmem:[%s1 + $0x298] sm:$0xf]
  %v196 = vld [vmem:[%s1 + $0x29c] sm:$0xf]
  %v197 = vld [vmem:[%s1 + $0x2a0] sm:$0xf]
  %v198 = vld [vmem:[%s1 + $0x2a4] sm:$0xf]
  %v199 = vld [vmem:[%s1 + $0x2a8] sm:$0xf]
  %v200 = vld [vmem:[%s1 + $0x2ac] sm:$0xf]
  %v201 = vld [vmem:[%s1 + $0x2b0] sm:$0xf]
  %v202 = vld [vmem:[%s1 + $0x2b4] sm:$0xf]
  %v203 = vld [vmem:[%s1 + $0x2b8] sm:$0xf]
  %v204 = vld [vmem:[%s1 + $0x2bc] sm:$0xf]
  %v205 = vld [vmem:[%s1 + $0x2c0] sm:$0xf]
  %v206 = vld [vmem:[%s1 + $0x2c4] sm:$0xf]
  %v207 = vld [vmem:[%s1 + $0x2c8] sm:$0xf]
  %v208 = vld [vmem:[%s1 + $0x2cc] sm:$0xf]
  %v209 = vld [vmem:[%s1 + $0x2d0] sm:$0xf]
  %v210 = vld [vmem:[%s1 + $0x2d4] sm:$0xf]
  %v211 = vld [vmem:[%s1 + $0x2d8] sm:$0xf]
  %v212 = vld [vmem:[%s1 + $0x2dc] sm:$0xf]
  %v213 = vld [vmem:[%s1 + $0x2e0] sm:$0xf]
  %v214 = vld [vmem:[%s1 + $0x2e4] sm:$0xf]
  %v215 = vld [vmem:[%s1 + $0x2e8] sm:$0xf]
  %v216 = vld [vmem:[%s1 + $0x2ec] sm:$0xf]
  %v217 = vld [vmem:[%s1 + $0x2f0] sm:$0xf]
  %v218 = vld [vmem:[%s1 + $0x2f4] sm:$0xf]
  %v219 = vld [vmem:[%s1 + $0x2f8] sm:$0xf]
  %v220 = vld [vmem:[%s1 + $0x2fc] sm:$0xf]
  %v221 = vld [vmem:[%s1 + $0x300] sm:$0xf]
  %v222 = vld [vmem:[%s1 + $0x304] sm:$0xf]
  %v223 = vld [vmem:[%s1 + $0x308] sm:$0xf]
  %v224 = vld [vmem:[%s1 + $0x30c] sm:$0xf]
  %v225 = vld [vmem:[%s1 + $0x310] sm:$0xf]
  %v226 = vld [vmem:[%s1 + $0x314] sm:$0xf]
  %v227 = vld [vmem:[%s1 + $0x318] sm:$0xf]
  %v228 = vld [vmem:[%s1 + $0x31c] sm:$0xf]
  %v229 = vld [vmem:[%s1 + $0x320] sm:$0xf]
  %v230 = vld [vmem:[%s1 + $0x324] sm:$0xf]
  %v231 = vld [vmem:[%s1 + $0x328] sm:$0xf]
  %v232 = vld [vmem:[%s1 + $0x32c] sm:$0xf]
  %v233 = vld [vmem:[%s1 + $0x330] sm:$0xf]
  %v234 = vld [vmem:[%s1 + $0x334] sm:$0xf]
  %v235 = vld [vmem:[%s1 + $0x338] sm:$0xf]
  %v236 = vld [vmem:[%s1 + $0x33c] sm:$0xf]
  %v237 = vld [vmem:[%s1 + $0x340] sm:$0xf]
  %v238 = vld [vmem:[%s1 + $0x344] sm:$0xf]
  %v239 = vld [vmem:[%s1 + $0x348] sm:$0xf]
  %v240 = vld [vmem:[%s1 + $0x34c] sm:$0xf]
  %v241 = vld [vmem:[%s1 + $0x350] sm:$0xf]
  %v242 = vld [vmem:[%s1 + $0x354] sm:$0xf]
  %v243 = vld [vmem:[%s1 + $0x358] sm:$0xf]
  %v244 = vld [vmem:[%s1 + $0x35c] sm:$0xf]
  %v245 = vld [vmem:[%s1 + $0x360] sm:$0xf]
  %v246 = vld [vmem:[%s1 + $0x364] sm:$0xf]
  %v247 = vld [vmem:[%s1 + $0x368] sm:$0xf]
  %v248 = vld [vmem:[%s1 + $0x36c] sm:$0xf]
  %v249 = vld [vmem:[%s1 + $0x370] sm:$0xf]
  %v250 = vld [vmem:[%s1 + $0x374] sm:$0xf]
  %v251 = vld [vmem:[%s1 + $0x378] sm:$0xf]
  %v252 = vld [vmem:[%s1 + $0x37c] sm:$0xf]
  %v253 = vld [vmem:[%s1 + $0x380] sm:$0xf]
  %v254 = vld [vmem:[%s1 + $0x384] sm:$0xf]
  %v255 = vld [vmem:[%s1 + $0x388] sm:$0xf]
  %v256 = vld [vmem:[%s1 + $0x38c] sm:$0xf]
  %v257 = vld [vmem:[%s1 + $0x390] sm:$0xf]
  %v258 = vld [vmem:[%s1 + $0x394] sm:$0xf]
  %v259 = vld [vmem:[%s1 + $0x398] sm:$0xf]
  %v260 = vld [vmem:[%s1 + $0x39c] sm:$0xf]
  %v261 = vld [vmem:[%s1 + $0x3a0] sm:$0xf]
  %v262 = vld [vmem:[%s1 + $0x3a4] sm:$0xf]
  %v263 = vld [vmem:[%s1 + $0x3a8] sm:$0xf]
  %v264 = vld [vmem:[%s1 + $0x3ac] sm:$0xf]
  %v265 = vld [vmem:[%s1 + $0x3b0] sm:$0xf]
  %v266 = vld [vmem:[%s1 + $0x3b4] sm:$0xf]
  %v267 = vld [vmem:[%s1 + $0x3b8] sm:$0xf]
  %v268 = vld [vmem:[%s1 + $0x3bc] sm:$0xf]
  %v269 = vld [vmem:[%s1 + $0x3c0] sm:$0xf]
  %v270 = vld [vmem:[%s1 + $0x3c4] sm:$0xf]
  %v271 = vld [vmem:[%s1 + $0x3c8] sm:$0xf]
  %v272 = vld [vmem:[%s1 + $0x3cc] sm:$0xf]
  %v273 = vld [vmem:[%s1 + $0x3d0] sm:$0xf]
  %v274 = vld [vmem:[%s1 + $0x3d4] sm:$0xf]
  %v275 = vld [vmem:[%s1 + $0x3d8] sm:$0xf]
  %v276 = vld [vmem:[%s1 + $0x3dc] sm:$0xf]
  %v277 = vld [vmem:[%s1 + $0x3e0] sm:$0xf]
  %v278 = vld [vmem:[%s1 + $0x3e4] sm:$0xf]
  %v279 = vld [vmem:[%s1 + $0x3e8] sm:$0xf]
  %v280 = vld [vmem:[%s1 + $0x3ec] sm:$0xf]
  %v281 = vld [vmem:[%s1 + $0x3f0] sm:$0xf]
  %v282 = vld [vmem:[%s1 + $0x3f4] sm:$0xf]
  %v283 = vld [vmem:[%s1 + $0x3f8] sm:$0xf]
  %v284 = vld [vmem:[%s1 + $0x3fc] sm:$0xf]
  %v285 = vld [vmem:[%s2] sm:$0x1]
  %v287 = vlaneseq
  %v288 = vshrl.u32 %v287, 7
  %v289 = vsub.s32 0, %v288
  %v290 = vrot.slane %v285, %v289
  %v300 = vunpack.c.l.b16 %v21
  %v301 = vunpack.c.h.b16 %v21
  %v302 = vunpack.c.l.b16 %v22
  %v303 = vunpack.c.h.b16 %v22
  %v304 = vunpack.c.l.b16 %v23
  %v305 = vunpack.c.h.b16 %v23
  %v306 = vunpack.c.l.b16 %v24
  %v307 = vunpack.c.h.b16 %v24
  %v308 = vunpack.c.l.b16 %v25
  %v309 = vunpack.c.h.b16 %v25
  %v310 = vunpack.c.l.b16 %v26
  %v311 = vunpack.c.h.b16 %v26
  %v312 = vunpack.c.l.b16 %v27
  %v313 = vunpack.c.h.b16 %v27
  %v314 = vunpack.c.l.b16 %v28
  %v315 = vunpack.c.h.b16 %v28
  %v316 = vpack.c.b16 %v300, %v300
  %v317 = vpack.c.b16 %v301, %v301
  %v318 = vpack.c.b16 %v302, %v302
  %v319 = vpack.c.b16 %v303, %v303
  %v320 = vpack.c.b16 %v304, %v304
  %v321 = vpack.c.b16 %v305, %v305
  %v322 = vpack.c.b16 %v306, %v306
  %v323 = vpack.c.b16 %v307, %v307
  %v324 = vpack.c.b16 %v308, %v308
  %v325 = vpack.c.b16 %v309, %v309
  %v326 = vpack.c.b16 %v310, %v310
  %v327 = vpack.c.b16 %v311, %v311
  %v328 = vpack.c.b16 %v312, %v312
  %v329 = vpack.c.b16 %v313, %v313
  %v330 = vpack.c.b16 %v314, %v314
  %v331 = vpack.c.b16 %v315, %v315
  %v604 = vunpack.c.l.b16 %v29
  %v605 = vunpack.c.l.b16 %v30
  %v606 = vunpack.c.l.b16 %v31
  %v607 = vunpack.c.l.b16 %v32
  %v608 = vunpack.c.l.b16 %v33
  %v609 = vunpack.c.l.b16 %v34
  %v610 = vunpack.c.l.b16 %v35
  %v611 = vunpack.c.l.b16 %v36
  %v612 = vunpack.c.l.b16 %v37
  %v613 = vunpack.c.l.b16 %v38
  %v614 = vunpack.c.l.b16 %v39
  %v615 = vunpack.c.l.b16 %v40
  %v616 = vunpack.c.l.b16 %v41
  %v617 = vunpack.c.l.b16 %v42
  %v618 = vunpack.c.l.b16 %v43
  %v619 = vunpack.c.l.b16 %v44
  %v620 = vunpack.c.l.b16 %v45
  %v621 = vunpack.c.l.b16 %v46
  %v622 = vunpack.c.l.b16 %v47
  %v623 = vunpack.c.l.b16 %v48
  %v624 = vunpack.c.l.b16 %v49
  %v625 = vunpack.c.l.b16 %v50
  %v626 = vunpack.c.l.b16 %v51
  %v627 = vunpack.c.l.b16 %v52
  %v628 = vunpack.c.l.b16 %v53
  %v629 = vunpack.c.l.b16 %v54
  %v630 = vunpack.c.l.b16 %v55
  %v631 = vunpack.c.l.b16 %v56
  %v632 = vunpack.c.l.b16 %v57
  %v633 = vunpack.c.l.b16 %v58
  %v634 = vunpack.c.l.b16 %v59
  %v635 = vunpack.c.l.b16 %v60
  %v636 = vunpack.c.l.b16 %v61
  %v637 = vunpack.c.l.b16 %v62
  %v638 = vunpack.c.l.b16 %v63
  %v639 = vunpack.c.l.b16 %v64
  %v640 = vunpack.c.l.b16 %v65
  %v641 = vunpack.c.l.b16 %v66
  %v642 = vunpack.c.l.b16 %v67
  %v643 = vunpack.c.l.b16 %v68
  %v644 = vunpack.c.l.b16 %v69
  %v645 = vunpack.c.l.b16 %v70
  %v646 = vunpack.c.l.b16 %v71
  %v647 = vunpack.c.l.b16 %v72
  %v648 = vunpack.c.l.b16 %v73
  %v649 = vunpack.c.l.b16 %v74
  %v650 = vunpack.c.l.b16 %v75
  %v651 = vunpack.c.l.b16 %v76
  %v652 = vunpack.c.l.b16 %v77
  %v653 = vunpack.c.l.b16 %v78
  %v654 = vunpack.c.l.b16 %v79
  %v655 = vunpack.c.l.b16 %v80
  %v656 = vunpack.c.l.b16 %v81
  %v657 = vunpack.c.l.b16 %v82
  %v658 = vunpack.c.l.b16 %v83
  %v659 = vunpack.c.l.b16 %v84
  %v660 = vunpack.c.l.b16 %v85
  %v661 = vunpack.c.l.b16 %v86
  %v662 = vunpack.c.l.b16 %v87
  %v663 = vunpack.c.l.b16 %v88
  %v664 = vunpack.c.l.b16 %v89
  %v665 = vunpack.c.l.b16 %v90
  %v666 = vunpack.c.l.b16 %v91
  %v667 = vunpack.c.l.b16 %v92
  %v668 = vunpack.c.l.b16 %v93
  %v669 = vunpack.c.l.b16 %v94
  %v670 = vunpack.c.l.b16 %v95
  %v671 = vunpack.c.l.b16 %v96
  %v672 = vunpack.c.l.b16 %v97
  %v673 = vunpack.c.l.b16 %v98
  %v674 = vunpack.c.l.b16 %v99
  %v675 = vunpack.c.l.b16 %v100
  %v676 = vunpack.c.l.b16 %v101
  %v677 = vunpack.c.l.b16 %v102
  %v678 = vunpack.c.l.b16 %v103
  %v679 = vunpack.c.l.b16 %v104
  %v680 = vunpack.c.l.b16 %v105
  %v681 = vunpack.c.l.b16 %v106
  %v682 = vunpack.c.l.b16 %v107
  %v683 = vunpack.c.l.b16 %v108
  %v684 = vunpack.c.l.b16 %v109
  %v685 = vunpack.c.l.b16 %v110
  %v686 = vunpack.c.l.b16 %v111
  %v687 = vunpack.c.l.b16 %v112
  %v688 = vunpack.c.l.b16 %v113
  %v689 = vunpack.c.l.b16 %v114
  %v690 = vunpack.c.l.b16 %v115
  %v691 = vunpack.c.l.b16 %v116
  %v692 = vunpack.c.l.b16 %v117
  %v693 = vunpack.c.l.b16 %v118
  %v694 = vunpack.c.l.b16 %v119
  %v695 = vunpack.c.l.b16 %v120
  %v696 = vunpack.c.l.b16 %v121
  %v697 = vunpack.c.l.b16 %v122
  %v698 = vunpack.c.l.b16 %v123
  %v699 = vunpack.c.l.b16 %v124
  %v700 = vunpack.c.l.b16 %v125
  %v701 = vunpack.c.l.b16 %v126
  %v702 = vunpack.c.l.b16 %v127
  %v703 = vunpack.c.l.b16 %v128
  %v704 = vunpack.c.l.b16 %v129
  %v705 = vunpack.c.l.b16 %v130
  %v706 = vunpack.c.l.b16 %v131
  %v707 = vunpack.c.l.b16 %v132
  %v708 = vunpack.c.l.b16 %v133
  %v709 = vunpack.c.l.b16 %v134
  %v710 = vunpack.c.l.b16 %v135
  %v711 = vunpack.c.l.b16 %v136
  %v712 = vunpack.c.l.b16 %v137
  %v713 = vunpack.c.l.b16 %v138
  %v714 = vunpack.c.l.b16 %v139
  %v715 = vunpack.c.l.b16 %v140
  %v716 = vunpack.c.l.b16 %v141
  %v717 = vunpack.c.l.b16 %v142
  %v718 = vunpack.c.l.b16 %v143
  %v719 = vunpack.c.l.b16 %v144
  %v720 = vunpack.c.l.b16 %v145
  %v721 = vunpack.c.l.b16 %v146
  %v722 = vunpack.c.l.b16 %v147
  %v723 = vunpack.c.l.b16 %v148
  %v724 = vunpack.c.l.b16 %v149
  %v725 = vunpack.c.l.b16 %v150
  %v726 = vunpack.c.l.b16 %v151
  %v727 = vunpack.c.l.b16 %v152
  %v728 = vunpack.c.l.b16 %v153
  %v729 = vunpack.c.l.b16 %v154
  %v730 = vunpack.c.l.b16 %v155
  %v731 = vunpack.c.l.b16 %v156
  %v732 = vunpack.c.l.b16 %v157
  %v733 = vunpack.c.l.b16 %v158
  %v734 = vunpack.c.l.b16 %v159
  %v735 = vunpack.c.l.b16 %v160
  %v736 = vunpack.c.l.b16 %v161
  %v737 = vunpack.c.l.b16 %v162
  %v738 = vunpack.c.l.b16 %v163
  %v739 = vunpack.c.l.b16 %v164
  %v740 = vunpack.c.l.b16 %v165
  %v741 = vunpack.c.l.b16 %v166
  %v742 = vunpack.c.l.b16 %v167
  %v743 = vunpack.c.l.b16 %v168
  %v744 = vunpack.c.l.b16 %v169
  %v745 = vunpack.c.l.b16 %v170
  %v746 = vunpack.c.l.b16 %v171
  %v747 = vunpack.c.l.b16 %v172
  %v748 = vunpack.c.l.b16 %v173
  %v749 = vunpack.c.l.b16 %v174
  %v750 = vunpack.c.l.b16 %v175
  %v751 = vunpack.c.l.b16 %v176
  %v752 = vunpack.c.l.b16 %v177
  %v753 = vunpack.c.l.b16 %v178
  %v754 = vunpack.c.l.b16 %v179
  %v755 = vunpack.c.l.b16 %v180
  %v756 = vunpack.c.l.b16 %v181
  %v757 = vunpack.c.l.b16 %v182
  %v758 = vunpack.c.l.b16 %v183
  %v759 = vunpack.c.l.b16 %v184
  %v760 = vunpack.c.l.b16 %v185
  %v761 = vunpack.c.l.b16 %v186
  %v762 = vunpack.c.l.b16 %v187
  %v763 = vunpack.c.l.b16 %v188
  %v764 = vunpack.c.l.b16 %v189
  %v765 = vunpack.c.l.b16 %v190
  %v766 = vunpack.c.l.b16 %v191
  %v767 = vunpack.c.l.b16 %v192
  %v768 = vunpack.c.l.b16 %v193
  %v769 = vunpack.c.l.b16 %v194
  %v770 = vunpack.c.l.b16 %v195
  %v771 = vunpack.c.l.b16 %v196
  %v772 = vunpack.c.l.b16 %v197
  %v773 = vunpack.c.l.b16 %v198
  %v774 = vunpack.c.l.b16 %v199
  %v775 = vunpack.c.l.b16 %v200
  %v776 = vunpack.c.l.b16 %v201
  %v777 = vunpack.c.l.b16 %v202
  %v778 = vunpack.c.l.b16 %v203
  %v779 = vunpack.c.l.b16 %v204
  %v780 = vunpack.c.l.b16 %v205
  %v781 = vunpack.c.l.b16 %v206
  %v782 = vunpack.c.l.b16 %v207
  %v783 = vunpack.c.l.b16 %v208
  %v784 = vunpack.c.l.b16 %v209
  %v785 = vunpack.c.l.b16 %v210
  %v786 = vunpack.c.l.b16 %v211
  %v787 = vunpack.c.l.b16 %v212
  %v788 = vunpack.c.l.b16 %v213
  %v789 = vunpack.c.l.b16 %v214
  %v790 = vunpack.c.l.b16 %v215
  %v791 = vunpack.c.l.b16 %v216
  %v792 = vunpack.c.l.b16 %v217
  %v793 = vunpack.c.l.b16 %v218
  %v794 = vunpack.c.l.b16 %v219
  %v795 = vunpack.c.l.b16 %v220
  %v796 = vunpack.c.l.b16 %v221
  %v797 = vunpack.c.l.b16 %v222
  %v798 = vunpack.c.l.b16 %v223
  %v799 = vunpack.c.l.b16 %v224
  %v800 = vunpack.c.l.b16 %v225
  %v801 = vunpack.c.l.b16 %v226
  %v802 = vunpack.c.l.b16 %v227
  %v803 = vunpack.c.l.b16 %v228
  %v804 = vunpack.c.l.b16 %v229
  %v805 = vunpack.c.l.b16 %v230
  %v806 = vunpack.c.l.b16 %v231
  %v807 = vunpack.c.l.b16 %v232
  %v808 = vunpack.c.l.b16 %v233
  %v809 = vunpack.c.l.b16 %v234
  %v810 = vunpack.c.l.b16 %v235
  %v811 = vunpack.c.l.b16 %v236
  %v812 = vunpack.c.l.b16 %v237
  %v813 = vunpack.c.l.b16 %v238
  %v814 = vunpack.c.l.b16 %v239
  %v815 = vunpack.c.l.b16 %v240
  %v816 = vunpack.c.l.b16 %v241
  %v817 = vunpack.c.l.b16 %v242
  %v818 = vunpack.c.l.b16 %v243
  %v819 = vunpack.c.l.b16 %v244
  %v820 = vunpack.c.l.b16 %v245
  %v821 = vunpack.c.l.b16 %v246
  %v822 = vunpack.c.l.b16 %v247
  %v823 = vunpack.c.l.b16 %v248
  %v824 = vunpack.c.l.b16 %v249
  %v825 = vunpack.c.l.b16 %v250
  %v826 = vunpack.c.l.b16 %v251
  %v827 = vunpack.c.l.b16 %v252
  %v828 = vunpack.c.l.b16 %v253
  %v829 = vunpack.c.l.b16 %v254
  %v830 = vunpack.c.l.b16 %v255
  %v831 = vunpack.c.l.b16 %v256
  %v832 = vunpack.c.l.b16 %v257
  %v833 = vunpack.c.l.b16 %v258
  %v834 = vunpack.c.l.b16 %v259
  %v835 = vunpack.c.l.b16 %v260
  %v836 = vunpack.c.l.b16 %v261
  %v837 = vunpack.c.l.b16 %v262
  %v838 = vunpack.c.l.b16 %v263
  %v839 = vunpack.c.l.b16 %v264
  %v840 = vunpack.c.l.b16 %v265
  %v841 = vunpack.c.l.b16 %v266
  %v842 = vunpack.c.l.b16 %v267
  %v843 = vunpack.c.l.b16 %v268
  %v844 = vunpack.c.l.b16 %v269
  %v845 = vunpack.c.l.b16 %v270
  %v846 = vunpack.c.l.b16 %v271
  %v847 = vunpack.c.l.b16 %v272
  %v848 = vunpack.c.l.b16 %v273
  %v849 = vunpack.c.l.b16 %v274
  %v850 = vunpack.c.l.b16 %v275
  %v851 = vunpack.c.l.b16 %v276
  %v852 = vunpack.c.l.b16 %v277
  %v853 = vunpack.c.l.b16 %v278
  %v854 = vunpack.c.l.b16 %v279
  %v855 = vunpack.c.l.b16 %v280
  %v856 = vunpack.c.l.b16 %v281
  %v857 = vunpack.c.l.b16 %v282
  %v858 = vunpack.c.l.b16 %v283
  %v859 = vunpack.c.l.b16 %v284
  %v860 = vpack.c.b16 %v605, %v604
  %v861 = vpack.c.b16 %v607, %v606
  %v862 = vpack.c.b16 %v609, %v608
  %v863 = vpack.c.b16 %v611, %v610
  %v864 = vpack.c.b16 %v613, %v612
  %v865 = vpack.c.b16 %v615, %v614
  %v866 = vpack.c.b16 %v617, %v616
  %v867 = vpack.c.b16 %v619, %v618
  %v868 = vpack.c.b16 %v621, %v620
  %v869 = vpack.c.b16 %v623, %v622
  %v870 = vpack.c.b16 %v625, %v624
  %v871 = vpack.c.b16 %v627, %v626
  %v872 = vpack.c.b16 %v629, %v628
  %v873 = vpack.c.b16 %v631, %v630
  %v874 = vpack.c.b16 %v633, %v632
  %v875 = vpack.c.b16 %v635, %v634
  %v876 = vpack.c.b16 %v637, %v636
  %v877 = vpack.c.b16 %v639, %v638
  %v878 = vpack.c.b16 %v641, %v640
  %v879 = vpack.c.b16 %v643, %v642
  %v880 = vpack.c.b16 %v645, %v644
  %v881 = vpack.c.b16 %v647, %v646
  %v882 = vpack.c.b16 %v649, %v648
  %v883 = vpack.c.b16 %v651, %v650
  %v884 = vpack.c.b16 %v653, %v652
  %v885 = vpack.c.b16 %v655, %v654
  %v886 = vpack.c.b16 %v657, %v656
  %v887 = vpack.c.b16 %v659, %v658
  %v888 = vpack.c.b16 %v661, %v660
  %v889 = vpack.c.b16 %v663, %v662
  %v890 = vpack.c.b16 %v665, %v664
  %v891 = vpack.c.b16 %v667, %v666
  %v892 = vpack.c.b16 %v669, %v668
  %v893 = vpack.c.b16 %v671, %v670
  %v894 = vpack.c.b16 %v673, %v672
  %v895 = vpack.c.b16 %v675, %v674
  %v896 = vpack.c.b16 %v677, %v676
  %v897 = vpack.c.b16 %v679, %v678
  %v898 = vpack.c.b16 %v681, %v680
  %v899 = vpack.c.b16 %v683, %v682
  %v900 = vpack.c.b16 %v685, %v684
  %v901 = vpack.c.b16 %v687, %v686
  %v902 = vpack.c.b16 %v689, %v688
  %v903 = vpack.c.b16 %v691, %v690
  %v904 = vpack.c.b16 %v693, %v692
  %v905 = vpack.c.b16 %v695, %v694
  %v906 = vpack.c.b16 %v697, %v696
  %v907 = vpack.c.b16 %v699, %v698
  %v908 = vpack.c.b16 %v701, %v700
  %v909 = vpack.c.b16 %v703, %v702
  %v910 = vpack.c.b16 %v705, %v704
  %v911 = vpack.c.b16 %v707, %v706
  %v912 = vpack.c.b16 %v709, %v708
  %v913 = vpack.c.b16 %v711, %v710
  %v914 = vpack.c.b16 %v713, %v712
  %v915 = vpack.c.b16 %v715, %v714
  %v916 = vpack.c.b16 %v717, %v716
  %v917 = vpack.c.b16 %v719, %v718
  %v918 = vpack.c.b16 %v721, %v720
  %v919 = vpack.c.b16 %v723, %v722
  %v920 = vpack.c.b16 %v725, %v724
  %v921 = vpack.c.b16 %v727, %v726
  %v922 = vpack.c.b16 %v729, %v728
  %v923 = vpack.c.b16 %v731, %v730
  %v924 = vpack.c.b16 %v733, %v732
  %v925 = vpack.c.b16 %v735, %v734
  %v926 = vpack.c.b16 %v737, %v736
  %v927 = vpack.c.b16 %v739, %v738
  %v928 = vpack.c.b16 %v741, %v740
  %v929 = vpack.c.b16 %v743, %v742
  %v930 = vpack.c.b16 %v745, %v744
  %v931 = vpack.c.b16 %v747, %v746
  %v932 = vpack.c.b16 %v749, %v748
  %v933 = vpack.c.b16 %v751, %v750
  %v934 = vpack.c.b16 %v753, %v752
  %v935 = vpack.c.b16 %v755, %v754
  %v936 = vpack.c.b16 %v757, %v756
  %v937 = vpack.c.b16 %v759, %v758
  %v938 = vpack.c.b16 %v761, %v760
  %v939 = vpack.c.b16 %v763, %v762
  %v940 = vpack.c.b16 %v765, %v764
  %v941 = vpack.c.b16 %v767, %v766
  %v942 = vpack.c.b16 %v769, %v768
  %v943 = vpack.c.b16 %v771, %v770
  %v944 = vpack.c.b16 %v773, %v772
  %v945 = vpack.c.b16 %v775, %v774
  %v946 = vpack.c.b16 %v777, %v776
  %v947 = vpack.c.b16 %v779, %v778
  %v948 = vpack.c.b16 %v781, %v780
  %v949 = vpack.c.b16 %v783, %v782
  %v950 = vpack.c.b16 %v785, %v784
  %v951 = vpack.c.b16 %v787, %v786
  %v952 = vpack.c.b16 %v789, %v788
  %v953 = vpack.c.b16 %v791, %v790
  %v954 = vpack.c.b16 %v793, %v792
  %v955 = vpack.c.b16 %v795, %v794
  %v956 = vpack.c.b16 %v797, %v796
  %v957 = vpack.c.b16 %v799, %v798
  %v958 = vpack.c.b16 %v801, %v800
  %v959 = vpack.c.b16 %v803, %v802
  %v960 = vpack.c.b16 %v805, %v804
  %v961 = vpack.c.b16 %v807, %v806
  %v962 = vpack.c.b16 %v809, %v808
  %v963 = vpack.c.b16 %v811, %v810
  %v964 = vpack.c.b16 %v813, %v812
  %v965 = vpack.c.b16 %v815, %v814
  %v966 = vpack.c.b16 %v817, %v816
  %v967 = vpack.c.b16 %v819, %v818
  %v968 = vpack.c.b16 %v821, %v820
  %v969 = vpack.c.b16 %v823, %v822
  %v970 = vpack.c.b16 %v825, %v824
  %v971 = vpack.c.b16 %v827, %v826
  %v972 = vpack.c.b16 %v829, %v828
  %v973 = vpack.c.b16 %v831, %v830
  %v974 = vpack.c.b16 %v833, %v832
  %v975 = vpack.c.b16 %v835, %v834
  %v976 = vpack.c.b16 %v837, %v836
  %v977 = vpack.c.b16 %v839, %v838
  %v978 = vpack.c.b16 %v841, %v840
  %v979 = vpack.c.b16 %v843, %v842
  %v980 = vpack.c.b16 %v845, %v844
  %v981 = vpack.c.b16 %v847, %v846
  %v982 = vpack.c.b16 %v849, %v848
  %v983 = vpack.c.b16 %v851, %v850
  %v984 = vpack.c.b16 %v853, %v852
  %v985 = vpack.c.b16 %v855, %v854
  %v986 = vpack.c.b16 %v857, %v856
  %v987 = vpack.c.b16 %v859, %v858
  %1116 = vmatprep.subr.bf16.mxu0 0
  %1117 = vmatpush1.bf16.msra.mxu0 %v867
  %1118 = vmatprep.subr.bf16.mxu0 0
  %1119 = vmatpush1.bf16.msra.mxu0 %v866
  %1120 = vmatprep.subr.bf16.mxu0 0
  %1121 = vmatpush1.bf16.msra.mxu0 %v865
  %1122 = vmatprep.subr.bf16.mxu0 0
  %1123 = vmatpush1.bf16.msra.mxu0 %v864
  %1124 = vmatprep.subr.bf16.mxu0 0
  %1125 = vmatpush1.bf16.msra.mxu0 %v863
  %1126 = vmatprep.subr.bf16.mxu0 0
  %1127 = vmatpush1.bf16.msra.mxu0 %v862
  %1128 = vmatprep.subr.bf16.mxu0 0
  %1129 = vmatpush1.bf16.msra.mxu0 %v861
  %1130 = vmatprep.subr.bf16.mxu0 0
  %1131 = vmatpush1.bf16.msra.mxu0 %v860
  %1132 = vmatprep.subr.bf16.mxu0 0
  %1133 = vmatpush2.bf16.msra.mxu0 %v875
  %1134 = vmatprep.subr.bf16.mxu0 0
  %1135 = vmatpush2.bf16.msra.mxu0 %v874
  %1136 = vmatprep.subr.bf16.mxu0 0
  %1137 = vmatpush2.bf16.msra.mxu0 %v873
  %1138 = vmatprep.subr.bf16.mxu0 0
  %1139 = vmatpush2.bf16.msra.mxu0 %v872
  %1140 = vmatprep.subr.bf16.mxu0 0
  %1141 = vmatpush2.bf16.msra.mxu0 %v871
  %1142 = vmatprep.subr.bf16.mxu0 0
  %1143 = vmatpush2.bf16.msra.mxu0 %v870
  %1144 = vmatprep.subr.bf16.mxu0 0
  %1145 = vmatpush2.bf16.msra.mxu0 %v869
  %1146 = vmatprep.subr.bf16.mxu0 0
  %1147 = vmatpush2.bf16.msra.mxu0 %v868
  %1148 = vmatprep.mubr.bf16.mxu0 %v317
  %1149 = vmatmul.mubr.bf16.gmra.mxu0 %v316
  %v1150 = vpop.f32.mrf.mxu0
  %v1151 = vadd.f32 %v290, %v1150
  %v1152 = vpop.f32.mrf.mxu0
  %v1153 = vpop.f32.mrf.mxu0
  %v1154 = vpop.f32.mrf.mxu0
  %1155 = vdwg.mxu0
  %1156 = vmatprep.subr.bf16.mxu0 0
  %1157 = vmatpush1.bf16.msra.mxu0 %v883
  %1158 = vmatprep.subr.bf16.mxu0 0
  %1159 = vmatpush1.bf16.msra.mxu0 %v882
  %1160 = vmatprep.subr.bf16.mxu0 0
  %1161 = vmatpush1.bf16.msra.mxu0 %v881
  %1162 = vmatprep.subr.bf16.mxu0 0
  %1163 = vmatpush1.bf16.msra.mxu0 %v880
  %1164 = vmatprep.subr.bf16.mxu0 0
  %1165 = vmatpush1.bf16.msra.mxu0 %v879
  %1166 = vmatprep.subr.bf16.mxu0 0
  %1167 = vmatpush1.bf16.msra.mxu0 %v878
  %1168 = vmatprep.subr.bf16.mxu0 0
  %1169 = vmatpush1.bf16.msra.mxu0 %v877
  %1170 = vmatprep.subr.bf16.mxu0 0
  %1171 = vmatpush1.bf16.msra.mxu0 %v876
  %1172 = vmatprep.subr.bf16.mxu0 0
  %1173 = vmatpush2.bf16.msra.mxu0 %v891
  %1174 = vmatprep.subr.bf16.mxu0 0
  %1175 = vmatpush2.bf16.msra.mxu0 %v890
  %1176 = vmatprep.subr.bf16.mxu0 0
  %1177 = vmatpush2.bf16.msra.mxu0 %v889
  %1178 = vmatprep.subr.bf16.mxu0 0
  %1179 = vmatpush2.bf16.msra.mxu0 %v888
  %1180 = vmatprep.subr.bf16.mxu0 0
  %1181 = vmatpush2.bf16.msra.mxu0 %v887
  %1182 = vmatprep.subr.bf16.mxu0 0
  %1183 = vmatpush2.bf16.msra.mxu0 %v886
  %1184 = vmatprep.subr.bf16.mxu0 0
  %1185 = vmatpush2.bf16.msra.mxu0 %v885
  %1186 = vmatprep.subr.bf16.mxu0 0
  %1187 = vmatpush2.bf16.msra.mxu0 %v884
  %1188 = vmatprep.mubr.bf16.mxu0 %v319
  %1189 = vmatmul.mubr.bf16.gmra.mxu0 %v318
  %v1190 = vpop.f32.mrf.mxu0
  %v1191 = vadd.f32 %v1151, %v1190
  %v1192 = vpop.f32.mrf.mxu0
  %v1193 = vpop.f32.mrf.mxu0
  %v1194 = vpop.f32.mrf.mxu0
  %1195 = vdwg.mxu0
  %1196 = vmatprep.subr.bf16.mxu0 0
  %1197 = vmatpush1.bf16.msra.mxu0 %v899
  %1198 = vmatprep.subr.bf16.mxu0 0
  %1199 = vmatpush1.bf16.msra.mxu0 %v898
  %1200 = vmatprep.subr.bf16.mxu0 0
  %1201 = vmatpush1.bf16.msra.mxu0 %v897
  %1202 = vmatprep.subr.bf16.mxu0 0
  %1203 = vmatpush1.bf16.msra.mxu0 %v896
  %1204 = vmatprep.subr.bf16.mxu0 0
  %1205 = vmatpush1.bf16.msra.mxu0 %v895
  %1206 = vmatprep.subr.bf16.mxu0 0
  %1207 = vmatpush1.bf16.msra.mxu0 %v894
  %1208 = vmatprep.subr.bf16.mxu0 0
  %1209 = vmatpush1.bf16.msra.mxu0 %v893
  %1210 = vmatprep.subr.bf16.mxu0 0
  %1211 = vmatpush1.bf16.msra.mxu0 %v892
  %1212 = vmatprep.subr.bf16.mxu0 0
  %1213 = vmatpush2.bf16.msra.mxu0 %v907
  %1214 = vmatprep.subr.bf16.mxu0 0
  %1215 = vmatpush2.bf16.msra.mxu0 %v906
  %1216 = vmatprep.subr.bf16.mxu0 0
  %1217 = vmatpush2.bf16.msra.mxu0 %v905
  %1218 = vmatprep.subr.bf16.mxu0 0
  %1219 = vmatpush2.bf16.msra.mxu0 %v904
  %1220 = vmatprep.subr.bf16.mxu0 0
  %1221 = vmatpush2.bf16.msra.mxu0 %v903
  %1222 = vmatprep.subr.bf16.mxu0 0
  %1223 = vmatpush2.bf16.msra.mxu0 %v902
  %1224 = vmatprep.subr.bf16.mxu0 0
  %1225 = vmatpush2.bf16.msra.mxu0 %v901
  %1226 = vmatprep.subr.bf16.mxu0 0
  %1227 = vmatpush2.bf16.msra.mxu0 %v900
  %1228 = vmatprep.mubr.bf16.mxu0 %v321
  %1229 = vmatmul.mubr.bf16.gmra.mxu0 %v320
  %v1230 = vpop.f32.mrf.mxu0
  %v1231 = vadd.f32 %v1191, %v1230
  %v1232 = vpop.f32.mrf.mxu0
  %v1233 = vpop.f32.mrf.mxu0
  %v1234 = vpop.f32.mrf.mxu0
  %1235 = vdwg.mxu0
  %1236 = vmatprep.subr.bf16.mxu0 0
  %1237 = vmatpush1.bf16.msra.mxu0 %v915
  %1238 = vmatprep.subr.bf16.mxu0 0
  %1239 = vmatpush1.bf16.msra.mxu0 %v914
  %1240 = vmatprep.subr.bf16.mxu0 0
  %1241 = vmatpush1.bf16.msra.mxu0 %v913
  %1242 = vmatprep.subr.bf16.mxu0 0
  %1243 = vmatpush1.bf16.msra.mxu0 %v912
  %1244 = vmatprep.subr.bf16.mxu0 0
  %1245 = vmatpush1.bf16.msra.mxu0 %v911
  %1246 = vmatprep.subr.bf16.mxu0 0
  %1247 = vmatpush1.bf16.msra.mxu0 %v910
  %1248 = vmatprep.subr.bf16.mxu0 0
  %1249 = vmatpush1.bf16.msra.mxu0 %v909
  %1250 = vmatprep.subr.bf16.mxu0 0
  %1251 = vmatpush1.bf16.msra.mxu0 %v908
  %1252 = vmatprep.subr.bf16.mxu0 0
  %1253 = vmatpush2.bf16.msra.mxu0 %v923
  %1254 = vmatprep.subr.bf16.mxu0 0
  %1255 = vmatpush2.bf16.msra.mxu0 %v922
  %1256 = vmatprep.subr.bf16.mxu0 0
  %1257 = vmatpush2.bf16.msra.mxu0 %v921
  %1258 = vmatprep.subr.bf16.mxu0 0
  %1259 = vmatpush2.bf16.msra.mxu0 %v920
  %1260 = vmatprep.subr.bf16.mxu0 0
  %1261 = vmatpush2.bf16.msra.mxu0 %v919
  %1262 = vmatprep.subr.bf16.mxu0 0
  %1263 = vmatpush2.bf16.msra.mxu0 %v918
  %1264 = vmatprep.subr.bf16.mxu0 0
  %1265 = vmatpush2.bf16.msra.mxu0 %v917
  %1266 = vmatprep.subr.bf16.mxu0 0
  %1267 = vmatpush2.bf16.msra.mxu0 %v916
  %1268 = vmatprep.mubr.bf16.mxu0 %v323
  %1269 = vmatmul.mubr.bf16.gmra.mxu0 %v322
  %v1270 = vpop.f32.mrf.mxu0
  %v1271 = vadd.f32 %v1231, %v1270
  %v1272 = vpop.f32.mrf.mxu0
  %v1273 = vpop.f32.mrf.mxu0
  %v1274 = vpop.f32.mrf.mxu0
  %1275 = vdwg.mxu0
  %1276 = vmatprep.subr.bf16.mxu0 0
  %1277 = vmatpush1.bf16.msra.mxu0 %v931
  %1278 = vmatprep.subr.bf16.mxu0 0
  %1279 = vmatpush1.bf16.msra.mxu0 %v930
  %1280 = vmatprep.subr.bf16.mxu0 0
  %1281 = vmatpush1.bf16.msra.mxu0 %v929
  %1282 = vmatprep.subr.bf16.mxu0 0
  %1283 = vmatpush1.bf16.msra.mxu0 %v928
  %1284 = vmatprep.subr.bf16.mxu0 0
  %1285 = vmatpush1.bf16.msra.mxu0 %v927
  %1286 = vmatprep.subr.bf16.mxu0 0
  %1287 = vmatpush1.bf16.msra.mxu0 %v926
  %1288 = vmatprep.subr.bf16.mxu0 0
  %1289 = vmatpush1.bf16.msra.mxu0 %v925
  %1290 = vmatprep.subr.bf16.mxu0 0
  %1291 = vmatpush1.bf16.msra.mxu0 %v924
  %1292 = vmatprep.subr.bf16.mxu0 0
  %1293 = vmatpush2.bf16.msra.mxu0 %v939
  %1294 = vmatprep.subr.bf16.mxu0 0
  %1295 = vmatpush2.bf16.msra.mxu0 %v938
  %1296 = vmatprep.subr.bf16.mxu0 0
  %1297 = vmatpush2.bf16.msra.mxu0 %v937
  %1298 = vmatprep.subr.bf16.mxu0 0
  %1299 = vmatpush2.bf16.msra.mxu0 %v936
  %1300 = vmatprep.subr.bf16.mxu0 0
  %1301 = vmatpush2.bf16.msra.mxu0 %v935
  %1302 = vmatprep.subr.bf16.mxu0 0
  %1303 = vmatpush2.bf16.msra.mxu0 %v934
  %1304 = vmatprep.subr.bf16.mxu0 0
  %1305 = vmatpush2.bf16.msra.mxu0 %v933
  %1306 = vmatprep.subr.bf16.mxu0 0
  %1307 = vmatpush2.bf16.msra.mxu0 %v932
  %1308 = vmatprep.mubr.bf16.mxu0 %v325
  %1309 = vmatmul.mubr.bf16.gmra.mxu0 %v324
  %v1310 = vpop.f32.mrf.mxu0
  %v1311 = vadd.f32 %v1271, %v1310
  %v1312 = vpop.f32.mrf.mxu0
  %v1313 = vpop.f32.mrf.mxu0
  %v1314 = vpop.f32.mrf.mxu0
  %1315 = vdwg.mxu0
  %1316 = vmatprep.subr.bf16.mxu0 0
  %1317 = vmatpush1.bf16.msra.mxu0 %v947
  %1318 = vmatprep.subr.bf16.mxu0 0
  %1319 = vmatpush1.bf16.msra.mxu0 %v946
  %1320 = vmatprep.subr.bf16.mxu0 0
  %1321 = vmatpush1.bf16.msra.mxu0 %v945
  %1322 = vmatprep.subr.bf16.mxu0 0
  %1323 = vmatpush1.bf16.msra.mxu0 %v944
  %1324 = vmatprep.subr.bf16.mxu0 0
  %1325 = vmatpush1.bf16.msra.mxu0 %v943
  %1326 = vmatprep.subr.bf16.mxu0 0
  %1327 = vmatpush1.bf16.msra.mxu0 %v942
  %1328 = vmatprep.subr.bf16.mxu0 0
  %1329 = vmatpush1.bf16.msra.mxu0 %v941
  %1330 = vmatprep.subr.bf16.mxu0 0
  %1331 = vmatpush1.bf16.msra.mxu0 %v940
  %1332 = vmatprep.subr.bf16.mxu0 0
  %1333 = vmatpush2.bf16.msra.mxu0 %v955
  %1334 = vmatprep.subr.bf16.mxu0 0
  %1335 = vmatpush2.bf16.msra.mxu0 %v954
  %1336 = vmatprep.subr.bf16.mxu0 0
  %1337 = vmatpush2.bf16.msra.mxu0 %v953
  %1338 = vmatprep.subr.bf16.mxu0 0
  %1339 = vmatpush2.bf16.msra.mxu0 %v952
  %1340 = vmatprep.subr.bf16.mxu0 0
  %1341 = vmatpush2.bf16.msra.mxu0 %v951
  %1342 = vmatprep.subr.bf16.mxu0 0
  %1343 = vmatpush2.bf16.msra.mxu0 %v950
  %1344 = vmatprep.subr.bf16.mxu0 0
  %1345 = vmatpush2.bf16.msra.mxu0 %v949
  %1346 = vmatprep.subr.bf16.mxu0 0
  %1347 = vmatpush2.bf16.msra.mxu0 %v948
  %1348 = vmatprep.mubr.bf16.mxu0 %v327
  %1349 = vmatmul.mubr.bf16.gmra.mxu0 %v326
  %v1350 = vpop.f32.mrf.mxu0
  %v1351 = vadd.f32 %v1311, %v1350
  %v1352 = vpop.f32.mrf.mxu0
  %v1353 = vpop.f32.mrf.mxu0
  %v1354 = vpop.f32.mrf.mxu0
  %1355 = vdwg.mxu0
  %1356 = vmatprep.subr.bf16.mxu0 0
  %1357 = vmatpush1.bf16.msra.mxu0 %v963
  %1358 = vmatprep.subr.bf16.mxu0 0
  %1359 = vmatpush1.bf16.msra.mxu0 %v962
  %1360 = vmatprep.subr.bf16.mxu0 0
  %1361 = vmatpush1.bf16.msra.mxu0 %v961
  %1362 = vmatprep.subr.bf16.mxu0 0
  %1363 = vmatpush1.bf16.msra.mxu0 %v960
  %1364 = vmatprep.subr.bf16.mxu0 0
  %1365 = vmatpush1.bf16.msra.mxu0 %v959
  %1366 = vmatprep.subr.bf16.mxu0 0
  %1367 = vmatpush1.bf16.msra.mxu0 %v958
  %1368 = vmatprep.subr.bf16.mxu0 0
  %1369 = vmatpush1.bf16.msra.mxu0 %v957
  %1370 = vmatprep.subr.bf16.mxu0 0
  %1371 = vmatpush1.bf16.msra.mxu0 %v956
  %1372 = vmatprep.subr.bf16.mxu0 0
  %1373 = vmatpush2.bf16.msra.mxu0 %v971
  %1374 = vmatprep.subr.bf16.mxu0 0
  %1375 = vmatpush2.bf16.msra.mxu0 %v970
  %1376 = vmatprep.subr.bf16.mxu0 0
  %1377 = vmatpush2.bf16.msra.mxu0 %v969
  %1378 = vmatprep.subr.bf16.mxu0 0
  %1379 = vmatpush2.bf16.msra.mxu0 %v968
  %1380 = vmatprep.subr.bf16.mxu0 0
  %1381 = vmatpush2.bf16.msra.mxu0 %v967
  %1382 = vmatprep.subr.bf16.mxu0 0
  %1383 = vmatpush2.bf16.msra.mxu0 %v966
  %1384 = vmatprep.subr.bf16.mxu0 0
  %1385 = vmatpush2.bf16.msra.mxu0 %v965
  %1386 = vmatprep.subr.bf16.mxu0 0
  %1387 = vmatpush2.bf16.msra.mxu0 %v964
  %1388 = vmatprep.mubr.bf16.mxu0 %v329
  %1389 = vmatmul.mubr.bf16.gmra.mxu0 %v328
  %v1390 = vpop.f32.mrf.mxu0
  %v1391 = vadd.f32 %v1351, %v1390
  %v1392 = vpop.f32.mrf.mxu0
  %v1393 = vpop.f32.mrf.mxu0
  %v1394 = vpop.f32.mrf.mxu0
  %1395 = vdwg.mxu0
  %1396 = vmatprep.subr.bf16.mxu0 0
  %1397 = vmatpush1.bf16.msra.mxu0 %v979
  %1398 = vmatprep.subr.bf16.mxu0 0
  %1399 = vmatpush1.bf16.msra.mxu0 %v978
  %1400 = vmatprep.subr.bf16.mxu0 0
  %1401 = vmatpush1.bf16.msra.mxu0 %v977
  %1402 = vmatprep.subr.bf16.mxu0 0
  %1403 = vmatpush1.bf16.msra.mxu0 %v976
  %1404 = vmatprep.subr.bf16.mxu0 0
  %1405 = vmatpush1.bf16.msra.mxu0 %v975
  %1406 = vmatprep.subr.bf16.mxu0 0
  %1407 = vmatpush1.bf16.msra.mxu0 %v974
  %1408 = vmatprep.subr.bf16.mxu0 0
  %1409 = vmatpush1.bf16.msra.mxu0 %v973
  %1410 = vmatprep.subr.bf16.mxu0 0
  %1411 = vmatpush1.bf16.msra.mxu0 %v972
  %1412 = vmatprep.subr.bf16.mxu0 0
  %1413 = vmatpush2.bf16.msra.mxu0 %v987
  %1414 = vmatprep.subr.bf16.mxu0 0
  %1415 = vmatpush2.bf16.msra.mxu0 %v986
  %1416 = vmatprep.subr.bf16.mxu0 0
  %1417 = vmatpush2.bf16.msra.mxu0 %v985
  %1418 = vmatprep.subr.bf16.mxu0 0
  %1419 = vmatpush2.bf16.msra.mxu0 %v984
  %1420 = vmatprep.subr.bf16.mxu0 0
  %1421 = vmatpush2.bf16.msra.mxu0 %v983
  %1422 = vmatprep.subr.bf16.mxu0 0
  %1423 = vmatpush2.bf16.msra.mxu0 %v982
  %1424 = vmatprep.subr.bf16.mxu0 0
  %1425 = vmatpush2.bf16.msra.mxu0 %v981
  %1426 = vmatprep.subr.bf16.mxu0 0
  %1427 = vmatpush2.bf16.msra.mxu0 %v980
  %1428 = vmatprep.mubr.bf16.mxu0 %v331
  %1429 = vmatmul.mubr.bf16.gmra.mxu0 %v330
  %v1430 = vpop.f32.mrf.mxu0
  %v1431 = vadd.f32 %v1391, %v1430
  %v1432 = vpop.f32.mrf.mxu0
  %v1433 = vpop.f32.mrf.mxu0
  %v1434 = vpop.f32.mrf.mxu0
  %1435 = vdwg.mxu0
  %v1436 = vmax.f32 %v1431, 0.0
  %v1437 = vrot.slane %v1436, 4
  %v1438 = vadd.f32 %v1436, %v1437
  %v1439 = vrot.slane %v1438, 2
  %v1440 = vadd.f32 %v1438, %v1439
  %v1441 = vrot.slane %v1440, 1
  %v1442 = vadd.f32 %v1440, %v1441
  %v1443 = vmul.f32 %v1442, 0.125
  %v1444 = vmul.f32 %v1436, %v1436
  %v1445 = vrot.slane %v1444, 4
  %v1446 = vadd.f32 %v1444, %v1445
  %v1447 = vrot.slane %v1446, 2
  %v1448 = vadd.f32 %v1446, %v1447
  %v1449 = vrot.slane %v1448, 1
  %v1450 = vadd.f32 %v1448, %v1449
  %v1451 = vmul.f32 %v1450, 0.125
  %v1452 = vmul.f32 %v1443, %v1443
  %v1453 = vsub.f32 %v1451, %v1452
  %v1454 = vld [vmem:[%s3] sm:$0x1]
  %v1455 = vadd.f32 %v1453, 1e-05
  %v1456 = vrsqrt.pop %v1455
  %v1457 = vmul.f32 %v1454, %v1456
  %v1458 = vld [vmem:[%s4] sm:$0x1]
  %v1459 = vmul.f32 %v1443, %v1457
  %v1460 = vsub.f32 %v1458, %v1459
  %v1462 = vlaneseq
  %v1463 = vshrl.u32 %v1462, 7
  %v1464 = vsub.s32 0, %v1463
  %v1465 = vrot.slane %v1457, %v1464
  %v1467 = vmul.f32 %v1436, %v1465
  %v1469 = vlaneseq
  %v1470 = vshrl.u32 %v1469, 7
  %v1471 = vsub.s32 0, %v1470
  %v1472 = vrot.slane %v1460, %v1471
  %v1474 = vadd.f32 %v1467, %v1472
  %1475 = vst [vmem:[%s5] sm:$0xff] %v1474
  // Predicated region
  $region22: #{baseline_forward.10} parent=0 // pred_check
    _
  $region23: #{baseline_forward.10} parent=0 // pred_check_branch
    %1477 = sbr.rel (0) target = $region25
  $region24: #{baseline_forward.10} parent=0 // pred_region
    _
  $region25: #{baseline_forward.10} parent=0 // pred_fallthru
    _
  // Predicated region
  $region26: #{baseline_forward.10} parent=0 // pred_check
    _
  $region27: #{baseline_forward.10} parent=0 // pred_check_branch
    %1479 = sbr.rel (0) target = $region29
  $region28: #{baseline_forward.10} parent=0 // pred_region
    _
  $region29: #{baseline_forward.10} parent=0 // pred_fallthru
    _

// kernel: baseline_forward.11
$region0: #{baseline_forward.11}
  #allocation0 [shape = 'u32[]', space=smem, size = 0x4, offset = 0x4, fixed_abs, tag = 'smem constant byte address 0x4 - core index']
  #allocation1 [shape = 'u32[144,128]{1,0:T(1,128)}', space=vmem, size = 0x12000, scoped, tag = 'internal scratch']
  %s0 = inlined_call_operand.vmem [shape: bf16[32,2048], index: 0, kind: input, shape index: {}]
  %s1 = inlined_call_operand.vmem [shape: bf16[2048,64], index: 1, kind: input, shape index: {}]
  %s2 = inlined_call_operand.vmem [shape: f32[1,64], index: 2, kind: input, shape index: {}]
  %s3 = inlined_call_operand.vmem [shape: f32[1,64], index: 3, kind: input, shape index: {}]
  %s4 = inlined_call_operand.vmem [shape: f32[1,64], index: 4, kind: input, shape index: {}]
  %s5 = inlined_call_operand.vmem [shape: f32[32,64], index: 5, kind: output, shape index: {}]
  %s6 = sld [smem:[#allocation0]]
  $region30: #{baseline_forward.11} parent=0
    _
  %s8 = ssub.s32 1, %s6
  %s9 = scalar_select 0, %s8, %s6
  // Predicated region
  $region2: #{baseline_forward.11} parent=0 // pred_check
    _
  $region3: #{baseline_forward.11} parent=0 // pred_check_branch
    %11 = sbr.rel (0) target = $region5
  $region4: #{baseline_forward.11} parent=0 // pred_region
    _
  $region5: #{baseline_forward.11} parent=0 // pred_fallthru
    _
  // Predicated region
  $region6: #{baseline_forward.11} parent=0 // pred_check
    _
  $region7: #{baseline_forward.11} parent=0 // pred_check_branch
    %13 = sbr.rel (0) target = $region9
  $region8: #{baseline_forward.11} parent=0 // pred_region
    _
  $region9: #{baseline_forward.11} parent=0 // pred_fallthru
    _
  // Predicated region
  $region10: #{baseline_forward.11} parent=0 // pred_check
    _
  $region11: #{baseline_forward.11} parent=0 // pred_check_branch
    %15 = sbr.rel (0) target = $region13
  $region12: #{baseline_forward.11} parent=0 // pred_region
    _
  $region13: #{baseline_forward.11} parent=0 // pred_fallthru
    _
  // Predicated region
  $region14: #{baseline_forward.11} parent=0 // pred_check
    _
  $region15: #{baseline_forward.11} parent=0 // pred_check_branch
    %17 = sbr.rel (0) target = $region17
  $region16: #{baseline_forward.11} parent=0 // pred_region
    _
  $region17: #{baseline_forward.11} parent=0 // pred_fallthru
    _
  // Predicated region
  $region18: #{baseline_forward.11} parent=0 // pred_check
    _
  $region19: #{baseline_forward.11} parent=0 // pred_check_branch
    %19 = sbr.rel (0) target = $region21
  $region20: #{baseline_forward.11} parent=0 // pred_region
    _
  $region21: #{baseline_forward.11} parent=0 // pred_fallthru
    _
  %v21 = vld [vmem:[%s0] sm:$0xff]
  %v22 = vld [vmem:[%s0 + $0x8] sm:$0xff]
  %v23 = vld [vmem:[%s0 + $0x10] sm:$0xff]
  %v24 = vld [vmem:[%s0 + $0x18] sm:$0xff]
  %v25 = vld [vmem:[%s0 + $0x20] sm:$0xff]
  %v26 = vld [vmem:[%s0 + $0x28] sm:$0xff]
  %v27 = vld [vmem:[%s0 + $0x30] sm:$0xff]
  %v28 = vld [vmem:[%s0 + $0x38] sm:$0xff]
  %v29 = vld [vmem:[%s0 + $0x40] sm:$0xff]
  %v30 = vld [vmem:[%s0 + $0x48] sm:$0xff]
  %v31 = vld [vmem:[%s0 + $0x50] sm:$0xff]
  %v32 = vld [vmem:[%s0 + $0x58] sm:$0xff]
  %v33 = vld [vmem:[%s0 + $0x60] sm:$0xff]
  %v34 = vld [vmem:[%s0 + $0x68] sm:$0xff]
  %v35 = vld [vmem:[%s0 + $0x70] sm:$0xff]
  %v36 = vld [vmem:[%s0 + $0x78] sm:$0xff]
  %v37 = vld [vmem:[%s0 + $0x80] sm:$0xff]
  %v38 = vld [vmem:[%s0 + $0x88] sm:$0xff]
  %v39 = vld [vmem:[%s0 + $0x90] sm:$0xff]
  %v40 = vld [vmem:[%s0 + $0x98] sm:$0xff]
  %v41 = vld [vmem:[%s0 + $0xa0] sm:$0xff]
  %v42 = vld [vmem:[%s0 + $0xa8] sm:$0xff]
  %v43 = vld [vmem:[%s0 + $0xb0] sm:$0xff]
  %v44 = vld [vmem:[%s0 + $0xb8] sm:$0xff]
  %v45 = vld [vmem:[%s0 + $0xc0] sm:$0xff]
  %v46 = vld [vmem:[%s0 + $0xc8] sm:$0xff]
  %v47 = vld [vmem:[%s0 + $0xd0] sm:$0xff]
  %v48 = vld [vmem:[%s0 + $0xd8] sm:$0xff]
  %v49 = vld [vmem:[%s0 + $0xe0] sm:$0xff]
  %v50 = vld [vmem:[%s0 + $0xe8] sm:$0xff]
  %v51 = vld [vmem:[%s0 + $0xf0] sm:$0xff]
  %v52 = vld [vmem:[%s0 + $0xf8] sm:$0xff]
  %v53 = vld [vmem:[%s1] sm:$0xf]
  %v54 = vld [vmem:[%s1 + $0x4] sm:$0xf]
  %v55 = vld [vmem:[%s1 + $0x8] sm:$0xf]
  %v56 = vld [vmem:[%s1 + $0xc] sm:$0xf]
  %v57 = vld [vmem:[%s1 + $0x10] sm:$0xf]
  %v58 = vld [vmem:[%s1 + $0x14] sm:$0xf]
  %v59 = vld [vmem:[%s1 + $0x18] sm:$0xf]
  %v60 = vld [vmem:[%s1 + $0x1c] sm:$0xf]
  %v61 = vld [vmem:[%s1 + $0x20] sm:$0xf]
  %v62 = vld [vmem:[%s1 + $0x24] sm:$0xf]
  %v63 = vld [vmem:[%s1 + $0x28] sm:$0xf]
  %v64 = vld [vmem:[%s1 + $0x2c] sm:$0xf]
  %v65 = vld [vmem:[%s1 + $0x30] sm:$0xf]
  %v66 = vld [vmem:[%s1 + $0x34] sm:$0xf]
  %v67 = vld [vmem:[%s1 + $0x38] sm:$0xf]
  %v68 = vld [vmem:[%s1 + $0x3c] sm:$0xf]
  %v69 = vld [vmem:[%s1 + $0x40] sm:$0xf]
  %v70 = vld [vmem:[%s1 + $0x44] sm:$0xf]
  %v71 = vld [vmem:[%s1 + $0x48] sm:$0xf]
  %v72 = vld [vmem:[%s1 + $0x4c] sm:$0xf]
  %v73 = vld [vmem:[%s1 + $0x50] sm:$0xf]
  %v74 = vld [vmem:[%s1 + $0x54] sm:$0xf]
  %v75 = vld [vmem:[%s1 + $0x58] sm:$0xf]
  %v76 = vld [vmem:[%s1 + $0x5c] sm:$0xf]
  %v77 = vld [vmem:[%s1 + $0x60] sm:$0xf]
  %v78 = vld [vmem:[%s1 + $0x64] sm:$0xf]
  %v79 = vld [vmem:[%s1 + $0x68] sm:$0xf]
  %v80 = vld [vmem:[%s1 + $0x6c] sm:$0xf]
  %v81 = vld [vmem:[%s1 + $0x70] sm:$0xf]
  %v82 = vld [vmem:[%s1 + $0x74] sm:$0xf]
  %v83 = vld [vmem:[%s1 + $0x78] sm:$0xf]
  %v84 = vld [vmem:[%s1 + $0x7c] sm:$0xf]
  %v85 = vld [vmem:[%s1 + $0x80] sm:$0xf]
  %v86 = vld [vmem:[%s1 + $0x84] sm:$0xf]
  %v87 = vld [vmem:[%s1 + $0x88] sm:$0xf]
  %v88 = vld [vmem:[%s1 + $0x8c] sm:$0xf]
  %v89 = vld [vmem:[%s1 + $0x90] sm:$0xf]
  %v90 = vld [vmem:[%s1 + $0x94] sm:$0xf]
  %v91 = vld [vmem:[%s1 + $0x98] sm:$0xf]
  %v92 = vld [vmem:[%s1 + $0x9c] sm:$0xf]
  %v93 = vld [vmem:[%s1 + $0xa0] sm:$0xf]
  %v94 = vld [vmem:[%s1 + $0xa4] sm:$0xf]
  %v95 = vld [vmem:[%s1 + $0xa8] sm:$0xf]
  %v96 = vld [vmem:[%s1 + $0xac] sm:$0xf]
  %v97 = vld [vmem:[%s1 + $0xb0] sm:$0xf]
  %v98 = vld [vmem:[%s1 + $0xb4] sm:$0xf]
  %v99 = vld [vmem:[%s1 + $0xb8] sm:$0xf]
  %v100 = vld [vmem:[%s1 + $0xbc] sm:$0xf]
  %v101 = vld [vmem:[%s1 + $0xc0] sm:$0xf]
  %v102 = vld [vmem:[%s1 + $0xc4] sm:$0xf]
  %v103 = vld [vmem:[%s1 + $0xc8] sm:$0xf]
  %v104 = vld [vmem:[%s1 + $0xcc] sm:$0xf]
  %v105 = vld [vmem:[%s1 + $0xd0] sm:$0xf]
  %v106 = vld [vmem:[%s1 + $0xd4] sm:$0xf]
  %v107 = vld [vmem:[%s1 + $0xd8] sm:$0xf]
  %v108 = vld [vmem:[%s1 + $0xdc] sm:$0xf]
  %v109 = vld [vmem:[%s1 + $0xe0] sm:$0xf]
  %v110 = vld [vmem:[%s1 + $0xe4] sm:$0xf]
  %v111 = vld [vmem:[%s1 + $0xe8] sm:$0xf]
  %v112 = vld [vmem:[%s1 + $0xec] sm:$0xf]
  %v113 = vld [vmem:[%s1 + $0xf0] sm:$0xf]
  %v114 = vld [vmem:[%s1 + $0xf4] sm:$0xf]
  %v115 = vld [vmem:[%s1 + $0xf8] sm:$0xf]
  %v116 = vld [vmem:[%s1 + $0xfc] sm:$0xf]
  %v117 = vld [vmem:[%s1 + $0x100] sm:$0xf]
  %v118 = vld [vmem:[%s1 + $0x104] sm:$0xf]
  %v119 = vld [vmem:[%s1 + $0x108] sm:$0xf]
  %v120 = vld [vmem:[%s1 + $0x10c] sm:$0xf]
  %v121 = vld [vmem:[%s1 + $0x110] sm:$0xf]
  %v122 = vld [vmem:[%s1 + $0x114] sm:$0xf]
  %v123 = vld [vmem:[%s1 + $0x118] sm:$0xf]
  %v124 = vld [vmem:[%s1 + $0x11c] sm:$0xf]
  %v125 = vld [vmem:[%s1 + $0x120] sm:$0xf]
  %v126 = vld [vmem:[%s1 + $0x124] sm:$0xf]
  %v127 = vld [vmem:[%s1 + $0x128] sm:$0xf]
  %v128 = vld [vmem:[%s1 + $0x12c] sm:$0xf]
  %v129 = vld [vmem:[%s1 + $0x130] sm:$0xf]
  %v130 = vld [vmem:[%s1 + $0x134] sm:$0xf]
  %v131 = vld [vmem:[%s1 + $0x138] sm:$0xf]
  %v132 = vld [vmem:[%s1 + $0x13c] sm:$0xf]
  %v133 = vld [vmem:[%s1 + $0x140] sm:$0xf]
  %v134 = vld [vmem:[%s1 + $0x144] sm:$0xf]
  %v135 = vld [vmem:[%s1 + $0x148] sm:$0xf]
  %v136 = vld [vmem:[%s1 + $0x14c] sm:$0xf]
  %v137 = vld [vmem:[%s1 + $0x150] sm:$0xf]
  %v138 = vld [vmem:[%s1 + $0x154] sm:$0xf]
  %v139 = vld [vmem:[%s1 + $0x158] sm:$0xf]
  %v140 = vld [vmem:[%s1 + $0x15c] sm:$0xf]
  %v141 = vld [vmem:[%s1 + $0x160] sm:$0xf]
  %v142 = vld [vmem:[%s1 + $0x164] sm:$0xf]
  %v143 = vld [vmem:[%s1 + $0x168] sm:$0xf]
  %v144 = vld [vmem:[%s1 + $0x16c] sm:$0xf]
  %v145 = vld [vmem:[%s1 + $0x170] sm:$0xf]
  %v146 = vld [vmem:[%s1 + $0x174] sm:$0xf]
  %v147 = vld [vmem:[%s1 + $0x178] sm:$0xf]
  %v148 = vld [vmem:[%s1 + $0x17c] sm:$0xf]
  %v149 = vld [vmem:[%s1 + $0x180] sm:$0xf]
  %v150 = vld [vmem:[%s1 + $0x184] sm:$0xf]
  %v151 = vld [vmem:[%s1 + $0x188] sm:$0xf]
  %v152 = vld [vmem:[%s1 + $0x18c] sm:$0xf]
  %v153 = vld [vmem:[%s1 + $0x190] sm:$0xf]
  %v154 = vld [vmem:[%s1 + $0x194] sm:$0xf]
  %v155 = vld [vmem:[%s1 + $0x198] sm:$0xf]
  %v156 = vld [vmem:[%s1 + $0x19c] sm:$0xf]
  %v157 = vld [vmem:[%s1 + $0x1a0] sm:$0xf]
  %v158 = vld [vmem:[%s1 + $0x1a4] sm:$0xf]
  %v159 = vld [vmem:[%s1 + $0x1a8] sm:$0xf]
  %v160 = vld [vmem:[%s1 + $0x1ac] sm:$0xf]
  %v161 = vld [vmem:[%s1 + $0x1b0] sm:$0xf]
  %v162 = vld [vmem:[%s1 + $0x1b4] sm:$0xf]
  %v163 = vld [vmem:[%s1 + $0x1b8] sm:$0xf]
  %v164 = vld [vmem:[%s1 + $0x1bc] sm:$0xf]
  %v165 = vld [vmem:[%s1 + $0x1c0] sm:$0xf]
  %v166 = vld [vmem:[%s1 + $0x1c4] sm:$0xf]
  %v167 = vld [vmem:[%s1 + $0x1c8] sm:$0xf]
  %v168 = vld [vmem:[%s1 + $0x1cc] sm:$0xf]
  %v169 = vld [vmem:[%s1 + $0x1d0] sm:$0xf]
  %v170 = vld [vmem:[%s1 + $0x1d4] sm:$0xf]
  %v171 = vld [vmem:[%s1 + $0x1d8] sm:$0xf]
  %v172 = vld [vmem:[%s1 + $0x1dc] sm:$0xf]
  %v173 = vld [vmem:[%s1 + $0x1e0] sm:$0xf]
  %v174 = vld [vmem:[%s1 + $0x1e4] sm:$0xf]
  %v175 = vld [vmem:[%s1 + $0x1e8] sm:$0xf]
  %v176 = vld [vmem:[%s1 + $0x1ec] sm:$0xf]
  %v177 = vld [vmem:[%s1 + $0x1f0] sm:$0xf]
  %v178 = vld [vmem:[%s1 + $0x1f4] sm:$0xf]
  %v179 = vld [vmem:[%s1 + $0x1f8] sm:$0xf]
  %v180 = vld [vmem:[%s1 + $0x1fc] sm:$0xf]
  %v181 = vld [vmem:[%s1 + $0x200] sm:$0xf]
  %v182 = vld [vmem:[%s1 + $0x204] sm:$0xf]
  %v183 = vld [vmem:[%s1 + $0x208] sm:$0xf]
  %v184 = vld [vmem:[%s1 + $0x20c] sm:$0xf]
  %v185 = vld [vmem:[%s1 + $0x210] sm:$0xf]
  %v186 = vld [vmem:[%s1 + $0x214] sm:$0xf]
  %v187 = vld [vmem:[%s1 + $0x218] sm:$0xf]
  %v188 = vld [vmem:[%s1 + $0x21c] sm:$0xf]
  %v189 = vld [vmem:[%s1 + $0x220] sm:$0xf]
  %v190 = vld [vmem:[%s1 + $0x224] sm:$0xf]
  %v191 = vld [vmem:[%s1 + $0x228] sm:$0xf]
  %v192 = vld [vmem:[%s1 + $0x22c] sm:$0xf]
  %v193 = vld [vmem:[%s1 + $0x230] sm:$0xf]
  %v194 = vld [vmem:[%s1 + $0x234] sm:$0xf]
  %v195 = vld [vmem:[%s1 + $0x238] sm:$0xf]
  %v196 = vld [vmem:[%s1 + $0x23c] sm:$0xf]
  %v197 = vld [vmem:[%s1 + $0x240] sm:$0xf]
  %v198 = vld [vmem:[%s1 + $0x244] sm:$0xf]
  %v199 = vld [vmem:[%s1 + $0x248] sm:$0xf]
  %v200 = vld [vmem:[%s1 + $0x24c] sm:$0xf]
  %v201 = vld [vmem:[%s1 + $0x250] sm:$0xf]
  %v202 = vld [vmem:[%s1 + $0x254] sm:$0xf]
  %v203 = vld [vmem:[%s1 + $0x258] sm:$0xf]
  %v204 = vld [vmem:[%s1 + $0x25c] sm:$0xf]
  %v205 = vld [vmem:[%s1 + $0x260] sm:$0xf]
  %v206 = vld [vmem:[%s1 + $0x264] sm:$0xf]
  %v207 = vld [vmem:[%s1 + $0x268] sm:$0xf]
  %v208 = vld [vmem:[%s1 + $0x26c] sm:$0xf]
  %v209 = vld [vmem:[%s1 + $0x270] sm:$0xf]
  %v210 = vld [vmem:[%s1 + $0x274] sm:$0xf]
  %v211 = vld [vmem:[%s1 + $0x278] sm:$0xf]
  %v212 = vld [vmem:[%s1 + $0x27c] sm:$0xf]
  %v213 = vld [vmem:[%s1 + $0x280] sm:$0xf]
  %v214 = vld [vmem:[%s1 + $0x284] sm:$0xf]
  %v215 = vld [vmem:[%s1 + $0x288] sm:$0xf]
  %v216 = vld [vmem:[%s1 + $0x28c] sm:$0xf]
  %v217 = vld [vmem:[%s1 + $0x290] sm:$0xf]
  %v218 = vld [vmem:[%s1 + $0x294] sm:$0xf]
  %v219 = vld [vmem:[%s1 + $0x298] sm:$0xf]
  %v220 = vld [vmem:[%s1 + $0x29c] sm:$0xf]
  %v221 = vld [vmem:[%s1 + $0x2a0] sm:$0xf]
  %v222 = vld [vmem:[%s1 + $0x2a4] sm:$0xf]
  %v223 = vld [vmem:[%s1 + $0x2a8] sm:$0xf]
  %v224 = vld [vmem:[%s1 + $0x2ac] sm:$0xf]
  %v225 = vld [vmem:[%s1 + $0x2b0] sm:$0xf]
  %v226 = vld [vmem:[%s1 + $0x2b4] sm:$0xf]
  %v227 = vld [vmem:[%s1 + $0x2b8] sm:$0xf]
  %v228 = vld [vmem:[%s1 + $0x2bc] sm:$0xf]
  %v229 = vld [vmem:[%s1 + $0x2c0] sm:$0xf]
  %v230 = vld [vmem:[%s1 + $0x2c4] sm:$0xf]
  %v231 = vld [vmem:[%s1 + $0x2c8] sm:$0xf]
  %v232 = vld [vmem:[%s1 + $0x2cc] sm:$0xf]
  %v233 = vld [vmem:[%s1 + $0x2d0] sm:$0xf]
  %v234 = vld [vmem:[%s1 + $0x2d4] sm:$0xf]
  %v235 = vld [vmem:[%s1 + $0x2d8] sm:$0xf]
  %v236 = vld [vmem:[%s1 + $0x2dc] sm:$0xf]
  %v237 = vld [vmem:[%s1 + $0x2e0] sm:$0xf]
  %v238 = vld [vmem:[%s1 + $0x2e4] sm:$0xf]
  %v239 = vld [vmem:[%s1 + $0x2e8] sm:$0xf]
  %v240 = vld [vmem:[%s1 + $0x2ec] sm:$0xf]
  %v241 = vld [vmem:[%s1 + $0x2f0] sm:$0xf]
  %v242 = vld [vmem:[%s1 + $0x2f4] sm:$0xf]
  %v243 = vld [vmem:[%s1 + $0x2f8] sm:$0xf]
  %v244 = vld [vmem:[%s1 + $0x2fc] sm:$0xf]
  %v245 = vld [vmem:[%s1 + $0x300] sm:$0xf]
  %v246 = vld [vmem:[%s1 + $0x304] sm:$0xf]
  %v247 = vld [vmem:[%s1 + $0x308] sm:$0xf]
  %v248 = vld [vmem:[%s1 + $0x30c] sm:$0xf]
  %v249 = vld [vmem:[%s1 + $0x310] sm:$0xf]
  %v250 = vld [vmem:[%s1 + $0x314] sm:$0xf]
  %v251 = vld [vmem:[%s1 + $0x318] sm:$0xf]
  %v252 = vld [vmem:[%s1 + $0x31c] sm:$0xf]
  %v253 = vld [vmem:[%s1 + $0x320] sm:$0xf]
  %v254 = vld [vmem:[%s1 + $0x324] sm:$0xf]
  %v255 = vld [vmem:[%s1 + $0x328] sm:$0xf]
  %v256 = vld [vmem:[%s1 + $0x32c] sm:$0xf]
  %v257 = vld [vmem:[%s1 + $0x330] sm:$0xf]
  %v258 = vld [vmem:[%s1 + $0x334] sm:$0xf]
  %v259 = vld [vmem:[%s1 + $0x338] sm:$0xf]
  %v260 = vld [vmem:[%s1 + $0x33c] sm:$0xf]
  %v261 = vld [vmem:[%s1 + $0x340] sm:$0xf]
  %v262 = vld [vmem:[%s1 + $0x344] sm:$0xf]
  %v263 = vld [vmem:[%s1 + $0x348] sm:$0xf]
  %v264 = vld [vmem:[%s1 + $0x34c] sm:$0xf]
  %v265 = vld [vmem:[%s1 + $0x350] sm:$0xf]
  %v266 = vld [vmem:[%s1 + $0x354] sm:$0xf]
  %v267 = vld [vmem:[%s1 + $0x358] sm:$0xf]
  %v268 = vld [vmem:[%s1 + $0x35c] sm:$0xf]
  %v269 = vld [vmem:[%s1 + $0x360] sm:$0xf]
  %v270 = vld [vmem:[%s1 + $0x364] sm:$0xf]
  %v271 = vld [vmem:[%s1 + $0x368] sm:$0xf]
  %v272 = vld [vmem:[%s1 + $0x36c] sm:$0xf]
  %v273 = vld [vmem:[%s1 + $0x370] sm:$0xf]
  %v274 = vld [vmem:[%s1 + $0x374] sm:$0xf]
  %v275 = vld [vmem:[%s1 + $0x378] sm:$0xf]
  %v276 = vld [vmem:[%s1 + $0x37c] sm:$0xf]
  %v277 = vld [vmem:[%s1 + $0x380] sm:$0xf]
  %v278 = vld [vmem:[%s1 + $0x384] sm:$0xf]
  %v279 = vld [vmem:[%s1 + $0x388] sm:$0xf]
  %v280 = vld [vmem:[%s1 + $0x38c] sm:$0xf]
  %v281 = vld [vmem:[%s1 + $0x390] sm:$0xf]
  %v282 = vld [vmem:[%s1 + $0x394] sm:$0xf]
  %v283 = vld [vmem:[%s1 + $0x398] sm:$0xf]
  %v284 = vld [vmem:[%s1 + $0x39c] sm:$0xf]
  %v285 = vld [vmem:[%s1 + $0x3a0] sm:$0xf]
  %v286 = vld [vmem:[%s1 + $0x3a4] sm:$0xf]
  %v287 = vld [vmem:[%s1 + $0x3a8] sm:$0xf]
  %v288 = vld [vmem:[%s1 + $0x3ac] sm:$0xf]
  %v289 = vld [vmem:[%s1 + $0x3b0] sm:$0xf]
  %v290 = vld [vmem:[%s1 + $0x3b4] sm:$0xf]
  %v291 = vld [vmem:[%s1 + $0x3b8] sm:$0xf]
  %v292 = vld [vmem:[%s1 + $0x3bc] sm:$0xf]
  %v293 = vld [vmem:[%s1 + $0x3c0] sm:$0xf]
  %v294 = vld [vmem:[%s1 + $0x3c4] sm:$0xf]
  %v295 = vld [vmem:[%s1 + $0x3c8] sm:$0xf]
  %v296 = vld [vmem:[%s1 + $0x3cc] sm:$0xf]
  %v297 = vld [vmem:[%s1 + $0x3d0] sm:$0xf]
  %v298 = vld [vmem:[%s1 + $0x3d4] sm:$0xf]
  %v299 = vld [vmem:[%s1 + $0x3d8] sm:$0xf]
  %v300 = vld [vmem:[%s1 + $0x3dc] sm:$0xf]
  %v301 = vld [vmem:[%s1 + $0x3e0] sm:$0xf]
  %v302 = vld [vmem:[%s1 + $0x3e4] sm:$0xf]
  %v303 = vld [vmem:[%s1 + $0x3e8] sm:$0xf]
  %v304 = vld [vmem:[%s1 + $0x3ec] sm:$0xf]
  %v305 = vld [vmem:[%s1 + $0x3f0] sm:$0xf]
  %v306 = vld [vmem:[%s1 + $0x3f4] sm:$0xf]
  %v307 = vld [vmem:[%s1 + $0x3f8] sm:$0xf]
  %v308 = vld [vmem:[%s1 + $0x3fc] sm:$0xf]
  %v309 = vld [vmem:[%s2] sm:$0x1]
  %v311 = vlaneseq
  %v312 = vshrl.u32 %v311, 7
  %v313 = vsub.s32 0, %v312
  %v314 = vrot.slane %v309, %v313
  %v348 = vunpack.c.l.b16 %v21
  %v349 = vunpack.c.h.b16 %v21
  %v350 = vunpack.c.l.b16 %v22
  %v351 = vunpack.c.h.b16 %v22
  %v352 = vunpack.c.l.b16 %v23
  %v353 = vunpack.c.h.b16 %v23
  %v354 = vunpack.c.l.b16 %v24
  %v355 = vunpack.c.h.b16 %v24
  %v356 = vunpack.c.l.b16 %v25
  %v357 = vunpack.c.h.b16 %v25
  %v358 = vunpack.c.l.b16 %v26
  %v359 = vunpack.c.h.b16 %v26
  %v360 = vunpack.c.l.b16 %v27
  %v361 = vunpack.c.h.b16 %v27
  %v362 = vunpack.c.l.b16 %v28
  %v363 = vunpack.c.h.b16 %v28
  %v364 = vunpack.c.l.b16 %v29
  %v365 = vunpack.c.h.b16 %v29
  %v366 = vunpack.c.l.b16 %v30
  %v367 = vunpack.c.h.b16 %v30
  %v368 = vunpack.c.l.b16 %v31
  %v369 = vunpack.c.h.b16 %v31
  %v370 = vunpack.c.l.b16 %v32
  %v371 = vunpack.c.h.b16 %v32
  %v372 = vunpack.c.l.b16 %v33
  %v373 = vunpack.c.h.b16 %v33
  %v374 = vunpack.c.l.b16 %v34
  %v375 = vunpack.c.h.b16 %v34
  %v376 = vunpack.c.l.b16 %v35
  %v377 = vunpack.c.h.b16 %v35
  %v378 = vunpack.c.l.b16 %v36
  %v379 = vunpack.c.h.b16 %v36
  %v380 = vunpack.c.l.b16 %v37
  %v381 = vunpack.c.h.b16 %v37
  %v382 = vunpack.c.l.b16 %v38
  %v383 = vunpack.c.h.b16 %v38
  %v384 = vunpack.c.l.b16 %v39
  %v385 = vunpack.c.h.b16 %v39
  %v386 = vunpack.c.l.b16 %v40
  %v387 = vunpack.c.h.b16 %v40
  %v388 = vunpack.c.l.b16 %v41
  %v389 = vunpack.c.h.b16 %v41
  %v390 = vunpack.c.l.b16 %v42
  %v391 = vunpack.c.h.b16 %v42
  %v392 = vunpack.c.l.b16 %v43
  %v393 = vunpack.c.h.b16 %v43
  %v394 = vunpack.c.l.b16 %v44
  %v395 = vunpack.c.h.b16 %v44
  %v396 = vunpack.c.l.b16 %v45
  %v397 = vunpack.c.h.b16 %v45
  %v398 = vunpack.c.l.b16 %v46
  %v399 = vunpack.c.h.b16 %v46
  %v400 = vunpack.c.l.b16 %v47
  %v401 = vunpack.c.h.b16 %v47
  %v402 = vunpack.c.l.b16 %v48
  %v403 = vunpack.c.h.b16 %v48
  %v404 = vunpack.c.l.b16 %v49
  %v405 = vunpack.c.h.b16 %v49
  %v406 = vunpack.c.l.b16 %v50
  %v407 = vunpack.c.h.b16 %v50
  %v408 = vunpack.c.l.b16 %v51
  %v409 = vunpack.c.h.b16 %v51
  %v410 = vunpack.c.l.b16 %v52
  %v411 = vunpack.c.h.b16 %v52
  %v412 = vpack.c.b16 %v364, %v348
  %v413 = vpack.c.b16 %v365, %v349
  %v414 = vpack.c.b16 %v366, %v350
  %v415 = vpack.c.b16 %v367, %v351
  %v416 = vpack.c.b16 %v368, %v352
  %v417 = vpack.c.b16 %v369, %v353
  %v418 = vpack.c.b16 %v370, %v354
  %v419 = vpack.c.b16 %v371, %v355
  %v420 = vpack.c.b16 %v372, %v356
  %v421 = vpack.c.b16 %v373, %v357
  %v422 = vpack.c.b16 %v374, %v358
  %v423 = vpack.c.b16 %v375, %v359
  %v424 = vpack.c.b16 %v376, %v360
  %v425 = vpack.c.b16 %v377, %v361
  %v426 = vpack.c.b16 %v378, %v362
  %v427 = vpack.c.b16 %v379, %v363
  %v428 = vpack.c.b16 %v396, %v380
  %v429 = vpack.c.b16 %v397, %v381
  %v430 = vpack.c.b16 %v398, %v382
  %v431 = vpack.c.b16 %v399, %v383
  %v432 = vpack.c.b16 %v400, %v384
  %v433 = vpack.c.b16 %v401, %v385
  %v434 = vpack.c.b16 %v402, %v386
  %v435 = vpack.c.b16 %v403, %v387
  %v436 = vpack.c.b16 %v404, %v388
  %v437 = vpack.c.b16 %v405, %v389
  %v438 = vpack.c.b16 %v406, %v390
  %v439 = vpack.c.b16 %v407, %v391
  %v440 = vpack.c.b16 %v408, %v392
  %v441 = vpack.c.b16 %v409, %v393
  %v442 = vpack.c.b16 %v410, %v394
  %v443 = vpack.c.b16 %v411, %v395
  %v732 = vunpack.c.l.b16 %v53
  %v733 = vunpack.c.l.b16 %v54
  %v734 = vunpack.c.l.b16 %v55
  %v735 = vunpack.c.l.b16 %v56
  %v736 = vunpack.c.l.b16 %v57
  %v737 = vunpack.c.l.b16 %v58
  %v738 = vunpack.c.l.b16 %v59
  %v739 = vunpack.c.l.b16 %v60
  %v740 = vunpack.c.l.b16 %v61
  %v741 = vunpack.c.l.b16 %v62
  %v742 = vunpack.c.l.b16 %v63
  %v743 = vunpack.c.l.b16 %v64
  %v744 = vunpack.c.l.b16 %v65
  %v745 = vunpack.c.l.b16 %v66
  %v746 = vunpack.c.l.b16 %v67
  %v747 = vunpack.c.l.b16 %v68
  %v748 = vunpack.c.l.b16 %v69
  %v749 = vunpack.c.l.b16 %v70
  %v750 = vunpack.c.l.b16 %v71
  %v751 = vunpack.c.l.b16 %v72
  %v752 = vunpack.c.l.b16 %v73
  %v753 = vunpack.c.l.b16 %v74
  %v754 = vunpack.c.l.b16 %v75
  %v755 = vunpack.c.l.b16 %v76
  %v756 = vunpack.c.l.b16 %v77
  %v757 = vunpack.c.l.b16 %v78
  %v758 = vunpack.c.l.b16 %v79
  %v759 = vunpack.c.l.b16 %v80
  %v760 = vunpack.c.l.b16 %v81
  %v761 = vunpack.c.l.b16 %v82
  %v762 = vunpack.c.l.b16 %v83
  %v763 = vunpack.c.l.b16 %v84
  %v764 = vunpack.c.l.b16 %v85
  %v765 = vunpack.c.l.b16 %v86
  %v766 = vunpack.c.l.b16 %v87
  %v767 = vunpack.c.l.b16 %v88
  %v768 = vunpack.c.l.b16 %v89
  %v769 = vunpack.c.l.b16 %v90
  %v770 = vunpack.c.l.b16 %v91
  %v771 = vunpack.c.l.b16 %v92
  %v772 = vunpack.c.l.b16 %v93
  %v773 = vunpack.c.l.b16 %v94
  %v774 = vunpack.c.l.b16 %v95
  %v775 = vunpack.c.l.b16 %v96
  %v776 = vunpack.c.l.b16 %v97
  %v777 = vunpack.c.l.b16 %v98
  %v778 = vunpack.c.l.b16 %v99
  %v779 = vunpack.c.l.b16 %v100
  %v780 = vunpack.c.l.b16 %v101
  %v781 = vunpack.c.l.b16 %v102
  %v782 = vunpack.c.l.b16 %v103
  %v783 = vunpack.c.l.b16 %v104
  %v784 = vunpack.c.l.b16 %v105
  %v785 = vunpack.c.l.b16 %v106
  %v786 = vunpack.c.l.b16 %v107
  %v787 = vunpack.c.l.b16 %v108
  %v788 = vunpack.c.l.b16 %v109
  %v789 = vunpack.c.l.b16 %v110
  %v790 = vunpack.c.l.b16 %v111
  %v791 = vunpack.c.l.b16 %v112
  %v792 = vunpack.c.l.b16 %v113
  %v793 = vunpack.c.l.b16 %v114
  %v794 = vunpack.c.l.b16 %v115
  %v795 = vunpack.c.l.b16 %v116
  %v796 = vunpack.c.l.b16 %v117
  %v797 = vunpack.c.l.b16 %v118
  %v798 = vunpack.c.l.b16 %v119
  %v799 = vunpack.c.l.b16 %v120
  %v800 = vunpack.c.l.b16 %v121
  %v801 = vunpack.c.l.b16 %v122
  %v802 = vunpack.c.l.b16 %v123
  %v803 = vunpack.c.l.b16 %v124
  %v804 = vunpack.c.l.b16 %v125
  %v805 = vunpack.c.l.b16 %v126
  %v806 = vunpack.c.l.b16 %v127
  %v807 = vunpack.c.l.b16 %v128
  %v808 = vunpack.c.l.b16 %v129
  %v809 = vunpack.c.l.b16 %v130
  %v810 = vunpack.c.l.b16 %v131
  %v811 = vunpack.c.l.b16 %v132
  %v812 = vunpack.c.l.b16 %v133
  %v813 = vunpack.c.l.b16 %v134
  %v814 = vunpack.c.l.b16 %v135
  %v815 = vunpack.c.l.b16 %v136
  %v816 = vunpack.c.l.b16 %v137
  %v817 = vunpack.c.l.b16 %v138
  %v818 = vunpack.c.l.b16 %v139
  %v819 = vunpack.c.l.b16 %v140
  %v820 = vunpack.c.l.b16 %v141
  %v821 = vunpack.c.l.b16 %v142
  %v822 = vunpack.c.l.b16 %v143
  %v823 = vunpack.c.l.b16 %v144
  %v824 = vunpack.c.l.b16 %v145
  %v825 = vunpack.c.l.b16 %v146
  %v826 = vunpack.c.l.b16 %v147
  %v827 = vunpack.c.l.b16 %v148
  %v828 = vunpack.c.l.b16 %v149
  %v829 = vunpack.c.l.b16 %v150
  %v830 = vunpack.c.l.b16 %v151
  %v831 = vunpack.c.l.b16 %v152
  %v832 = vunpack.c.l.b16 %v153
  %v833 = vunpack.c.l.b16 %v154
  %v834 = vunpack.c.l.b16 %v155
  %v835 = vunpack.c.l.b16 %v156
  %v836 = vunpack.c.l.b16 %v157
  %v837 = vunpack.c.l.b16 %v158
  %v838 = vunpack.c.l.b16 %v159
  %v839 = vunpack.c.l.b16 %v160
  %v840 = vunpack.c.l.b16 %v161
  %v841 = vunpack.c.l.b16 %v162
  %v842 = vunpack.c.l.b16 %v163
  %v843 = vunpack.c.l.b16 %v164
  %v844 = vunpack.c.l.b16 %v165
  %v845 = vunpack.c.l.b16 %v166
  %v846 = vunpack.c.l.b16 %v167
  %v847 = vunpack.c.l.b16 %v168
  %v848 = vunpack.c.l.b16 %v169
  %v849 = vunpack.c.l.b16 %v170
  %v850 = vunpack.c.l.b16 %v171
  %v851 = vunpack.c.l.b16 %v172
  %v852 = vunpack.c.l.b16 %v173
  %v853 = vunpack.c.l.b16 %v174
  %v854 = vunpack.c.l.b16 %v175
  %v855 = vunpack.c.l.b16 %v176
  %v856 = vunpack.c.l.b16 %v177
  %v857 = vunpack.c.l.b16 %v178
  %v858 = vunpack.c.l.b16 %v179
  %v859 = vunpack.c.l.b16 %v180
  %v860 = vunpack.c.l.b16 %v181
  %v861 = vunpack.c.l.b16 %v182
  %v862 = vunpack.c.l.b16 %v183
  %v863 = vunpack.c.l.b16 %v184
  %v864 = vunpack.c.l.b16 %v185
  %v865 = vunpack.c.l.b16 %v186
  %v866 = vunpack.c.l.b16 %v187
  %v867 = vunpack.c.l.b16 %v188
  %v868 = vunpack.c.l.b16 %v189
  %v869 = vunpack.c.l.b16 %v190
  %v870 = vunpack.c.l.b16 %v191
  %v871 = vunpack.c.l.b16 %v192
  %v872 = vunpack.c.l.b16 %v193
  %v873 = vunpack.c.l.b16 %v194
  %v874 = vunpack.c.l.b16 %v195
  %v875 = vunpack.c.l.b16 %v196
  %v876 = vunpack.c.l.b16 %v197
  %v877 = vunpack.c.l.b16 %v198
  %v878 = vunpack.c.l.b16 %v199
  %v879 = vunpack.c.l.b16 %v200
  %v880 = vunpack.c.l.b16 %v201
  %v881 = vunpack.c.l.b16 %v202
  %v882 = vunpack.c.l.b16 %v203
  %v883 = vunpack.c.l.b16 %v204
  %v884 = vunpack.c.l.b16 %v205
  %v885 = vunpack.c.l.b16 %v206
  %v886 = vunpack.c.l.b16 %v207
  %v887 = vunpack.c.l.b16 %v208
  %v888 = vunpack.c.l.b16 %v209
  %v889 = vunpack.c.l.b16 %v210
  %v890 = vunpack.c.l.b16 %v211
  %v891 = vunpack.c.l.b16 %v212
  %v892 = vunpack.c.l.b16 %v213
  %v893 = vunpack.c.l.b16 %v214
  %v894 = vunpack.c.l.b16 %v215
  %v895 = vunpack.c.l.b16 %v216
  %v896 = vunpack.c.l.b16 %v217
  %v897 = vunpack.c.l.b16 %v218
  %v898 = vunpack.c.l.b16 %v219
  %v899 = vunpack.c.l.b16 %v220
  %v900 = vunpack.c.l.b16 %v221
  %v901 = vunpack.c.l.b16 %v222
  %v902 = vunpack.c.l.b16 %v223
  %v903 = vunpack.c.l.b16 %v224
  %v904 = vunpack.c.l.b16 %v225
  %v905 = vunpack.c.l.b16 %v226
  %v906 = vunpack.c.l.b16 %v227
  %v907 = vunpack.c.l.b16 %v228
  %v908 = vunpack.c.l.b16 %v229
  %v909 = vunpack.c.l.b16 %v230
  %v910 = vunpack.c.l.b16 %v231
  %v911 = vunpack.c.l.b16 %v232
  %v912 = vunpack.c.l.b16 %v233
  %v913 = vunpack.c.l.b16 %v234
  %v914 = vunpack.c.l.b16 %v235
  %v915 = vunpack.c.l.b16 %v236
  %v916 = vunpack.c.l.b16 %v237
  %v917 = vunpack.c.l.b16 %v238
  %v918 = vunpack.c.l.b16 %v239
  %v919 = vunpack.c.l.b16 %v240
  %v920 = vunpack.c.l.b16 %v241
  %v921 = vunpack.c.l.b16 %v242
  %v922 = vunpack.c.l.b16 %v243
  %v923 = vunpack.c.l.b16 %v244
  %v924 = vunpack.c.l.b16 %v245
  %v925 = vunpack.c.l.b16 %v246
  %v926 = vunpack.c.l.b16 %v247
  %v927 = vunpack.c.l.b16 %v248
  %v928 = vunpack.c.l.b16 %v249
  %v929 = vunpack.c.l.b16 %v250
  %v930 = vunpack.c.l.b16 %v251
  %v931 = vunpack.c.l.b16 %v252
  %v932 = vunpack.c.l.b16 %v253
  %v933 = vunpack.c.l.b16 %v254
  %v934 = vunpack.c.l.b16 %v255
  %v935 = vunpack.c.l.b16 %v256
  %v936 = vunpack.c.l.b16 %v257
  %v937 = vunpack.c.l.b16 %v258
  %v938 = vunpack.c.l.b16 %v259
  %v939 = vunpack.c.l.b16 %v260
  %v940 = vunpack.c.l.b16 %v261
  %v941 = vunpack.c.l.b16 %v262
  %v942 = vunpack.c.l.b16 %v263
  %v943 = vunpack.c.l.b16 %v264
  %v944 = vunpack.c.l.b16 %v265
  %v945 = vunpack.c.l.b16 %v266
  %v946 = vunpack.c.l.b16 %v267
  %v947 = vunpack.c.l.b16 %v268
  %v948 = vunpack.c.l.b16 %v269
  %v949 = vunpack.c.l.b16 %v270
  %v950 = vunpack.c.l.b16 %v271
  %v951 = vunpack.c.l.b16 %v272
  %v952 = vunpack.c.l.b16 %v273
  %v953 = vunpack.c.l.b16 %v274
  %v954 = vunpack.c.l.b16 %v275
  %v955 = vunpack.c.l.b16 %v276
  %v956 = vunpack.c.l.b16 %v277
  %v957 = vunpack.c.l.b16 %v278
  %v958 = vunpack.c.l.b16 %v279
  %v959 = vunpack.c.l.b16 %v280
  %v960 = vunpack.c.l.b16 %v281
  %v961 = vunpack.c.l.b16 %v282
  %v962 = vunpack.c.l.b16 %v283
  %v963 = vunpack.c.l.b16 %v284
  %v964 = vunpack.c.l.b16 %v285
  %v965 = vunpack.c.l.b16 %v286
  %v966 = vunpack.c.l.b16 %v287
  %v967 = vunpack.c.l.b16 %v288
  %v968 = vunpack.c.l.b16 %v289
  %v969 = vunpack.c.l.b16 %v290
  %v970 = vunpack.c.l.b16 %v291
  %v971 = vunpack.c.l.b16 %v292
  %v972 = vunpack.c.l.b16 %v293
  %v973 = vunpack.c.l.b16 %v294
  %v974 = vunpack.c.l.b16 %v295
  %v975 = vunpack.c.l.b16 %v296
  %v976 = vunpack.c.l.b16 %v297
  %v977 = vunpack.c.l.b16 %v298
  %v978 = vunpack.c.l.b16 %v299
  %v979 = vunpack.c.l.b16 %v300
  %v980 = vunpack.c.l.b16 %v301
  %v981 = vunpack.c.l.b16 %v302
  %v982 = vunpack.c.l.b16 %v303
  %v983 = vunpack.c.l.b16 %v304
  %v984 = vunpack.c.l.b16 %v305
  %v985 = vunpack.c.l.b16 %v306
  %v986 = vunpack.c.l.b16 %v307
  %v987 = vunpack.c.l.b16 %v308
  %v988 = vpack.c.b16 %v733, %v732
  %v989 = vpack.c.b16 %v735, %v734
  %v990 = vpack.c.b16 %v737, %v736
  %v991 = vpack.c.b16 %v739, %v738
  %v992 = vpack.c.b16 %v741, %v740
  %v993 = vpack.c.b16 %v743, %v742
  %v994 = vpack.c.b16 %v745, %v744
  %v995 = vpack.c.b16 %v747, %v746
  %v996 = vpack.c.b16 %v749, %v748
  %v997 = vpack.c.b16 %v751, %v750
  %v998 = vpack.c.b16 %v753, %v752
  %v999 = vpack.c.b16 %v755, %v754
  %v1000 = vpack.c.b16 %v757, %v756
  %v1001 = vpack.c.b16 %v759, %v758
  %v1002 = vpack.c.b16 %v761, %v760
  %v1003 = vpack.c.b16 %v763, %v762
  %v1004 = vpack.c.b16 %v765, %v764
  %v1005 = vpack.c.b16 %v767, %v766
  %v1006 = vpack.c.b16 %v769, %v768
  %v1007 = vpack.c.b16 %v771, %v770
  %v1008 = vpack.c.b16 %v773, %v772
  %v1009 = vpack.c.b16 %v775, %v774
  %v1010 = vpack.c.b16 %v777, %v776
  %v1011 = vpack.c.b16 %v779, %v778
  %v1012 = vpack.c.b16 %v781, %v780
  %v1013 = vpack.c.b16 %v783, %v782
  %v1014 = vpack.c.b16 %v785, %v784
  %v1015 = vpack.c.b16 %v787, %v786
  %v1016 = vpack.c.b16 %v789, %v788
  %v1017 = vpack.c.b16 %v791, %v790
  %v1018 = vpack.c.b16 %v793, %v792
  %v1019 = vpack.c.b16 %v795, %v794
  %v1020 = vpack.c.b16 %v797, %v796
  %v1021 = vpack.c.b16 %v799, %v798
  %v1022 = vpack.c.b16 %v801, %v800
  %v1023 = vpack.c.b16 %v803, %v802
  %v1024 = vpack.c.b16 %v805, %v804
  %v1025 = vpack.c.b16 %v807, %v806
  %v1026 = vpack.c.b16 %v809, %v808
  %v1027 = vpack.c.b16 %v811, %v810
  %v1028 = vpack.c.b16 %v813, %v812
  %v1029 = vpack.c.b16 %v815, %v814
  %v1030 = vpack.c.b16 %v817, %v816
  %v1031 = vpack.c.b16 %v819, %v818
  %v1032 = vpack.c.b16 %v821, %v820
  %v1033 = vpack.c.b16 %v823, %v822
  %v1034 = vpack.c.b16 %v825, %v824
  %v1035 = vpack.c.b16 %v827, %v826
  %v1036 = vpack.c.b16 %v829, %v828
  %v1037 = vpack.c.b16 %v831, %v830
  %v1038 = vpack.c.b16 %v833, %v832
  %v1039 = vpack.c.b16 %v835, %v834
  %v1040 = vpack.c.b16 %v837, %v836
  %v1041 = vpack.c.b16 %v839, %v838
  %v1042 = vpack.c.b16 %v841, %v840
  %v1043 = vpack.c.b16 %v843, %v842
  %v1044 = vpack.c.b16 %v845, %v844
  %v1045 = vpack.c.b16 %v847, %v846
  %v1046 = vpack.c.b16 %v849, %v848
  %v1047 = vpack.c.b16 %v851, %v850
  %v1048 = vpack.c.b16 %v853, %v852
  %v1049 = vpack.c.b16 %v855, %v854
  %v1050 = vpack.c.b16 %v857, %v856
  %v1051 = vpack.c.b16 %v859, %v858
  %v1052 = vpack.c.b16 %v861, %v860
  %v1053 = vpack.c.b16 %v863, %v862
  %v1054 = vpack.c.b16 %v865, %v864
  %v1055 = vpack.c.b16 %v867, %v866
  %v1056 = vpack.c.b16 %v869, %v868
  %v1057 = vpack.c.b16 %v871, %v870
  %v1058 = vpack.c.b16 %v873, %v872
  %v1059 = vpack.c.b16 %v875, %v874
  %v1060 = vpack.c.b16 %v877, %v876
  %v1061 = vpack.c.b16 %v879, %v878
  %v1062 = vpack.c.b16 %v881, %v880
  %v1063 = vpack.c.b16 %v883, %v882
  %v1064 = vpack.c.b16 %v885, %v884
  %v1065 = vpack.c.b16 %v887, %v886
  %v1066 = vpack.c.b16 %v889, %v888
  %v1067 = vpack.c.b16 %v891, %v890
  %v1068 = vpack.c.b16 %v893, %v892
  %v1069 = vpack.c.b16 %v895, %v894
  %v1070 = vpack.c.b16 %v897, %v896
  %v1071 = vpack.c.b16 %v899, %v898
  %v1072 = vpack.c.b16 %v901, %v900
  %v1073 = vpack.c.b16 %v903, %v902
  %v1074 = vpack.c.b16 %v905, %v904
  %v1075 = vpack.c.b16 %v907, %v906
  %v1076 = vpack.c.b16 %v909, %v908
  %v1077 = vpack.c.b16 %v911, %v910
  %v1078 = vpack.c.b16 %v913, %v912
  %v1079 = vpack.c.b16 %v915, %v914
  %v1080 = vpack.c.b16 %v917, %v916
  %v1081 = vpack.c.b16 %v919, %v918
  %v1082 = vpack.c.b16 %v921, %v920
  %v1083 = vpack.c.b16 %v923, %v922
  %v1084 = vpack.c.b16 %v925, %v924
  %v1085 = vpack.c.b16 %v927, %v926
  %v1086 = vpack.c.b16 %v929, %v928
  %v1087 = vpack.c.b16 %v931, %v930
  %v1088 = vpack.c.b16 %v933, %v932
  %v1089 = vpack.c.b16 %v935, %v934
  %v1090 = vpack.c.b16 %v937, %v936
  %v1091 = vpack.c.b16 %v939, %v938
  %v1092 = vpack.c.b16 %v941, %v940
  %v1093 = vpack.c.b16 %v943, %v942
  %v1094 = vpack.c.b16 %v945, %v944
  %v1095 = vpack.c.b16 %v947, %v946
  %v1096 = vpack.c.b16 %v949, %v948
  %v1097 = vpack.c.b16 %v951, %v950
  %v1098 = vpack.c.b16 %v953, %v952
  %v1099 = vpack.c.b16 %v955, %v954
  %v1100 = vpack.c.b16 %v957, %v956
  %v1101 = vpack.c.b16 %v959, %v958
  %v1102 = vpack.c.b16 %v961, %v960
  %v1103 = vpack.c.b16 %v963, %v962
  %v1104 = vpack.c.b16 %v965, %v964
  %v1105 = vpack.c.b16 %v967, %v966
  %v1106 = vpack.c.b16 %v969, %v968
  %v1107 = vpack.c.b16 %v971, %v970
  %v1108 = vpack.c.b16 %v973, %v972
  %v1109 = vpack.c.b16 %v975, %v974
  %v1110 = vpack.c.b16 %v977, %v976
  %v1111 = vpack.c.b16 %v979, %v978
  %v1112 = vpack.c.b16 %v981, %v980
  %v1113 = vpack.c.b16 %v983, %v982
  %v1114 = vpack.c.b16 %v985, %v984
  %v1115 = vpack.c.b16 %v987, %v986
  %1244 = vmatprep.subr.bf16.mxu0 0
  %1245 = vmatpush1.bf16.msra.mxu0 %v995
  %1246 = vmatprep.subr.bf16.mxu0 0
  %1247 = vmatpush1.bf16.msra.mxu0 %v994
  %1248 = vmatprep.subr.bf16.mxu0 0
  %1249 = vmatpush1.bf16.msra.mxu0 %v993
  %1250 = vmatprep.subr.bf16.mxu0 0
  %1251 = vmatpush1.bf16.msra.mxu0 %v992
  %1252 = vmatprep.subr.bf16.mxu0 0
  %1253 = vmatpush1.bf16.msra.mxu0 %v991
  %1254 = vmatprep.subr.bf16.mxu0 0
  %1255 = vmatpush1.bf16.msra.mxu0 %v990
  %1256 = vmatprep.subr.bf16.mxu0 0
  %1257 = vmatpush1.bf16.msra.mxu0 %v989
  %1258 = vmatprep.subr.bf16.mxu0 0
  %1259 = vmatpush1.bf16.msra.mxu0 %v988
  %1260 = vmatprep.subr.bf16.mxu0 0
  %1261 = vmatpush2.bf16.msra.mxu0 %v1003
  %1262 = vmatprep.subr.bf16.mxu0 0
  %1263 = vmatpush2.bf16.msra.mxu0 %v1002
  %1264 = vmatprep.subr.bf16.mxu0 0
  %1265 = vmatpush2.bf16.msra.mxu0 %v1001
  %1266 = vmatprep.subr.bf16.mxu0 0
  %1267 = vmatpush2.bf16.msra.mxu0 %v1000
  %1268 = vmatprep.subr.bf16.mxu0 0
  %1269 = vmatpush2.bf16.msra.mxu0 %v999
  %1270 = vmatprep.subr.bf16.mxu0 0
  %1271 = vmatpush2.bf16.msra.mxu0 %v998
  %1272 = vmatprep.subr.bf16.mxu0 0
  %1273 = vmatpush2.bf16.msra.mxu0 %v997
  %1274 = vmatprep.subr.bf16.mxu0 0
  %1275 = vmatpush2.bf16.msra.mxu0 %v996
  %1276 = vmatprep.mubr.bf16.mxu0 %v413
  %1277 = vmatmul.mubr.bf16.gmra.mxu0 %v412
  %v1278 = vpop.f32.mrf.mxu0
  %v1279 = vadd.f32 %v314, %v1278
  %v1280 = vpop.f32.mrf.mxu0
  %v1281 = vpop.f32.mrf.mxu0
  %v1282 = vadd.f32 %v314, %v1281
  %v1283 = vpop.f32.mrf.mxu0
  %1284 = vmatprep.mubr.bf16.mxu0 %v429
  %1285 = vmatmul.mubr.bf16.gmra.mxu0 %v428
  %v1286 = vpop.f32.mrf.mxu0
  %v1287 = vadd.f32 %v314, %v1286
  %v1288 = vpop.f32.mrf.mxu0
  %v1289 = vpop.f32.mrf.mxu0
  %v1290 = vadd.f32 %v314, %v1289
  %v1291 = vpop.f32.mrf.mxu0
  %1292 = vdwg.mxu0
  %1293 = vmatprep.subr.bf16.mxu0 0
  %1294 = vmatpush1.bf16.msra.mxu0 %v1011
  %1295 = vmatprep.subr.bf16.mxu0 0
  %1296 = vmatpush1.bf16.msra.mxu0 %v1010
  %1297 = vmatprep.subr.bf16.mxu0 0
  %1298 = vmatpush1.bf16.msra.mxu0 %v1009
  %1299 = vmatprep.subr.bf16.mxu0 0
  %1300 = vmatpush1.bf16.msra.mxu0 %v1008
  %1301 = vmatprep.subr.bf16.mxu0 0
  %1302 = vmatpush1.bf16.msra.mxu0 %v1007
  %1303 = vmatprep.subr.bf16.mxu0 0
  %1304 = vmatpush1.bf16.msra.mxu0 %v1006
  %1305 = vmatprep.subr.bf16.mxu0 0
  %1306 = vmatpush1.bf16.msra.mxu0 %v1005
  %1307 = vmatprep.subr.bf16.mxu0 0
  %1308 = vmatpush1.bf16.msra.mxu0 %v1004
  %1309 = vmatprep.subr.bf16.mxu0 0
  %1310 = vmatpush2.bf16.msra.mxu0 %v1019
  %1311 = vmatprep.subr.bf16.mxu0 0
  %1312 = vmatpush2.bf16.msra.mxu0 %v1018
  %1313 = vmatprep.subr.bf16.mxu0 0
  %1314 = vmatpush2.bf16.msra.mxu0 %v1017
  %1315 = vmatprep.subr.bf16.mxu0 0
  %1316 = vmatpush2.bf16.msra.mxu0 %v1016
  %1317 = vmatprep.subr.bf16.mxu0 0
  %1318 = vmatpush2.bf16.msra.mxu0 %v1015
  %1319 = vmatprep.subr.bf16.mxu0 0
  %1320 = vmatpush2.bf16.msra.mxu0 %v1014
  %1321 = vmatprep.subr.bf16.mxu0 0
  %1322 = vmatpush2.bf16.msra.mxu0 %v1013
  %1323 = vmatprep.subr.bf16.mxu0 0
  %1324 = vmatpush2.bf16.msra.mxu0 %v1012
  %1325 = vmatprep.mubr.bf16.mxu0 %v415
  %1326 = vmatmul.mubr.bf16.gmra.mxu0 %v414
  %v1327 = vpop.f32.mrf.mxu0
  %v1328 = vadd.f32 %v1279, %v1327
  %v1329 = vpop.f32.mrf.mxu0
  %v1330 = vpop.f32.mrf.mxu0
  %v1331 = vadd.f32 %v1282, %v1330
  %v1332 = vpop.f32.mrf.mxu0
  %1333 = vmatprep.mubr.bf16.mxu0 %v431
  %1334 = vmatmul.mubr.bf16.gmra.mxu0 %v430
  %v1335 = vpop.f32.mrf.mxu0
  %v1336 = vadd.f32 %v1287, %v1335
  %v1337 = vpop.f32.mrf.mxu0
  %v1338 = vpop.f32.mrf.mxu0
  %v1339 = vadd.f32 %v1290, %v1338
  %v1340 = vpop.f32.mrf.mxu0
  %1341 = vdwg.mxu0
  %1342 = vmatprep.subr.bf16.mxu0 0
  %1343 = vmatpush1.bf16.msra.mxu0 %v1027
  %1344 = vmatprep.subr.bf16.mxu0 0
  %1345 = vmatpush1.bf16.msra.mxu0 %v1026
  %1346 = vmatprep.subr.bf16.mxu0 0
  %1347 = vmatpush1.bf16.msra.mxu0 %v1025
  %1348 = vmatprep.subr.bf16.mxu0 0
  %1349 = vmatpush1.bf16.msra.mxu0 %v1024
  %1350 = vmatprep.subr.bf16.mxu0 0
  %1351 = vmatpush1.bf16.msra.mxu0 %v1023
  %1352 = vmatprep.subr.bf16.mxu0 0
  %1353 = vmatpush1.bf16.msra.mxu0 %v1022
  %1354 = vmatprep.subr.bf16.mxu0 0
  %1355 = vmatpush1.bf16.msra.mxu0 %v1021
  %1356 = vmatprep.subr.bf16.mxu0 0
  %1357 = vmatpush1.bf16.msra.mxu0 %v1020
  %1358 = vmatprep.subr.bf16.mxu0 0
  %1359 = vmatpush2.bf16.msra.mxu0 %v1035
  %1360 = vmatprep.subr.bf16.mxu0 0
  %1361 = vmatpush2.bf16.msra.mxu0 %v1034
  %1362 = vmatprep.subr.bf16.mxu0 0
  %1363 = vmatpush2.bf16.msra.mxu0 %v1033
  %1364 = vmatprep.subr.bf16.mxu0 0
  %1365 = vmatpush2.bf16.msra.mxu0 %v1032
  %1366 = vmatprep.subr.bf16.mxu0 0
  %1367 = vmatpush2.bf16.msra.mxu0 %v1031
  %1368 = vmatprep.subr.bf16.mxu0 0
  %1369 = vmatpush2.bf16.msra.mxu0 %v1030
  %1370 = vmatprep.subr.bf16.mxu0 0
  %1371 = vmatpush2.bf16.msra.mxu0 %v1029
  %1372 = vmatprep.subr.bf16.mxu0 0
  %1373 = vmatpush2.bf16.msra.mxu0 %v1028
  %1374 = vmatprep.mubr.bf16.mxu0 %v417
  %1375 = vmatmul.mubr.bf16.gmra.mxu0 %v416
  %v1376 = vpop.f32.mrf.mxu0
  %v1377 = vadd.f32 %v1328, %v1376
  %v1378 = vpop.f32.mrf.mxu0
  %v1379 = vpop.f32.mrf.mxu0
  %v1380 = vadd.f32 %v1331, %v1379
  %v1381 = vpop.f32.mrf.mxu0
  %1382 = vmatprep.mubr.bf16.mxu0 %v433
  %1383 = vmatmul.mubr.bf16.gmra.mxu0 %v432
  %v1384 = vpop.f32.mrf.mxu0
  %v1385 = vadd.f32 %v1336, %v1384
  %v1386 = vpop.f32.mrf.mxu0
  %v1387 = vpop.f32.mrf.mxu0
  %v1388 = vadd.f32 %v1339, %v1387
  %v1389 = vpop.f32.mrf.mxu0
  %1390 = vdwg.mxu0
  %1391 = vmatprep.subr.bf16.mxu0 0
  %1392 = vmatpush1.bf16.msra.mxu0 %v1043
  %1393 = vmatprep.subr.bf16.mxu0 0
  %1394 = vmatpush1.bf16.msra.mxu0 %v1042
  %1395 = vmatprep.subr.bf16.mxu0 0
  %1396 = vmatpush1.bf16.msra.mxu0 %v1041
  %1397 = vmatprep.subr.bf16.mxu0 0
  %1398 = vmatpush1.bf16.msra.mxu0 %v1040
  %1399 = vmatprep.subr.bf16.mxu0 0
  %1400 = vmatpush1.bf16.msra.mxu0 %v1039
  %1401 = vmatprep.subr.bf16.mxu0 0
  %1402 = vmatpush1.bf16.msra.mxu0 %v1038
  %1403 = vmatprep.subr.bf16.mxu0 0
  %1404 = vmatpush1.bf16.msra.mxu0 %v1037
  %1405 = vmatprep.subr.bf16.mxu0 0
  %1406 = vmatpush1.bf16.msra.mxu0 %v1036
  %1407 = vmatprep.subr.bf16.mxu0 0
  %1408 = vmatpush2.bf16.msra.mxu0 %v1051
  %1409 = vmatprep.subr.bf16.mxu0 0
  %1410 = vmatpush2.bf16.msra.mxu0 %v1050
  %1411 = vmatprep.subr.bf16.mxu0 0
  %1412 = vmatpush2.bf16.msra.mxu0 %v1049
  %1413 = vmatprep.subr.bf16.mxu0 0
  %1414 = vmatpush2.bf16.msra.mxu0 %v1048
  %1415 = vmatprep.subr.bf16.mxu0 0
  %1416 = vmatpush2.bf16.msra.mxu0 %v1047
  %1417 = vmatprep.subr.bf16.mxu0 0
  %1418 = vmatpush2.bf16.msra.mxu0 %v1046
  %1419 = vmatprep.subr.bf16.mxu0 0
  %1420 = vmatpush2.bf16.msra.mxu0 %v1045
  %1421 = vmatprep.subr.bf16.mxu0 0
  %1422 = vmatpush2.bf16.msra.mxu0 %v1044
  %1423 = vmatprep.mubr.bf16.mxu0 %v419
  %1424 = vmatmul.mubr.bf16.gmra.mxu0 %v418
  %v1425 = vpop.f32.mrf.mxu0
  %v1426 = vadd.f32 %v1377, %v1425
  %v1427 = vpop.f32.mrf.mxu0
  %v1428 = vpop.f32.mrf.mxu0
  %v1429 = vadd.f32 %v1380, %v1428
  %v1430 = vpop.f32.mrf.mxu0
  %1431 = vmatprep.mubr.bf16.mxu0 %v435
  %1432 = vmatmul.mubr.bf16.gmra.mxu0 %v434
  %v1433 = vpop.f32.mrf.mxu0
  %v1434 = vadd.f32 %v1385, %v1433
  %v1435 = vpop.f32.mrf.mxu0
  %v1436 = vpop.f32.mrf.mxu0
  %v1437 = vadd.f32 %v1388, %v1436
  %v1438 = vpop.f32.mrf.mxu0
  %1439 = vdwg.mxu0
  %1440 = vmatprep.subr.bf16.mxu0 0
  %1441 = vmatpush1.bf16.msra.mxu0 %v1059
  %1442 = vmatprep.subr.bf16.mxu0 0
  %1443 = vmatpush1.bf16.msra.mxu0 %v1058
  %1444 = vmatprep.subr.bf16.mxu0 0
  %1445 = vmatpush1.bf16.msra.mxu0 %v1057
  %1446 = vmatprep.subr.bf16.mxu0 0
  %1447 = vmatpush1.bf16.msra.mxu0 %v1056
  %1448 = vmatprep.subr.bf16.mxu0 0
  %1449 = vmatpush1.bf16.msra.mxu0 %v1055
  %1450 = vmatprep.subr.bf16.mxu0 0
  %1451 = vmatpush1.bf16.msra.mxu0 %v1054
  %1452 = vmatprep.subr.bf16.mxu0 0
  %1453 = vmatpush1.bf16.msra.mxu0 %v1053
  %1454 = vmatprep.subr.bf16.mxu0 0
  %1455 = vmatpush1.bf16.msra.mxu0 %v1052
  %1456 = vmatprep.subr.bf16.mxu0 0
  %1457 = vmatpush2.bf16.msra.mxu0 %v1067
  %1458 = vmatprep.subr.bf16.mxu0 0
  %1459 = vmatpush2.bf16.msra.mxu0 %v1066
  %1460 = vmatprep.subr.bf16.mxu0 0
  %1461 = vmatpush2.bf16.msra.mxu0 %v1065
  %1462 = vmatprep.subr.bf16.mxu0 0
  %1463 = vmatpush2.bf16.msra.mxu0 %v1064
  %1464 = vmatprep.subr.bf16.mxu0 0
  %1465 = vmatpush2.bf16.msra.mxu0 %v1063
  %1466 = vmatprep.subr.bf16.mxu0 0
  %1467 = vmatpush2.bf16.msra.mxu0 %v1062
  %1468 = vmatprep.subr.bf16.mxu0 0
  %1469 = vmatpush2.bf16.msra.mxu0 %v1061
  %1470 = vmatprep.subr.bf16.mxu0 0
  %1471 = vmatpush2.bf16.msra.mxu0 %v1060
  %1472 = vmatprep.mubr.bf16.mxu0 %v421
  %1473 = vmatmul.mubr.bf16.gmra.mxu0 %v420
  %v1474 = vpop.f32.mrf.mxu0
  %v1475 = vadd.f32 %v1426, %v1474
  %v1476 = vpop.f32.mrf.mxu0
  %v1477 = vpop.f32.mrf.mxu0
  %v1478 = vadd.f32 %v1429, %v1477
  %v1479 = vpop.f32.mrf.mxu0
  %1480 = vmatprep.mubr.bf16.mxu0 %v437
  %1481 = vmatmul.mubr.bf16.gmra.mxu0 %v436
  %v1482 = vpop.f32.mrf.mxu0
  %v1483 = vadd.f32 %v1434, %v1482
  %v1484 = vpop.f32.mrf.mxu0
  %v1485 = vpop.f32.mrf.mxu0
  %v1486 = vadd.f32 %v1437, %v1485
  %v1487 = vpop.f32.mrf.mxu0
  %1488 = vdwg.mxu0
  %1489 = vmatprep.subr.bf16.mxu0 0
  %1490 = vmatpush1.bf16.msra.mxu0 %v1075
  %1491 = vmatprep.subr.bf16.mxu0 0
  %1492 = vmatpush1.bf16.msra.mxu0 %v1074
  %1493 = vmatprep.subr.bf16.mxu0 0
  %1494 = vmatpush1.bf16.msra.mxu0 %v1073
  %1495 = vmatprep.subr.bf16.mxu0 0
  %1496 = vmatpush1.bf16.msra.mxu0 %v1072
  %1497 = vmatprep.subr.bf16.mxu0 0
  %1498 = vmatpush1.bf16.msra.mxu0 %v1071
  %1499 = vmatprep.subr.bf16.mxu0 0
  %1500 = vmatpush1.bf16.msra.mxu0 %v1070
  %1501 = vmatprep.subr.bf16.mxu0 0
  %1502 = vmatpush1.bf16.msra.mxu0 %v1069
  %1503 = vmatprep.subr.bf16.mxu0 0
  %1504 = vmatpush1.bf16.msra.mxu0 %v1068
  %1505 = vmatprep.subr.bf16.mxu0 0
  %1506 = vmatpush2.bf16.msra.mxu0 %v1083
  %1507 = vmatprep.subr.bf16.mxu0 0
  %1508 = vmatpush2.bf16.msra.mxu0 %v1082
  %1509 = vmatprep.subr.bf16.mxu0 0
  %1510 = vmatpush2.bf16.msra.mxu0 %v1081
  %1511 = vmatprep.subr.bf16.mxu0 0
  %1512 = vmatpush2.bf16.msra.mxu0 %v1080
  %1513 = vmatprep.subr.bf16.mxu0 0
  %1514 = vmatpush2.bf16.msra.mxu0 %v1079
  %1515 = vmatprep.subr.bf16.mxu0 0
  %1516 = vmatpush2.bf16.msra.mxu0 %v1078
  %1517 = vmatprep.subr.bf16.mxu0 0
  %1518 = vmatpush2.bf16.msra.mxu0 %v1077
  %1519 = vmatprep.subr.bf16.mxu0 0
  %1520 = vmatpush2.bf16.msra.mxu0 %v1076
  %1521 = vmatprep.mubr.bf16.mxu0 %v423
  %1522 = vmatmul.mubr.bf16.gmra.mxu0 %v422
  %v1523 = vpop.f32.mrf.mxu0
  %v1524 = vadd.f32 %v1475, %v1523
  %v1525 = vpop.f32.mrf.mxu0
  %v1526 = vpop.f32.mrf.mxu0
  %v1527 = vadd.f32 %v1478, %v1526
  %v1528 = vpop.f32.mrf.mxu0
  %1529 = vmatprep.mubr.bf16.mxu0 %v439
  %1530 = vmatmul.mubr.bf16.gmra.mxu0 %v438
  %v1531 = vpop.f32.mrf.mxu0
  %v1532 = vadd.f32 %v1483, %v1531
  %v1533 = vpop.f32.mrf.mxu0
  %v1534 = vpop.f32.mrf.mxu0
  %v1535 = vadd.f32 %v1486, %v1534
  %v1536 = vpop.f32.mrf.mxu0
  %1537 = vdwg.mxu0
  %1538 = vmatprep.subr.bf16.mxu0 0
  %1539 = vmatpush1.bf16.msra.mxu0 %v1091
  %1540 = vmatprep.subr.bf16.mxu0 0
  %1541 = vmatpush1.bf16.msra.mxu0 %v1090
  %1542 = vmatprep.subr.bf16.mxu0 0
  %1543 = vmatpush1.bf16.msra.mxu0 %v1089
  %1544 = vmatprep.subr.bf16.mxu0 0
  %1545 = vmatpush1.bf16.msra.mxu0 %v1088
  %1546 = vmatprep.subr.bf16.mxu0 0
  %1547 = vmatpush1.bf16.msra.mxu0 %v1087
  %1548 = vmatprep.subr.bf16.mxu0 0
  %1549 = vmatpush1.bf16.msra.mxu0 %v1086
  %1550 = vmatprep.subr.bf16.mxu0 0
  %1551 = vmatpush1.bf16.msra.mxu0 %v1085
  %1552 = vmatprep.subr.bf16.mxu0 0
  %1553 = vmatpush1.bf16.msra.mxu0 %v1084
  %1554 = vmatprep.subr.bf16.mxu0 0
  %1555 = vmatpush2.bf16.msra.mxu0 %v1099
  %1556 = vmatprep.subr.bf16.mxu0 0
  %1557 = vmatpush2.bf16.msra.mxu0 %v1098
  %1558 = vmatprep.subr.bf16.mxu0 0
  %1559 = vmatpush2.bf16.msra.mxu0 %v1097
  %1560 = vmatprep.subr.bf16.mxu0 0
  %1561 = vmatpush2.bf16.msra.mxu0 %v1096
  %1562 = vmatprep.subr.bf16.mxu0 0
  %1563 = vmatpush2.bf16.msra.mxu0 %v1095
  %1564 = vmatprep.subr.bf16.mxu0 0
  %1565 = vmatpush2.bf16.msra.mxu0 %v1094
  %1566 = vmatprep.subr.bf16.mxu0 0
  %1567 = vmatpush2.bf16.msra.mxu0 %v1093
  %1568 = vmatprep.subr.bf16.mxu0 0
  %1569 = vmatpush2.bf16.msra.mxu0 %v1092
  %1570 = vmatprep.mubr.bf16.mxu0 %v425
  %1571 = vmatmul.mubr.bf16.gmra.mxu0 %v424
  %v1572 = vpop.f32.mrf.mxu0
  %v1573 = vadd.f32 %v1524, %v1572
  %v1574 = vpop.f32.mrf.mxu0
  %v1575 = vpop.f32.mrf.mxu0
  %v1576 = vadd.f32 %v1527, %v1575
  %v1577 = vpop.f32.mrf.mxu0
  %1578 = vmatprep.mubr.bf16.mxu0 %v441
  %1579 = vmatmul.mubr.bf16.gmra.mxu0 %v440
  %v1580 = vpop.f32.mrf.mxu0
  %v1581 = vadd.f32 %v1532, %v1580
  %v1582 = vpop.f32.mrf.mxu0
  %v1583 = vpop.f32.mrf.mxu0
  %v1584 = vadd.f32 %v1535, %v1583
  %v1585 = vpop.f32.mrf.mxu0
  %1586 = vdwg.mxu0
  %1587 = vmatprep.subr.bf16.mxu0 0
  %1588 = vmatpush1.bf16.msra.mxu0 %v1107
  %1589 = vmatprep.subr.bf16.mxu0 0
  %1590 = vmatpush1.bf16.msra.mxu0 %v1106
  %1591 = vmatprep.subr.bf16.mxu0 0
  %1592 = vmatpush1.bf16.msra.mxu0 %v1105
  %1593 = vmatprep.subr.bf16.mxu0 0
  %1594 = vmatpush1.bf16.msra.mxu0 %v1104
  %1595 = vmatprep.subr.bf16.mxu0 0
  %1596 = vmatpush1.bf16.msra.mxu0 %v1103
  %1597 = vmatprep.subr.bf16.mxu0 0
  %1598 = vmatpush1.bf16.msra.mxu0 %v1102
  %1599 = vmatprep.subr.bf16.mxu0 0
  %1600 = vmatpush1.bf16.msra.mxu0 %v1101
  %1601 = vmatprep.subr.bf16.mxu0 0
  %1602 = vmatpush1.bf16.msra.mxu0 %v1100
  %1603 = vmatprep.subr.bf16.mxu0 0
  %1604 = vmatpush2.bf16.msra.mxu0 %v1115
  %1605 = vmatprep.subr.bf16.mxu0 0
  %1606 = vmatpush2.bf16.msra.mxu0 %v1114
  %1607 = vmatprep.subr.bf16.mxu0 0
  %1608 = vmatpush2.bf16.msra.mxu0 %v1113
  %1609 = vmatprep.subr.bf16.mxu0 0
  %1610 = vmatpush2.bf16.msra.mxu0 %v1112
  %1611 = vmatprep.subr.bf16.mxu0 0
  %1612 = vmatpush2.bf16.msra.mxu0 %v1111
  %1613 = vmatprep.subr.bf16.mxu0 0
  %1614 = vmatpush2.bf16.msra.mxu0 %v1110
  %1615 = vmatprep.subr.bf16.mxu0 0
  %1616 = vmatpush2.bf16.msra.mxu0 %v1109
  %1617 = vmatprep.subr.bf16.mxu0 0
  %1618 = vmatpush2.bf16.msra.mxu0 %v1108
  %1619 = vmatprep.mubr.bf16.mxu0 %v427
  %1620 = vmatmul.mubr.bf16.gmra.mxu0 %v426
  %v1621 = vpop.f32.mrf.mxu0
  %v1622 = vadd.f32 %v1573, %v1621
  %v1623 = vpop.f32.mrf.mxu0
  %v1624 = vpop.f32.mrf.mxu0
  %v1625 = vadd.f32 %v1576, %v1624
  %v1626 = vpop.f32.mrf.mxu0
  %1627 = vmatprep.mubr.bf16.mxu0 %v443
  %1628 = vmatmul.mubr.bf16.gmra.mxu0 %v442
  %v1629 = vpop.f32.mrf.mxu0
  %v1630 = vadd.f32 %v1581, %v1629
  %v1631 = vpop.f32.mrf.mxu0
  %v1632 = vpop.f32.mrf.mxu0
  %v1633 = vadd.f32 %v1584, %v1632
  %v1634 = vpop.f32.mrf.mxu0
  %1635 = vdwg.mxu0
  %v1636 = vmax.f32 %v1622, 0.0
  %v1637 = vmax.f32 %v1625, 0.0
  %v1638 = vmax.f32 %v1630, 0.0
  %v1639 = vmax.f32 %v1633, 0.0
  %vm1640 = vcmask 523264
  %v1641 = vsel %vm1640, %v1636, 0.0
  %v1642 = vsel %vm1640, %v1637, 0.0
  %v1643 = vadd.f32 %v1641, %v1642
  %v1644 = vsel %vm1640, %v1638, 0.0
  %v1645 = vadd.f32 %v1643, %v1644
  %v1646 = vsel %vm1640, %v1639, 0.0
  %v1647 = vadd.f32 %v1645, %v1646
  %v1648 = vrot.slane %v1647, 4
  %v1649 = vadd.f32 %v1647, %v1648
  %v1650 = vrot.slane %v1649, 2
  %v1651 = vadd.f32 %v1649, %v1650
  %v1652 = vrot.slane %v1651, 1
  %v1653 = vadd.f32 %v1651, %v1652
  %v1654 = vmul.f32 %v1653, 0.03125
  %v1655 = vmul.f32 %v1636, %v1636
  %v1656 = vmul.f32 %v1637, %v1637
  %v1657 = vmul.f32 %v1638, %v1638
  %v1658 = vmul.f32 %v1639, %v1639
  %v1659 = vsel %vm1640, %v1655, 0.0
  %v1660 = vsel %vm1640, %v1656, 0.0
  %v1661 = vadd.f32 %v1659, %v1660
  %v1662 = vsel %vm1640, %v1657, 0.0
  %v1663 = vadd.f32 %v1661, %v1662
  %v1664 = vsel %vm1640, %v1658, 0.0
  %v1665 = vadd.f32 %v1663, %v1664
  %v1666 = vrot.slane %v1665, 4
  %v1667 = vadd.f32 %v1665, %v1666
  %v1668 = vrot.slane %v1667, 2
  %v1669 = vadd.f32 %v1667, %v1668
  %v1670 = vrot.slane %v1669, 1
  %v1671 = vadd.f32 %v1669, %v1670
  %v1672 = vmul.f32 %v1671, 0.03125
  %v1673 = vmul.f32 %v1654, %v1654
  %v1674 = vsub.f32 %v1672, %v1673
  %v1675 = vld [vmem:[%s3] sm:$0x1]
  %v1676 = vadd.f32 %v1674, 1e-05
  %v1677 = vrsqrt.pop %v1676
  %v1678 = vmul.f32 %v1675, %v1677
  %v1679 = vld [vmem:[%s4] sm:$0x1]
  %v1680 = vmul.f32 %v1654, %v1678
  %v1681 = vsub.f32 %v1679, %v1680
  %v1683 = vlaneseq
  %v1684 = vshrl.u32 %v1683, 7
  %v1685 = vsub.s32 0, %v1684
  %v1686 = vrot.slane %v1678, %v1685
  %v1688 = vmul.f32 %v1636, %v1686
  %v1689 = vmul.f32 %v1637, %v1686
  %v1690 = vmul.f32 %v1638, %v1686
  %v1691 = vmul.f32 %v1639, %v1686
  %v1693 = vlaneseq
  %v1694 = vshrl.u32 %v1693, 7
  %v1695 = vsub.s32 0, %v1694
  %v1696 = vrot.slane %v1681, %v1695
  %v1698 = vadd.f32 %v1688, %v1696
  %v1699 = vadd.f32 %v1689, %v1696
  %v1700 = vadd.f32 %v1690, %v1696
  %v1701 = vadd.f32 %v1691, %v1696
  %1702 = vst.msk [vmem:[%s5] sm:$0xff] %vm1640, %v1698
  %1703 = vst.msk [vmem:[%s5 + $0x8] sm:$0xff] %vm1640, %v1699
  %1704 = vst.msk [vmem:[%s5 + $0x10] sm:$0xff] %vm1640, %v1700
  %1705 = vst.msk [vmem:[%s5 + $0x18] sm:$0xff] %vm1640, %v1701
  // Predicated region
  $region22: #{baseline_forward.11} parent=0 // pred_check
    _
  $region23: #{baseline_forward.11} parent=0 // pred_check_branch
    %1707 = sbr.rel (0) target = $region25
  $region24: #{baseline_forward.11} parent=0 // pred_region
    _
  $region25: #{baseline_forward.11} parent=0 // pred_fallthru
    _
  // Predicated region
  $region26: #{baseline_forward.11} parent=0 // pred_check
    _
  $region27: #{baseline_forward.11} parent=0 // pred_check_branch
    %1709 = sbr.rel (0) target = $region29
  $region28: #{baseline_forward.11} parent=0 // pred_region
    _
  $region29: #{baseline_forward.11} parent=0 // pred_fallthru
    _

// kernel: baseline_forward.13
$region0: #{baseline_forward.13}
  #allocation0 [shape = 'u32[]', space=smem, size = 0x4, offset = 0x4, fixed_abs, tag = 'smem constant byte address 0x4 - core index']
  #allocation1 [shape = 'u32[144,128]{1,0:T(1,128)}', space=vmem, size = 0x12000, scoped, tag = 'internal scratch']
  %s0 = inlined_call_operand.vmem [shape: f32[64,64], index: 0, kind: input, shape index: {}]
  %s1 = inlined_call_operand.vmem [shape: f32[4,64], index: 1, kind: input, shape index: {}]
  %s2 = inlined_call_operand.vmem [shape: f32[4,1], index: 2, kind: input, shape index: {}]
  %s3 = inlined_call_operand.vmem [shape: f32[64,1024], index: 3, kind: input, shape index: {}]
  %s4 = inlined_call_operand.vmem [shape: f32[4,1024], index: 4, kind: output, shape index: {}]
  %s5 = sld [smem:[#allocation0]]
  $region26: #{baseline_forward.13} parent=0
    _
  %s7 = ssub.s32 1, %s5
  %s8 = scalar_select 0, %s7, %s5
  // Predicated region
  $region2: #{baseline_forward.13} parent=0 // pred_check
    _
  $region3: #{baseline_forward.13} parent=0 // pred_check_branch
    %10 = sbr.rel (0) target = $region5
  $region4: #{baseline_forward.13} parent=0 // pred_region
    _
  $region5: #{baseline_forward.13} parent=0 // pred_fallthru
    _
  // Predicated region
  $region6: #{baseline_forward.13} parent=0 // pred_check
    _
  $region7: #{baseline_forward.13} parent=0 // pred_check_branch
    %12 = sbr.rel (0) target = $region9
  $region8: #{baseline_forward.13} parent=0 // pred_region
    _
  $region9: #{baseline_forward.13} parent=0 // pred_fallthru
    _
  // Predicated region
  $region10: #{baseline_forward.13} parent=0 // pred_check
    _
  $region11: #{baseline_forward.13} parent=0 // pred_check_branch
    %14 = sbr.rel (0) target = $region13
  $region12: #{baseline_forward.13} parent=0 // pred_region
    _
  $region13: #{baseline_forward.13} parent=0 // pred_fallthru
    _
  // Predicated region
  $region14: #{baseline_forward.13} parent=0 // pred_check
    _
  $region15: #{baseline_forward.13} parent=0 // pred_check_branch
    %16 = sbr.rel (0) target = $region17
  $region16: #{baseline_forward.13} parent=0 // pred_region
    _
  $region17: #{baseline_forward.13} parent=0 // pred_fallthru
    _
  %v17 = vld [vmem:[%s1] sm:$0xf]
  %v18 = vld [vmem:[%s0] sm:$0xff]
  %v19 = vld [vmem:[%s0 + $0x8] sm:$0xff]
  %v20 = vld [vmem:[%s0 + $0x10] sm:$0xff]
  %v21 = vld [vmem:[%s0 + $0x18] sm:$0xff]
  %v22 = vld [vmem:[%s0 + $0x20] sm:$0xff]
  %v23 = vld [vmem:[%s0 + $0x28] sm:$0xff]
  %v24 = vld [vmem:[%s0 + $0x30] sm:$0xff]
  %v25 = vld [vmem:[%s0 + $0x38] sm:$0xff]
  %v26 = vld [vmem:[%s2] sm:$0xf]
  %28 = vset.pattern.permute.xlu0 0
  %29 = vperm.xlu0 %28, %v26
  %v30 = vpop.permute.xlu0 %29
  %vm32 = vcmask 523264
  %v34 = vsel %vm32, %v17, 0
  %36 = vmatprep.subr.mxu0 0.0
  %37 = vmatpush1.msra.mxu0 0.0
  %38 = vmatprep.subr.mxu0 0.0
  %39 = vmatpush1.msra.mxu0 0.0
  %40 = vmatprep.subr.mxu0 0.0
  %41 = vmatpush1.msra.mxu0 0.0
  %42 = vmatprep.subr.mxu0 0.0
  %43 = vmatpush1.msra.mxu0 0.0
  %44 = vmatprep.subr.mxu0 0.0
  %45 = vmatpush1.msra.mxu0 0.0
  %46 = vmatprep.subr.mxu0 0.0
  %47 = vmatpush1.msra.mxu0 0.0
  %48 = vmatprep.subr.mxu0 0.0
  %49 = vmatpush1.msra.mxu0 0.0
  %50 = vmatprep.subr.mxu0 0.0
  %51 = vmatpush1.msra.mxu0 0.0
  %52 = vmatprep.subr.mxu0 0.0
  %53 = vmatpush1.msra.mxu0 %v25
  %54 = vmatprep.subr.mxu0 0.0
  %55 = vmatpush1.msra.mxu0 %v24
  %56 = vmatprep.subr.mxu0 0.0
  %57 = vmatpush1.msra.mxu0 %v23
  %58 = vmatprep.subr.mxu0 0.0
  %59 = vmatpush1.msra.mxu0 %v22
  %60 = vmatprep.subr.mxu0 0.0
  %61 = vmatpush1.msra.mxu0 %v21
  %62 = vmatprep.subr.mxu0 0.0
  %63 = vmatpush1.msra.mxu0 %v20
  %64 = vmatprep.subr.mxu0 0.0
  %65 = vmatpush1.msra.mxu0 %v19
  %66 = vmatprep.subr.mxu0 0.0
  %67 = vmatpush1.msra.mxu0 %v18
  %68 = vmatprep.subr.mxu0 0.0
  %69 = vmatpush2.msra.mxu0 0.0
  %70 = vmatprep.subr.mxu0 0.0
  %71 = vmatpush2.msra.mxu0 0.0
  %72 = vmatprep.subr.mxu0 0.0
  %73 = vmatpush2.msra.mxu0 0.0
  %74 = vmatprep.subr.mxu0 0.0
  %75 = vmatpush2.msra.mxu0 0.0
  %76 = vmatprep.subr.mxu0 0.0
  %77 = vmatpush2.msra.mxu0 0.0
  %78 = vmatprep.subr.mxu0 0.0
  %79 = vmatpush2.msra.mxu0 0.0
  %80 = vmatprep.subr.mxu0 0.0
  %81 = vmatpush2.msra.mxu0 0.0
  %82 = vmatprep.subr.mxu0 0.0
  %83 = vmatpush2.msra.mxu0 0.0
  %84 = vmatprep.subr.mxu0 0.0
  %85 = vmatpush2.msra.mxu0 0.0
  %86 = vmatprep.subr.mxu0 0.0
  %87 = vmatpush2.msra.mxu0 0.0
  %88 = vmatprep.subr.mxu0 0.0
  %89 = vmatpush2.msra.mxu0 0.0
  %90 = vmatprep.subr.mxu0 0.0
  %91 = vmatpush2.msra.mxu0 0.0
  %92 = vmatprep.subr.mxu0 0.0
  %93 = vmatpush2.msra.mxu0 0.0
  %94 = vmatprep.subr.mxu0 0.0
  %95 = vmatpush2.msra.mxu0 0.0
  %96 = vmatprep.subr.mxu0 0.0
  %97 = vmatpush2.msra.mxu0 0.0
  %98 = vmatprep.subr.mxu0 0.0
  %99 = vmatpush2.msra.mxu0 0.0
  %100 = vmatprep.mubr.f32.mxu0 0.0
  %101 = vmatmul.mubr.f32.gmra.mxu0 %v34
  %v102 = vpop.f32.mrf.mxu0
  %v103 = vadd.f32 %v30, %v102
  %v104 = vpop.f32.mrf.mxu0
  %105 = vdwg.mxu0
  %v106 = vld [vmem:[%s3] sm:$0xff]
  %v107 = vld [vmem:[%s3 + $0x8] sm:$0xff]
  %v108 = vld [vmem:[%s3 + $0x10] sm:$0xff]
  %v109 = vld [vmem:[%s3 + $0x18] sm:$0xff]
  %v110 = vld [vmem:[%s3 + $0x20] sm:$0xff]
  %v111 = vld [vmem:[%s3 + $0x28] sm:$0xff]
  %v112 = vld [vmem:[%s3 + $0x30] sm:$0xff]
  %v113 = vld [vmem:[%s3 + $0x38] sm:$0xff]
  %v114 = vld [vmem:[%s3 + $0x40] sm:$0xff]
  %v115 = vld [vmem:[%s3 + $0x48] sm:$0xff]
  %v116 = vld [vmem:[%s3 + $0x50] sm:$0xff]
  %v117 = vld [vmem:[%s3 + $0x58] sm:$0xff]
  %v118 = vld [vmem:[%s3 + $0x60] sm:$0xff]
  %v119 = vld [vmem:[%s3 + $0x68] sm:$0xff]
  %v120 = vld [vmem:[%s3 + $0x70] sm:$0xff]
  %v121 = vld [vmem:[%s3 + $0x78] sm:$0xff]
  %v122 = vld [vmem:[%s3 + $0x80] sm:$0xff]
  %v123 = vld [vmem:[%s3 + $0x88] sm:$0xff]
  %v124 = vld [vmem:[%s3 + $0x90] sm:$0xff]
  %v125 = vld [vmem:[%s3 + $0x98] sm:$0xff]
  %v126 = vld [vmem:[%s3 + $0xa0] sm:$0xff]
  %v127 = vld [vmem:[%s3 + $0xa8] sm:$0xff]
  %v128 = vld [vmem:[%s3 + $0xb0] sm:$0xff]
  %v129 = vld [vmem:[%s3 + $0xb8] sm:$0xff]
  %v130 = vld [vmem:[%s3 + $0xc0] sm:$0xff]
  %v131 = vld [vmem:[%s3 + $0xc8] sm:$0xff]
  %v132 = vld [vmem:[%s3 + $0xd0] sm:$0xff]
  %v133 = vld [vmem:[%s3 + $0xd8] sm:$0xff]
  %v134 = vld [vmem:[%s3 + $0xe0] sm:$0xff]
  %v135 = vld [vmem:[%s3 + $0xe8] sm:$0xff]
  %v136 = vld [vmem:[%s3 + $0xf0] sm:$0xff]
  %v137 = vld [vmem:[%s3 + $0xf8] sm:$0xff]
  %v138 = vld [vmem:[%s3 + $0x100] sm:$0xff]
  %v139 = vld [vmem:[%s3 + $0x108] sm:$0xff]
  %v140 = vld [vmem:[%s3 + $0x110] sm:$0xff]
  %v141 = vld [vmem:[%s3 + $0x118] sm:$0xff]
  %v142 = vld [vmem:[%s3 + $0x120] sm:$0xff]
  %v143 = vld [vmem:[%s3 + $0x128] sm:$0xff]
  %v144 = vld [vmem:[%s3 + $0x130] sm:$0xff]
  %v145 = vld [vmem:[%s3 + $0x138] sm:$0xff]
  %v146 = vld [vmem:[%s3 + $0x140] sm:$0xff]
  %v147 = vld [vmem:[%s3 + $0x148] sm:$0xff]
  %v148 = vld [vmem:[%s3 + $0x150] sm:$0xff]
  %v149 = vld [vmem:[%s3 + $0x158] sm:$0xff]
  %v150 = vld [vmem:[%s3 + $0x160] sm:$0xff]
  %v151 = vld [vmem:[%s3 + $0x168] sm:$0xff]
  %v152 = vld [vmem:[%s3 + $0x170] sm:$0xff]
  %v153 = vld [vmem:[%s3 + $0x178] sm:$0xff]
  %v154 = vld [vmem:[%s3 + $0x180] sm:$0xff]
  %v155 = vld [vmem:[%s3 + $0x188] sm:$0xff]
  %v156 = vld [vmem:[%s3 + $0x190] sm:$0xff]
  %v157 = vld [vmem:[%s3 + $0x198] sm:$0xff]
  %v158 = vld [vmem:[%s3 + $0x1a0] sm:$0xff]
  %v159 = vld [vmem:[%s3 + $0x1a8] sm:$0xff]
  %v160 = vld [vmem:[%s3 + $0x1b0] sm:$0xff]
  %v161 = vld [vmem:[%s3 + $0x1b8] sm:$0xff]
  %v162 = vld [vmem:[%s3 + $0x1c0] sm:$0xff]
  %v163 = vld [vmem:[%s3 + $0x1c8] sm:$0xff]
  %v164 = vld [vmem:[%s3 + $0x1d0] sm:$0xff]
  %v165 = vld [vmem:[%s3 + $0x1d8] sm:$0xff]
  %v166 = vld [vmem:[%s3 + $0x1e0] sm:$0xff]
  %v167 = vld [vmem:[%s3 + $0x1e8] sm:$0xff]
  %v168 = vld [vmem:[%s3 + $0x1f0] sm:$0xff]
  %v169 = vld [vmem:[%s3 + $0x1f8] sm:$0xff]
  %v171 = vsel %vm32, %v103, 0
  %173 = vmatprep.subr.mxu0 0.0
  %174 = vmatpush1.msra.mxu0 0.0
  %175 = vmatprep.subr.mxu0 0.0
  %176 = vmatpush1.msra.mxu0 0.0
  %177 = vmatprep.subr.mxu0 0.0
  %178 = vmatpush1.msra.mxu0 0.0
  %179 = vmatprep.subr.mxu0 0.0
  %180 = vmatpush1.msra.mxu0 0.0
  %181 = vmatprep.subr.mxu0 0.0
  %182 = vmatpush1.msra.mxu0 0.0
  %183 = vmatprep.subr.mxu0 0.0
  %184 = vmatpush1.msra.mxu0 0.0
  %185 = vmatprep.subr.mxu0 0.0
  %186 = vmatpush1.msra.mxu0 0.0
  %187 = vmatprep.subr.mxu0 0.0
  %188 = vmatpush1.msra.mxu0 0.0
  %189 = vmatprep.subr.mxu0 %v163
  %190 = vmatpush1.msra.mxu0 %v162
  %191 = vmatprep.subr.mxu0 %v155
  %192 = vmatpush1.msra.mxu0 %v154
  %193 = vmatprep.subr.mxu0 %v147
  %194 = vmatpush1.msra.mxu0 %v146
  %195 = vmatprep.subr.mxu0 %v139
  %196 = vmatpush1.msra.mxu0 %v138
  %197 = vmatprep.subr.mxu0 %v131
  %198 = vmatpush1.msra.mxu0 %v130
  %199 = vmatprep.subr.mxu0 %v123
  %200 = vmatpush1.msra.mxu0 %v122
  %201 = vmatprep.subr.mxu0 %v115
  %202 = vmatpush1.msra.mxu0 %v114
  %203 = vmatprep.subr.mxu0 %v107
  %204 = vmatpush1.msra.mxu0 %v106
  %205 = vmatprep.subr.mxu0 0.0
  %206 = vmatpush2.msra.mxu0 0.0
  %207 = vmatprep.subr.mxu0 0.0
  %208 = vmatpush2.msra.mxu0 0.0
  %209 = vmatprep.subr.mxu0 0.0
  %210 = vmatpush2.msra.mxu0 0.0
  %211 = vmatprep.subr.mxu0 0.0
  %212 = vmatpush2.msra.mxu0 0.0
  %213 = vmatprep.subr.mxu0 0.0
  %214 = vmatpush2.msra.mxu0 0.0
  %215 = vmatprep.subr.mxu0 0.0
  %216 = vmatpush2.msra.mxu0 0.0
  %217 = vmatprep.subr.mxu0 0.0
  %218 = vmatpush2.msra.mxu0 0.0
  %219 = vmatprep.subr.mxu0 0.0
  %220 = vmatpush2.msra.mxu0 0.0
  %221 = vmatprep.subr.mxu0 0.0
  %222 = vmatpush2.msra.mxu0 0.0
  %223 = vmatprep.subr.mxu0 0.0
  %224 = vmatpush2.msra.mxu0 0.0
  %225 = vmatprep.subr.mxu0 0.0
  %226 = vmatpush2.msra.mxu0 0.0
  %227 = vmatprep.subr.mxu0 0.0
  %228 = vmatpush2.msra.mxu0 0.0
  %229 = vmatprep.subr.mxu0 0.0
  %230 = vmatpush2.msra.mxu0 0.0
  %231 = vmatprep.subr.mxu0 0.0
  %232 = vmatpush2.msra.mxu0 0.0
  %233 = vmatprep.subr.mxu0 0.0
  %234 = vmatpush2.msra.mxu0 0.0
  %235 = vmatprep.subr.mxu0 0.0
  %236 = vmatpush2.msra.mxu0 0.0
  %237 = vmatprep.mubr.f32.mxu0 0.0
  %238 = vmatmul.mubr.f32.gmra.mxu0 %v171
  %v239 = vpop.f32.mrf.mxu0
  %v240 = vadd.f32 0.0, %v239
  %v241 = vpop.f32.mrf.mxu0
  %v242 = vadd.f32 0.0, %v241
  %243 = vdwg.mxu0
  %244 = vmatprep.subr.mxu0 0.0
  %245 = vmatpush1.msra.mxu0 0.0
  %246 = vmatprep.subr.mxu0 0.0
  %247 = vmatpush1.msra.mxu0 0.0
  %248 = vmatprep.subr.mxu0 0.0
  %249 = vmatpush1.msra.mxu0 0.0
  %250 = vmatprep.subr.mxu0 0.0
  %251 = vmatpush1.msra.mxu0 0.0
  %252 = vmatprep.subr.mxu0 0.0
  %253 = vmatpush1.msra.mxu0 0.0
  %254 = vmatprep.subr.mxu0 0.0
  %255 = vmatpush1.msra.mxu0 0.0
  %256 = vmatprep.subr.mxu0 0.0
  %257 = vmatpush1.msra.mxu0 0.0
  %258 = vmatprep.subr.mxu0 0.0
  %259 = vmatpush1.msra.mxu0 0.0
  %260 = vmatprep.subr.mxu0 %v165
  %261 = vmatpush1.msra.mxu0 %v164
  %262 = vmatprep.subr.mxu0 %v157
  %263 = vmatpush1.msra.mxu0 %v156
  %264 = vmatprep.subr.mxu0 %v149
  %265 = vmatpush1.msra.mxu0 %v148
  %266 = vmatprep.subr.mxu0 %v141
  %267 = vmatpush1.msra.mxu0 %v140
  %268 = vmatprep.subr.mxu0 %v133
  %269 = vmatpush1.msra.mxu0 %v132
  %270 = vmatprep.subr.mxu0 %v125
  %271 = vmatpush1.msra.mxu0 %v124
  %272 = vmatprep.subr.mxu0 %v117
  %273 = vmatpush1.msra.mxu0 %v116
  %274 = vmatprep.subr.mxu0 %v109
  %275 = vmatpush1.msra.mxu0 %v108
  %276 = vmatprep.subr.mxu0 0.0
  %277 = vmatpush2.msra.mxu0 0.0
  %278 = vmatprep.subr.mxu0 0.0
  %279 = vmatpush2.msra.mxu0 0.0
  %280 = vmatprep.subr.mxu0 0.0
  %281 = vmatpush2.msra.mxu0 0.0
  %282 = vmatprep.subr.mxu0 0.0
  %283 = vmatpush2.msra.mxu0 0.0
  %284 = vmatprep.subr.mxu0 0.0
  %285 = vmatpush2.msra.mxu0 0.0
  %286 = vmatprep.subr.mxu0 0.0
  %287 = vmatpush2.msra.mxu0 0.0
  %288 = vmatprep.subr.mxu0 0.0
  %289 = vmatpush2.msra.mxu0 0.0
  %290 = vmatprep.subr.mxu0 0.0
  %291 = vmatpush2.msra.mxu0 0.0
  %292 = vmatprep.subr.mxu0 0.0
  %293 = vmatpush2.msra.mxu0 0.0
  %294 = vmatprep.subr.mxu0 0.0
  %295 = vmatpush2.msra.mxu0 0.0
  %296 = vmatprep.subr.mxu0 0.0
  %297 = vmatpush2.msra.mxu0 0.0
  %298 = vmatprep.subr.mxu0 0.0
  %299 = vmatpush2.msra.mxu0 0.0
  %300 = vmatprep.subr.mxu0 0.0
  %301 = vmatpush2.msra.mxu0 0.0
  %302 = vmatprep.subr.mxu0 0.0
  %303 = vmatpush2.msra.mxu0 0.0
  %304 = vmatprep.subr.mxu0 0.0
  %305 = vmatpush2.msra.mxu0 0.0
  %306 = vmatprep.subr.mxu0 0.0
  %307 = vmatpush2.msra.mxu0 0.0
  %308 = vmatprep.mubr.f32.mxu0 0.0
  %309 = vmatmul.mubr.f32.gmra.mxu0 %v171
  %v310 = vpop.f32.mrf.mxu0
  %v311 = vadd.f32 0.0, %v310
  %v312 = vpop.f32.mrf.mxu0
  %v313 = vadd.f32 0.0, %v312
  %314 = vdwg.mxu0
  %315 = vmatprep.subr.mxu0 0.0
  %316 = vmatpush1.msra.mxu0 0.0
  %317 = vmatprep.subr.mxu0 0.0
  %318 = vmatpush1.msra.mxu0 0.0
  %319 = vmatprep.subr.mxu0 0.0
  %320 = vmatpush1.msra.mxu0 0.0
  %321 = vmatprep.subr.mxu0 0.0
  %322 = vmatpush1.msra.mxu0 0.0
  %323 = vmatprep.subr.mxu0 0.0
  %324 = vmatpush1.msra.mxu0 0.0
  %325 = vmatprep.subr.mxu0 0.0
  %326 = vmatpush1.msra.mxu0 0.0
  %327 = vmatprep.subr.mxu0 0.0
  %328 = vmatpush1.msra.mxu0 0.0
  %329 = vmatprep.subr.mxu0 0.0
  %330 = vmatpush1.msra.mxu0 0.0
  %331 = vmatprep.subr.mxu0 %v167
  %332 = vmatpush1.msra.mxu0 %v166
  %333 = vmatprep.subr.mxu0 %v159
  %334 = vmatpush1.msra.mxu0 %v158
  %335 = vmatprep.subr.mxu0 %v151
  %336 = vmatpush1.msra.mxu0 %v150
  %337 = vmatprep.subr.mxu0 %v143
  %338 = vmatpush1.msra.mxu0 %v142
  %339 = vmatprep.subr.mxu0 %v135
  %340 = vmatpush1.msra.mxu0 %v134
  %341 = vmatprep.subr.mxu0 %v127
  %342 = vmatpush1.msra.mxu0 %v126
  %343 = vmatprep.subr.mxu0 %v119
  %344 = vmatpush1.msra.mxu0 %v118
  %345 = vmatprep.subr.mxu0 %v111
  %346 = vmatpush1.msra.mxu0 %v110
  %347 = vmatprep.subr.mxu0 0.0
  %348 = vmatpush2.msra.mxu0 0.0
  %349 = vmatprep.subr.mxu0 0.0
  %350 = vmatpush2.msra.mxu0 0.0
  %351 = vmatprep.subr.mxu0 0.0
  %352 = vmatpush2.msra.mxu0 0.0
  %353 = vmatprep.subr.mxu0 0.0
  %354 = vmatpush2.msra.mxu0 0.0
  %355 = vmatprep.subr.mxu0 0.0
  %356 = vmatpush2.msra.mxu0 0.0
  %357 = vmatprep.subr.mxu0 0.0
  %358 = vmatpush2.msra.mxu0 0.0
  %359 = vmatprep.subr.mxu0 0.0
  %360 = vmatpush2.msra.mxu0 0.0
  %361 = vmatprep.subr.mxu0 0.0
  %362 = vmatpush2.msra.mxu0 0.0
  %363 = vmatprep.subr.mxu0 0.0
  %364 = vmatpush2.msra.mxu0 0.0
  %365 = vmatprep.subr.mxu0 0.0
  %366 = vmatpush2.msra.mxu0 0.0
  %367 = vmatprep.subr.mxu0 0.0
  %368 = vmatpush2.msra.mxu0 0.0
  %369 = vmatprep.subr.mxu0 0.0
  %370 = vmatpush2.msra.mxu0 0.0
  %371 = vmatprep.subr.mxu0 0.0
  %372 = vmatpush2.msra.mxu0 0.0
  %373 = vmatprep.subr.mxu0 0.0
  %374 = vmatpush2.msra.mxu0 0.0
  %375 = vmatprep.subr.mxu0 0.0
  %376 = vmatpush2.msra.mxu0 0.0
  %377 = vmatprep.subr.mxu0 0.0
  %378 = vmatpush2.msra.mxu0 0.0
  %379 = vmatprep.mubr.f32.mxu0 0.0
  %380 = vmatmul.mubr.f32.gmra.mxu0 %v171
  %v381 = vpop.f32.mrf.mxu0
  %v382 = vadd.f32 0.0, %v381
  %v383 = vpop.f32.mrf.mxu0
  %v384 = vadd.f32 0.0, %v383
  %385 = vdwg.mxu0
  %386 = vmatprep.subr.mxu0 0.0
  %387 = vmatpush1.msra.mxu0 0.0
  %388 = vmatprep.subr.mxu0 0.0
  %389 = vmatpush1.msra.mxu0 0.0
  %390 = vmatprep.subr.mxu0 0.0
  %391 = vmatpush1.msra.mxu0 0.0
  %392 = vmatprep.subr.mxu0 0.0
  %393 = vmatpush1.msra.mxu0 0.0
  %394 = vmatprep.subr.mxu0 0.0
  %395 = vmatpush1.msra.mxu0 0.0
  %396 = vmatprep.subr.mxu0 0.0
  %397 = vmatpush1.msra.mxu0 0.0
  %398 = vmatprep.subr.mxu0 0.0
  %399 = vmatpush1.msra.mxu0 0.0
  %400 = vmatprep.subr.mxu0 0.0
  %401 = vmatpush1.msra.mxu0 0.0
  %402 = vmatprep.subr.mxu0 %v169
  %403 = vmatpush1.msra.mxu0 %v168
  %404 = vmatprep.subr.mxu0 %v161
  %405 = vmatpush1.msra.mxu0 %v160
  %406 = vmatprep.subr.mxu0 %v153
  %407 = vmatpush1.msra.mxu0 %v152
  %408 = vmatprep.subr.mxu0 %v145
  %409 = vmatpush1.msra.mxu0 %v144
  %410 = vmatprep.subr.mxu0 %v137
  %411 = vmatpush1.msra.mxu0 %v136
  %412 = vmatprep.subr.mxu0 %v129
  %413 = vmatpush1.msra.mxu0 %v128
  %414 = vmatprep.subr.mxu0 %v121
  %415 = vmatpush1.msra.mxu0 %v120
  %416 = vmatprep.subr.mxu0 %v113
  %417 = vmatpush1.msra.mxu0 %v112
  %418 = vmatprep.subr.mxu0 0.0
  %419 = vmatpush2.msra.mxu0 0.0
  %420 = vmatprep.subr.mxu0 0.0
  %421 = vmatpush2.msra.mxu0 0.0
  %422 = vmatprep.subr.mxu0 0.0
  %423 = vmatpush2.msra.mxu0 0.0
  %424 = vmatprep.subr.mxu0 0.0
  %425 = vmatpush2.msra.mxu0 0.0
  %426 = vmatprep.subr.mxu0 0.0
  %427 = vmatpush2.msra.mxu0 0.0
  %428 = vmatprep.subr.mxu0 0.0
  %429 = vmatpush2.msra.mxu0 0.0
  %430 = vmatprep.subr.mxu0 0.0
  %431 = vmatpush2.msra.mxu0 0.0
  %432 = vmatprep.subr.mxu0 0.0
  %433 = vmatpush2.msra.mxu0 0.0
  %434 = vmatprep.subr.mxu0 0.0
  %435 = vmatpush2.msra.mxu0 0.0
  %436 = vmatprep.subr.mxu0 0.0
  %437 = vmatpush2.msra.mxu0 0.0
  %438 = vmatprep.subr.mxu0 0.0
  %439 = vmatpush2.msra.mxu0 0.0
  %440 = vmatprep.subr.mxu0 0.0
  %441 = vmatpush2.msra.mxu0 0.0
  %442 = vmatprep.subr.mxu0 0.0
  %443 = vmatpush2.msra.mxu0 0.0
  %444 = vmatprep.subr.mxu0 0.0
  %445 = vmatpush2.msra.mxu0 0.0
  %446 = vmatprep.subr.mxu0 0.0
  %447 = vmatpush2.msra.mxu0 0.0
  %448 = vmatprep.subr.mxu0 0.0
  %449 = vmatpush2.msra.mxu0 0.0
  %450 = vmatprep.mubr.f32.mxu0 0.0
  %451 = vmatmul.mubr.f32.gmra.mxu0 %v171
  %v452 = vpop.f32.mrf.mxu0
  %v453 = vadd.f32 0.0, %v452
  %v454 = vpop.f32.mrf.mxu0
  %v455 = vadd.f32 0.0, %v454
  %456 = vdwg.mxu0
  %v465 = vcombine.low %v240, %v242
  %v466 = vcombine.low %v311, %v313
  %v467 = vcombine.low %v382, %v384
  %v468 = vcombine.low %v453, %v455
  %473 = vst [vmem:[%s4] sm:$0xff] %v465
  %474 = vst [vmem:[%s4 + $0x8] sm:$0xff] %v466
  %475 = vst [vmem:[%s4 + $0x10] sm:$0xff] %v467
  %476 = vst [vmem:[%s4 + $0x18] sm:$0xff] %v468
  // Predicated region
  $region18: #{baseline_forward.13} parent=0 // pred_check
    _
  $region19: #{baseline_forward.13} parent=0 // pred_check_branch
    %478 = sbr.rel (0) target = $region21
  $region20: #{baseline_forward.13} parent=0 // pred_region
    _
  $region21: #{baseline_forward.13} parent=0 // pred_fallthru
    _
  // Predicated region
  $region22: #{baseline_forward.13} parent=0 // pred_check
    _
  $region23: #{baseline_forward.13} parent=0 // pred_check_branch
    %480 = sbr.rel (0) target = $region25
  $region24: #{baseline_forward.13} parent=0 // pred_region
    _
  $region25: #{baseline_forward.13} parent=0 // pred_fallthru
    _

// kernel: baseline_forward.12
$region0: #{baseline_forward.12}
  #allocation0 [shape = 'u32[]', space=smem, size = 0x4, offset = 0x4, fixed_abs, tag = 'smem constant byte address 0x4 - core index']
  #allocation1 [shape = 'u32[144,128]{1,0:T(1,128)}', space=vmem, size = 0x12000, scoped, tag = 'internal scratch']
  %s0 = inlined_call_operand.vmem [shape: bf16[128,1024], index: 0, kind: input, shape index: {}]
  %s1 = inlined_call_operand.vmem [shape: bf16[1024,32], index: 1, kind: input, shape index: {}]
  %s2 = inlined_call_operand.vmem [shape: f32[1,32], index: 2, kind: input, shape index: {}]
  %s3 = inlined_call_operand.vmem [shape: f32[1,32], index: 3, kind: input, shape index: {}]
  %s4 = inlined_call_operand.vmem [shape: f32[1,32], index: 4, kind: input, shape index: {}]
  %s5 = inlined_call_operand.vmem [shape: f32[128,32], index: 5, kind: output, shape index: {}]
  %s6 = sld [smem:[#allocation0]]
  $region30: #{baseline_forward.12} parent=0
    _
  %s8 = ssub.s32 1, %s6
  %s9 = scalar_select 0, %s8, %s6
  // Predicated region
  $region2: #{baseline_forward.12} parent=0 // pred_check
    _
  $region3: #{baseline_forward.12} parent=0 // pred_check_branch
    %11 = sbr.rel (0) target = $region5
  $region4: #{baseline_forward.12} parent=0 // pred_region
    _
  $region5: #{baseline_forward.12} parent=0 // pred_fallthru
    _
  // Predicated region
  $region6: #{baseline_forward.12} parent=0 // pred_check
    _
  $region7: #{baseline_forward.12} parent=0 // pred_check_branch
    %13 = sbr.rel (0) target = $region9
  $region8: #{baseline_forward.12} parent=0 // pred_region
    _
  $region9: #{baseline_forward.12} parent=0 // pred_fallthru
    _
  // Predicated region
  $region10: #{baseline_forward.12} parent=0 // pred_check
    _
  $region11: #{baseline_forward.12} parent=0 // pred_check_branch
    %15 = sbr.rel (0) target = $region13
  $region12: #{baseline_forward.12} parent=0 // pred_region
    _
  $region13: #{baseline_forward.12} parent=0 // pred_fallthru
    _
  // Predicated region
  $region14: #{baseline_forward.12} parent=0 // pred_check
    _
  $region15: #{baseline_forward.12} parent=0 // pred_check_branch
    %17 = sbr.rel (0) target = $region17
  $region16: #{baseline_forward.12} parent=0 // pred_region
    _
  $region17: #{baseline_forward.12} parent=0 // pred_fallthru
    _
  // Predicated region
  $region18: #{baseline_forward.12} parent=0 // pred_check
    _
  $region19: #{baseline_forward.12} parent=0 // pred_check_branch
    %19 = sbr.rel (0) target = $region21
  $region20: #{baseline_forward.12} parent=0 // pred_region
    _
  $region21: #{baseline_forward.12} parent=0 // pred_fallthru
    _
  %v21 = vld [vmem:[%s0] sm:$0xff]
  %v22 = vld [vmem:[%s0 + $0x8] sm:$0xff]
  %v23 = vld [vmem:[%s0 + $0x10] sm:$0xff]
  %v24 = vld [vmem:[%s0 + $0x18] sm:$0xff]
  %v25 = vld [vmem:[%s0 + $0x20] sm:$0xff]
  %v26 = vld [vmem:[%s0 + $0x28] sm:$0xff]
  %v27 = vld [vmem:[%s0 + $0x30] sm:$0xff]
  %v28 = vld [vmem:[%s0 + $0x38] sm:$0xff]
  %v29 = vld [vmem:[%s0 + $0x40] sm:$0xff]
  %v30 = vld [vmem:[%s0 + $0x48] sm:$0xff]
  %v31 = vld [vmem:[%s0 + $0x50] sm:$0xff]
  %v32 = vld [vmem:[%s0 + $0x58] sm:$0xff]
  %v33 = vld [vmem:[%s0 + $0x60] sm:$0xff]
  %v34 = vld [vmem:[%s0 + $0x68] sm:$0xff]
  %v35 = vld [vmem:[%s0 + $0x70] sm:$0xff]
  %v36 = vld [vmem:[%s0 + $0x78] sm:$0xff]
  %v37 = vld [vmem:[%s0 + $0x80] sm:$0xff]
  %v38 = vld [vmem:[%s0 + $0x88] sm:$0xff]
  %v39 = vld [vmem:[%s0 + $0x90] sm:$0xff]
  %v40 = vld [vmem:[%s0 + $0x98] sm:$0xff]
  %v41 = vld [vmem:[%s0 + $0xa0] sm:$0xff]
  %v42 = vld [vmem:[%s0 + $0xa8] sm:$0xff]
  %v43 = vld [vmem:[%s0 + $0xb0] sm:$0xff]
  %v44 = vld [vmem:[%s0 + $0xb8] sm:$0xff]
  %v45 = vld [vmem:[%s0 + $0xc0] sm:$0xff]
  %v46 = vld [vmem:[%s0 + $0xc8] sm:$0xff]
  %v47 = vld [vmem:[%s0 + $0xd0] sm:$0xff]
  %v48 = vld [vmem:[%s0 + $0xd8] sm:$0xff]
  %v49 = vld [vmem:[%s0 + $0xe0] sm:$0xff]
  %v50 = vld [vmem:[%s0 + $0xe8] sm:$0xff]
  %v51 = vld [vmem:[%s0 + $0xf0] sm:$0xff]
  %v52 = vld [vmem:[%s0 + $0xf8] sm:$0xff]
  %v53 = vld [vmem:[%s0 + $0x100] sm:$0xff]
  %v54 = vld [vmem:[%s0 + $0x108] sm:$0xff]
  %v55 = vld [vmem:[%s0 + $0x110] sm:$0xff]
  %v56 = vld [vmem:[%s0 + $0x118] sm:$0xff]
  %v57 = vld [vmem:[%s0 + $0x120] sm:$0xff]
  %v58 = vld [vmem:[%s0 + $0x128] sm:$0xff]
  %v59 = vld [vmem:[%s0 + $0x130] sm:$0xff]
  %v60 = vld [vmem:[%s0 + $0x138] sm:$0xff]
  %v61 = vld [vmem:[%s0 + $0x140] sm:$0xff]
  %v62 = vld [vmem:[%s0 + $0x148] sm:$0xff]
  %v63 = vld [vmem:[%s0 + $0x150] sm:$0xff]
  %v64 = vld [vmem:[%s0 + $0x158] sm:$0xff]
  %v65 = vld [vmem:[%s0 + $0x160] sm:$0xff]
  %v66 = vld [vmem:[%s0 + $0x168] sm:$0xff]
  %v67 = vld [vmem:[%s0 + $0x170] sm:$0xff]
  %v68 = vld [vmem:[%s0 + $0x178] sm:$0xff]
  %v69 = vld [vmem:[%s0 + $0x180] sm:$0xff]
  %v70 = vld [vmem:[%s0 + $0x188] sm:$0xff]
  %v71 = vld [vmem:[%s0 + $0x190] sm:$0xff]
  %v72 = vld [vmem:[%s0 + $0x198] sm:$0xff]
  %v73 = vld [vmem:[%s0 + $0x1a0] sm:$0xff]
  %v74 = vld [vmem:[%s0 + $0x1a8] sm:$0xff]
  %v75 = vld [vmem:[%s0 + $0x1b0] sm:$0xff]
  %v76 = vld [vmem:[%s0 + $0x1b8] sm:$0xff]
  %v77 = vld [vmem:[%s0 + $0x1c0] sm:$0xff]
  %v78 = vld [vmem:[%s0 + $0x1c8] sm:$0xff]
  %v79 = vld [vmem:[%s0 + $0x1d0] sm:$0xff]
  %v80 = vld [vmem:[%s0 + $0x1d8] sm:$0xff]
  %v81 = vld [vmem:[%s0 + $0x1e0] sm:$0xff]
  %v82 = vld [vmem:[%s0 + $0x1e8] sm:$0xff]
  %v83 = vld [vmem:[%s0 + $0x1f0] sm:$0xff]
  %v84 = vld [vmem:[%s0 + $0x1f8] sm:$0xff]
  %v85 = vld [vmem:[%s1] sm:$0xf]
  %v86 = vld [vmem:[%s1 + $0x4] sm:$0xf]
  %v87 = vld [vmem:[%s1 + $0x8] sm:$0xf]
  %v88 = vld [vmem:[%s1 + $0xc] sm:$0xf]
  %v89 = vld [vmem:[%s1 + $0x10] sm:$0xf]
  %v90 = vld [vmem:[%s1 + $0x14] sm:$0xf]
  %v91 = vld [vmem:[%s1 + $0x18] sm:$0xf]
  %v92 = vld [vmem:[%s1 + $0x1c] sm:$0xf]
  %v93 = vld [vmem:[%s1 + $0x20] sm:$0xf]
  %v94 = vld [vmem:[%s1 + $0x24] sm:$0xf]
  %v95 = vld [vmem:[%s1 + $0x28] sm:$0xf]
  %v96 = vld [vmem:[%s1 + $0x2c] sm:$0xf]
  %v97 = vld [vmem:[%s1 + $0x30] sm:$0xf]
  %v98 = vld [vmem:[%s1 + $0x34] sm:$0xf]
  %v99 = vld [vmem:[%s1 + $0x38] sm:$0xf]
  %v100 = vld [vmem:[%s1 + $0x3c] sm:$0xf]
  %v101 = vld [vmem:[%s1 + $0x40] sm:$0xf]
  %v102 = vld [vmem:[%s1 + $0x44] sm:$0xf]
  %v103 = vld [vmem:[%s1 + $0x48] sm:$0xf]
  %v104 = vld [vmem:[%s1 + $0x4c] sm:$0xf]
  %v105 = vld [vmem:[%s1 + $0x50] sm:$0xf]
  %v106 = vld [vmem:[%s1 + $0x54] sm:$0xf]
  %v107 = vld [vmem:[%s1 + $0x58] sm:$0xf]
  %v108 = vld [vmem:[%s1 + $0x5c] sm:$0xf]
  %v109 = vld [vmem:[%s1 + $0x60] sm:$0xf]
  %v110 = vld [vmem:[%s1 + $0x64] sm:$0xf]
  %v111 = vld [vmem:[%s1 + $0x68] sm:$0xf]
  %v112 = vld [vmem:[%s1 + $0x6c] sm:$0xf]
  %v113 = vld [vmem:[%s1 + $0x70] sm:$0xf]
  %v114 = vld [vmem:[%s1 + $0x74] sm:$0xf]
  %v115 = vld [vmem:[%s1 + $0x78] sm:$0xf]
  %v116 = vld [vmem:[%s1 + $0x7c] sm:$0xf]
  %v117 = vld [vmem:[%s1 + $0x80] sm:$0xf]
  %v118 = vld [vmem:[%s1 + $0x84] sm:$0xf]
  %v119 = vld [vmem:[%s1 + $0x88] sm:$0xf]
  %v120 = vld [vmem:[%s1 + $0x8c] sm:$0xf]
  %v121 = vld [vmem:[%s1 + $0x90] sm:$0xf]
  %v122 = vld [vmem:[%s1 + $0x94] sm:$0xf]
  %v123 = vld [vmem:[%s1 + $0x98] sm:$0xf]
  %v124 = vld [vmem:[%s1 + $0x9c] sm:$0xf]
  %v125 = vld [vmem:[%s1 + $0xa0] sm:$0xf]
  %v126 = vld [vmem:[%s1 + $0xa4] sm:$0xf]
  %v127 = vld [vmem:[%s1 + $0xa8] sm:$0xf]
  %v128 = vld [vmem:[%s1 + $0xac] sm:$0xf]
  %v129 = vld [vmem:[%s1 + $0xb0] sm:$0xf]
  %v130 = vld [vmem:[%s1 + $0xb4] sm:$0xf]
  %v131 = vld [vmem:[%s1 + $0xb8] sm:$0xf]
  %v132 = vld [vmem:[%s1 + $0xbc] sm:$0xf]
  %v133 = vld [vmem:[%s1 + $0xc0] sm:$0xf]
  %v134 = vld [vmem:[%s1 + $0xc4] sm:$0xf]
  %v135 = vld [vmem:[%s1 + $0xc8] sm:$0xf]
  %v136 = vld [vmem:[%s1 + $0xcc] sm:$0xf]
  %v137 = vld [vmem:[%s1 + $0xd0] sm:$0xf]
  %v138 = vld [vmem:[%s1 + $0xd4] sm:$0xf]
  %v139 = vld [vmem:[%s1 + $0xd8] sm:$0xf]
  %v140 = vld [vmem:[%s1 + $0xdc] sm:$0xf]
  %v141 = vld [vmem:[%s1 + $0xe0] sm:$0xf]
  %v142 = vld [vmem:[%s1 + $0xe4] sm:$0xf]
  %v143 = vld [vmem:[%s1 + $0xe8] sm:$0xf]
  %v144 = vld [vmem:[%s1 + $0xec] sm:$0xf]
  %v145 = vld [vmem:[%s1 + $0xf0] sm:$0xf]
  %v146 = vld [vmem:[%s1 + $0xf4] sm:$0xf]
  %v147 = vld [vmem:[%s1 + $0xf8] sm:$0xf]
  %v148 = vld [vmem:[%s1 + $0xfc] sm:$0xf]
  %v149 = vld [vmem:[%s1 + $0x100] sm:$0xf]
  %v150 = vld [vmem:[%s1 + $0x104] sm:$0xf]
  %v151 = vld [vmem:[%s1 + $0x108] sm:$0xf]
  %v152 = vld [vmem:[%s1 + $0x10c] sm:$0xf]
  %v153 = vld [vmem:[%s1 + $0x110] sm:$0xf]
  %v154 = vld [vmem:[%s1 + $0x114] sm:$0xf]
  %v155 = vld [vmem:[%s1 + $0x118] sm:$0xf]
  %v156 = vld [vmem:[%s1 + $0x11c] sm:$0xf]
  %v157 = vld [vmem:[%s1 + $0x120] sm:$0xf]
  %v158 = vld [vmem:[%s1 + $0x124] sm:$0xf]
  %v159 = vld [vmem:[%s1 + $0x128] sm:$0xf]
  %v160 = vld [vmem:[%s1 + $0x12c] sm:$0xf]
  %v161 = vld [vmem:[%s1 + $0x130] sm:$0xf]
  %v162 = vld [vmem:[%s1 + $0x134] sm:$0xf]
  %v163 = vld [vmem:[%s1 + $0x138] sm:$0xf]
  %v164 = vld [vmem:[%s1 + $0x13c] sm:$0xf]
  %v165 = vld [vmem:[%s1 + $0x140] sm:$0xf]
  %v166 = vld [vmem:[%s1 + $0x144] sm:$0xf]
  %v167 = vld [vmem:[%s1 + $0x148] sm:$0xf]
  %v168 = vld [vmem:[%s1 + $0x14c] sm:$0xf]
  %v169 = vld [vmem:[%s1 + $0x150] sm:$0xf]
  %v170 = vld [vmem:[%s1 + $0x154] sm:$0xf]
  %v171 = vld [vmem:[%s1 + $0x158] sm:$0xf]
  %v172 = vld [vmem:[%s1 + $0x15c] sm:$0xf]
  %v173 = vld [vmem:[%s1 + $0x160] sm:$0xf]
  %v174 = vld [vmem:[%s1 + $0x164] sm:$0xf]
  %v175 = vld [vmem:[%s1 + $0x168] sm:$0xf]
  %v176 = vld [vmem:[%s1 + $0x16c] sm:$0xf]
  %v177 = vld [vmem:[%s1 + $0x170] sm:$0xf]
  %v178 = vld [vmem:[%s1 + $0x174] sm:$0xf]
  %v179 = vld [vmem:[%s1 + $0x178] sm:$0xf]
  %v180 = vld [vmem:[%s1 + $0x17c] sm:$0xf]
  %v181 = vld [vmem:[%s1 + $0x180] sm:$0xf]
  %v182 = vld [vmem:[%s1 + $0x184] sm:$0xf]
  %v183 = vld [vmem:[%s1 + $0x188] sm:$0xf]
  %v184 = vld [vmem:[%s1 + $0x18c] sm:$0xf]
  %v185 = vld [vmem:[%s1 + $0x190] sm:$0xf]
  %v186 = vld [vmem:[%s1 + $0x194] sm:$0xf]
  %v187 = vld [vmem:[%s1 + $0x198] sm:$0xf]
  %v188 = vld [vmem:[%s1 + $0x19c] sm:$0xf]
  %v189 = vld [vmem:[%s1 + $0x1a0] sm:$0xf]
  %v190 = vld [vmem:[%s1 + $0x1a4] sm:$0xf]
  %v191 = vld [vmem:[%s1 + $0x1a8] sm:$0xf]
  %v192 = vld [vmem:[%s1 + $0x1ac] sm:$0xf]
  %v193 = vld [vmem:[%s1 + $0x1b0] sm:$0xf]
  %v194 = vld [vmem:[%s1 + $0x1b4] sm:$0xf]
  %v195 = vld [vmem:[%s1 + $0x1b8] sm:$0xf]
  %v196 = vld [vmem:[%s1 + $0x1bc] sm:$0xf]
  %v197 = vld [vmem:[%s1 + $0x1c0] sm:$0xf]
  %v198 = vld [vmem:[%s1 + $0x1c4] sm:$0xf]
  %v199 = vld [vmem:[%s1 + $0x1c8] sm:$0xf]
  %v200 = vld [vmem:[%s1 + $0x1cc] sm:$0xf]
  %v201 = vld [vmem:[%s1 + $0x1d0] sm:$0xf]
  %v202 = vld [vmem:[%s1 + $0x1d4] sm:$0xf]
  %v203 = vld [vmem:[%s1 + $0x1d8] sm:$0xf]
  %v204 = vld [vmem:[%s1 + $0x1dc] sm:$0xf]
  %v205 = vld [vmem:[%s1 + $0x1e0] sm:$0xf]
  %v206 = vld [vmem:[%s1 + $0x1e4] sm:$0xf]
  %v207 = vld [vmem:[%s1 + $0x1e8] sm:$0xf]
  %v208 = vld [vmem:[%s1 + $0x1ec] sm:$0xf]
  %v209 = vld [vmem:[%s1 + $0x1f0] sm:$0xf]
  %v210 = vld [vmem:[%s1 + $0x1f4] sm:$0xf]
  %v211 = vld [vmem:[%s1 + $0x1f8] sm:$0xf]
  %v212 = vld [vmem:[%s1 + $0x1fc] sm:$0xf]
  %v213 = vld [vmem:[%s2] sm:$0x1]
  %v215 = vlaneseq
  %v216 = vshrl.u32 %v215, 7
  %v217 = vsub.s32 0, %v216
  %v218 = vrot.slane %v213, %v217
  %v284 = vunpack.c.l.b16 %v21
  %v285 = vunpack.c.h.b16 %v21
  %v286 = vunpack.c.l.b16 %v22
  %v287 = vunpack.c.h.b16 %v22
  %v288 = vunpack.c.l.b16 %v23
  %v289 = vunpack.c.h.b16 %v23
  %v290 = vunpack.c.l.b16 %v24
  %v291 = vunpack.c.h.b16 %v24
  %v292 = vunpack.c.l.b16 %v25
  %v293 = vunpack.c.h.b16 %v25
  %v294 = vunpack.c.l.b16 %v26
  %v295 = vunpack.c.h.b16 %v26
  %v296 = vunpack.c.l.b16 %v27
  %v297 = vunpack.c.h.b16 %v27
  %v298 = vunpack.c.l.b16 %v28
  %v299 = vunpack.c.h.b16 %v28
  %v300 = vunpack.c.l.b16 %v29
  %v301 = vunpack.c.h.b16 %v29
  %v302 = vunpack.c.l.b16 %v30
  %v303 = vunpack.c.h.b16 %v30
  %v304 = vunpack.c.l.b16 %v31
  %v305 = vunpack.c.h.b16 %v31
  %v306 = vunpack.c.l.b16 %v32
  %v307 = vunpack.c.h.b16 %v32
  %v308 = vunpack.c.l.b16 %v33
  %v309 = vunpack.c.h.b16 %v33
  %v310 = vunpack.c.l.b16 %v34
  %v311 = vunpack.c.h.b16 %v34
  %v312 = vunpack.c.l.b16 %v35
  %v313 = vunpack.c.h.b16 %v35
  %v314 = vunpack.c.l.b16 %v36
  %v315 = vunpack.c.h.b16 %v36
  %v316 = vunpack.c.l.b16 %v37
  %v317 = vunpack.c.h.b16 %v37
  %v318 = vunpack.c.l.b16 %v38
  %v319 = vunpack.c.h.b16 %v38
  %v320 = vunpack.c.l.b16 %v39
  %v321 = vunpack.c.h.b16 %v39
  %v322 = vunpack.c.l.b16 %v40
  %v323 = vunpack.c.h.b16 %v40
  %v324 = vunpack.c.l.b16 %v41
  %v325 = vunpack.c.h.b16 %v41
  %v326 = vunpack.c.l.b16 %v42
  %v327 = vunpack.c.h.b16 %v42
  %v328 = vunpack.c.l.b16 %v43
  %v329 = vunpack.c.h.b16 %v43
  %v330 = vunpack.c.l.b16 %v44
  %v331 = vunpack.c.h.b16 %v44
  %v332 = vunpack.c.l.b16 %v45
  %v333 = vunpack.c.h.b16 %v45
  %v334 = vunpack.c.l.b16 %v46
  %v335 = vunpack.c.h.b16 %v46
  %v336 = vunpack.c.l.b16 %v47
  %v337 = vunpack.c.h.b16 %v47
  %v338 = vunpack.c.l.b16 %v48
  %v339 = vunpack.c.h.b16 %v48
  %v340 = vunpack.c.l.b16 %v49
  %v341 = vunpack.c.h.b16 %v49
  %v342 = vunpack.c.l.b16 %v50
  %v343 = vunpack.c.h.b16 %v50
  %v344 = vunpack.c.l.b16 %v51
  %v345 = vunpack.c.h.b16 %v51
  %v346 = vunpack.c.l.b16 %v52
  %v347 = vunpack.c.h.b16 %v52
  %v348 = vunpack.c.l.b16 %v53
  %v349 = vunpack.c.h.b16 %v53
  %v350 = vunpack.c.l.b16 %v54
  %v351 = vunpack.c.h.b16 %v54
  %v352 = vunpack.c.l.b16 %v55
  %v353 = vunpack.c.h.b16 %v55
  %v354 = vunpack.c.l.b16 %v56
  %v355 = vunpack.c.h.b16 %v56
  %v356 = vunpack.c.l.b16 %v57
  %v357 = vunpack.c.h.b16 %v57
  %v358 = vunpack.c.l.b16 %v58
  %v359 = vunpack.c.h.b16 %v58
  %v360 = vunpack.c.l.b16 %v59
  %v361 = vunpack.c.h.b16 %v59
  %v362 = vunpack.c.l.b16 %v60
  %v363 = vunpack.c.h.b16 %v60
  %v364 = vunpack.c.l.b16 %v61
  %v365 = vunpack.c.h.b16 %v61
  %v366 = vunpack.c.l.b16 %v62
  %v367 = vunpack.c.h.b16 %v62
  %v368 = vunpack.c.l.b16 %v63
  %v369 = vunpack.c.h.b16 %v63
  %v370 = vunpack.c.l.b16 %v64
  %v371 = vunpack.c.h.b16 %v64
  %v372 = vunpack.c.l.b16 %v65
  %v373 = vunpack.c.h.b16 %v65
  %v374 = vunpack.c.l.b16 %v66
  %v375 = vunpack.c.h.b16 %v66
  %v376 = vunpack.c.l.b16 %v67
  %v377 = vunpack.c.h.b16 %v67
  %v378 = vunpack.c.l.b16 %v68
  %v379 = vunpack.c.h.b16 %v68
  %v380 = vunpack.c.l.b16 %v69
  %v381 = vunpack.c.h.b16 %v69
  %v382 = vunpack.c.l.b16 %v70
  %v383 = vunpack.c.h.b16 %v70
  %v384 = vunpack.c.l.b16 %v71
  %v385 = vunpack.c.h.b16 %v71
  %v386 = vunpack.c.l.b16 %v72
  %v387 = vunpack.c.h.b16 %v72
  %v388 = vunpack.c.l.b16 %v73
  %v389 = vunpack.c.h.b16 %v73
  %v390 = vunpack.c.l.b16 %v74
  %v391 = vunpack.c.h.b16 %v74
  %v392 = vunpack.c.l.b16 %v75
  %v393 = vunpack.c.h.b16 %v75
  %v394 = vunpack.c.l.b16 %v76
  %v395 = vunpack.c.h.b16 %v76
  %v396 = vunpack.c.l.b16 %v77
  %v397 = vunpack.c.h.b16 %v77
  %v398 = vunpack.c.l.b16 %v78
  %v399 = vunpack.c.h.b16 %v78
  %v400 = vunpack.c.l.b16 %v79
  %v401 = vunpack.c.h.b16 %v79
  %v402 = vunpack.c.l.b16 %v80
  %v403 = vunpack.c.h.b16 %v80
  %v404 = vunpack.c.l.b16 %v81
  %v405 = vunpack.c.h.b16 %v81
  %v406 = vunpack.c.l.b16 %v82
  %v407 = vunpack.c.h.b16 %v82
  %v408 = vunpack.c.l.b16 %v83
  %v409 = vunpack.c.h.b16 %v83
  %v410 = vunpack.c.l.b16 %v84
  %v411 = vunpack.c.h.b16 %v84
  %v412 = vpack.c.b16 %v292, %v284
  %v413 = vpack.c.b16 %v293, %v285
  %v414 = vpack.c.b16 %v294, %v286
  %v415 = vpack.c.b16 %v295, %v287
  %v416 = vpack.c.b16 %v296, %v288
  %v417 = vpack.c.b16 %v297, %v289
  %v418 = vpack.c.b16 %v298, %v290
  %v419 = vpack.c.b16 %v299, %v291
  %v420 = vpack.c.b16 %v308, %v300
  %v421 = vpack.c.b16 %v309, %v301
  %v422 = vpack.c.b16 %v310, %v302
  %v423 = vpack.c.b16 %v311, %v303
  %v424 = vpack.c.b16 %v312, %v304
  %v425 = vpack.c.b16 %v313, %v305
  %v426 = vpack.c.b16 %v314, %v306
  %v427 = vpack.c.b16 %v315, %v307
  %v428 = vpack.c.b16 %v324, %v316
  %v429 = vpack.c.b16 %v325, %v317
  %v430 = vpack.c.b16 %v326, %v318
  %v431 = vpack.c.b16 %v327, %v319
  %v432 = vpack.c.b16 %v328, %v320
  %v433 = vpack.c.b16 %v329, %v321
  %v434 = vpack.c.b16 %v330, %v322
  %v435 = vpack.c.b16 %v331, %v323
  %v436 = vpack.c.b16 %v340, %v332
  %v437 = vpack.c.b16 %v341, %v333
  %v438 = vpack.c.b16 %v342, %v334
  %v439 = vpack.c.b16 %v343, %v335
  %v440 = vpack.c.b16 %v344, %v336
  %v441 = vpack.c.b16 %v345, %v337
  %v442 = vpack.c.b16 %v346, %v338
  %v443 = vpack.c.b16 %v347, %v339
  %v444 = vpack.c.b16 %v356, %v348
  %v445 = vpack.c.b16 %v357, %v349
  %v446 = vpack.c.b16 %v358, %v350
  %v447 = vpack.c.b16 %v359, %v351
  %v448 = vpack.c.b16 %v360, %v352
  %v449 = vpack.c.b16 %v361, %v353
  %v450 = vpack.c.b16 %v362, %v354
  %v451 = vpack.c.b16 %v363, %v355
  %v452 = vpack.c.b16 %v372, %v364
  %v453 = vpack.c.b16 %v373, %v365
  %v454 = vpack.c.b16 %v374, %v366
  %v455 = vpack.c.b16 %v375, %v367
  %v456 = vpack.c.b16 %v376, %v368
  %v457 = vpack.c.b16 %v377, %v369
  %v458 = vpack.c.b16 %v378, %v370
  %v459 = vpack.c.b16 %v379, %v371
  %v460 = vpack.c.b16 %v388, %v380
  %v461 = vpack.c.b16 %v389, %v381
  %v462 = vpack.c.b16 %v390, %v382
  %v463 = vpack.c.b16 %v391, %v383
  %v464 = vpack.c.b16 %v392, %v384
  %v465 = vpack.c.b16 %v393, %v385
  %v466 = vpack.c.b16 %v394, %v386
  %v467 = vpack.c.b16 %v395, %v387
  %v468 = vpack.c.b16 %v404, %v396
  %v469 = vpack.c.b16 %v405, %v397
  %v470 = vpack.c.b16 %v406, %v398
  %v471 = vpack.c.b16 %v407, %v399
  %v472 = vpack.c.b16 %v408, %v400
  %v473 = vpack.c.b16 %v409, %v401
  %v474 = vpack.c.b16 %v410, %v402
  %v475 = vpack.c.b16 %v411, %v403
  %v668 = vunpack.c.l.b16 %v85
  %v669 = vunpack.c.l.b16 %v86
  %v670 = vunpack.c.l.b16 %v87
  %v671 = vunpack.c.l.b16 %v88
  %v672 = vunpack.c.l.b16 %v89
  %v673 = vunpack.c.l.b16 %v90
  %v674 = vunpack.c.l.b16 %v91
  %v675 = vunpack.c.l.b16 %v92
  %v676 = vunpack.c.l.b16 %v93
  %v677 = vunpack.c.l.b16 %v94
  %v678 = vunpack.c.l.b16 %v95
  %v679 = vunpack.c.l.b16 %v96
  %v680 = vunpack.c.l.b16 %v97
  %v681 = vunpack.c.l.b16 %v98
  %v682 = vunpack.c.l.b16 %v99
  %v683 = vunpack.c.l.b16 %v100
  %v684 = vunpack.c.l.b16 %v101
  %v685 = vunpack.c.l.b16 %v102
  %v686 = vunpack.c.l.b16 %v103
  %v687 = vunpack.c.l.b16 %v104
  %v688 = vunpack.c.l.b16 %v105
  %v689 = vunpack.c.l.b16 %v106
  %v690 = vunpack.c.l.b16 %v107
  %v691 = vunpack.c.l.b16 %v108
  %v692 = vunpack.c.l.b16 %v109
  %v693 = vunpack.c.l.b16 %v110
  %v694 = vunpack.c.l.b16 %v111
  %v695 = vunpack.c.l.b16 %v112
  %v696 = vunpack.c.l.b16 %v113
  %v697 = vunpack.c.l.b16 %v114
  %v698 = vunpack.c.l.b16 %v115
  %v699 = vunpack.c.l.b16 %v116
  %v700 = vunpack.c.l.b16 %v117
  %v701 = vunpack.c.l.b16 %v118
  %v702 = vunpack.c.l.b16 %v119
  %v703 = vunpack.c.l.b16 %v120
  %v704 = vunpack.c.l.b16 %v121
  %v705 = vunpack.c.l.b16 %v122
  %v706 = vunpack.c.l.b16 %v123
  %v707 = vunpack.c.l.b16 %v124
  %v708 = vunpack.c.l.b16 %v125
  %v709 = vunpack.c.l.b16 %v126
  %v710 = vunpack.c.l.b16 %v127
  %v711 = vunpack.c.l.b16 %v128
  %v712 = vunpack.c.l.b16 %v129
  %v713 = vunpack.c.l.b16 %v130
  %v714 = vunpack.c.l.b16 %v131
  %v715 = vunpack.c.l.b16 %v132
  %v716 = vunpack.c.l.b16 %v133
  %v717 = vunpack.c.l.b16 %v134
  %v718 = vunpack.c.l.b16 %v135
  %v719 = vunpack.c.l.b16 %v136
  %v720 = vunpack.c.l.b16 %v137
  %v721 = vunpack.c.l.b16 %v138
  %v722 = vunpack.c.l.b16 %v139
  %v723 = vunpack.c.l.b16 %v140
  %v724 = vunpack.c.l.b16 %v141
  %v725 = vunpack.c.l.b16 %v142
  %v726 = vunpack.c.l.b16 %v143
  %v727 = vunpack.c.l.b16 %v144
  %v728 = vunpack.c.l.b16 %v145
  %v729 = vunpack.c.l.b16 %v146
  %v730 = vunpack.c.l.b16 %v147
  %v731 = vunpack.c.l.b16 %v148
  %v732 = vunpack.c.l.b16 %v149
  %v733 = vunpack.c.l.b16 %v150
  %v734 = vunpack.c.l.b16 %v151
  %v735 = vunpack.c.l.b16 %v152
  %v736 = vunpack.c.l.b16 %v153
  %v737 = vunpack.c.l.b16 %v154
  %v738 = vunpack.c.l.b16 %v155
  %v739 = vunpack.c.l.b16 %v156
  %v740 = vunpack.c.l.b16 %v157
  %v741 = vunpack.c.l.b16 %v158
  %v742 = vunpack.c.l.b16 %v159
  %v743 = vunpack.c.l.b16 %v160
  %v744 = vunpack.c.l.b16 %v161
  %v745 = vunpack.c.l.b16 %v162
  %v746 = vunpack.c.l.b16 %v163
  %v747 = vunpack.c.l.b16 %v164
  %v748 = vunpack.c.l.b16 %v165
  %v749 = vunpack.c.l.b16 %v166
  %v750 = vunpack.c.l.b16 %v167
  %v751 = vunpack.c.l.b16 %v168
  %v752 = vunpack.c.l.b16 %v169
  %v753 = vunpack.c.l.b16 %v170
  %v754 = vunpack.c.l.b16 %v171
  %v755 = vunpack.c.l.b16 %v172
  %v756 = vunpack.c.l.b16 %v173
  %v757 = vunpack.c.l.b16 %v174
  %v758 = vunpack.c.l.b16 %v175
  %v759 = vunpack.c.l.b16 %v176
  %v760 = vunpack.c.l.b16 %v177
  %v761 = vunpack.c.l.b16 %v178
  %v762 = vunpack.c.l.b16 %v179
  %v763 = vunpack.c.l.b16 %v180
  %v764 = vunpack.c.l.b16 %v181
  %v765 = vunpack.c.l.b16 %v182
  %v766 = vunpack.c.l.b16 %v183
  %v767 = vunpack.c.l.b16 %v184
  %v768 = vunpack.c.l.b16 %v185
  %v769 = vunpack.c.l.b16 %v186
  %v770 = vunpack.c.l.b16 %v187
  %v771 = vunpack.c.l.b16 %v188
  %v772 = vunpack.c.l.b16 %v189
  %v773 = vunpack.c.l.b16 %v190
  %v774 = vunpack.c.l.b16 %v191
  %v775 = vunpack.c.l.b16 %v192
  %v776 = vunpack.c.l.b16 %v193
  %v777 = vunpack.c.l.b16 %v194
  %v778 = vunpack.c.l.b16 %v195
  %v779 = vunpack.c.l.b16 %v196
  %v780 = vunpack.c.l.b16 %v197
  %v781 = vunpack.c.l.b16 %v198
  %v782 = vunpack.c.l.b16 %v199
  %v783 = vunpack.c.l.b16 %v200
  %v784 = vunpack.c.l.b16 %v201
  %v785 = vunpack.c.l.b16 %v202
  %v786 = vunpack.c.l.b16 %v203
  %v787 = vunpack.c.l.b16 %v204
  %v788 = vunpack.c.l.b16 %v205
  %v789 = vunpack.c.l.b16 %v206
  %v790 = vunpack.c.l.b16 %v207
  %v791 = vunpack.c.l.b16 %v208
  %v792 = vunpack.c.l.b16 %v209
  %v793 = vunpack.c.l.b16 %v210
  %v794 = vunpack.c.l.b16 %v211
  %v795 = vunpack.c.l.b16 %v212
  %v796 = vpack.c.b16 %v669, %v668
  %v797 = vpack.c.b16 %v671, %v670
  %v798 = vpack.c.b16 %v673, %v672
  %v799 = vpack.c.b16 %v675, %v674
  %v800 = vpack.c.b16 %v677, %v676
  %v801 = vpack.c.b16 %v679, %v678
  %v802 = vpack.c.b16 %v681, %v680
  %v803 = vpack.c.b16 %v683, %v682
  %v804 = vpack.c.b16 %v685, %v684
  %v805 = vpack.c.b16 %v687, %v686
  %v806 = vpack.c.b16 %v689, %v688
  %v807 = vpack.c.b16 %v691, %v690
  %v808 = vpack.c.b16 %v693, %v692
  %v809 = vpack.c.b16 %v695, %v694
  %v810 = vpack.c.b16 %v697, %v696
  %v811 = vpack.c.b16 %v699, %v698
  %v812 = vpack.c.b16 %v701, %v700
  %v813 = vpack.c.b16 %v703, %v702
  %v814 = vpack.c.b16 %v705, %v704
  %v815 = vpack.c.b16 %v707, %v706
  %v816 = vpack.c.b16 %v709, %v708
  %v817 = vpack.c.b16 %v711, %v710
  %v818 = vpack.c.b16 %v713, %v712
  %v819 = vpack.c.b16 %v715, %v714
  %v820 = vpack.c.b16 %v717, %v716
  %v821 = vpack.c.b16 %v719, %v718
  %v822 = vpack.c.b16 %v721, %v720
  %v823 = vpack.c.b16 %v723, %v722
  %v824 = vpack.c.b16 %v725, %v724
  %v825 = vpack.c.b16 %v727, %v726
  %v826 = vpack.c.b16 %v729, %v728
  %v827 = vpack.c.b16 %v731, %v730
  %v828 = vpack.c.b16 %v733, %v732
  %v829 = vpack.c.b16 %v735, %v734
  %v830 = vpack.c.b16 %v737, %v736
  %v831 = vpack.c.b16 %v739, %v738
  %v832 = vpack.c.b16 %v741, %v740
  %v833 = vpack.c.b16 %v743, %v742
  %v834 = vpack.c.b16 %v745, %v744
  %v835 = vpack.c.b16 %v747, %v746
  %v836 = vpack.c.b16 %v749, %v748
  %v837 = vpack.c.b16 %v751, %v750
  %v838 = vpack.c.b16 %v753, %v752
  %v839 = vpack.c.b16 %v755, %v754
  %v840 = vpack.c.b16 %v757, %v756
  %v841 = vpack.c.b16 %v759, %v758
  %v842 = vpack.c.b16 %v761, %v760
  %v843 = vpack.c.b16 %v763, %v762
  %v844 = vpack.c.b16 %v765, %v764
  %v845 = vpack.c.b16 %v767, %v766
  %v846 = vpack.c.b16 %v769, %v768
  %v847 = vpack.c.b16 %v771, %v770
  %v848 = vpack.c.b16 %v773, %v772
  %v849 = vpack.c.b16 %v775, %v774
  %v850 = vpack.c.b16 %v777, %v776
  %v851 = vpack.c.b16 %v779, %v778
  %v852 = vpack.c.b16 %v781, %v780
  %v853 = vpack.c.b16 %v783, %v782
  %v854 = vpack.c.b16 %v785, %v784
  %v855 = vpack.c.b16 %v787, %v786
  %v856 = vpack.c.b16 %v789, %v788
  %v857 = vpack.c.b16 %v791, %v790
  %v858 = vpack.c.b16 %v793, %v792
  %v859 = vpack.c.b16 %v795, %v794
  %924 = vmatprep.subr.bf16.mxu0 0
  %925 = vmatpush1.bf16.msra.mxu0 %v803
  %926 = vmatprep.subr.bf16.mxu0 0
  %927 = vmatpush1.bf16.msra.mxu0 %v802
  %928 = vmatprep.subr.bf16.mxu0 0
  %929 = vmatpush1.bf16.msra.mxu0 %v801
  %930 = vmatprep.subr.bf16.mxu0 0
  %931 = vmatpush1.bf16.msra.mxu0 %v800
  %932 = vmatprep.subr.bf16.mxu0 0
  %933 = vmatpush1.bf16.msra.mxu0 %v799
  %934 = vmatprep.subr.bf16.mxu0 0
  %935 = vmatpush1.bf16.msra.mxu0 %v798
  %936 = vmatprep.subr.bf16.mxu0 0
  %937 = vmatpush1.bf16.msra.mxu0 %v797
  %938 = vmatprep.subr.bf16.mxu0 0
  %939 = vmatpush1.bf16.msra.mxu0 %v796
  %940 = vmatprep.subr.bf16.mxu0 0
  %941 = vmatpush2.bf16.msra.mxu0 %v811
  %942 = vmatprep.subr.bf16.mxu0 0
  %943 = vmatpush2.bf16.msra.mxu0 %v810
  %944 = vmatprep.subr.bf16.mxu0 0
  %945 = vmatpush2.bf16.msra.mxu0 %v809
  %946 = vmatprep.subr.bf16.mxu0 0
  %947 = vmatpush2.bf16.msra.mxu0 %v808
  %948 = vmatprep.subr.bf16.mxu0 0
  %949 = vmatpush2.bf16.msra.mxu0 %v807
  %950 = vmatprep.subr.bf16.mxu0 0
  %951 = vmatpush2.bf16.msra.mxu0 %v806
  %952 = vmatprep.subr.bf16.mxu0 0
  %953 = vmatpush2.bf16.msra.mxu0 %v805
  %954 = vmatprep.subr.bf16.mxu0 0
  %955 = vmatpush2.bf16.msra.mxu0 %v804
  %956 = vmatprep.mubr.bf16.mxu0 %v413
  %957 = vmatmul.mubr.bf16.gmra.mxu0 %v412
  %v958 = vpop.f32.mrf.mxu0
  %v959 = vadd.f32 %v218, %v958
  %v960 = vpop.f32.mrf.mxu0
  %v961 = vpop.f32.mrf.mxu0
  %v962 = vadd.f32 %v218, %v961
  %v963 = vpop.f32.mrf.mxu0
  %964 = vmatprep.mubr.bf16.mxu0 %v421
  %965 = vmatmul.mubr.bf16.gmra.mxu0 %v420
  %v966 = vpop.f32.mrf.mxu0
  %v967 = vadd.f32 %v218, %v966
  %v968 = vpop.f32.mrf.mxu0
  %v969 = vpop.f32.mrf.mxu0
  %v970 = vadd.f32 %v218, %v969
  %v971 = vpop.f32.mrf.mxu0
  %972 = vmatprep.mubr.bf16.mxu0 %v429
  %973 = vmatmul.mubr.bf16.gmra.mxu0 %v428
  %v974 = vpop.f32.mrf.mxu0
  %v975 = vadd.f32 %v218, %v974
  %v976 = vpop.f32.mrf.mxu0
  %v977 = vpop.f32.mrf.mxu0
  %v978 = vadd.f32 %v218, %v977
  %v979 = vpop.f32.mrf.mxu0
  %980 = vmatprep.mubr.bf16.mxu0 %v437
  %981 = vmatmul.mubr.bf16.gmra.mxu0 %v436
  %v982 = vpop.f32.mrf.mxu0
  %v983 = vadd.f32 %v218, %v982
  %v984 = vpop.f32.mrf.mxu0
  %v985 = vpop.f32.mrf.mxu0
  %v986 = vadd.f32 %v218, %v985
  %v987 = vpop.f32.mrf.mxu0
  %988 = vmatprep.mubr.bf16.mxu0 %v445
  %989 = vmatmul.mubr.bf16.gmra.mxu0 %v444
  %v990 = vpop.f32.mrf.mxu0
  %v991 = vadd.f32 %v218, %v990
  %v992 = vpop.f32.mrf.mxu0
  %v993 = vpop.f32.mrf.mxu0
  %v994 = vadd.f32 %v218, %v993
  %v995 = vpop.f32.mrf.mxu0
  %996 = vmatprep.mubr.bf16.mxu0 %v453
  %997 = vmatmul.mubr.bf16.gmra.mxu0 %v452
  %v998 = vpop.f32.mrf.mxu0
  %v999 = vadd.f32 %v218, %v998
  %v1000 = vpop.f32.mrf.mxu0
  %v1001 = vpop.f32.mrf.mxu0
  %v1002 = vadd.f32 %v218, %v1001
  %v1003 = vpop.f32.mrf.mxu0
  %1004 = vmatprep.mubr.bf16.mxu0 %v461
  %1005 = vmatmul.mubr.bf16.gmra.mxu0 %v460
  %v1006 = vpop.f32.mrf.mxu0
  %v1007 = vadd.f32 %v218, %v1006
  %v1008 = vpop.f32.mrf.mxu0
  %v1009 = vpop.f32.mrf.mxu0
  %v1010 = vadd.f32 %v218, %v1009
  %v1011 = vpop.f32.mrf.mxu0
  %1012 = vmatprep.mubr.bf16.mxu0 %v469
  %1013 = vmatmul.mubr.bf16.gmra.mxu0 %v468
  %v1014 = vpop.f32.mrf.mxu0
  %v1015 = vadd.f32 %v218, %v1014
  %v1016 = vpop.f32.mrf.mxu0
  %v1017 = vpop.f32.mrf.mxu0
  %v1018 = vadd.f32 %v218, %v1017
  %v1019 = vpop.f32.mrf.mxu0
  %1020 = vdwg.mxu0
  %1021 = vmatprep.subr.bf16.mxu0 0
  %1022 = vmatpush1.bf16.msra.mxu0 %v819
  %1023 = vmatprep.subr.bf16.mxu0 0
  %1024 = vmatpush1.bf16.msra.mxu0 %v818
  %1025 = vmatprep.subr.bf16.mxu0 0
  %1026 = vmatpush1.bf16.msra.mxu0 %v817
  %1027 = vmatprep.subr.bf16.mxu0 0
  %1028 = vmatpush1.bf16.msra.mxu0 %v816
  %1029 = vmatprep.subr.bf16.mxu0 0
  %1030 = vmatpush1.bf16.msra.mxu0 %v815
  %1031 = vmatprep.subr.bf16.mxu0 0
  %1032 = vmatpush1.bf16.msra.mxu0 %v814
  %1033 = vmatprep.subr.bf16.mxu0 0
  %1034 = vmatpush1.bf16.msra.mxu0 %v813
  %1035 = vmatprep.subr.bf16.mxu0 0
  %1036 = vmatpush1.bf16.msra.mxu0 %v812
  %1037 = vmatprep.subr.bf16.mxu0 0
  %1038 = vmatpush2.bf16.msra.mxu0 %v827
  %1039 = vmatprep.subr.bf16.mxu0 0
  %1040 = vmatpush2.bf16.msra.mxu0 %v826
  %1041 = vmatprep.subr.bf16.mxu0 0
  %1042 = vmatpush2.bf16.msra.mxu0 %v825
  %1043 = vmatprep.subr.bf16.mxu0 0
  %1044 = vmatpush2.bf16.msra.mxu0 %v824
  %1045 = vmatprep.subr.bf16.mxu0 0
  %1046 = vmatpush2.bf16.msra.mxu0 %v823
  %1047 = vmatprep.subr.bf16.mxu0 0
  %1048 = vmatpush2.bf16.msra.mxu0 %v822
  %1049 = vmatprep.subr.bf16.mxu0 0
  %1050 = vmatpush2.bf16.msra.mxu0 %v821
  %1051 = vmatprep.subr.bf16.mxu0 0
  %1052 = vmatpush2.bf16.msra.mxu0 %v820
  %1053 = vmatprep.mubr.bf16.mxu0 %v415
  %1054 = vmatmul.mubr.bf16.gmra.mxu0 %v414
  %v1055 = vpop.f32.mrf.mxu0
  %v1056 = vadd.f32 %v959, %v1055
  %v1057 = vpop.f32.mrf.mxu0
  %v1058 = vpop.f32.mrf.mxu0
  %v1059 = vadd.f32 %v962, %v1058
  %v1060 = vpop.f32.mrf.mxu0
  %1061 = vmatprep.mubr.bf16.mxu0 %v423
  %1062 = vmatmul.mubr.bf16.gmra.mxu0 %v422
  %v1063 = vpop.f32.mrf.mxu0
  %v1064 = vadd.f32 %v967, %v1063
  %v1065 = vpop.f32.mrf.mxu0
  %v1066 = vpop.f32.mrf.mxu0
  %v1067 = vadd.f32 %v970, %v1066
  %v1068 = vpop.f32.mrf.mxu0
  %1069 = vmatprep.mubr.bf16.mxu0 %v431
  %1070 = vmatmul.mubr.bf16.gmra.mxu0 %v430
  %v1071 = vpop.f32.mrf.mxu0
  %v1072 = vadd.f32 %v975, %v1071
  %v1073 = vpop.f32.mrf.mxu0
  %v1074 = vpop.f32.mrf.mxu0
  %v1075 = vadd.f32 %v978, %v1074
  %v1076 = vpop.f32.mrf.mxu0
  %1077 = vmatprep.mubr.bf16.mxu0 %v439
  %1078 = vmatmul.mubr.bf16.gmra.mxu0 %v438
  %v1079 = vpop.f32.mrf.mxu0
  %v1080 = vadd.f32 %v983, %v1079
  %v1081 = vpop.f32.mrf.mxu0
  %v1082 = vpop.f32.mrf.mxu0
  %v1083 = vadd.f32 %v986, %v1082
  %v1084 = vpop.f32.mrf.mxu0
  %1085 = vmatprep.mubr.bf16.mxu0 %v447
  %1086 = vmatmul.mubr.bf16.gmra.mxu0 %v446
  %v1087 = vpop.f32.mrf.mxu0
  %v1088 = vadd.f32 %v991, %v1087
  %v1089 = vpop.f32.mrf.mxu0
  %v1090 = vpop.f32.mrf.mxu0
  %v1091 = vadd.f32 %v994, %v1090
  %v1092 = vpop.f32.mrf.mxu0
  %1093 = vmatprep.mubr.bf16.mxu0 %v455
  %1094 = vmatmul.mubr.bf16.gmra.mxu0 %v454
  %v1095 = vpop.f32.mrf.mxu0
  %v1096 = vadd.f32 %v999, %v1095
  %v1097 = vpop.f32.mrf.mxu0
  %v1098 = vpop.f32.mrf.mxu0
  %v1099 = vadd.f32 %v1002, %v1098
  %v1100 = vpop.f32.mrf.mxu0
  %1101 = vmatprep.mubr.bf16.mxu0 %v463
  %1102 = vmatmul.mubr.bf16.gmra.mxu0 %v462
  %v1103 = vpop.f32.mrf.mxu0
  %v1104 = vadd.f32 %v1007, %v1103
  %v1105 = vpop.f32.mrf.mxu0
  %v1106 = vpop.f32.mrf.mxu0
  %v1107 = vadd.f32 %v1010, %v1106
  %v1108 = vpop.f32.mrf.mxu0
  %1109 = vmatprep.mubr.bf16.mxu0 %v471
  %1110 = vmatmul.mubr.bf16.gmra.mxu0 %v470
  %v1111 = vpop.f32.mrf.mxu0
  %v1112 = vadd.f32 %v1015, %v1111
  %v1113 = vpop.f32.mrf.mxu0
  %v1114 = vpop.f32.mrf.mxu0
  %v1115 = vadd.f32 %v1018, %v1114
  %v1116 = vpop.f32.mrf.mxu0
  %1117 = vdwg.mxu0
  %1118 = vmatprep.subr.bf16.mxu0 0
  %1119 = vmatpush1.bf16.msra.mxu0 %v835
  %1120 = vmatprep.subr.bf16.mxu0 0
  %1121 = vmatpush1.bf16.msra.mxu0 %v834
  %1122 = vmatprep.subr.bf16.mxu0 0
  %1123 = vmatpush1.bf16.msra.mxu0 %v833
  %1124 = vmatprep.subr.bf16.mxu0 0
  %1125 = vmatpush1.bf16.msra.mxu0 %v832
  %1126 = vmatprep.subr.bf16.mxu0 0
  %1127 = vmatpush1.bf16.msra.mxu0 %v831
  %1128 = vmatprep.subr.bf16.mxu0 0
  %1129 = vmatpush1.bf16.msra.mxu0 %v830
  %1130 = vmatprep.subr.bf16.mxu0 0
  %1131 = vmatpush1.bf16.msra.mxu0 %v829
  %1132 = vmatprep.subr.bf16.mxu0 0
  %1133 = vmatpush1.bf16.msra.mxu0 %v828
  %1134 = vmatprep.subr.bf16.mxu0 0
  %1135 = vmatpush2.bf16.msra.mxu0 %v843
  %1136 = vmatprep.subr.bf16.mxu0 0
  %1137 = vmatpush2.bf16.msra.mxu0 %v842
  %1138 = vmatprep.subr.bf16.mxu0 0
  %1139 = vmatpush2.bf16.msra.mxu0 %v841
  %1140 = vmatprep.subr.bf16.mxu0 0
  %1141 = vmatpush2.bf16.msra.mxu0 %v840
  %1142 = vmatprep.subr.bf16.mxu0 0
  %1143 = vmatpush2.bf16.msra.mxu0 %v839
  %1144 = vmatprep.subr.bf16.mxu0 0
  %1145 = vmatpush2.bf16.msra.mxu0 %v838
  %1146 = vmatprep.subr.bf16.mxu0 0
  %1147 = vmatpush2.bf16.msra.mxu0 %v837
  %1148 = vmatprep.subr.bf16.mxu0 0
  %1149 = vmatpush2.bf16.msra.mxu0 %v836
  %1150 = vmatprep.mubr.bf16.mxu0 %v417
  %1151 = vmatmul.mubr.bf16.gmra.mxu0 %v416
  %v1152 = vpop.f32.mrf.mxu0
  %v1153 = vadd.f32 %v1056, %v1152
  %v1154 = vpop.f32.mrf.mxu0
  %v1155 = vpop.f32.mrf.mxu0
  %v1156 = vadd.f32 %v1059, %v1155
  %v1157 = vpop.f32.mrf.mxu0
  %1158 = vmatprep.mubr.bf16.mxu0 %v425
  %1159 = vmatmul.mubr.bf16.gmra.mxu0 %v424
  %v1160 = vpop.f32.mrf.mxu0
  %v1161 = vadd.f32 %v1064, %v1160
  %v1162 = vpop.f32.mrf.mxu0
  %v1163 = vpop.f32.mrf.mxu0
  %v1164 = vadd.f32 %v1067, %v1163
  %v1165 = vpop.f32.mrf.mxu0
  %1166 = vmatprep.mubr.bf16.mxu0 %v433
  %1167 = vmatmul.mubr.bf16.gmra.mxu0 %v432
  %v1168 = vpop.f32.mrf.mxu0
  %v1169 = vadd.f32 %v1072, %v1168
  %v1170 = vpop.f32.mrf.mxu0
  %v1171 = vpop.f32.mrf.mxu0
  %v1172 = vadd.f32 %v1075, %v1171
  %v1173 = vpop.f32.mrf.mxu0
  %1174 = vmatprep.mubr.bf16.mxu0 %v441
  %1175 = vmatmul.mubr.bf16.gmra.mxu0 %v440
  %v1176 = vpop.f32.mrf.mxu0
  %v1177 = vadd.f32 %v1080, %v1176
  %v1178 = vpop.f32.mrf.mxu0
  %v1179 = vpop.f32.mrf.mxu0
  %v1180 = vadd.f32 %v1083, %v1179
  %v1181 = vpop.f32.mrf.mxu0
  %1182 = vmatprep.mubr.bf16.mxu0 %v449
  %1183 = vmatmul.mubr.bf16.gmra.mxu0 %v448
  %v1184 = vpop.f32.mrf.mxu0
  %v1185 = vadd.f32 %v1088, %v1184
  %v1186 = vpop.f32.mrf.mxu0
  %v1187 = vpop.f32.mrf.mxu0
  %v1188 = vadd.f32 %v1091, %v1187
  %v1189 = vpop.f32.mrf.mxu0
  %1190 = vmatprep.mubr.bf16.mxu0 %v457
  %1191 = vmatmul.mubr.bf16.gmra.mxu0 %v456
  %v1192 = vpop.f32.mrf.mxu0
  %v1193 = vadd.f32 %v1096, %v1192
  %v1194 = vpop.f32.mrf.mxu0
  %v1195 = vpop.f32.mrf.mxu0
  %v1196 = vadd.f32 %v1099, %v1195
  %v1197 = vpop.f32.mrf.mxu0
  %1198 = vmatprep.mubr.bf16.mxu0 %v465
  %1199 = vmatmul.mubr.bf16.gmra.mxu0 %v464
  %v1200 = vpop.f32.mrf.mxu0
  %v1201 = vadd.f32 %v1104, %v1200
  %v1202 = vpop.f32.mrf.mxu0
  %v1203 = vpop.f32.mrf.mxu0
  %v1204 = vadd.f32 %v1107, %v1203
  %v1205 = vpop.f32.mrf.mxu0
  %1206 = vmatprep.mubr.bf16.mxu0 %v473
  %1207 = vmatmul.mubr.bf16.gmra.mxu0 %v472
  %v1208 = vpop.f32.mrf.mxu0
  %v1209 = vadd.f32 %v1112, %v1208
  %v1210 = vpop.f32.mrf.mxu0
  %v1211 = vpop.f32.mrf.mxu0
  %v1212 = vadd.f32 %v1115, %v1211
  %v1213 = vpop.f32.mrf.mxu0
  %1214 = vdwg.mxu0
  %1215 = vmatprep.subr.bf16.mxu0 0
  %1216 = vmatpush1.bf16.msra.mxu0 %v851
  %1217 = vmatprep.subr.bf16.mxu0 0
  %1218 = vmatpush1.bf16.msra.mxu0 %v850
  %1219 = vmatprep.subr.bf16.mxu0 0
  %1220 = vmatpush1.bf16.msra.mxu0 %v849
  %1221 = vmatprep.subr.bf16.mxu0 0
  %1222 = vmatpush1.bf16.msra.mxu0 %v848
  %1223 = vmatprep.subr.bf16.mxu0 0
  %1224 = vmatpush1.bf16.msra.mxu0 %v847
  %1225 = vmatprep.subr.bf16.mxu0 0
  %1226 = vmatpush1.bf16.msra.mxu0 %v846
  %1227 = vmatprep.subr.bf16.mxu0 0
  %1228 = vmatpush1.bf16.msra.mxu0 %v845
  %1229 = vmatprep.subr.bf16.mxu0 0
  %1230 = vmatpush1.bf16.msra.mxu0 %v844
  %1231 = vmatprep.subr.bf16.mxu0 0
  %1232 = vmatpush2.bf16.msra.mxu0 %v859
  %1233 = vmatprep.subr.bf16.mxu0 0
  %1234 = vmatpush2.bf16.msra.mxu0 %v858
  %1235 = vmatprep.subr.bf16.mxu0 0
  %1236 = vmatpush2.bf16.msra.mxu0 %v857
  %1237 = vmatprep.subr.bf16.mxu0 0
  %1238 = vmatpush2.bf16.msra.mxu0 %v856
  %1239 = vmatprep.subr.bf16.mxu0 0
  %1240 = vmatpush2.bf16.msra.mxu0 %v855
  %1241 = vmatprep.subr.bf16.mxu0 0
  %1242 = vmatpush2.bf16.msra.mxu0 %v854
  %1243 = vmatprep.subr.bf16.mxu0 0
  %1244 = vmatpush2.bf16.msra.mxu0 %v853
  %1245 = vmatprep.subr.bf16.mxu0 0
  %1246 = vmatpush2.bf16.msra.mxu0 %v852
  %1247 = vmatprep.mubr.bf16.mxu0 %v419
  %1248 = vmatmul.mubr.bf16.gmra.mxu0 %v418
  %v1249 = vpop.f32.mrf.mxu0
  %v1250 = vadd.f32 %v1153, %v1249
  %v1251 = vpop.f32.mrf.mxu0
  %v1252 = vpop.f32.mrf.mxu0
  %v1253 = vadd.f32 %v1156, %v1252
  %v1254 = vpop.f32.mrf.mxu0
  %1255 = vmatprep.mubr.bf16.mxu0 %v427
  %1256 = vmatmul.mubr.bf16.gmra.mxu0 %v426
  %v1257 = vpop.f32.mrf.mxu0
  %v1258 = vadd.f32 %v1161, %v1257
  %v1259 = vpop.f32.mrf.mxu0
  %v1260 = vpop.f32.mrf.mxu0
  %v1261 = vadd.f32 %v1164, %v1260
  %v1262 = vpop.f32.mrf.mxu0
  %1263 = vmatprep.mubr.bf16.mxu0 %v435
  %1264 = vmatmul.mubr.bf16.gmra.mxu0 %v434
  %v1265 = vpop.f32.mrf.mxu0
  %v1266 = vadd.f32 %v1169, %v1265
  %v1267 = vpop.f32.mrf.mxu0
  %v1268 = vpop.f32.mrf.mxu0
  %v1269 = vadd.f32 %v1172, %v1268
  %v1270 = vpop.f32.mrf.mxu0
  %1271 = vmatprep.mubr.bf16.mxu0 %v443
  %1272 = vmatmul.mubr.bf16.gmra.mxu0 %v442
  %v1273 = vpop.f32.mrf.mxu0
  %v1274 = vadd.f32 %v1177, %v1273
  %v1275 = vpop.f32.mrf.mxu0
  %v1276 = vpop.f32.mrf.mxu0
  %v1277 = vadd.f32 %v1180, %v1276
  %v1278 = vpop.f32.mrf.mxu0
  %1279 = vmatprep.mubr.bf16.mxu0 %v451
  %1280 = vmatmul.mubr.bf16.gmra.mxu0 %v450
  %v1281 = vpop.f32.mrf.mxu0
  %v1282 = vadd.f32 %v1185, %v1281
  %v1283 = vpop.f32.mrf.mxu0
  %v1284 = vpop.f32.mrf.mxu0
  %v1285 = vadd.f32 %v1188, %v1284
  %v1286 = vpop.f32.mrf.mxu0
  %1287 = vmatprep.mubr.bf16.mxu0 %v459
  %1288 = vmatmul.mubr.bf16.gmra.mxu0 %v458
  %v1289 = vpop.f32.mrf.mxu0
  %v1290 = vadd.f32 %v1193, %v1289
  %v1291 = vpop.f32.mrf.mxu0
  %v1292 = vpop.f32.mrf.mxu0
  %v1293 = vadd.f32 %v1196, %v1292
  %v1294 = vpop.f32.mrf.mxu0
  %1295 = vmatprep.mubr.bf16.mxu0 %v467
  %1296 = vmatmul.mubr.bf16.gmra.mxu0 %v466
  %v1297 = vpop.f32.mrf.mxu0
  %v1298 = vadd.f32 %v1201, %v1297
  %v1299 = vpop.f32.mrf.mxu0
  %v1300 = vpop.f32.mrf.mxu0
  %v1301 = vadd.f32 %v1204, %v1300
  %v1302 = vpop.f32.mrf.mxu0
  %1303 = vmatprep.mubr.bf16.mxu0 %v475
  %1304 = vmatmul.mubr.bf16.gmra.mxu0 %v474
  %v1305 = vpop.f32.mrf.mxu0
  %v1306 = vadd.f32 %v1209, %v1305
  %v1307 = vpop.f32.mrf.mxu0
  %v1308 = vpop.f32.mrf.mxu0
  %v1309 = vadd.f32 %v1212, %v1308
  %v1310 = vpop.f32.mrf.mxu0
  %1311 = vdwg.mxu0
  %v1312 = vmax.f32 %v1250, 0.0
  %v1313 = vmax.f32 %v1253, 0.0
  %v1314 = vmax.f32 %v1258, 0.0
  %v1315 = vmax.f32 %v1261, 0.0
  %v1316 = vmax.f32 %v1266, 0.0
  %v1317 = vmax.f32 %v1269, 0.0
  %v1318 = vmax.f32 %v1274, 0.0
  %v1319 = vmax.f32 %v1277, 0.0
  %v1320 = vmax.f32 %v1282, 0.0
  %v1321 = vmax.f32 %v1285, 0.0
  %v1322 = vmax.f32 %v1290, 0.0
  %v1323 = vmax.f32 %v1293, 0.0
  %v1324 = vmax.f32 %v1298, 0.0
  %v1325 = vmax.f32 %v1301, 0.0
  %v1326 = vmax.f32 %v1306, 0.0
  %v1327 = vmax.f32 %v1309, 0.0
  %vm1328 = vcmask 261120
  %v1329 = vsel %vm1328, %v1312, 0.0
  %v1330 = vsel %vm1328, %v1313, 0.0
  %v1331 = vadd.f32 %v1329, %v1330
  %v1332 = vsel %vm1328, %v1314, 0.0
  %v1333 = vadd.f32 %v1331, %v1332
  %v1334 = vsel %vm1328, %v1315, 0.0
  %v1335 = vadd.f32 %v1333, %v1334
  %v1336 = vsel %vm1328, %v1316, 0.0
  %v1337 = vadd.f32 %v1335, %v1336
  %v1338 = vsel %vm1328, %v1317, 0.0
  %v1339 = vadd.f32 %v1337, %v1338
  %v1340 = vsel %vm1328, %v1318, 0.0
  %v1341 = vadd.f32 %v1339, %v1340
  %v1342 = vsel %vm1328, %v1319, 0.0
  %v1343 = vadd.f32 %v1341, %v1342
  %v1344 = vsel %vm1328, %v1320, 0.0
  %v1345 = vadd.f32 %v1343, %v1344
  %v1346 = vsel %vm1328, %v1321, 0.0
  %v1347 = vadd.f32 %v1345, %v1346
  %v1348 = vsel %vm1328, %v1322, 0.0
  %v1349 = vadd.f32 %v1347, %v1348
  %v1350 = vsel %vm1328, %v1323, 0.0
  %v1351 = vadd.f32 %v1349, %v1350
  %v1352 = vsel %vm1328, %v1324, 0.0
  %v1353 = vadd.f32 %v1351, %v1352
  %v1354 = vsel %vm1328, %v1325, 0.0
  %v1355 = vadd.f32 %v1353, %v1354
  %v1356 = vsel %vm1328, %v1326, 0.0
  %v1357 = vadd.f32 %v1355, %v1356
  %v1358 = vsel %vm1328, %v1327, 0.0
  %v1359 = vadd.f32 %v1357, %v1358
  %v1360 = vrot.slane %v1359, 4
  %v1361 = vadd.f32 %v1359, %v1360
  %v1362 = vrot.slane %v1361, 2
  %v1363 = vadd.f32 %v1361, %v1362
  %v1364 = vrot.slane %v1363, 1
  %v1365 = vadd.f32 %v1363, %v1364
  %v1366 = vmul.f32 %v1365, 0.0078125
  %v1367 = vmul.f32 %v1312, %v1312
  %v1368 = vmul.f32 %v1313, %v1313
  %v1369 = vmul.f32 %v1314, %v1314
  %v1370 = vmul.f32 %v1315, %v1315
  %v1371 = vmul.f32 %v1316, %v1316
  %v1372 = vmul.f32 %v1317, %v1317
  %v1373 = vmul.f32 %v1318, %v1318
  %v1374 = vmul.f32 %v1319, %v1319
  %v1375 = vmul.f32 %v1320, %v1320
  %v1376 = vmul.f32 %v1321, %v1321
  %v1377 = vmul.f32 %v1322, %v1322
  %v1378 = vmul.f32 %v1323, %v1323
  %v1379 = vmul.f32 %v1324, %v1324
  %v1380 = vmul.f32 %v1325, %v1325
  %v1381 = vmul.f32 %v1326, %v1326
  %v1382 = vmul.f32 %v1327, %v1327
  %v1383 = vsel %vm1328, %v1367, 0.0
  %v1384 = vsel %vm1328, %v1368, 0.0
  %v1385 = vadd.f32 %v1383, %v1384
  %v1386 = vsel %vm1328, %v1369, 0.0
  %v1387 = vadd.f32 %v1385, %v1386
  %v1388 = vsel %vm1328, %v1370, 0.0
  %v1389 = vadd.f32 %v1387, %v1388
  %v1390 = vsel %vm1328, %v1371, 0.0
  %v1391 = vadd.f32 %v1389, %v1390
  %v1392 = vsel %vm1328, %v1372, 0.0
  %v1393 = vadd.f32 %v1391, %v1392
  %v1394 = vsel %vm1328, %v1373, 0.0
  %v1395 = vadd.f32 %v1393, %v1394
  %v1396 = vsel %vm1328, %v1374, 0.0
  %v1397 = vadd.f32 %v1395, %v1396
  %v1398 = vsel %vm1328, %v1375, 0.0
  %v1399 = vadd.f32 %v1397, %v1398
  %v1400 = vsel %vm1328, %v1376, 0.0
  %v1401 = vadd.f32 %v1399, %v1400
  %v1402 = vsel %vm1328, %v1377, 0.0
  %v1403 = vadd.f32 %v1401, %v1402
  %v1404 = vsel %vm1328, %v1378, 0.0
  %v1405 = vadd.f32 %v1403, %v1404
  %v1406 = vsel %vm1328, %v1379, 0.0
  %v1407 = vadd.f32 %v1405, %v1406
  %v1408 = vsel %vm1328, %v1380, 0.0
  %v1409 = vadd.f32 %v1407, %v1408
  %v1410 = vsel %vm1328, %v1381, 0.0
  %v1411 = vadd.f32 %v1409, %v1410
  %v1412 = vsel %vm1328, %v1382, 0.0
  %v1413 = vadd.f32 %v1411, %v1412
  %v1414 = vrot.slane %v1413, 4
  %v1415 = vadd.f32 %v1413, %v1414
  %v1416 = vrot.slane %v1415, 2
  %v1417 = vadd.f32 %v1415, %v1416
  %v1418 = vrot.slane %v1417, 1
  %v1419 = vadd.f32 %v1417, %v1418
  %v1420 = vmul.f32 %v1419, 0.0078125
  %v1421 = vmul.f32 %v1366, %v1366
  %v1422 = vsub.f32 %v1420, %v1421
  %v1423 = vld [vmem:[%s3] sm:$0x1]
  %v1424 = vadd.f32 %v1422, 1e-05
  %v1425 = vrsqrt.pop %v1424
  %v1426 = vmul.f32 %v1423, %v1425
  %v1427 = vld [vmem:[%s4] sm:$0x1]
  %v1428 = vmul.f32 %v1366, %v1426
  %v1429 = vsub.f32 %v1427, %v1428
  %v1431 = vlaneseq
  %v1432 = vshrl.u32 %v1431, 7
  %v1433 = vsub.s32 0, %v1432
  %v1434 = vrot.slane %v1426, %v1433
  %v1436 = vmul.f32 %v1312, %v1434
  %v1437 = vmul.f32 %v1313, %v1434
  %v1438 = vmul.f32 %v1314, %v1434
  %v1439 = vmul.f32 %v1315, %v1434
  %v1440 = vmul.f32 %v1316, %v1434
  %v1441 = vmul.f32 %v1317, %v1434
  %v1442 = vmul.f32 %v1318, %v1434
  %v1443 = vmul.f32 %v1319, %v1434
  %v1444 = vmul.f32 %v1320, %v1434
  %v1445 = vmul.f32 %v1321, %v1434
  %v1446 = vmul.f32 %v1322, %v1434
  %v1447 = vmul.f32 %v1323, %v1434
  %v1448 = vmul.f32 %v1324, %v1434
  %v1449 = vmul.f32 %v1325, %v1434
  %v1450 = vmul.f32 %v1326, %v1434
  %v1451 = vmul.f32 %v1327, %v1434
  %v1453 = vlaneseq
  %v1454 = vshrl.u32 %v1453, 7
  %v1455 = vsub.s32 0, %v1454
  %v1456 = vrot.slane %v1429, %v1455
  %v1458 = vadd.f32 %v1436, %v1456
  %v1459 = vadd.f32 %v1437, %v1456
  %v1460 = vadd.f32 %v1438, %v1456
  %v1461 = vadd.f32 %v1439, %v1456
  %v1462 = vadd.f32 %v1440, %v1456
  %v1463 = vadd.f32 %v1441, %v1456
  %v1464 = vadd.f32 %v1442, %v1456
  %v1465 = vadd.f32 %v1443, %v1456
  %v1466 = vadd.f32 %v1444, %v1456
  %v1467 = vadd.f32 %v1445, %v1456
  %v1468 = vadd.f32 %v1446, %v1456
  %v1469 = vadd.f32 %v1447, %v1456
  %v1470 = vadd.f32 %v1448, %v1456
  %v1471 = vadd.f32 %v1449, %v1456
  %v1472 = vadd.f32 %v1450, %v1456
  %v1473 = vadd.f32 %v1451, %v1456
  %1474 = vst.msk [vmem:[%s5] sm:$0xff] %vm1328, %v1458
  %1475 = vst.msk [vmem:[%s5 + $0x8] sm:$0xff] %vm1328, %v1459
  %1476 = vst.msk [vmem:[%s5 + $0x10] sm:$0xff] %vm1328, %v1460
  %1477 = vst.msk [vmem:[%s5 + $0x18] sm:$0xff] %vm1328, %v1461
  %1478 = vst.msk [vmem:[%s5 + $0x20] sm:$0xff] %vm1328, %v1462
  %1479 = vst.msk [vmem:[%s5 + $0x28] sm:$0xff] %vm1328, %v1463
  %1480 = vst.msk [vmem:[%s5 + $0x30] sm:$0xff] %vm1328, %v1464
  %1481 = vst.msk [vmem:[%s5 + $0x38] sm:$0xff] %vm1328, %v1465
  %1482 = vst.msk [vmem:[%s5 + $0x40] sm:$0xff] %vm1328, %v1466
  %1483 = vst.msk [vmem:[%s5 + $0x48] sm:$0xff] %vm1328, %v1467
  %1484 = vst.msk [vmem:[%s5 + $0x50] sm:$0xff] %vm1328, %v1468
  %1485 = vst.msk [vmem:[%s5 + $0x58] sm:$0xff] %vm1328, %v1469
  %1486 = vst.msk [vmem:[%s5 + $0x60] sm:$0xff] %vm1328, %v1470
  %1487 = vst.msk [vmem:[%s5 + $0x68] sm:$0xff] %vm1328, %v1471
  %1488 = vst.msk [vmem:[%s5 + $0x70] sm:$0xff] %vm1328, %v1472
  %1489 = vst.msk [vmem:[%s5 + $0x78] sm:$0xff] %vm1328, %v1473
  // Predicated region
  $region22: #{baseline_forward.12} parent=0 // pred_check
    _
  $region23: #{baseline_forward.12} parent=0 // pred_check_branch
    %1491 = sbr.rel (0) target = $region25
  $region24: #{baseline_forward.12} parent=0 // pred_region
    _
  $region25: #{baseline_forward.12} parent=0 // pred_fallthru
    _
  // Predicated region
  $region26: #{baseline_forward.12} parent=0 // pred_check
    _
  $region27: #{baseline_forward.12} parent=0 // pred_check_branch
    %1493 = sbr.rel (0) target = $region29
  $region28: #{baseline_forward.12} parent=0 // pred_region
    _
  $region29: #{baseline_forward.12} parent=0 // pred_fallthru
    _

</llo_original>
